<compile_context>
chip_gen: v6e
topology: v6e:2x2x1
jax: 0.10.0
libtpu: 0.0.40
codegen_flags: <defaults>
</compile_context>

<pallas_src>
import numpy as np
import jax
import jax.numpy as jnp
from jax import lax
from jax.experimental import pallas as pl
from jax.experimental.pallas import tpu as pltpu


# ---------------------------------------------------------------------------
# Fused-kernel geometry (LeNet on 1x28x28 inputs, batch N).
# ---------------------------------------------------------------------------
N = 2                     # batch size
HP = 32                   # zero-padded conv1 plane height == width
P1 = HP * HP              # 1024 flattened plane positions per sample
LANES = N * P1            # 2048 active lanes (sample-major, row-major plane)
X_W = LANES + 256         # input width   (conv1 shifts go up to 4*32+4 = 132)
A1_W = LANES + 128        # conv1 act width (pool1 shifts <= 33)
MF_W = LANES + 384        # pool1 width     (conv2 shifts <= 2*(4*32+4) = 264)
A2_W = LANES + 128        # conv2 act width (pool2 shifts <= 66)

OC1 = 6                   # real conv1 channels
OC1P = 8                  # conv1 channels padded to a full sublane tile
OC2 = 16
K1 = 25                   # conv1 taps (1 input channel * 5 * 5)
K2P = 25 * OC1P           # conv2 GEMM contraction, 25 groups of 8 rows = 200
FC_IN = OC2 * 25          # 400
NSEL = N * 25             # 50 gather columns


def _build_sel():
    """One-hot (2048, 50) matrix gathering the valid pool2 lanes per channel.

    Column n*25 + 5p + q selects lane n*1024 + 128p + 4q, i.e. pooled output
    (p, q) of sample n on the stride-4 grid of the flat 32x32 plane.
    """
    sel = np.zeros((LANES, NSEL), np.float32)
    for n in range(N):
        for p in range(5):
            for q in range(5):
                sel[n * P1 + 4 * HP * p + 4 * q, n * 25 + 5 * p + q] = 1.0
    return sel


_SEL = _build_sel()


# ---------------------------------------------------------------------------
# The fused kernel.
# ---------------------------------------------------------------------------
def _lenet_kernel(x_ref, w1_ref, b1_ref, w2_ref, b2_ref, sel_hbm, wf1_hbm,
                  bf1_ref, wf2_ref, bf2_ref, wf3_ref, bf3_ref,
                  out_ref,
                  a1_ref, mf_ref, cols2_ref, a2_ref, p2_ref, xfc_ref,
                  sel_vmem, wf1_vmem, dma_sem):
    f32 = jnp.float32

    # ---- kick off the two big parameter DMAs so they overlap conv compute.
    sel_cp = pltpu.make_async_copy(sel_hbm, sel_vmem, dma_sem.at[0])
    wf1_cp = pltpu.make_async_copy(wf1_hbm, wf1_vmem, dma_sem.at[1])
    sel_cp.start()
    wf1_cp.start()

    # ---- zero ONLY the over-read tail lanes (shifted reads run past LANES;
    # those lanes never carry meaning but must be finite because the gather
    # matmul contracts every lane against sel's zero rows).
    a1_ref[:, LANES:] = jnp.zeros((OC1P, A1_W - LANES), f32)
    mf_ref[:, LANES:] = jnp.zeros((OC1P, MF_W - LANES), f32)
    a2_ref[:, LANES:] = jnp.zeros((OC2, A2_W - LANES), f32)

    # ---- conv1 (1 -> 6, 5x5, pad 2) + ReLU ---------------------------------
    # Single input channel: do the 25-tap contraction as VPU broadcast-FMAs
    # over lane-shifted views of the flat plane.  No im2col scratch, no
    # masked single-sublane stores.  Rows 6..7 of w1/b1 are zero padding.
    acc = None
    for ki in range(5):
        for kj in range(5):
            k = ki * 5 + kj
            d = ki * HP + kj
            term = w1_ref[:, k:k + 1] * x_ref[:, d:d + LANES]   # (8,1)*(1,2048)
            acc = term if acc is None else acc + term
    a1_ref[:, 0:LANES] = jnp.maximum(acc + b1_ref[...], 0.0)    # (8, 2048)

    # ---- pool1 (2x2 / 2): max of 4 shifted views ---------------------------
    mf_ref[:, 0:LANES] = jnp.maximum(
        jnp.maximum(a1_ref[:, 0:LANES], a1_ref[:, 1:1 + LANES]),
        jnp.maximum(a1_ref[:, HP:HP + LANES],
                    a1_ref[:, HP + 1:HP + 1 + LANES]))

    # ---- conv2 (6 -> 16, 5x5, valid) + ReLU --------------------------------
    # Pooled pixels sit on the stride-2 grid of the same plane, so patch
    # (ki,kj) is a shift by 2*(ki*32+kj).  cols2 is 25 groups of 8 rows
    # ((ki,kj)-major, padded-channel-minor): every store below is a full,
    # tile-aligned, unmasked (8, 2048) store.
    for ki in range(5):
        for kj in range(5):
            gi = ki * 5 + kj
            d = 2 * (ki * HP + kj)
            cols2_ref[gi * OC1P:(gi + 1) * OC1P, :] = mf_ref[:, d:d + LANES]
    y2 = jnp.dot(w2_ref[...], cols2_ref[...], preferred_element_type=f32)
    a2_ref[:, 0:LANES] = jnp.maximum(y2 + b2_ref[...], 0.0)     # (16, 2048)

    # ---- pool2 (2x2 / 2) into scratch (keeps vreg pressure low before MXU) -
    p2_ref[...] = jnp.maximum(
        jnp.maximum(a2_ref[:, 0:LANES], a2_ref[:, 2:2 + LANES]),
        jnp.maximum(a2_ref[:, 2 * HP:2 * HP + LANES],
                    a2_ref[:, 2 * HP + 2:2 * HP + 2 + LANES]))

    # ---- gather the 2*5*5 valid lanes per channel (one-hot matmul) ---------
    sel_cp.wait()                                               # DMA now done
    g = jnp.dot(p2_ref[...], sel_vmem[...], preferred_element_type=f32)  # (16,50)

    # ---- flatten to torch .view order: xfc[n, c*25 + j] = g[c, n*25 + j] ---
    for n in range(N):
        for c in range(OC2):
            xfc_ref[n:n + 1, c * 25:(c + 1) * 25] = \
                g[c:c + 1, n * 25:(n + 1) * 25]

    # ---- fc1 -> fc2 -> fc3 -------------------------------------------------
    wf1_cp.wait()
    h = jnp.maximum(
        jnp.dot(xfc_ref[...], wf1_vmem[...], preferred_element_type=f32)
        + bf1_ref[...], 0.0)
    h = jnp.maximum(
        jnp.dot(h, wf2_ref[...], preferred_element_type=f32) + bf2_ref[...],
        0.0)
    out_ref[...] = (jnp.dot(h, wf3_ref[...], preferred_element_type=f32)
                    + bf3_ref[...])


# ---------------------------------------------------------------------------
# Wrapper: cheap host-side layout prep (pad/reshape of a 9 KB input + weight
# reshapes), then a single pallas_call for the entire network.
# ---------------------------------------------------------------------------
def lenet_forward(x, p):
    assert x.shape == (N, 1, 28, 28), x.shape

    xpad = jnp.pad(x.astype(jnp.float32), ((0, 0), (0, 0), (2, 2), (2, 2)))
    xflat = jnp.pad(xpad.reshape(1, LANES), ((0, 0), (0, X_W - LANES)))

    # conv1 weights: (6,1,5,5) -> (6,25), pad channel rows to 8.
    w1r = jnp.pad(p["w1"].reshape(OC1, K1), ((0, OC1P - OC1), (0, 0)))   # (8,25)
    b1c = jnp.pad(p["b1"].reshape(OC1, 1), ((0, OC1P - OC1), (0, 0)))    # (8,1)
    # conv2 weights: (16,6,5,5) -> (16,5,5,6) -> pad c to 8 -> (16,200),
    # matching cols2's (ki,kj)-major / padded-channel-minor row layout.
    w2r = jnp.pad(p["w2"].transpose(0, 2, 3, 1),
                  ((0, 0), (0, 0), (0, 0), (0, OC1P - OC1))).reshape(OC2, K2P)
    b2c = p["b2"].reshape(OC2, 1)
    bf1 = p["bf1"].reshape(1, -1)
    bf2 = p["bf2"].reshape(1, -1)
    bf3 = p["bf3"].reshape(1, -1)
    sel = jnp.asarray(_SEL)

    vmem = lambda: pl.BlockSpec(memory_space=pltpu.MemorySpace.VMEM)
    hbm = lambda: pl.BlockSpec(memory_space=pl.ANY)   # manual async DMA inside

    return pl.pallas_call(
        _lenet_kernel,
        out_shape=jax.ShapeDtypeStruct((N, 10), jnp.float32),
        in_specs=[vmem(),          # xflat
                  vmem(),          # w1r
                  vmem(),          # b1c
                  vmem(),          # w2r
                  vmem(),          # b2c
                  hbm(),           # sel    (overlapped DMA)
                  hbm(),           # wf1    (overlapped DMA)
                  vmem(),          # bf1
                  vmem(),          # wf2
                  vmem(),          # bf2
                  vmem(),          # wf3
                  vmem()],         # bf3
        out_specs=vmem(),
        scratch_shapes=[
            pltpu.VMEM((OC1P, A1_W), jnp.float32),   # conv1 activations (8, *)
            pltpu.VMEM((OC1P, MF_W), jnp.float32),   # pool1             (8, *)
            pltpu.VMEM((K2P, LANES), jnp.float32),   # cols2 (200, 2048)
            pltpu.VMEM((OC2, A2_W), jnp.float32),    # conv2 activations
            pltpu.VMEM((OC2, LANES), jnp.float32),   # pool2
            pltpu.VMEM((N, FC_IN), jnp.float32),     # flattened fc input
            pltpu.VMEM((LANES, NSEL), jnp.float32),  # sel landing buffer
            pltpu.VMEM((FC_IN, 120), jnp.float32),   # wf1 landing buffer
            pltpu.SemaphoreType.DMA((2,)),           # sel / wf1 copy sems
        ],
    )(xflat, w1r, b1c, w2r, b2c, sel,
      p["wf1"], bf1, p["wf2"], bf2, p["wf3"], bf3)


# ---------------------------------------------------------------------------
# Pure-JAX reference (high precision) and parameter init.
# ---------------------------------------------------------------------------
def _ref_forward(x, p):
    dn = ("NCHW", "OIHW", "NCHW")
    hp = lax.Precision.HIGHEST
    y = lax.conv_general_dilated(x, p["w1"], (1, 1), ((2, 2), (2, 2)),
                                 dimension_numbers=dn, precision=hp)
    y = jax.nn.relu(y + p["b1"][None, :, None, None])
    y = lax.reduce_window(y, -jnp.inf, lax.max, (1, 1, 2, 2), (1, 1, 2, 2),
                          "VALID")
    y = lax.conv_general_dilated(y, p["w2"], (1, 1), "VALID",
                                 dimension_numbers=dn, precision=hp)
    y = jax.nn.relu(y + p["b2"][None, :, None, None])
    y = lax.reduce_window(y, -jnp.inf, lax.max, (1, 1, 2, 2), (1, 1, 2, 2),
                          "VALID")
    y = y.reshape(y.shape[0], -1)
    y = jax.nn.relu(jnp.dot(y, p["wf1"], precision=hp) + p["bf1"])
    y = jax.nn.relu(jnp.dot(y, p["wf2"], precision=hp) + p["bf2"])
    return jnp.dot(y, p["wf3"], precision=hp) + p["bf3"]


def init_params(key):
    ks = jax.random.split(key, 10)
    s = 0.1
    return {
        "w1": s * jax.random.normal(ks[0], (6, 1, 5, 5), jnp.float32),
        "b1": s * jax.random.normal(ks[1], (6,), jnp.float32),
        "w2": s * jax.random.normal(ks[2], (16, 6, 5, 5), jnp.float32),
        "b2": s * jax.random.normal(ks[3], (16,), jnp.float32),
        "wf1": s * jax.random.normal(ks[4], (16 * 5 * 5, 120), jnp.float32),
        "bf1": s * jax.random.normal(ks[5], (120,), jnp.float32),
        "wf2": s * jax.random.normal(ks[6], (120, 84), jnp.float32),
        "bf2": s * jax.random.normal(ks[7], (84,), jnp.float32),
        "wf3": s * jax.random.normal(ks[8], (84, 10), jnp.float32),
        "bf3": s * jax.random.normal(ks[9], (10,), jnp.float32),
    }


if __name__ == "__main__":
    key = jax.random.PRNGKey(0)
    kx, kp = jax.random.split(key)
    # LeNet's FC sizes (16*5*5) imply a 28x28 single-channel input.
    x = jax.random.normal(kx, (N, 1, 28, 28), jnp.float32)
    params = init_params(kp)

    out = jax.block_until_ready(jax.jit(lenet_forward)(x, params))
    assert out.shape == (N, 10), out.shape

    ref = jax.block_until_ready(_ref_forward(x, params))
    max_err = float(jnp.max(jnp.abs(out - ref)))
    assert jnp.allclose(out, ref, rtol=1e-3, atol=1e-3), max_err

    print("KERNEL_OK")
</pallas_src>

<mosaic_0001>
module attributes {stable_mosaic.version = 11 : i64} {
  func.func @_lenet_kernel(%arg0: memref<1x2304xf32, #tpu.memory_space<vmem>>, %arg1: memref<8x25xf32, #tpu.memory_space<vmem>>, %arg2: memref<8x1xf32, #tpu.memory_space<vmem>>, %arg3: memref<16x200xf32, #tpu.memory_space<vmem>>, %arg4: memref<16x1xf32, #tpu.memory_space<vmem>>, %arg5: memref<2048x50xf32, #tpu.memory_space<any>>, %arg6: memref<400x120xf32, #tpu.memory_space<any>>, %arg7: memref<1x120xf32, #tpu.memory_space<vmem>>, %arg8: memref<120x84xf32, #tpu.memory_space<vmem>>, %arg9: memref<1x84xf32, #tpu.memory_space<vmem>>, %arg10: memref<84x10xf32, #tpu.memory_space<vmem>>, %arg11: memref<1x10xf32, #tpu.memory_space<vmem>>, %arg12: memref<2x10xf32, #tpu.memory_space<vmem>>, %arg13: memref<8x2176xf32, #tpu.memory_space<vmem>>, %arg14: memref<8x2432xf32, #tpu.memory_space<vmem>>, %arg15: memref<200x2048xf32, #tpu.memory_space<vmem>>, %arg16: memref<16x2176xf32, #tpu.memory_space<vmem>>, %arg17: memref<16x2048xf32, #tpu.memory_space<vmem>>, %arg18: memref<2x400xf32, #tpu.memory_space<vmem>>, %arg19: memref<2048x50xf32, #tpu.memory_space<vmem>>, %arg20: memref<400x120xf32, #tpu.memory_space<vmem>>, %arg21: memref<2x!tpu.dma_semaphore, #tpu.memory_space<semaphore_mem>>) attributes {dimension_semantics = [], scalar_prefetch = 0 : i64, scratch_operands = 9 : i64, tpu.core_type = #tpu.core_type<tc>} {
    %c0_i32 = arith.constant 0 : i32
    %0 = tpu.memref_slice %arg21[%c0_i32] : memref<2x!tpu.dma_semaphore, #tpu.memory_space<semaphore_mem>> -> memref<1x!tpu.dma_semaphore, #tpu.memory_space<semaphore_mem>>
    %1 = tpu.memref_squeeze %0 : memref<1x!tpu.dma_semaphore, #tpu.memory_space<semaphore_mem>> -> memref<!tpu.dma_semaphore, #tpu.memory_space<semaphore_mem>>
    tpu.enqueue_dma source(%arg5 : memref<2048x50xf32, #tpu.memory_space<any>>) target(%arg19 : memref<2048x50xf32, #tpu.memory_space<vmem>>) target_semaphore(%1 : memref<!tpu.dma_semaphore, #tpu.memory_space<semaphore_mem>>)
    %c1_i32 = arith.constant 1 : i32
    %2 = tpu.memref_slice %arg21[%c1_i32] : memref<2x!tpu.dma_semaphore, #tpu.memory_space<semaphore_mem>> -> memref<1x!tpu.dma_semaphore, #tpu.memory_space<semaphore_mem>>
    %3 = tpu.memref_squeeze %2 : memref<1x!tpu.dma_semaphore, #tpu.memory_space<semaphore_mem>> -> memref<!tpu.dma_semaphore, #tpu.memory_space<semaphore_mem>>
    tpu.enqueue_dma source(%arg6 : memref<400x120xf32, #tpu.memory_space<any>>) target(%arg20 : memref<400x120xf32, #tpu.memory_space<vmem>>) target_semaphore(%3 : memref<!tpu.dma_semaphore, #tpu.memory_space<semaphore_mem>>)
    %cst = arith.constant 0.000000e+00 : f32
    %4 = vector.broadcast %cst : f32 to vector<8x128xf32>
    %c0 = arith.constant 0 : index
    %c2048 = arith.constant 2048 : index
    %5 = vector.load %arg13[%c0, %c2048] : memref<8x2176xf32, #tpu.memory_space<vmem>>, vector<8x128xf32>
    tpu.vector_store %arg13[%c0, %c2048], %4 {strides = array<i32>} : memref<8x2176xf32, #tpu.memory_space<vmem>>, vector<8x128xf32>,
    %cst_0 = arith.constant 0.000000e+00 : f32
    %6 = vector.broadcast %cst_0 : f32 to vector<8x384xf32>
    %c0_1 = arith.constant 0 : index
    %c2048_2 = arith.constant 2048 : index
    %7 = vector.load %arg14[%c0_1, %c2048_2] : memref<8x2432xf32, #tpu.memory_space<vmem>>, vector<8x384xf32>
    tpu.vector_store %arg14[%c0_1, %c2048_2], %6 {strides = array<i32>} : memref<8x2432xf32, #tpu.memory_space<vmem>>, vector<8x384xf32>,
    %cst_3 = arith.constant 0.000000e+00 : f32
    %8 = vector.broadcast %cst_3 : f32 to vector<16x128xf32>
    %c0_4 = arith.constant 0 : index
    %c2048_5 = arith.constant 2048 : index
    %9 = vector.load %arg16[%c0_4, %c2048_5] : memref<16x2176xf32, #tpu.memory_space<vmem>>, vector<16x128xf32>
    tpu.vector_store %arg16[%c0_4, %c2048_5], %8 {strides = array<i32>} : memref<16x2176xf32, #tpu.memory_space<vmem>>, vector<16x128xf32>,
    %c0_6 = arith.constant 0 : index
    %c0_7 = arith.constant 0 : index
    %10 = vector.load %arg1[%c0_6, %c0_7] : memref<8x25xf32, #tpu.memory_space<vmem>>, vector<8x1xf32>
    %c0_8 = arith.constant 0 : index
    %c0_9 = arith.constant 0 : index
    %11 = vector.load %arg0[%c0_8, %c0_9] : memref<1x2304xf32, #tpu.memory_space<vmem>>, vector<1x2048xf32>
    %12 = vector.broadcast %10 : vector<8x1xf32> to vector<8x2048xf32>
    %13 = vector.broadcast %11 : vector<1x2048xf32> to vector<8x2048xf32>
    %14 = arith.mulf %12, %13 : vector<8x2048xf32>
    %c0_10 = arith.constant 0 : index
    %c1 = arith.constant 1 : index
    %15 = vector.load %arg1[%c0_10, %c1] : memref<8x25xf32, #tpu.memory_space<vmem>>, vector<8x1xf32>
    %c0_11 = arith.constant 0 : index
    %c1_12 = arith.constant 1 : index
    %16 = vector.load %arg0[%c0_11, %c1_12] : memref<1x2304xf32, #tpu.memory_space<vmem>>, vector<1x2048xf32>
    %17 = vector.broadcast %15 : vector<8x1xf32> to vector<8x2048xf32>
    %18 = vector.broadcast %16 : vector<1x2048xf32> to vector<8x2048xf32>
    %19 = arith.mulf %17, %18 : vector<8x2048xf32>
    %20 = arith.addf %14, %19 : vector<8x2048xf32>
    %c0_13 = arith.constant 0 : index
    %c2 = arith.constant 2 : index
    %21 = vector.load %arg1[%c0_13, %c2] : memref<8x25xf32, #tpu.memory_space<vmem>>, vector<8x1xf32>
    %c0_14 = arith.constant 0 : index
    %c2_15 = arith.constant 2 : index
    %22 = vector.load %arg0[%c0_14, %c2_15] : memref<1x2304xf32, #tpu.memory_space<vmem>>, vector<1x2048xf32>
    %23 = vector.broadcast %21 : vector<8x1xf32> to vector<8x2048xf32>
    %24 = vector.broadcast %22 : vector<1x2048xf32> to vector<8x2048xf32>
    %25 = arith.mulf %23, %24 : vector<8x2048xf32>
    %26 = arith.addf %20, %25 : vector<8x2048xf32>
    %c0_16 = arith.constant 0 : index
    %c3 = arith.constant 3 : index
    %27 = vector.load %arg1[%c0_16, %c3] : memref<8x25xf32, #tpu.memory_space<vmem>>, vector<8x1xf32>
    %c0_17 = arith.constant 0 : index
    %c3_18 = arith.constant 3 : index
    %28 = vector.load %arg0[%c0_17, %c3_18] : memref<1x2304xf32, #tpu.memory_space<vmem>>, vector<1x2048xf32>
    %29 = vector.broadcast %27 : vector<8x1xf32> to vector<8x2048xf32>
    %30 = vector.broadcast %28 : vector<1x2048xf32> to vector<8x2048xf32>
    %31 = arith.mulf %29, %30 : vector<8x2048xf32>
    %32 = arith.addf %26, %31 : vector<8x2048xf32>
    %c0_19 = arith.constant 0 : index
    %c4 = arith.constant 4 : index
    %33 = vector.load %arg1[%c0_19, %c4] : memref<8x25xf32, #tpu.memory_space<vmem>>, vector<8x1xf32>
    %c0_20 = arith.constant 0 : index
    %c4_21 = arith.constant 4 : index
    %34 = vector.load %arg0[%c0_20, %c4_21] : memref<1x2304xf32, #tpu.memory_space<vmem>>, vector<1x2048xf32>
    %35 = vector.broadcast %33 : vector<8x1xf32> to vector<8x2048xf32>
    %36 = vector.broadcast %34 : vector<1x2048xf32> to vector<8x2048xf32>
    %37 = arith.mulf %35, %36 : vector<8x2048xf32>
    %38 = arith.addf %32, %37 : vector<8x2048xf32>
    %c0_22 = arith.constant 0 : index
    %c5 = arith.constant 5 : index
    %39 = vector.load %arg1[%c0_22, %c5] : memref<8x25xf32, #tpu.memory_space<vmem>>, vector<8x1xf32>
    %c0_23 = arith.constant 0 : index
    %c32 = arith.constant 32 : index
    %40 = vector.load %arg0[%c0_23, %c32] : memref<1x2304xf32, #tpu.memory_space<vmem>>, vector<1x2048xf32>
    %41 = vector.broadcast %39 : vector<8x1xf32> to vector<8x2048xf32>
    %42 = vector.broadcast %40 : vector<1x2048xf32> to vector<8x2048xf32>
    %43 = arith.mulf %41, %42 : vector<8x2048xf32>
    %44 = arith.addf %38, %43 : vector<8x2048xf32>
    %c0_24 = arith.constant 0 : index
    %c6 = arith.constant 6 : index
    %45 = vector.load %arg1[%c0_24, %c6] : memref<8x25xf32, #tpu.memory_space<vmem>>, vector<8x1xf32>
    %c0_25 = arith.constant 0 : index
    %c33 = arith.constant 33 : index
    %46 = vector.load %arg0[%c0_25, %c33] : memref<1x2304xf32, #tpu.memory_space<vmem>>, vector<1x2048xf32>
    %47 = vector.broadcast %45 : vector<8x1xf32> to vector<8x2048xf32>
    %48 = vector.broadcast %46 : vector<1x2048xf32> to vector<8x2048xf32>
    %49 = arith.mulf %47, %48 : vector<8x2048xf32>
    %50 = arith.addf %44, %49 : vector<8x2048xf32>
    %c0_26 = arith.constant 0 : index
    %c7 = arith.constant 7 : index
    %51 = vector.load %arg1[%c0_26, %c7] : memref<8x25xf32, #tpu.memory_space<vmem>>, vector<8x1xf32>
    %c0_27 = arith.constant 0 : index
    %c34 = arith.constant 34 : index
    %52 = vector.load %arg0[%c0_27, %c34] : memref<1x2304xf32, #tpu.memory_space<vmem>>, vector<1x2048xf32>
    %53 = vector.broadcast %51 : vector<8x1xf32> to vector<8x2048xf32>
    %54 = vector.broadcast %52 : vector<1x2048xf32> to vector<8x2048xf32>
    %55 = arith.mulf %53, %54 : vector<8x2048xf32>
    %56 = arith.addf %50, %55 : vector<8x2048xf32>
    %c0_28 = arith.constant 0 : index
    %c8 = arith.constant 8 : index
    %57 = vector.load %arg1[%c0_28, %c8] : memref<8x25xf32, #tpu.memory_space<vmem>>, vector<8x1xf32>
    %c0_29 = arith.constant 0 : index
    %c35 = arith.constant 35 : index
    %58 = vector.load %arg0[%c0_29, %c35] : memref<1x2304xf32, #tpu.memory_space<vmem>>, vector<1x2048xf32>
    %59 = vector.broadcast %57 : vector<8x1xf32> to vector<8x2048xf32>
    %60 = vector.broadcast %58 : vector<1x2048xf32> to vector<8x2048xf32>
    %61 = arith.mulf %59, %60 : vector<8x2048xf32>
    %62 = arith.addf %56, %61 : vector<8x2048xf32>
    %c0_30 = arith.constant 0 : index
    %c9 = arith.constant 9 : index
    %63 = vector.load %arg1[%c0_30, %c9] : memref<8x25xf32, #tpu.memory_space<vmem>>, vector<8x1xf32>
    %c0_31 = arith.constant 0 : index
    %c36 = arith.constant 36 : index
    %64 = vector.load %arg0[%c0_31, %c36] : memref<1x2304xf32, #tpu.memory_space<vmem>>, vector<1x2048xf32>
    %65 = vector.broadcast %63 : vector<8x1xf32> to vector<8x2048xf32>
    %66 = vector.broadcast %64 : vector<1x2048xf32> to vector<8x2048xf32>
    %67 = arith.mulf %65, %66 : vector<8x2048xf32>
    %68 = arith.addf %62, %67 : vector<8x2048xf32>
    %c0_32 = arith.constant 0 : index
    %c10 = arith.constant 10 : index
    %69 = vector.load %arg1[%c0_32, %c10] : memref<8x25xf32, #tpu.memory_space<vmem>>, vector<8x1xf32>
    %c0_33 = arith.constant 0 : index
    %c64 = arith.constant 64 : index
    %70 = vector.load %arg0[%c0_33, %c64] : memref<1x2304xf32, #tpu.memory_space<vmem>>, vector<1x2048xf32>
    %71 = vector.broadcast %69 : vector<8x1xf32> to vector<8x2048xf32>
    %72 = vector.broadcast %70 : vector<1x2048xf32> to vector<8x2048xf32>
    %73 = arith.mulf %71, %72 : vector<8x2048xf32>
    %74 = arith.addf %68, %73 : vector<8x2048xf32>
    %c0_34 = arith.constant 0 : index
    %c11 = arith.constant 11 : index
    %75 = vector.load %arg1[%c0_34, %c11] : memref<8x25xf32, #tpu.memory_space<vmem>>, vector<8x1xf32>
    %c0_35 = arith.constant 0 : index
    %c65 = arith.constant 65 : index
    %76 = vector.load %arg0[%c0_35, %c65] : memref<1x2304xf32, #tpu.memory_space<vmem>>, vector<1x2048xf32>
    %77 = vector.broadcast %75 : vector<8x1xf32> to vector<8x2048xf32>
    %78 = vector.broadcast %76 : vector<1x2048xf32> to vector<8x2048xf32>
    %79 = arith.mulf %77, %78 : vector<8x2048xf32>
    %80 = arith.addf %74, %79 : vector<8x2048xf32>
    %c0_36 = arith.constant 0 : index
    %c12 = arith.constant 12 : index
    %81 = vector.load %arg1[%c0_36, %c12] : memref<8x25xf32, #tpu.memory_space<vmem>>, vector<8x1xf32>
    %c0_37 = arith.constant 0 : index
    %c66 = arith.constant 66 : index
    %82 = vector.load %arg0[%c0_37, %c66] : memref<1x2304xf32, #tpu.memory_space<vmem>>, vector<1x2048xf32>
    %83 = vector.broadcast %81 : vector<8x1xf32> to vector<8x2048xf32>
    %84 = vector.broadcast %82 : vector<1x2048xf32> to vector<8x2048xf32>
    %85 = arith.mulf %83, %84 : vector<8x2048xf32>
    %86 = arith.addf %80, %85 : vector<8x2048xf32>
    %c0_38 = arith.constant 0 : index
    %c13 = arith.constant 13 : index
    %87 = vector.load %arg1[%c0_38, %c13] : memref<8x25xf32, #tpu.memory_space<vmem>>, vector<8x1xf32>
    %c0_39 = arith.constant 0 : index
    %c67 = arith.constant 67 : index
    %88 = vector.load %arg0[%c0_39, %c67] : memref<1x2304xf32, #tpu.memory_space<vmem>>, vector<1x2048xf32>
    %89 = vector.broadcast %87 : vector<8x1xf32> to vector<8x2048xf32>
    %90 = vector.broadcast %88 : vector<1x2048xf32> to vector<8x2048xf32>
    %91 = arith.mulf %89, %90 : vector<8x2048xf32>
    %92 = arith.addf %86, %91 : vector<8x2048xf32>
    %c0_40 = arith.constant 0 : index
    %c14 = arith.constant 14 : index
    %93 = vector.load %arg1[%c0_40, %c14] : memref<8x25xf32, #tpu.memory_space<vmem>>, vector<8x1xf32>
    %c0_41 = arith.constant 0 : index
    %c68 = arith.constant 68 : index
    %94 = vector.load %arg0[%c0_41, %c68] : memref<1x2304xf32, #tpu.memory_space<vmem>>, vector<1x2048xf32>
    %95 = vector.broadcast %93 : vector<8x1xf32> to vector<8x2048xf32>
    %96 = vector.broadcast %94 : vector<1x2048xf32> to vector<8x2048xf32>
    %97 = arith.mulf %95, %96 : vector<8x2048xf32>
    %98 = arith.addf %92, %97 : vector<8x2048xf32>
    %c0_42 = arith.constant 0 : index
    %c15 = arith.constant 15 : index
    %99 = vector.load %arg1[%c0_42, %c15] : memref<8x25xf32, #tpu.memory_space<vmem>>, vector<8x1xf32>
    %c0_43 = arith.constant 0 : index
    %c96 = arith.constant 96 : index
    %100 = vector.load %arg0[%c0_43, %c96] : memref<1x2304xf32, #tpu.memory_space<vmem>>, vector<1x2048xf32>
    %101 = vector.broadcast %99 : vector<8x1xf32> to vector<8x2048xf32>
    %102 = vector.broadcast %100 : vector<1x2048xf32> to vector<8x2048xf32>
    %103 = arith.mulf %101, %102 : vector<8x2048xf32>
    %104 = arith.addf %98, %103 : vector<8x2048xf32>
    %c0_44 = arith.constant 0 : index
    %c16 = arith.constant 16 : index
    %105 = vector.load %arg1[%c0_44, %c16] : memref<8x25xf32, #tpu.memory_space<vmem>>, vector<8x1xf32>
    %c0_45 = arith.constant 0 : index
    %c97 = arith.constant 97 : index
    %106 = vector.load %arg0[%c0_45, %c97] : memref<1x2304xf32, #tpu.memory_space<vmem>>, vector<1x2048xf32>
    %107 = vector.broadcast %105 : vector<8x1xf32> to vector<8x2048xf32>
    %108 = vector.broadcast %106 : vector<1x2048xf32> to vector<8x2048xf32>
    %109 = arith.mulf %107, %108 : vector<8x2048xf32>
    %110 = arith.addf %104, %109 : vector<8x2048xf32>
    %c0_46 = arith.constant 0 : index
    %c17 = arith.constant 17 : index
    %111 = vector.load %arg1[%c0_46, %c17] : memref<8x25xf32, #tpu.memory_space<vmem>>, vector<8x1xf32>
    %c0_47 = arith.constant 0 : index
    %c98 = arith.constant 98 : index
    %112 = vector.load %arg0[%c0_47, %c98] : memref<1x2304xf32, #tpu.memory_space<vmem>>, vector<1x2048xf32>
    %113 = vector.broadcast %111 : vector<8x1xf32> to vector<8x2048xf32>
    %114 = vector.broadcast %112 : vector<1x2048xf32> to vector<8x2048xf32>
    %115 = arith.mulf %113, %114 : vector<8x2048xf32>
    %116 = arith.addf %110, %115 : vector<8x2048xf32>
    %c0_48 = arith.constant 0 : index
    %c18 = arith.constant 18 : index
    %117 = vector.load %arg1[%c0_48, %c18] : memref<8x25xf32, #tpu.memory_space<vmem>>, vector<8x1xf32>
    %c0_49 = arith.constant 0 : index
    %c99 = arith.constant 99 : index
    %118 = vector.load %arg0[%c0_49, %c99] : memref<1x2304xf32, #tpu.memory_space<vmem>>, vector<1x2048xf32>
    %119 = vector.broadcast %117 : vector<8x1xf32> to vector<8x2048xf32>
    %120 = vector.broadcast %118 : vector<1x2048xf32> to vector<8x2048xf32>
    %121 = arith.mulf %119, %120 : vector<8x2048xf32>
    %122 = arith.addf %116, %121 : vector<8x2048xf32>
    %c0_50 = arith.constant 0 : index
    %c19 = arith.constant 19 : index
    %123 = vector.load %arg1[%c0_50, %c19] : memref<8x25xf32, #tpu.memory_space<vmem>>, vector<8x1xf32>
    %c0_51 = arith.constant 0 : index
    %c100 = arith.constant 100 : index
    %124 = vector.load %arg0[%c0_51, %c100] : memref<1x2304xf32, #tpu.memory_space<vmem>>, vector<1x2048xf32>
    %125 = vector.broadcast %123 : vector<8x1xf32> to vector<8x2048xf32>
    %126 = vector.broadcast %124 : vector<1x2048xf32> to vector<8x2048xf32>
    %127 = arith.mulf %125, %126 : vector<8x2048xf32>
    %128 = arith.addf %122, %127 : vector<8x2048xf32>
    %c0_52 = arith.constant 0 : index
    %c20 = arith.constant 20 : index
    %129 = vector.load %arg1[%c0_52, %c20] : memref<8x25xf32, #tpu.memory_space<vmem>>, vector<8x1xf32>
    %c0_53 = arith.constant 0 : index
    %c128 = arith.constant 128 : index
    %130 = vector.load %arg0[%c0_53, %c128] : memref<1x2304xf32, #tpu.memory_space<vmem>>, vector<1x2048xf32>
    %131 = vector.broadcast %129 : vector<8x1xf32> to vector<8x2048xf32>
    %132 = vector.broadcast %130 : vector<1x2048xf32> to vector<8x2048xf32>
    %133 = arith.mulf %131, %132 : vector<8x2048xf32>
    %134 = arith.addf %128, %133 : vector<8x2048xf32>
    %c0_54 = arith.constant 0 : index
    %c21 = arith.constant 21 : index
    %135 = vector.load %arg1[%c0_54, %c21] : memref<8x25xf32, #tpu.memory_space<vmem>>, vector<8x1xf32>
    %c0_55 = arith.constant 0 : index
    %c129 = arith.constant 129 : index
    %136 = vector.load %arg0[%c0_55, %c129] : memref<1x2304xf32, #tpu.memory_space<vmem>>, vector<1x2048xf32>
    %137 = vector.broadcast %135 : vector<8x1xf32> to vector<8x2048xf32>
    %138 = vector.broadcast %136 : vector<1x2048xf32> to vector<8x2048xf32>
    %139 = arith.mulf %137, %138 : vector<8x2048xf32>
    %140 = arith.addf %134, %139 : vector<8x2048xf32>
    %c0_56 = arith.constant 0 : index
    %c22 = arith.constant 22 : index
    %141 = vector.load %arg1[%c0_56, %c22] : memref<8x25xf32, #tpu.memory_space<vmem>>, vector<8x1xf32>
    %c0_57 = arith.constant 0 : index
    %c130 = arith.constant 130 : index
    %142 = vector.load %arg0[%c0_57, %c130] : memref<1x2304xf32, #tpu.memory_space<vmem>>, vector<1x2048xf32>
    %143 = vector.broadcast %141 : vector<8x1xf32> to vector<8x2048xf32>
    %144 = vector.broadcast %142 : vector<1x2048xf32> to vector<8x2048xf32>
    %145 = arith.mulf %143, %144 : vector<8x2048xf32>
    %146 = arith.addf %140, %145 : vector<8x2048xf32>
    %c0_58 = arith.constant 0 : index
    %c23 = arith.constant 23 : index
    %147 = vector.load %arg1[%c0_58, %c23] : memref<8x25xf32, #tpu.memory_space<vmem>>, vector<8x1xf32>
    %c0_59 = arith.constant 0 : index
    %c131 = arith.constant 131 : index
    %148 = vector.load %arg0[%c0_59, %c131] : memref<1x2304xf32, #tpu.memory_space<vmem>>, vector<1x2048xf32>
    %149 = vector.broadcast %147 : vector<8x1xf32> to vector<8x2048xf32>
    %150 = vector.broadcast %148 : vector<1x2048xf32> to vector<8x2048xf32>
    %151 = arith.mulf %149, %150 : vector<8x2048xf32>
    %152 = arith.addf %146, %151 : vector<8x2048xf32>
    %c0_60 = arith.constant 0 : index
    %c24 = arith.constant 24 : index
    %153 = vector.load %arg1[%c0_60, %c24] : memref<8x25xf32, #tpu.memory_space<vmem>>, vector<8x1xf32>
    %c0_61 = arith.constant 0 : index
    %c132 = arith.constant 132 : index
    %154 = vector.load %arg0[%c0_61, %c132] : memref<1x2304xf32, #tpu.memory_space<vmem>>, vector<1x2048xf32>
    %155 = vector.broadcast %153 : vector<8x1xf32> to vector<8x2048xf32>
    %156 = vector.broadcast %154 : vector<1x2048xf32> to vector<8x2048xf32>
    %157 = arith.mulf %155, %156 : vector<8x2048xf32>
    %158 = arith.addf %152, %157 : vector<8x2048xf32>
    %c0_62 = arith.constant 0 : index
    %c0_63 = arith.constant 0 : index
    %159 = vector.load %arg2[%c0_62, %c0_63] : memref<8x1xf32, #tpu.memory_space<vmem>>, vector<8x1xf32>
    %160 = vector.broadcast %159 : vector<8x1xf32> to vector<8x2048xf32>
    %161 = arith.addf %158, %160 : vector<8x2048xf32>
    %cst_64 = arith.constant 0.000000e+00 : f32
    %162 = vector.broadcast %cst_64 : f32 to vector<8x2048xf32>
    %163 = arith.maximumf %161, %162 : vector<8x2048xf32>
    %c0_65 = arith.constant 0 : index
    %c0_66 = arith.constant 0 : index
    %164 = vector.load %arg13[%c0_65, %c0_66] : memref<8x2176xf32, #tpu.memory_space<vmem>>, vector<8x2048xf32>
    tpu.vector_store %arg13[%c0_65, %c0_66], %163 {strides = array<i32>} : memref<8x2176xf32, #tpu.memory_space<vmem>>, vector<8x2048xf32>,
    %c0_67 = arith.constant 0 : index
    %c0_68 = arith.constant 0 : index
    %165 = vector.load %arg13[%c0_67, %c0_68] : memref<8x2176xf32, #tpu.memory_space<vmem>>, vector<8x2048xf32>
    %c0_69 = arith.constant 0 : index
    %c1_70 = arith.constant 1 : index
    %166 = vector.load %arg13[%c0_69, %c1_70] : memref<8x2176xf32, #tpu.memory_space<vmem>>, vector<8x2048xf32>
    %167 = arith.maximumf %165, %166 : vector<8x2048xf32>
    %c0_71 = arith.constant 0 : index
    %c32_72 = arith.constant 32 : index
    %168 = vector.load %arg13[%c0_71, %c32_72] : memref<8x2176xf32, #tpu.memory_space<vmem>>, vector<8x2048xf32>
    %c0_73 = arith.constant 0 : index
    %c33_74 = arith.constant 33 : index
    %169 = vector.load %arg13[%c0_73, %c33_74] : memref<8x2176xf32, #tpu.memory_space<vmem>>, vector<8x2048xf32>
    %170 = arith.maximumf %168, %169 : vector<8x2048xf32>
    %171 = arith.maximumf %167, %170 : vector<8x2048xf32>
    %c0_75 = arith.constant 0 : index
    %c0_76 = arith.constant 0 : index
    %172 = vector.load %arg14[%c0_75, %c0_76] : memref<8x2432xf32, #tpu.memory_space<vmem>>, vector<8x2048xf32>
    tpu.vector_store %arg14[%c0_75, %c0_76], %171 {strides = array<i32>} : memref<8x2432xf32, #tpu.memory_space<vmem>>, vector<8x2048xf32>,
    %c0_77 = arith.constant 0 : index
    %c0_78 = arith.constant 0 : index
    %173 = vector.load %arg14[%c0_77, %c0_78] : memref<8x2432xf32, #tpu.memory_space<vmem>>, vector<8x2048xf32>
    %c0_79 = arith.constant 0 : index
    %c0_80 = arith.constant 0 : index
    %174 = vector.load %arg15[%c0_79, %c0_80] : memref<200x2048xf32, #tpu.memory_space<vmem>>, vector<8x2048xf32>
    tpu.vector_store %arg15[%c0_79, %c0_80], %173 {strides = array<i32>} : memref<200x2048xf32, #tpu.memory_space<vmem>>, vector<8x2048xf32>,
    %c0_81 = arith.constant 0 : index
    %c2_82 = arith.constant 2 : index
    %175 = vector.load %arg14[%c0_81, %c2_82] : memref<8x2432xf32, #tpu.memory_space<vmem>>, vector<8x2048xf32>
    %c8_83 = arith.constant 8 : index
    %c0_84 = arith.constant 0 : index
    %176 = vector.load %arg15[%c8_83, %c0_84] : memref<200x2048xf32, #tpu.memory_space<vmem>>, vector<8x2048xf32>
    tpu.vector_store %arg15[%c8_83, %c0_84], %175 {strides = array<i32>} : memref<200x2048xf32, #tpu.memory_space<vmem>>, vector<8x2048xf32>,
    %c0_85 = arith.constant 0 : index
    %c4_86 = arith.constant 4 : index
    %177 = vector.load %arg14[%c0_85, %c4_86] : memref<8x2432xf32, #tpu.memory_space<vmem>>, vector<8x2048xf32>
    %c16_87 = arith.constant 16 : index
    %c0_88 = arith.constant 0 : index
    %178 = vector.load %arg15[%c16_87, %c0_88] : memref<200x2048xf32, #tpu.memory_space<vmem>>, vector<8x2048xf32>
    tpu.vector_store %arg15[%c16_87, %c0_88], %177 {strides = array<i32>} : memref<200x2048xf32, #tpu.memory_space<vmem>>, vector<8x2048xf32>,
    %c0_89 = arith.constant 0 : index
    %c6_90 = arith.constant 6 : index
    %179 = vector.load %arg14[%c0_89, %c6_90] : memref<8x2432xf32, #tpu.memory_space<vmem>>, vector<8x2048xf32>
    %c24_91 = arith.constant 24 : index
    %c0_92 = arith.constant 0 : index
    %180 = vector.load %arg15[%c24_91, %c0_92] : memref<200x2048xf32, #tpu.memory_space<vmem>>, vector<8x2048xf32>
    tpu.vector_store %arg15[%c24_91, %c0_92], %179 {strides = array<i32>} : memref<200x2048xf32, #tpu.memory_space<vmem>>, vector<8x2048xf32>,
    %c0_93 = arith.constant 0 : index
    %c8_94 = arith.constant 8 : index
    %181 = vector.load %arg14[%c0_93, %c8_94] : memref<8x2432xf32, #tpu.memory_space<vmem>>, vector<8x2048xf32>
    %c32_95 = arith.constant 32 : index
    %c0_96 = arith.constant 0 : index
    %182 = vector.load %arg15[%c32_95, %c0_96] : memref<200x2048xf32, #tpu.memory_space<vmem>>, vector<8x2048xf32>
    tpu.vector_store %arg15[%c32_95, %c0_96], %181 {strides = array<i32>} : memref<200x2048xf32, #tpu.memory_space<vmem>>, vector<8x2048xf32>,
    %c0_97 = arith.constant 0 : index
    %c64_98 = arith.constant 64 : index
    %183 = vector.load %arg14[%c0_97, %c64_98] : memref<8x2432xf32, #tpu.memory_space<vmem>>, vector<8x2048xf32>
    %c40 = arith.constant 40 : index
    %c0_99 = arith.constant 0 : index
    %184 = vector.load %arg15[%c40, %c0_99] : memref<200x2048xf32, #tpu.memory_space<vmem>>, vector<8x2048xf32>
    tpu.vector_store %arg15[%c40, %c0_99], %183 {strides = array<i32>} : memref<200x2048xf32, #tpu.memory_space<vmem>>, vector<8x2048xf32>,
    %c0_100 = arith.constant 0 : index
    %c66_101 = arith.constant 66 : index
    %185 = vector.load %arg14[%c0_100, %c66_101] : memref<8x2432xf32, #tpu.memory_space<vmem>>, vector<8x2048xf32>
    %c48 = arith.constant 48 : index
    %c0_102 = arith.constant 0 : index
    %186 = vector.load %arg15[%c48, %c0_102] : memref<200x2048xf32, #tpu.memory_space<vmem>>, vector<8x2048xf32>
    tpu.vector_store %arg15[%c48, %c0_102], %185 {strides = array<i32>} : memref<200x2048xf32, #tpu.memory_space<vmem>>, vector<8x2048xf32>,
    %c0_103 = arith.constant 0 : index
    %c68_104 = arith.constant 68 : index
    %187 = vector.load %arg14[%c0_103, %c68_104] : memref<8x2432xf32, #tpu.memory_space<vmem>>, vector<8x2048xf32>
    %c56 = arith.constant 56 : index
    %c0_105 = arith.constant 0 : index
    %188 = vector.load %arg15[%c56, %c0_105] : memref<200x2048xf32, #tpu.memory_space<vmem>>, vector<8x2048xf32>
    tpu.vector_store %arg15[%c56, %c0_105], %187 {strides = array<i32>} : memref<200x2048xf32, #tpu.memory_space<vmem>>, vector<8x2048xf32>,
    %c0_106 = arith.constant 0 : index
    %c70 = arith.constant 70 : index
    %189 = vector.load %arg14[%c0_106, %c70] : memref<8x2432xf32, #tpu.memory_space<vmem>>, vector<8x2048xf32>
    %c64_107 = arith.constant 64 : index
    %c0_108 = arith.constant 0 : index
    %190 = vector.load %arg15[%c64_107, %c0_108] : memref<200x2048xf32, #tpu.memory_space<vmem>>, vector<8x2048xf32>
    tpu.vector_store %arg15[%c64_107, %c0_108], %189 {strides = array<i32>} : memref<200x2048xf32, #tpu.memory_space<vmem>>, vector<8x2048xf32>,
    %c0_109 = arith.constant 0 : index
    %c72 = arith.constant 72 : index
    %191 = vector.load %arg14[%c0_109, %c72] : memref<8x2432xf32, #tpu.memory_space<vmem>>, vector<8x2048xf32>
    %c72_110 = arith.constant 72 : index
    %c0_111 = arith.constant 0 : index
    %192 = vector.load %arg15[%c72_110, %c0_111] : memref<200x2048xf32, #tpu.memory_space<vmem>>, vector<8x2048xf32>
    tpu.vector_store %arg15[%c72_110, %c0_111], %191 {strides = array<i32>} : memref<200x2048xf32, #tpu.memory_space<vmem>>, vector<8x2048xf32>,
    %c0_112 = arith.constant 0 : index
    %c128_113 = arith.constant 128 : index
    %193 = vector.load %arg14[%c0_112, %c128_113] : memref<8x2432xf32, #tpu.memory_space<vmem>>, vector<8x2048xf32>
    %c80 = arith.constant 80 : index
    %c0_114 = arith.constant 0 : index
    %194 = vector.load %arg15[%c80, %c0_114] : memref<200x2048xf32, #tpu.memory_space<vmem>>, vector<8x2048xf32>
    tpu.vector_store %arg15[%c80, %c0_114], %193 {strides = array<i32>} : memref<200x2048xf32, #tpu.memory_space<vmem>>, vector<8x2048xf32>,
    %c0_115 = arith.constant 0 : index
    %c130_116 = arith.constant 130 : index
    %195 = vector.load %arg14[%c0_115, %c130_116] : memref<8x2432xf32, #tpu.memory_space<vmem>>, vector<8x2048xf32>
    %c88 = arith.constant 88 : index
    %c0_117 = arith.constant 0 : index
    %196 = vector.load %arg15[%c88, %c0_117] : memref<200x2048xf32, #tpu.memory_space<vmem>>, vector<8x2048xf32>
    tpu.vector_store %arg15[%c88, %c0_117], %195 {strides = array<i32>} : memref<200x2048xf32, #tpu.memory_space<vmem>>, vector<8x2048xf32>,
    %c0_118 = arith.constant 0 : index
    %c132_119 = arith.constant 132 : index
    %197 = vector.load %arg14[%c0_118, %c132_119] : memref<8x2432xf32, #tpu.memory_space<vmem>>, vector<8x2048xf32>
    %c96_120 = arith.constant 96 : index
    %c0_121 = arith.constant 0 : index
    %198 = vector.load %arg15[%c96_120, %c0_121] : memref<200x2048xf32, #tpu.memory_space<vmem>>, vector<8x2048xf32>
    tpu.vector_store %arg15[%c96_120, %c0_121], %197 {strides = array<i32>} : memref<200x2048xf32, #tpu.memory_space<vmem>>, vector<8x2048xf32>,
    %c0_122 = arith.constant 0 : index
    %c134 = arith.constant 134 : index
    %199 = vector.load %arg14[%c0_122, %c134] : memref<8x2432xf32, #tpu.memory_space<vmem>>, vector<8x2048xf32>
    %c104 = arith.constant 104 : index
    %c0_123 = arith.constant 0 : index
    %200 = vector.load %arg15[%c104, %c0_123] : memref<200x2048xf32, #tpu.memory_space<vmem>>, vector<8x2048xf32>
    tpu.vector_store %arg15[%c104, %c0_123], %199 {strides = array<i32>} : memref<200x2048xf32, #tpu.memory_space<vmem>>, vector<8x2048xf32>,
    %c0_124 = arith.constant 0 : index
    %c136 = arith.constant 136 : index
    %201 = vector.load %arg14[%c0_124, %c136] : memref<8x2432xf32, #tpu.memory_space<vmem>>, vector<8x2048xf32>
    %c112 = arith.constant 112 : index
    %c0_125 = arith.constant 0 : index
    %202 = vector.load %arg15[%c112, %c0_125] : memref<200x2048xf32, #tpu.memory_space<vmem>>, vector<8x2048xf32>
    tpu.vector_store %arg15[%c112, %c0_125], %201 {strides = array<i32>} : memref<200x2048xf32, #tpu.memory_space<vmem>>, vector<8x2048xf32>,
    %c0_126 = arith.constant 0 : index
    %c192 = arith.constant 192 : index
    %203 = vector.load %arg14[%c0_126, %c192] : memref<8x2432xf32, #tpu.memory_space<vmem>>, vector<8x2048xf32>
    %c120 = arith.constant 120 : index
    %c0_127 = arith.constant 0 : index
    %204 = vector.load %arg15[%c120, %c0_127] : memref<200x2048xf32, #tpu.memory_space<vmem>>, vector<8x2048xf32>
    tpu.vector_store %arg15[%c120, %c0_127], %203 {strides = array<i32>} : memref<200x2048xf32, #tpu.memory_space<vmem>>, vector<8x2048xf32>,
    %c0_128 = arith.constant 0 : index
    %c194 = arith.constant 194 : index
    %205 = vector.load %arg14[%c0_128, %c194] : memref<8x2432xf32, #tpu.memory_space<vmem>>, vector<8x2048xf32>
    %c128_129 = arith.constant 128 : index
    %c0_130 = arith.constant 0 : index
    %206 = vector.load %arg15[%c128_129, %c0_130] : memref<200x2048xf32, #tpu.memory_space<vmem>>, vector<8x2048xf32>
    tpu.vector_store %arg15[%c128_129, %c0_130], %205 {strides = array<i32>} : memref<200x2048xf32, #tpu.memory_space<vmem>>, vector<8x2048xf32>,
    %c0_131 = arith.constant 0 : index
    %c196 = arith.constant 196 : index
    %207 = vector.load %arg14[%c0_131, %c196] : memref<8x2432xf32, #tpu.memory_space<vmem>>, vector<8x2048xf32>
    %c136_132 = arith.constant 136 : index
    %c0_133 = arith.constant 0 : index
    %208 = vector.load %arg15[%c136_132, %c0_133] : memref<200x2048xf32, #tpu.memory_space<vmem>>, vector<8x2048xf32>
    tpu.vector_store %arg15[%c136_132, %c0_133], %207 {strides = array<i32>} : memref<200x2048xf32, #tpu.memory_space<vmem>>, vector<8x2048xf32>,
    %c0_134 = arith.constant 0 : index
    %c198 = arith.constant 198 : index
    %209 = vector.load %arg14[%c0_134, %c198] : memref<8x2432xf32, #tpu.memory_space<vmem>>, vector<8x2048xf32>
    %c144 = arith.constant 144 : index
    %c0_135 = arith.constant 0 : index
    %210 = vector.load %arg15[%c144, %c0_135] : memref<200x2048xf32, #tpu.memory_space<vmem>>, vector<8x2048xf32>
    tpu.vector_store %arg15[%c144, %c0_135], %209 {strides = array<i32>} : memref<200x2048xf32, #tpu.memory_space<vmem>>, vector<8x2048xf32>,
    %c0_136 = arith.constant 0 : index
    %c200 = arith.constant 200 : index
    %211 = vector.load %arg14[%c0_136, %c200] : memref<8x2432xf32, #tpu.memory_space<vmem>>, vector<8x2048xf32>
    %c152 = arith.constant 152 : index
    %c0_137 = arith.constant 0 : index
    %212 = vector.load %arg15[%c152, %c0_137] : memref<200x2048xf32, #tpu.memory_space<vmem>>, vector<8x2048xf32>
    tpu.vector_store %arg15[%c152, %c0_137], %211 {strides = array<i32>} : memref<200x2048xf32, #tpu.memory_space<vmem>>, vector<8x2048xf32>,
    %c0_138 = arith.constant 0 : index
    %c256 = arith.constant 256 : index
    %213 = vector.load %arg14[%c0_138, %c256] : memref<8x2432xf32, #tpu.memory_space<vmem>>, vector<8x2048xf32>
    %c160 = arith.constant 160 : index
    %c0_139 = arith.constant 0 : index
    %214 = vector.load %arg15[%c160, %c0_139] : memref<200x2048xf32, #tpu.memory_space<vmem>>, vector<8x2048xf32>
    tpu.vector_store %arg15[%c160, %c0_139], %213 {strides = array<i32>} : memref<200x2048xf32, #tpu.memory_space<vmem>>, vector<8x2048xf32>,
    %c0_140 = arith.constant 0 : index
    %c258 = arith.constant 258 : index
    %215 = vector.load %arg14[%c0_140, %c258] : memref<8x2432xf32, #tpu.memory_space<vmem>>, vector<8x2048xf32>
    %c168 = arith.constant 168 : index
    %c0_141 = arith.constant 0 : index
    %216 = vector.load %arg15[%c168, %c0_141] : memref<200x2048xf32, #tpu.memory_space<vmem>>, vector<8x2048xf32>
    tpu.vector_store %arg15[%c168, %c0_141], %215 {strides = array<i32>} : memref<200x2048xf32, #tpu.memory_space<vmem>>, vector<8x2048xf32>,
    %c0_142 = arith.constant 0 : index
    %c260 = arith.constant 260 : index
    %217 = vector.load %arg14[%c0_142, %c260] : memref<8x2432xf32, #tpu.memory_space<vmem>>, vector<8x2048xf32>
    %c176 = arith.constant 176 : index
    %c0_143 = arith.constant 0 : index
    %218 = vector.load %arg15[%c176, %c0_143] : memref<200x2048xf32, #tpu.memory_space<vmem>>, vector<8x2048xf32>
    tpu.vector_store %arg15[%c176, %c0_143], %217 {strides = array<i32>} : memref<200x2048xf32, #tpu.memory_space<vmem>>, vector<8x2048xf32>,
    %c0_144 = arith.constant 0 : index
    %c262 = arith.constant 262 : index
    %219 = vector.load %arg14[%c0_144, %c262] : memref<8x2432xf32, #tpu.memory_space<vmem>>, vector<8x2048xf32>
    %c184 = arith.constant 184 : index
    %c0_145 = arith.constant 0 : index
    %220 = vector.load %arg15[%c184, %c0_145] : memref<200x2048xf32, #tpu.memory_space<vmem>>, vector<8x2048xf32>
    tpu.vector_store %arg15[%c184, %c0_145], %219 {strides = array<i32>} : memref<200x2048xf32, #tpu.memory_space<vmem>>, vector<8x2048xf32>,
    %c0_146 = arith.constant 0 : index
    %c264 = arith.constant 264 : index
    %221 = vector.load %arg14[%c0_146, %c264] : memref<8x2432xf32, #tpu.memory_space<vmem>>, vector<8x2048xf32>
    %c192_147 = arith.constant 192 : index
    %c0_148 = arith.constant 0 : index
    %222 = vector.load %arg15[%c192_147, %c0_148] : memref<200x2048xf32, #tpu.memory_space<vmem>>, vector<8x2048xf32>
    tpu.vector_store %arg15[%c192_147, %c0_148], %221 {strides = array<i32>} : memref<200x2048xf32, #tpu.memory_space<vmem>>, vector<8x2048xf32>,
    %c0_149 = arith.constant 0 : index
    %c0_150 = arith.constant 0 : index
    %223 = vector.load %arg3[%c0_149, %c0_150] : memref<16x200xf32, #tpu.memory_space<vmem>>, vector<16x200xf32>
    %c0_151 = arith.constant 0 : index
    %c0_152 = arith.constant 0 : index
    %224 = vector.load %arg15[%c0_151, %c0_152] : memref<200x2048xf32, #tpu.memory_space<vmem>>, vector<200x2048xf32>
    %cst_153 = arith.constant dense<0.000000e+00> : vector<16x2048xf32>
    %225 = tpu.matmul %223, %224, %cst_153 {dimension_numbers = #tpu.dot_dimension_numbers<[1], [0], [0], [1], [0, 0, 1, 1], [], []>} : vector<16x200xf32>, vector<200x2048xf32>, vector<16x2048xf32> -> vector<16x2048xf32>
    %c0_154 = arith.constant 0 : index
    %c0_155 = arith.constant 0 : index
    %226 = vector.load %arg4[%c0_154, %c0_155] : memref<16x1xf32, #tpu.memory_space<vmem>>, vector<16x1xf32>
    %227 = vector.broadcast %226 : vector<16x1xf32> to vector<16x2048xf32>
    %228 = arith.addf %225, %227 : vector<16x2048xf32>
    %cst_156 = arith.constant 0.000000e+00 : f32
    %229 = vector.broadcast %cst_156 : f32 to vector<16x2048xf32>
    %230 = arith.maximumf %228, %229 : vector<16x2048xf32>
    %c0_157 = arith.constant 0 : index
    %c0_158 = arith.constant 0 : index
    %231 = vector.load %arg16[%c0_157, %c0_158] : memref<16x2176xf32, #tpu.memory_space<vmem>>, vector<16x2048xf32>
    tpu.vector_store %arg16[%c0_157, %c0_158], %230 {strides = array<i32>} : memref<16x2176xf32, #tpu.memory_space<vmem>>, vector<16x2048xf32>,
    %c0_159 = arith.constant 0 : index
    %c0_160 = arith.constant 0 : index
    %232 = vector.load %arg16[%c0_159, %c0_160] : memref<16x2176xf32, #tpu.memory_space<vmem>>, vector<16x2048xf32>
    %c0_161 = arith.constant 0 : index
    %c2_162 = arith.constant 2 : index
    %233 = vector.load %arg16[%c0_161, %c2_162] : memref<16x2176xf32, #tpu.memory_space<vmem>>, vector<16x2048xf32>
    %234 = arith.maximumf %232, %233 : vector<16x2048xf32>
    %c0_163 = arith.constant 0 : index
    %c64_164 = arith.constant 64 : index
    %235 = vector.load %arg16[%c0_163, %c64_164] : memref<16x2176xf32, #tpu.memory_space<vmem>>, vector<16x2048xf32>
    %c0_165 = arith.constant 0 : index
    %c66_166 = arith.constant 66 : index
    %236 = vector.load %arg16[%c0_165, %c66_166] : memref<16x2176xf32, #tpu.memory_space<vmem>>, vector<16x2048xf32>
    %237 = arith.maximumf %235, %236 : vector<16x2048xf32>
    %238 = arith.maximumf %234, %237 : vector<16x2048xf32>
    %c0_167 = arith.constant 0 : index
    %c0_168 = arith.constant 0 : index
    %239 = vector.load %arg17[%c0_167, %c0_168] : memref<16x2048xf32, #tpu.memory_space<vmem>>, vector<16x2048xf32>
    tpu.vector_store %arg17[%c0_167, %c0_168], %238 {strides = array<i32>} : memref<16x2048xf32, #tpu.memory_space<vmem>>, vector<16x2048xf32>,
    %c0_i32_169 = arith.constant 0 : i32
    %240 = tpu.memref_slice %arg21[%c0_i32_169] : memref<2x!tpu.dma_semaphore, #tpu.memory_space<semaphore_mem>> -> memref<1x!tpu.dma_semaphore, #tpu.memory_space<semaphore_mem>>
    %241 = tpu.memref_squeeze %240 : memref<1x!tpu.dma_semaphore, #tpu.memory_space<semaphore_mem>> -> memref<!tpu.dma_semaphore, #tpu.memory_space<semaphore_mem>>
    tpu.wait_dma2 semaphore(%241 : memref<!tpu.dma_semaphore, #tpu.memory_space<semaphore_mem>>) src(%arg5 : memref<2048x50xf32, #tpu.memory_space<any>>) dst(%arg19 : memref<2048x50xf32, #tpu.memory_space<vmem>>)
    %c0_170 = arith.constant 0 : index
    %c0_171 = arith.constant 0 : index
    %242 = vector.load %arg17[%c0_170, %c0_171] : memref<16x2048xf32, #tpu.memory_space<vmem>>, vector<16x2048xf32>
    %c0_172 = arith.constant 0 : index
    %c0_173 = arith.constant 0 : index
    %243 = vector.load %arg19[%c0_172, %c0_173] : memref<2048x50xf32, #tpu.memory_space<vmem>>, vector<2048x50xf32>
    %cst_174 = arith.constant dense<0.000000e+00> : vector<16x50xf32>
    %244 = tpu.matmul %242, %243, %cst_174 {dimension_numbers = #tpu.dot_dimension_numbers<[1], [0], [0], [1], [0, 0, 1, 1], [], []>} : vector<16x2048xf32>, vector<2048x50xf32>, vector<16x50xf32> -> vector<16x50xf32>
    %245 = vector.extract_strided_slice %244 {offsets = [0, 0], sizes = [1, 25], strides = [1, 1]} : vector<16x50xf32> to vector<1x25xf32>
    %c0_175 = arith.constant 0 : index
    %c0_176 = arith.constant 0 : index
    %246 = vector.load %arg18[%c0_175, %c0_176] : memref<2x400xf32, #tpu.memory_space<vmem>>, vector<1x25xf32>
    tpu.vector_store %arg18[%c0_175, %c0_176], %245 {strides = array<i32>} : memref<2x400xf32, #tpu.memory_space<vmem>>, vector<1x25xf32>,
    %247 = vector.extract_strided_slice %244 {offsets = [1, 0], sizes = [1, 25], strides = [1, 1]} : vector<16x50xf32> to vector<1x25xf32>
    %c0_177 = arith.constant 0 : index
    %c25 = arith.constant 25 : index
    %248 = vector.load %arg18[%c0_177, %c25] : memref<2x400xf32, #tpu.memory_space<vmem>>, vector<1x25xf32>
    tpu.vector_store %arg18[%c0_177, %c25], %247 {strides = array<i32>} : memref<2x400xf32, #tpu.memory_space<vmem>>, vector<1x25xf32>,
    %249 = vector.extract_strided_slice %244 {offsets = [2, 0], sizes = [1, 25], strides = [1, 1]} : vector<16x50xf32> to vector<1x25xf32>
    %c0_178 = arith.constant 0 : index
    %c50 = arith.constant 50 : index
    %250 = vector.load %arg18[%c0_178, %c50] : memref<2x400xf32, #tpu.memory_space<vmem>>, vector<1x25xf32>
    tpu.vector_store %arg18[%c0_178, %c50], %249 {strides = array<i32>} : memref<2x400xf32, #tpu.memory_space<vmem>>, vector<1x25xf32>,
    %251 = vector.extract_strided_slice %244 {offsets = [3, 0], sizes = [1, 25], strides = [1, 1]} : vector<16x50xf32> to vector<1x25xf32>
    %c0_179 = arith.constant 0 : index
    %c75 = arith.constant 75 : index
    %252 = vector.load %arg18[%c0_179, %c75] : memref<2x400xf32, #tpu.memory_space<vmem>>, vector<1x25xf32>
    tpu.vector_store %arg18[%c0_179, %c75], %251 {strides = array<i32>} : memref<2x400xf32, #tpu.memory_space<vmem>>, vector<1x25xf32>,
    %253 = vector.extract_strided_slice %244 {offsets = [4, 0], sizes = [1, 25], strides = [1, 1]} : vector<16x50xf32> to vector<1x25xf32>
    %c0_180 = arith.constant 0 : index
    %c100_181 = arith.constant 100 : index
    %254 = vector.load %arg18[%c0_180, %c100_181] : memref<2x400xf32, #tpu.memory_space<vmem>>, vector<1x25xf32>
    tpu.vector_store %arg18[%c0_180, %c100_181], %253 {strides = array<i32>} : memref<2x400xf32, #tpu.memory_space<vmem>>, vector<1x25xf32>,
    %255 = vector.extract_strided_slice %244 {offsets = [5, 0], sizes = [1, 25], strides = [1, 1]} : vector<16x50xf32> to vector<1x25xf32>
    %c0_182 = arith.constant 0 : index
    %c125 = arith.constant 125 : index
    %256 = vector.load %arg18[%c0_182, %c125] : memref<2x400xf32, #tpu.memory_space<vmem>>, vector<1x25xf32>
    tpu.vector_store %arg18[%c0_182, %c125], %255 {strides = array<i32>} : memref<2x400xf32, #tpu.memory_space<vmem>>, vector<1x25xf32>,
    %257 = vector.extract_strided_slice %244 {offsets = [6, 0], sizes = [1, 25], strides = [1, 1]} : vector<16x50xf32> to vector<1x25xf32>
    %c0_183 = arith.constant 0 : index
    %c150 = arith.constant 150 : index
    %258 = vector.load %arg18[%c0_183, %c150] : memref<2x400xf32, #tpu.memory_space<vmem>>, vector<1x25xf32>
    tpu.vector_store %arg18[%c0_183, %c150], %257 {strides = array<i32>} : memref<2x400xf32, #tpu.memory_space<vmem>>, vector<1x25xf32>,
    %259 = vector.extract_strided_slice %244 {offsets = [7, 0], sizes = [1, 25], strides = [1, 1]} : vector<16x50xf32> to vector<1x25xf32>
    %c0_184 = arith.constant 0 : index
    %c175 = arith.constant 175 : index
    %260 = vector.load %arg18[%c0_184, %c175] : memref<2x400xf32, #tpu.memory_space<vmem>>, vector<1x25xf32>
    tpu.vector_store %arg18[%c0_184, %c175], %259 {strides = array<i32>} : memref<2x400xf32, #tpu.memory_space<vmem>>, vector<1x25xf32>,
    %261 = vector.extract_strided_slice %244 {offsets = [8, 0], sizes = [1, 25], strides = [1, 1]} : vector<16x50xf32> to vector<1x25xf32>
    %c0_185 = arith.constant 0 : index
    %c200_186 = arith.constant 200 : index
    %262 = vector.load %arg18[%c0_185, %c200_186] : memref<2x400xf32, #tpu.memory_space<vmem>>, vector<1x25xf32>
    tpu.vector_store %arg18[%c0_185, %c200_186], %261 {strides = array<i32>} : memref<2x400xf32, #tpu.memory_space<vmem>>, vector<1x25xf32>,
    %263 = vector.extract_strided_slice %244 {offsets = [9, 0], sizes = [1, 25], strides = [1, 1]} : vector<16x50xf32> to vector<1x25xf32>
    %c0_187 = arith.constant 0 : index
    %c225 = arith.constant 225 : index
    %264 = vector.load %arg18[%c0_187, %c225] : memref<2x400xf32, #tpu.memory_space<vmem>>, vector<1x25xf32>
    tpu.vector_store %arg18[%c0_187, %c225], %263 {strides = array<i32>} : memref<2x400xf32, #tpu.memory_space<vmem>>, vector<1x25xf32>,
    %265 = vector.extract_strided_slice %244 {offsets = [10, 0], sizes = [1, 25], strides = [1, 1]} : vector<16x50xf32> to vector<1x25xf32>
    %c0_188 = arith.constant 0 : index
    %c250 = arith.constant 250 : index
    %266 = vector.load %arg18[%c0_188, %c250] : memref<2x400xf32, #tpu.memory_space<vmem>>, vector<1x25xf32>
    tpu.vector_store %arg18[%c0_188, %c250], %265 {strides = array<i32>} : memref<2x400xf32, #tpu.memory_space<vmem>>, vector<1x25xf32>,
    %267 = vector.extract_strided_slice %244 {offsets = [11, 0], sizes = [1, 25], strides = [1, 1]} : vector<16x50xf32> to vector<1x25xf32>
    %c0_189 = arith.constant 0 : index
    %c275 = arith.constant 275 : index
    %268 = vector.load %arg18[%c0_189, %c275] : memref<2x400xf32, #tpu.memory_space<vmem>>, vector<1x25xf32>
    tpu.vector_store %arg18[%c0_189, %c275], %267 {strides = array<i32>} : memref<2x400xf32, #tpu.memory_space<vmem>>, vector<1x25xf32>,
    %269 = vector.extract_strided_slice %244 {offsets = [12, 0], sizes = [1, 25], strides = [1, 1]} : vector<16x50xf32> to vector<1x25xf32>
    %c0_190 = arith.constant 0 : index
    %c300 = arith.constant 300 : index
    %270 = vector.load %arg18[%c0_190, %c300] : memref<2x400xf32, #tpu.memory_space<vmem>>, vector<1x25xf32>
    tpu.vector_store %arg18[%c0_190, %c300], %269 {strides = array<i32>} : memref<2x400xf32, #tpu.memory_space<vmem>>, vector<1x25xf32>,
    %271 = vector.extract_strided_slice %244 {offsets = [13, 0], sizes = [1, 25], strides = [1, 1]} : vector<16x50xf32> to vector<1x25xf32>
    %c0_191 = arith.constant 0 : index
    %c325 = arith.constant 325 : index
    %272 = vector.load %arg18[%c0_191, %c325] : memref<2x400xf32, #tpu.memory_space<vmem>>, vector<1x25xf32>
    tpu.vector_store %arg18[%c0_191, %c325], %271 {strides = array<i32>} : memref<2x400xf32, #tpu.memory_space<vmem>>, vector<1x25xf32>,
    %273 = vector.extract_strided_slice %244 {offsets = [14, 0], sizes = [1, 25], strides = [1, 1]} : vector<16x50xf32> to vector<1x25xf32>
    %c0_192 = arith.constant 0 : index
    %c350 = arith.constant 350 : index
    %274 = vector.load %arg18[%c0_192, %c350] : memref<2x400xf32, #tpu.memory_space<vmem>>, vector<1x25xf32>
    tpu.vector_store %arg18[%c0_192, %c350], %273 {strides = array<i32>} : memref<2x400xf32, #tpu.memory_space<vmem>>, vector<1x25xf32>,
    %275 = vector.extract_strided_slice %244 {offsets = [15, 0], sizes = [1, 25], strides = [1, 1]} : vector<16x50xf32> to vector<1x25xf32>
    %c0_193 = arith.constant 0 : index
    %c375 = arith.constant 375 : index
    %276 = vector.load %arg18[%c0_193, %c375] : memref<2x400xf32, #tpu.memory_space<vmem>>, vector<1x25xf32>
    tpu.vector_store %arg18[%c0_193, %c375], %275 {strides = array<i32>} : memref<2x400xf32, #tpu.memory_space<vmem>>, vector<1x25xf32>,
    %277 = vector.extract_strided_slice %244 {offsets = [0, 25], sizes = [1, 25], strides = [1, 1]} : vector<16x50xf32> to vector<1x25xf32>
    %c1_194 = arith.constant 1 : index
    %c0_195 = arith.constant 0 : index
    %278 = vector.load %arg18[%c1_194, %c0_195] : memref<2x400xf32, #tpu.memory_space<vmem>>, vector<1x25xf32>
    tpu.vector_store %arg18[%c1_194, %c0_195], %277 {strides = array<i32>} : memref<2x400xf32, #tpu.memory_space<vmem>>, vector<1x25xf32>,
    %279 = vector.extract_strided_slice %244 {offsets = [1, 25], sizes = [1, 25], strides = [1, 1]} : vector<16x50xf32> to vector<1x25xf32>
    %c1_196 = arith.constant 1 : index
    %c25_197 = arith.constant 25 : index
    %280 = vector.load %arg18[%c1_196, %c25_197] : memref<2x400xf32, #tpu.memory_space<vmem>>, vector<1x25xf32>
    tpu.vector_store %arg18[%c1_196, %c25_197], %279 {strides = array<i32>} : memref<2x400xf32, #tpu.memory_space<vmem>>, vector<1x25xf32>,
    %281 = vector.extract_strided_slice %244 {offsets = [2, 25], sizes = [1, 25], strides = [1, 1]} : vector<16x50xf32> to vector<1x25xf32>
    %c1_198 = arith.constant 1 : index
    %c50_199 = arith.constant 50 : index
    %282 = vector.load %arg18[%c1_198, %c50_199] : memref<2x400xf32, #tpu.memory_space<vmem>>, vector<1x25xf32>
    tpu.vector_store %arg18[%c1_198, %c50_199], %281 {strides = array<i32>} : memref<2x400xf32, #tpu.memory_space<vmem>>, vector<1x25xf32>,
    %283 = vector.extract_strided_slice %244 {offsets = [3, 25], sizes = [1, 25], strides = [1, 1]} : vector<16x50xf32> to vector<1x25xf32>
    %c1_200 = arith.constant 1 : index
    %c75_201 = arith.constant 75 : index
    %284 = vector.load %arg18[%c1_200, %c75_201] : memref<2x400xf32, #tpu.memory_space<vmem>>, vector<1x25xf32>
    tpu.vector_store %arg18[%c1_200, %c75_201], %283 {strides = array<i32>} : memref<2x400xf32, #tpu.memory_space<vmem>>, vector<1x25xf32>,
    %285 = vector.extract_strided_slice %244 {offsets = [4, 25], sizes = [1, 25], strides = [1, 1]} : vector<16x50xf32> to vector<1x25xf32>
    %c1_202 = arith.constant 1 : index
    %c100_203 = arith.constant 100 : index
    %286 = vector.load %arg18[%c1_202, %c100_203] : memref<2x400xf32, #tpu.memory_space<vmem>>, vector<1x25xf32>
    tpu.vector_store %arg18[%c1_202, %c100_203], %285 {strides = array<i32>} : memref<2x400xf32, #tpu.memory_space<vmem>>, vector<1x25xf32>,
    %287 = vector.extract_strided_slice %244 {offsets = [5, 25], sizes = [1, 25], strides = [1, 1]} : vector<16x50xf32> to vector<1x25xf32>
    %c1_204 = arith.constant 1 : index
    %c125_205 = arith.constant 125 : index
    %288 = vector.load %arg18[%c1_204, %c125_205] : memref<2x400xf32, #tpu.memory_space<vmem>>, vector<1x25xf32>
    tpu.vector_store %arg18[%c1_204, %c125_205], %287 {strides = array<i32>} : memref<2x400xf32, #tpu.memory_space<vmem>>, vector<1x25xf32>,
    %289 = vector.extract_strided_slice %244 {offsets = [6, 25], sizes = [1, 25], strides = [1, 1]} : vector<16x50xf32> to vector<1x25xf32>
    %c1_206 = arith.constant 1 : index
    %c150_207 = arith.constant 150 : index
    %290 = vector.load %arg18[%c1_206, %c150_207] : memref<2x400xf32, #tpu.memory_space<vmem>>, vector<1x25xf32>
    tpu.vector_store %arg18[%c1_206, %c150_207], %289 {strides = array<i32>} : memref<2x400xf32, #tpu.memory_space<vmem>>, vector<1x25xf32>,
    %291 = vector.extract_strided_slice %244 {offsets = [7, 25], sizes = [1, 25], strides = [1, 1]} : vector<16x50xf32> to vector<1x25xf32>
    %c1_208 = arith.constant 1 : index
    %c175_209 = arith.constant 175 : index
    %292 = vector.load %arg18[%c1_208, %c175_209] : memref<2x400xf32, #tpu.memory_space<vmem>>, vector<1x25xf32>
    tpu.vector_store %arg18[%c1_208, %c175_209], %291 {strides = array<i32>} : memref<2x400xf32, #tpu.memory_space<vmem>>, vector<1x25xf32>,
    %293 = vector.extract_strided_slice %244 {offsets = [8, 25], sizes = [1, 25], strides = [1, 1]} : vector<16x50xf32> to vector<1x25xf32>
    %c1_210 = arith.constant 1 : index
    %c200_211 = arith.constant 200 : index
    %294 = vector.load %arg18[%c1_210, %c200_211] : memref<2x400xf32, #tpu.memory_space<vmem>>, vector<1x25xf32>
    tpu.vector_store %arg18[%c1_210, %c200_211], %293 {strides = array<i32>} : memref<2x400xf32, #tpu.memory_space<vmem>>, vector<1x25xf32>,
    %295 = vector.extract_strided_slice %244 {offsets = [9, 25], sizes = [1, 25], strides = [1, 1]} : vector<16x50xf32> to vector<1x25xf32>
    %c1_212 = arith.constant 1 : index
    %c225_213 = arith.constant 225 : index
    %296 = vector.load %arg18[%c1_212, %c225_213] : memref<2x400xf32, #tpu.memory_space<vmem>>, vector<1x25xf32>
    tpu.vector_store %arg18[%c1_212, %c225_213], %295 {strides = array<i32>} : memref<2x400xf32, #tpu.memory_space<vmem>>, vector<1x25xf32>,
    %297 = vector.extract_strided_slice %244 {offsets = [10, 25], sizes = [1, 25], strides = [1, 1]} : vector<16x50xf32> to vector<1x25xf32>
    %c1_214 = arith.constant 1 : index
    %c250_215 = arith.constant 250 : index
    %298 = vector.load %arg18[%c1_214, %c250_215] : memref<2x400xf32, #tpu.memory_space<vmem>>, vector<1x25xf32>
    tpu.vector_store %arg18[%c1_214, %c250_215], %297 {strides = array<i32>} : memref<2x400xf32, #tpu.memory_space<vmem>>, vector<1x25xf32>,
    %299 = vector.extract_strided_slice %244 {offsets = [11, 25], sizes = [1, 25], strides = [1, 1]} : vector<16x50xf32> to vector<1x25xf32>
    %c1_216 = arith.constant 1 : index
    %c275_217 = arith.constant 275 : index
    %300 = vector.load %arg18[%c1_216, %c275_217] : memref<2x400xf32, #tpu.memory_space<vmem>>, vector<1x25xf32>
    tpu.vector_store %arg18[%c1_216, %c275_217], %299 {strides = array<i32>} : memref<2x400xf32, #tpu.memory_space<vmem>>, vector<1x25xf32>,
    %301 = vector.extract_strided_slice %244 {offsets = [12, 25], sizes = [1, 25], strides = [1, 1]} : vector<16x50xf32> to vector<1x25xf32>
    %c1_218 = arith.constant 1 : index
    %c300_219 = arith.constant 300 : index
    %302 = vector.load %arg18[%c1_218, %c300_219] : memref<2x400xf32, #tpu.memory_space<vmem>>, vector<1x25xf32>
    tpu.vector_store %arg18[%c1_218, %c300_219], %301 {strides = array<i32>} : memref<2x400xf32, #tpu.memory_space<vmem>>, vector<1x25xf32>,
    %303 = vector.extract_strided_slice %244 {offsets = [13, 25], sizes = [1, 25], strides = [1, 1]} : vector<16x50xf32> to vector<1x25xf32>
    %c1_220 = arith.constant 1 : index
    %c325_221 = arith.constant 325 : index
    %304 = vector.load %arg18[%c1_220, %c325_221] : memref<2x400xf32, #tpu.memory_space<vmem>>, vector<1x25xf32>
    tpu.vector_store %arg18[%c1_220, %c325_221], %303 {strides = array<i32>} : memref<2x400xf32, #tpu.memory_space<vmem>>, vector<1x25xf32>,
    %305 = vector.extract_strided_slice %244 {offsets = [14, 25], sizes = [1, 25], strides = [1, 1]} : vector<16x50xf32> to vector<1x25xf32>
    %c1_222 = arith.constant 1 : index
    %c350_223 = arith.constant 350 : index
    %306 = vector.load %arg18[%c1_222, %c350_223] : memref<2x400xf32, #tpu.memory_space<vmem>>, vector<1x25xf32>
    tpu.vector_store %arg18[%c1_222, %c350_223], %305 {strides = array<i32>} : memref<2x400xf32, #tpu.memory_space<vmem>>, vector<1x25xf32>,
    %307 = vector.extract_strided_slice %244 {offsets = [15, 25], sizes = [1, 25], strides = [1, 1]} : vector<16x50xf32> to vector<1x25xf32>
    %c1_224 = arith.constant 1 : index
    %c375_225 = arith.constant 375 : index
    %308 = vector.load %arg18[%c1_224, %c375_225] : memref<2x400xf32, #tpu.memory_space<vmem>>, vector<1x25xf32>
    tpu.vector_store %arg18[%c1_224, %c375_225], %307 {strides = array<i32>} : memref<2x400xf32, #tpu.memory_space<vmem>>, vector<1x25xf32>,
    %c1_i32_226 = arith.constant 1 : i32
    %309 = tpu.memref_slice %arg21[%c1_i32_226] : memref<2x!tpu.dma_semaphore, #tpu.memory_space<semaphore_mem>> -> memref<1x!tpu.dma_semaphore, #tpu.memory_space<semaphore_mem>>
    %310 = tpu.memref_squeeze %309 : memref<1x!tpu.dma_semaphore, #tpu.memory_space<semaphore_mem>> -> memref<!tpu.dma_semaphore, #tpu.memory_space<semaphore_mem>>
    tpu.wait_dma2 semaphore(%310 : memref<!tpu.dma_semaphore, #tpu.memory_space<semaphore_mem>>) src(%arg6 : memref<400x120xf32, #tpu.memory_space<any>>) dst(%arg20 : memref<400x120xf32, #tpu.memory_space<vmem>>)
    %c0_227 = arith.constant 0 : index
    %c0_228 = arith.constant 0 : index
    %311 = vector.load %arg18[%c0_227, %c0_228] : memref<2x400xf32, #tpu.memory_space<vmem>>, vector<2x400xf32>
    %c0_229 = arith.constant 0 : index
    %c0_230 = arith.constant 0 : index
    %312 = vector.load %arg20[%c0_229, %c0_230] : memref<400x120xf32, #tpu.memory_space<vmem>>, vector<400x120xf32>
    %cst_231 = arith.constant dense<0.000000e+00> : vector<2x120xf32>
    %313 = tpu.matmul %311, %312, %cst_231 {dimension_numbers = #tpu.dot_dimension_numbers<[1], [0], [0], [1], [0, 0, 1, 1], [], []>} : vector<2x400xf32>, vector<400x120xf32>, vector<2x120xf32> -> vector<2x120xf32>
    %c0_232 = arith.constant 0 : index
    %c0_233 = arith.constant 0 : index
    %314 = vector.load %arg7[%c0_232, %c0_233] : memref<1x120xf32, #tpu.memory_space<vmem>>, vector<1x120xf32>
    %315 = vector.broadcast %314 : vector<1x120xf32> to vector<2x120xf32>
    %316 = arith.addf %313, %315 : vector<2x120xf32>
    %cst_234 = arith.constant 0.000000e+00 : f32
    %317 = vector.broadcast %cst_234 : f32 to vector<2x120xf32>
    %318 = arith.maximumf %316, %317 : vector<2x120xf32>
    %c0_235 = arith.constant 0 : index
    %c0_236 = arith.constant 0 : index
    %319 = vector.load %arg8[%c0_235, %c0_236] : memref<120x84xf32, #tpu.memory_space<vmem>>, vector<120x84xf32>
    %cst_237 = arith.constant dense<0.000000e+00> : vector<2x84xf32>
    %320 = tpu.matmul %318, %319, %cst_237 {dimension_numbers = #tpu.dot_dimension_numbers<[1], [0], [0], [1], [0, 0, 1, 1], [], []>} : vector<2x120xf32>, vector<120x84xf32>, vector<2x84xf32> -> vector<2x84xf32>
    %c0_238 = arith.constant 0 : index
    %c0_239 = arith.constant 0 : index
    %321 = vector.load %arg9[%c0_238, %c0_239] : memref<1x84xf32, #tpu.memory_space<vmem>>, vector<1x84xf32>
    %322 = vector.broadcast %321 : vector<1x84xf32> to vector<2x84xf32>
    %323 = arith.addf %320, %322 : vector<2x84xf32>
    %cst_240 = arith.constant 0.000000e+00 : f32
    %324 = vector.broadcast %cst_240 : f32 to vector<2x84xf32>
    %325 = arith.maximumf %323, %324 : vector<2x84xf32>
    %c0_241 = arith.constant 0 : index
    %c0_242 = arith.constant 0 : index
    %326 = vector.load %arg10[%c0_241, %c0_242] : memref<84x10xf32, #tpu.memory_space<vmem>>, vector<84x10xf32>
    %cst_243 = arith.constant dense<0.000000e+00> : vector<2x10xf32>
    %327 = tpu.matmul %325, %326, %cst_243 {dimension_numbers = #tpu.dot_dimension_numbers<[1], [0], [0], [1], [0, 0, 1, 1], [], []>} : vector<2x84xf32>, vector<84x10xf32>, vector<2x10xf32> -> vector<2x10xf32>
    %c0_244 = arith.constant 0 : index
    %c0_245 = arith.constant 0 : index
    %328 = vector.load %arg11[%c0_244, %c0_245] : memref<1x10xf32, #tpu.memory_space<vmem>>, vector<1x10xf32>
    %329 = vector.broadcast %328 : vector<1x10xf32> to vector<2x10xf32>
    %330 = arith.addf %327, %329 : vector<2x10xf32>
    %c0_246 = arith.constant 0 : index
    %c0_247 = arith.constant 0 : index
    %331 = vector.load %arg12[%c0_246, %c0_247] : memref<2x10xf32, #tpu.memory_space<vmem>>, vector<2x10xf32>
    tpu.vector_store %arg12[%c0_246, %c0_247], %330 {strides = array<i32>} : memref<2x10xf32, #tpu.memory_space<vmem>>, vector<2x10xf32>,
    return
  }
}

</mosaic_0001>

<llo_original>
// kernel: lenet_forward.1
$region0: #{lenet_forward.1}
  #allocation0 [shape = 'u32[]', space=smem, size = 0x4, offset = 0x4, fixed_abs, tag = 'smem constant byte address 0x4 - core index']
  #allocation1 [shape = 'u32[144,128]{1,0:T(1,128)}', space=vmem, size = 0x12000, scoped, tag = 'internal scratch']
  #allocation2 [shape = 'f32[8,2176]{1,0:T(8,128)}', space=vmem, size = 0x11000, scoped, tag = 'scratch operand']
  #allocation3 [shape = 'f32[8,2432]{1,0:T(8,128)}', space=vmem, size = 0x13000, scoped, tag = 'scratch operand']
  #allocation4 [shape = 'f32[200,2048]{1,0:T(8,128)}', space=vmem, size = 0x190000, scoped, tag = 'scratch operand']
  #allocation5 [shape = 'f32[16,2176]{1,0:T(8,128)}', space=vmem, size = 0x22000, scoped, tag = 'scratch operand']
  #allocation6 [shape = 'f32[16,2048]{1,0:T(8,128)}', space=vmem, size = 0x20000, scoped, tag = 'scratch operand']
  #allocation7 [shape = 'f32[2,400]{1,0:T(2,128)}', space=vmem, size = 0x1000, scoped, tag = 'scratch operand']
  #allocation8 [shape = 'f32[2048,50]{1,0:T(8,128)}', space=vmem, size = 0x100000, scoped, tag = 'scratch operand']
  #allocation9 [shape = 'f32[400,120]{1,0:T(8,128)}', space=vmem, size = 0x32000, scoped, tag = 'scratch operand']
  #allocation10 [shape = 's32[2]{0}', space=sflag, size = 0x8, scoped, tag = 'scratch operand']
  #allocation13 [shape = 's32[]', space=sflag, size = 0x4, offset = 0, fixed_abs, tag = 'sflag constant byte address 0x0 - dummy sync flag']
  #allocation14 [shape = 's32[]', space=sflag, size = 0x4, offset = 0, fixed_abs, tag = 'sflag constant byte address 0x0 - dummy sync flag']
  #allocation15 [shape = 'u32[]', space=smem, size = 0x4, offset = 0x44, fixed_abs, tag = 'smem constant byte address 0x44 - assertion arg 0']
  #allocation16 [shape = 'u32[]', space=smem, size = 0x4, offset = 0x48, fixed_abs, tag = 'smem constant byte address 0x48 - assertion arg 1']
  #allocation17 [shape = 's32[]', space=sflag, size = 0x4, offset = 0, fixed_abs, tag = 'sflag constant byte address 0x0 - dummy sync flag']
  %s0 = inlined_call_operand.vmem [shape: f32[1,2304], index: 0, kind: input, shape index: {}]
  %s1 = inlined_call_operand.vmem [shape: f32[8,25], index: 1, kind: input, shape index: {}]
  %s2 = inlined_call_operand.vmem [shape: f32[8,1], index: 2, kind: input, shape index: {}]
  %s3 = inlined_call_operand.vmem [shape: f32[16,200], index: 3, kind: input, shape index: {}]
  %s4 = inlined_call_operand.vmem [shape: f32[16,1], index: 4, kind: input, shape index: {}]
  %s5 = inlined_call_operand.hbm [shape: f32[2048,50], index: 5, kind: input, shape index: {}]
  %s6 = inlined_call_operand.vmem [shape: f32[400,120], index: 6, kind: input, shape index: {}]
  %s7 = inlined_call_operand.vmem [shape: f32[1,120], index: 7, kind: input, shape index: {}]
  %s8 = inlined_call_operand.vmem [shape: f32[120,84], index: 8, kind: input, shape index: {}]
  %s9 = inlined_call_operand.vmem [shape: f32[1,84], index: 9, kind: input, shape index: {}]
  %s10 = inlined_call_operand.vmem [shape: f32[84,10], index: 10, kind: input, shape index: {}]
  %s11 = inlined_call_operand.vmem [shape: f32[1,10], index: 11, kind: input, shape index: {}]
  %s12 = inlined_call_operand.hbm [shape: f32[2,10], index: 12, kind: output, shape index: {}]
  %s13 = sld [smem:[#allocation0]]
  $region88: #{lenet_forward.1} parent=0
    _
  %s15 = ssub.s32 1, %s13
  %s16 = scalar_select 0, %s15, %s13
  $region1: #{lenet_forward.1} parent=0
    #allocation11 [shape = 'u8[1024]{0}', space=vmem, size = 0x400, scoped, tag = 'output window, operand 0, single buffered']
    #allocation12 [shape = 's32[1]{0}', space=sflag, size = 0x4, scoped, tag = 'scoped memory for lenet_forward.1']
    %17 = vsyncpa [#allocation12], 0
    // Predicated region
    $region2: #{lenet_forward.1} parent=1 // pred_check
      _
    $region3: #{lenet_forward.1} parent=1 // pred_check_branch
      %19 = sbr.rel (0) target = $region5
    $region4: #{lenet_forward.1} parent=1 // pred_region
      _
    $region5: #{lenet_forward.1} parent=1 // pred_fallthru
      _
    // Predicated region
    $region6: #{lenet_forward.1} parent=1 // pred_check
      _
    $region7: #{lenet_forward.1} parent=1 // pred_check_branch
      %21 = sbr.rel (0) target = $region9
    $region8: #{lenet_forward.1} parent=1 // pred_region
      _
    $region9: #{lenet_forward.1} parent=1 // pred_fallthru
      _
    // Predicated region
    $region10: #{lenet_forward.1} parent=1 // pred_check
      _
    $region11: #{lenet_forward.1} parent=1 // pred_check_branch
      %23 = sbr.rel (0) target = $region13
    $region12: #{lenet_forward.1} parent=1 // pred_region
      _
    $region13: #{lenet_forward.1} parent=1 // pred_fallthru
      _
    // Predicated region
    $region14: #{lenet_forward.1} parent=1 // pred_check
      _
    $region15: #{lenet_forward.1} parent=1 // pred_check_branch
      %25 = sbr.rel (0) target = $region17
    $region16: #{lenet_forward.1} parent=1 // pred_region
      _
    $region17: #{lenet_forward.1} parent=1 // pred_fallthru
      _
    // Predicated region
    $region18: #{lenet_forward.1} parent=1 // pred_check
      _
    $region19: #{lenet_forward.1} parent=1 // pred_check_branch
      %27 = sbr.rel (0) target = $region21
    $region20: #{lenet_forward.1} parent=1 // pred_region
      _
    $region21: #{lenet_forward.1} parent=1 // pred_fallthru
      _
    // Predicated region
    $region22: #{lenet_forward.1} parent=1 // pred_check
      _
    $region23: #{lenet_forward.1} parent=1 // pred_check_branch
      %29 = sbr.rel (0) target = $region25
    $region24: #{lenet_forward.1} parent=1 // pred_region
      _
    $region25: #{lenet_forward.1} parent=1 // pred_fallthru
      _
    // Predicated region
    $region26: #{lenet_forward.1} parent=1 // pred_check
      _
    $region27: #{lenet_forward.1} parent=1 // pred_check_branch
      %31 = sbr.rel (0) target = $region29
    $region28: #{lenet_forward.1} parent=1 // pred_region
      _
    $region29: #{lenet_forward.1} parent=1 // pred_fallthru
      _
    // Predicated region
    $region30: #{lenet_forward.1} parent=1 // pred_check
      _
    $region31: #{lenet_forward.1} parent=1 // pred_check_branch
      %33 = sbr.rel (0) target = $region33
    $region32: #{lenet_forward.1} parent=1 // pred_region
      _
    $region33: #{lenet_forward.1} parent=1 // pred_fallthru
      _
    // Predicated region
    $region34: #{lenet_forward.1} parent=1 // pred_check
      _
    $region35: #{lenet_forward.1} parent=1 // pred_check_branch
      %35 = sbr.rel (0) target = $region37
    $region36: #{lenet_forward.1} parent=1 // pred_region
      _
    $region37: #{lenet_forward.1} parent=1 // pred_fallthru
      _
    // Predicated region
    $region38: #{lenet_forward.1} parent=1 // pred_check
      _
    $region39: #{lenet_forward.1} parent=1 // pred_check_branch
      %37 = sbr.rel (0) target = $region41
    $region40: #{lenet_forward.1} parent=1 // pred_region
      _
    $region41: #{lenet_forward.1} parent=1 // pred_fallthru
      _
    // Predicated region
    $region42: #{lenet_forward.1} parent=1 // pred_check
      _
    $region43: #{lenet_forward.1} parent=1 // pred_check_branch
      %39 = sbr.rel target = $region45
    $region44: #{lenet_forward.1} parent=1 // pred_region
      %40 = sst [smem:[#allocation15]] [#allocation14]
      %41 = sst [smem:[#allocation16]] [#allocation13]
    $region45: #{lenet_forward.1} parent=1 // pred_fallthru
      _
    %43 = shalt.err (0)
    %s45 = sshll.u32 [#allocation8], 4
    %s46 = int_to_ptr.vmem [resolvable:$true] %s45
    %48 = dma.hbm_to_vmem [thread:$0]  %s5, 32768, %s46, [#allocation10]
    %s49 = scalar_lea.sflag [#allocation10], 1
    %p51 = scmp.lt.u32.totalorder 400, 8
    %p52 = pneg %p51
    // Predicated region
    $region46: #{lenet_forward.1} parent=1 // pred_check
      _
    $region47: #{lenet_forward.1} parent=1 // pred_check_branch
      %54 = sbr.rel (%p51) target = $region49
    $region48: #{lenet_forward.1} parent=1 // pred_region
      %s70 = sand.u32 400, 7
      %p71 = scmp.eq.s32.totalorder %s70, 0
      // Predicated region
      $region61: #{lenet_forward.1} parent=48 // pred_check
        %p72 = pneg %p71
      $region62: #{lenet_forward.1} parent=48 // pred_check_branch
        %74 = sbr.rel (%p72) target = $region64
      $region63: #{lenet_forward.1} parent=48 // pred_region
        loop: start=0, step=1, limit=1
        $region65: #{lenet_forward.1} parent=63 // loop_pre_header
          _
        $region66: #{lenet_forward.1} parent=63 // loop_header
          %s76 = sphi 0, %s80
          %p77 = scmp.ge.s32.totalorder %s76, 1
          %s81 = sphi %s6, %s6
          %s82 = sphi [#allocation9], [#allocation9]
        $region67: #{lenet_forward.1} parent=63 // loop_header_branch
          %79 = sbr.rel (%p77) target = $region71
        $region68: #{lenet_forward.1} parent=63 // loop_body
          %v83 = vld [vmem:[%s81] sm:$0xff]
          %84 = vst [vmem:[%s82] sm:$0xff] %v83
          %v85 = vld [vmem:[%s81 + $0x8] sm:$0xff]
          %86 = vst [vmem:[%s82 + $0x8] sm:$0xff] %v85
          %v87 = vld [vmem:[%s81 + $0x10] sm:$0xff]
          %88 = vst [vmem:[%s82 + $0x10] sm:$0xff] %v87
          %v89 = vld [vmem:[%s81 + $0x18] sm:$0xff]
          %90 = vst [vmem:[%s82 + $0x18] sm:$0xff] %v89
          %v91 = vld [vmem:[%s81 + $0x20] sm:$0xff]
          %92 = vst [vmem:[%s82 + $0x20] sm:$0xff] %v91
          %v93 = vld [vmem:[%s81 + $0x28] sm:$0xff]
          %94 = vst [vmem:[%s82 + $0x28] sm:$0xff] %v93
          %v95 = vld [vmem:[%s81 + $0x30] sm:$0xff]
          %96 = vst [vmem:[%s82 + $0x30] sm:$0xff] %v95
          %v97 = vld [vmem:[%s81 + $0x38] sm:$0xff]
          %98 = vst [vmem:[%s82 + $0x38] sm:$0xff] %v97
          %v99 = vld [vmem:[%s81 + $0x40] sm:$0xff]
          %100 = vst [vmem:[%s82 + $0x40] sm:$0xff] %v99
          %v101 = vld [vmem:[%s81 + $0x48] sm:$0xff]
          %102 = vst [vmem:[%s82 + $0x48] sm:$0xff] %v101
          %v103 = vld [vmem:[%s81 + $0x50] sm:$0xff]
          %104 = vst [vmem:[%s82 + $0x50] sm:$0xff] %v103
          %v105 = vld [vmem:[%s81 + $0x58] sm:$0xff]
          %106 = vst [vmem:[%s82 + $0x58] sm:$0xff] %v105
          %v107 = vld [vmem:[%s81 + $0x60] sm:$0xff]
          %108 = vst [vmem:[%s82 + $0x60] sm:$0xff] %v107
          %v109 = vld [vmem:[%s81 + $0x68] sm:$0xff]
          %110 = vst [vmem:[%s82 + $0x68] sm:$0xff] %v109
          %v111 = vld [vmem:[%s81 + $0x70] sm:$0xff]
          %112 = vst [vmem:[%s82 + $0x70] sm:$0xff] %v111
          %v113 = vld [vmem:[%s81 + $0x78] sm:$0xff]
          %114 = vst [vmem:[%s82 + $0x78] sm:$0xff] %v113
          %v115 = vld [vmem:[%s81 + $0x80] sm:$0xff]
          %116 = vst [vmem:[%s82 + $0x80] sm:$0xff] %v115
          %v117 = vld [vmem:[%s81 + $0x88] sm:$0xff]
          %118 = vst [vmem:[%s82 + $0x88] sm:$0xff] %v117
          %v119 = vld [vmem:[%s81 + $0x90] sm:$0xff]
          %120 = vst [vmem:[%s82 + $0x90] sm:$0xff] %v119
          %v121 = vld [vmem:[%s81 + $0x98] sm:$0xff]
          %122 = vst [vmem:[%s82 + $0x98] sm:$0xff] %v121
          %v123 = vld [vmem:[%s81 + $0xa0] sm:$0xff]
          %124 = vst [vmem:[%s82 + $0xa0] sm:$0xff] %v123
          %v125 = vld [vmem:[%s81 + $0xa8] sm:$0xff]
          %126 = vst [vmem:[%s82 + $0xa8] sm:$0xff] %v125
          %v127 = vld [vmem:[%s81 + $0xb0] sm:$0xff]
          %128 = vst [vmem:[%s82 + $0xb0] sm:$0xff] %v127
          %v129 = vld [vmem:[%s81 + $0xb8] sm:$0xff]
          %130 = vst [vmem:[%s82 + $0xb8] sm:$0xff] %v129
          %v131 = vld [vmem:[%s81 + $0xc0] sm:$0xff]
          %132 = vst [vmem:[%s82 + $0xc0] sm:$0xff] %v131
          %v133 = vld [vmem:[%s81 + $0xc8] sm:$0xff]
          %134 = vst [vmem:[%s82 + $0xc8] sm:$0xff] %v133
          %v135 = vld [vmem:[%s81 + $0xd0] sm:$0xff]
          %136 = vst [vmem:[%s82 + $0xd0] sm:$0xff] %v135
          %v137 = vld [vmem:[%s81 + $0xd8] sm:$0xff]
          %138 = vst [vmem:[%s82 + $0xd8] sm:$0xff] %v137
          %v139 = vld [vmem:[%s81 + $0xe0] sm:$0xff]
          %140 = vst [vmem:[%s82 + $0xe0] sm:$0xff] %v139
          %v141 = vld [vmem:[%s81 + $0xe8] sm:$0xff]
          %142 = vst [vmem:[%s82 + $0xe8] sm:$0xff] %v141
          %v143 = vld [vmem:[%s81 + $0xf0] sm:$0xff]
          %144 = vst [vmem:[%s82 + $0xf0] sm:$0xff] %v143
          %v145 = vld [vmem:[%s81 + $0xf8] sm:$0xff]
          %146 = vst [vmem:[%s82 + $0xf8] sm:$0xff] %v145
          %v147 = vld [vmem:[%s81 + $0x100] sm:$0xff]
          %148 = vst [vmem:[%s82 + $0x100] sm:$0xff] %v147
          %v149 = vld [vmem:[%s81 + $0x108] sm:$0xff]
          %150 = vst [vmem:[%s82 + $0x108] sm:$0xff] %v149
          %v151 = vld [vmem:[%s81 + $0x110] sm:$0xff]
          %152 = vst [vmem:[%s82 + $0x110] sm:$0xff] %v151
          %v153 = vld [vmem:[%s81 + $0x118] sm:$0xff]
          %154 = vst [vmem:[%s82 + $0x118] sm:$0xff] %v153
          %v155 = vld [vmem:[%s81 + $0x120] sm:$0xff]
          %156 = vst [vmem:[%s82 + $0x120] sm:$0xff] %v155
          %v157 = vld [vmem:[%s81 + $0x128] sm:$0xff]
          %158 = vst [vmem:[%s82 + $0x128] sm:$0xff] %v157
          %v159 = vld [vmem:[%s81 + $0x130] sm:$0xff]
          %160 = vst [vmem:[%s82 + $0x130] sm:$0xff] %v159
          %v161 = vld [vmem:[%s81 + $0x138] sm:$0xff]
          %162 = vst [vmem:[%s82 + $0x138] sm:$0xff] %v161
          %v163 = vld [vmem:[%s81 + $0x140] sm:$0xff]
          %164 = vst [vmem:[%s82 + $0x140] sm:$0xff] %v163
          %v165 = vld [vmem:[%s81 + $0x148] sm:$0xff]
          %166 = vst [vmem:[%s82 + $0x148] sm:$0xff] %v165
          %v167 = vld [vmem:[%s81 + $0x150] sm:$0xff]
          %168 = vst [vmem:[%s82 + $0x150] sm:$0xff] %v167
          %v169 = vld [vmem:[%s81 + $0x158] sm:$0xff]
          %170 = vst [vmem:[%s82 + $0x158] sm:$0xff] %v169
          %v171 = vld [vmem:[%s81 + $0x160] sm:$0xff]
          %172 = vst [vmem:[%s82 + $0x160] sm:$0xff] %v171
          %v173 = vld [vmem:[%s81 + $0x168] sm:$0xff]
          %174 = vst [vmem:[%s82 + $0x168] sm:$0xff] %v173
          %v175 = vld [vmem:[%s81 + $0x170] sm:$0xff]
          %176 = vst [vmem:[%s82 + $0x170] sm:$0xff] %v175
          %v177 = vld [vmem:[%s81 + $0x178] sm:$0xff]
          %178 = vst [vmem:[%s82 + $0x178] sm:$0xff] %v177
          %v179 = vld [vmem:[%s81 + $0x180] sm:$0xff]
          %180 = vst [vmem:[%s82 + $0x180] sm:$0xff] %v179
          %v181 = vld [vmem:[%s81 + $0x188] sm:$0xff]
          %182 = vst [vmem:[%s82 + $0x188] sm:$0xff] %v181
        $region69: #{lenet_forward.1} parent=63 // loop_footer
          %s80 = sadd.s32 1, %s76
        $region70: #{lenet_forward.1} parent=63 // loop_footer_branch
          %75 = sbr.rel target = $region66
        $region71: #{lenet_forward.1} parent=63 // loop_exit
          _
      $region64: #{lenet_forward.1} parent=48 // pred_fallthru
        _
      %p183 = pneg %p71
      // Predicated region
      $region72: #{lenet_forward.1} parent=48 // pred_check
        _
      $region73: #{lenet_forward.1} parent=48 // pred_check_branch
        %185 = sbr.rel (%p71) target = $region75
      $region74: #{lenet_forward.1} parent=48 // pred_region
        %s186 = sand.u32 400, 7
      $region75: #{lenet_forward.1} parent=48 // pred_fallthru
        _
    $region49: #{lenet_forward.1} parent=1 // pred_fallthru
      _
    // Predicated region
    $region50: #{lenet_forward.1} parent=1 // pred_check
      %p55 = pneg %p51
    $region51: #{lenet_forward.1} parent=1 // pred_check_branch
      %57 = sbr.rel (%p55) target = $region53
    $region52: #{lenet_forward.1} parent=1 // pred_region
      %s58 = sshll.u32 1, 400
      %s59 = ssub.s32 %s58, 1
      loop: start=0, step=1, limit=1
      $region54: #{lenet_forward.1} parent=52 // loop_pre_header
        _
      $region55: #{lenet_forward.1} parent=52 // loop_header
        %s61 = sphi 0, %s65
        %p62 = scmp.ge.s32.totalorder %s61, 1
        %s66 = sphi %s6, %s6
        %s67 = sphi [#allocation9], [#allocation9]
      $region56: #{lenet_forward.1} parent=52 // loop_header_branch
        %64 = sbr.rel (%p62) target = $region60
      $region57: #{lenet_forward.1} parent=52 // loop_body
        %v68 = vld [vmem:[%s66] sm:%s59]
        %69 = vst [vmem:[%s67] sm:%s59] %v68
      $region58: #{lenet_forward.1} parent=52 // loop_footer
        %s65 = sadd.s32 1, %s61
      $region59: #{lenet_forward.1} parent=52 // loop_footer_branch
        %60 = sbr.rel target = $region55
      $region60: #{lenet_forward.1} parent=52 // loop_exit
        _
    $region53: #{lenet_forward.1} parent=1 // pred_fallthru
      _
    // Predicated region
    $region76: #{lenet_forward.1} parent=1 // pred_check
      _
    $region77: #{lenet_forward.1} parent=1 // pred_check_branch
      %189 = sbr.rel (0) target = $region79
    $region78: #{lenet_forward.1} parent=1 // pred_region
      %190 = vsyncadd %s49, 6400
    $region79: #{lenet_forward.1} parent=1 // pred_fallthru
      _
    %191 = vst [vmem:[#allocation2 + $0x80] sm:$0xff] 0.0
    %192 = vst [vmem:[#allocation3 + $0x80] sm:$0xff] 0.0
    %193 = vst [vmem:[#allocation3 + $0x88] sm:$0xff] 0.0
    %194 = vst [vmem:[#allocation3 + $0x90] sm:$0xff] 0.0
    %195 = vst [vmem:[#allocation5 + $0x80] sm:$0xff] 0.0
    %196 = vst [vmem:[#allocation5 + $0x108] sm:$0xff] 0.0
    %v197 = vld [vmem:[%s1] sm:$0xff]
    %v198 = vld [vmem:[%s0] sm:$0xff]
    %v199 = vld [vmem:[%s0 + $0x8] sm:$0xff]
    %201 = vset.pattern.permute.xlu0 0
    %202 = vperm.xlu0 %201, %v197
    %v203 = vpop.permute.xlu0 %202
    %v207 = vlaneseq
    %v208 = vshrl.u32 %v207, 7
    %v209 = vsub.s32 0, %v208
    %v210 = vrot.slane %v198, %v209
    %v211 = vlaneseq
    %v212 = vshrl.u32 %v211, 7
    %v213 = vsub.s32 1, %v212
    %v214 = vrot.slane %v198, %v213
    %v215 = vlaneseq
    %v216 = vshrl.u32 %v215, 7
    %v217 = vsub.s32 2, %v216
    %v218 = vrot.slane %v198, %v217
    %v219 = vlaneseq
    %v220 = vshrl.u32 %v219, 7
    %v221 = vsub.s32 3, %v220
    %v222 = vrot.slane %v198, %v221
    %v223 = vlaneseq
    %v224 = vshrl.u32 %v223, 7
    %v225 = vsub.s32 4, %v224
    %v226 = vrot.slane %v198, %v225
    %v227 = vlaneseq
    %v228 = vshrl.u32 %v227, 7
    %v229 = vsub.s32 5, %v228
    %v230 = vrot.slane %v198, %v229
    %v231 = vlaneseq
    %v232 = vshrl.u32 %v231, 7
    %v233 = vsub.s32 6, %v232
    %v234 = vrot.slane %v198, %v233
    %v235 = vlaneseq
    %v236 = vshrl.u32 %v235, 7
    %v237 = vsub.s32 7, %v236
    %v238 = vrot.slane %v198, %v237
    %v239 = vlaneseq
    %v240 = vshrl.u32 %v239, 7
    %v241 = vsub.s32 0, %v240
    %v242 = vrot.slane %v199, %v241
    %v243 = vlaneseq
    %v244 = vshrl.u32 %v243, 7
    %v245 = vsub.s32 1, %v244
    %v246 = vrot.slane %v199, %v245
    %v247 = vlaneseq
    %v248 = vshrl.u32 %v247, 7
    %v249 = vsub.s32 2, %v248
    %v250 = vrot.slane %v199, %v249
    %v251 = vlaneseq
    %v252 = vshrl.u32 %v251, 7
    %v253 = vsub.s32 3, %v252
    %v254 = vrot.slane %v199, %v253
    %v255 = vlaneseq
    %v256 = vshrl.u32 %v255, 7
    %v257 = vsub.s32 4, %v256
    %v258 = vrot.slane %v199, %v257
    %v259 = vlaneseq
    %v260 = vshrl.u32 %v259, 7
    %v261 = vsub.s32 5, %v260
    %v262 = vrot.slane %v199, %v261
    %v263 = vlaneseq
    %v264 = vshrl.u32 %v263, 7
    %v265 = vsub.s32 6, %v264
    %v266 = vrot.slane %v199, %v265
    %v267 = vlaneseq
    %v268 = vshrl.u32 %v267, 7
    %v269 = vsub.s32 7, %v268
    %v270 = vrot.slane %v199, %v269
    %v287 = vmul.f32 %v203, %v210
    %v288 = vmul.f32 %v203, %v214
    %v289 = vmul.f32 %v203, %v218
    %v290 = vmul.f32 %v203, %v222
    %v291 = vmul.f32 %v203, %v226
    %v292 = vmul.f32 %v203, %v230
    %v293 = vmul.f32 %v203, %v234
    %v294 = vmul.f32 %v203, %v238
    %v295 = vmul.f32 %v203, %v242
    %v296 = vmul.f32 %v203, %v246
    %v297 = vmul.f32 %v203, %v250
    %v298 = vmul.f32 %v203, %v254
    %v299 = vmul.f32 %v203, %v258
    %v300 = vmul.f32 %v203, %v262
    %v301 = vmul.f32 %v203, %v266
    %v302 = vmul.f32 %v203, %v270
    %v303 = vld [vmem:[%s0] sm:$0xff]
    %v304 = vld [vmem:[%s0 + $0x8] sm:$0xff]
    %v305 = vld [vmem:[%s0 + $0x10] sm:$0x1]
    %306 = vset.pattern.permute.xlu0 1
    %307 = vperm.xlu0 %306, %v197
    %v308 = vpop.permute.xlu0 %307
    %v313 = vlaneseq
    %v314 = vshrl.u32 %v313, 7
    %v315 = vsub.s32 0, %v314
    %v316 = vrot.slane %v303, %v315
    %v317 = vlaneseq
    %v318 = vshrl.u32 %v317, 7
    %v319 = vsub.s32 1, %v318
    %v320 = vrot.slane %v303, %v319
    %v321 = vlaneseq
    %v322 = vshrl.u32 %v321, 7
    %v323 = vsub.s32 2, %v322
    %v324 = vrot.slane %v303, %v323
    %v325 = vlaneseq
    %v326 = vshrl.u32 %v325, 7
    %v327 = vsub.s32 3, %v326
    %v328 = vrot.slane %v303, %v327
    %v329 = vlaneseq
    %v330 = vshrl.u32 %v329, 7
    %v331 = vsub.s32 4, %v330
    %v332 = vrot.slane %v303, %v331
    %v333 = vlaneseq
    %v334 = vshrl.u32 %v333, 7
    %v335 = vsub.s32 5, %v334
    %v336 = vrot.slane %v303, %v335
    %v337 = vlaneseq
    %v338 = vshrl.u32 %v337, 7
    %v339 = vsub.s32 6, %v338
    %v340 = vrot.slane %v303, %v339
    %v341 = vlaneseq
    %v342 = vshrl.u32 %v341, 7
    %v343 = vsub.s32 7, %v342
    %v344 = vrot.slane %v303, %v343
    %v345 = vlaneseq
    %v346 = vshrl.u32 %v345, 7
    %v347 = vsub.s32 0, %v346
    %v348 = vrot.slane %v304, %v347
    %v349 = vlaneseq
    %v350 = vshrl.u32 %v349, 7
    %v351 = vsub.s32 1, %v350
    %v352 = vrot.slane %v304, %v351
    %v353 = vlaneseq
    %v354 = vshrl.u32 %v353, 7
    %v355 = vsub.s32 2, %v354
    %v356 = vrot.slane %v304, %v355
    %v357 = vlaneseq
    %v358 = vshrl.u32 %v357, 7
    %v359 = vsub.s32 3, %v358
    %v360 = vrot.slane %v304, %v359
    %v361 = vlaneseq
    %v362 = vshrl.u32 %v361, 7
    %v363 = vsub.s32 4, %v362
    %v364 = vrot.slane %v304, %v363
    %v365 = vlaneseq
    %v366 = vshrl.u32 %v365, 7
    %v367 = vsub.s32 5, %v366
    %v368 = vrot.slane %v304, %v367
    %v369 = vlaneseq
    %v370 = vshrl.u32 %v369, 7
    %v371 = vsub.s32 6, %v370
    %v372 = vrot.slane %v304, %v371
    %v373 = vlaneseq
    %v374 = vshrl.u32 %v373, 7
    %v375 = vsub.s32 7, %v374
    %v376 = vrot.slane %v304, %v375
    %v377 = vlaneseq
    %v378 = vshrl.u32 %v377, 7
    %v379 = vsub.s32 0, %v378
    %v380 = vrot.slane %v305, %v379
    %v398 = vmul.f32 %v308, %v316
    %v399 = vmul.f32 %v308, %v320
    %v400 = vmul.f32 %v308, %v324
    %v401 = vmul.f32 %v308, %v328
    %v402 = vmul.f32 %v308, %v332
    %v403 = vmul.f32 %v308, %v336
    %v404 = vmul.f32 %v308, %v340
    %v405 = vmul.f32 %v308, %v344
    %v406 = vmul.f32 %v308, %v348
    %v407 = vmul.f32 %v308, %v352
    %v408 = vmul.f32 %v308, %v356
    %v409 = vmul.f32 %v308, %v360
    %v410 = vmul.f32 %v308, %v364
    %v411 = vmul.f32 %v308, %v368
    %v412 = vmul.f32 %v308, %v372
    %v413 = vmul.f32 %v308, %v376
    %v414 = vmul.f32 %v308, %v380
    %432 = vrot.lane.b32.xlu0 %v398, 127
    %v433 = vpop.permute.xlu0 %432
    %434 = vrot.lane.b32.xlu0 %v399, 127
    %v435 = vpop.permute.xlu0 %434
    %436 = vrot.lane.b32.xlu0 %v400, 127
    %v437 = vpop.permute.xlu0 %436
    %438 = vrot.lane.b32.xlu0 %v401, 127
    %v439 = vpop.permute.xlu0 %438
    %440 = vrot.lane.b32.xlu0 %v402, 127
    %v441 = vpop.permute.xlu0 %440
    %442 = vrot.lane.b32.xlu0 %v403, 127
    %v443 = vpop.permute.xlu0 %442
    %444 = vrot.lane.b32.xlu0 %v404, 127
    %v445 = vpop.permute.xlu0 %444
    %446 = vrot.lane.b32.xlu0 %v405, 127
    %v447 = vpop.permute.xlu0 %446
    %448 = vrot.lane.b32.xlu0 %v406, 127
    %v449 = vpop.permute.xlu0 %448
    %450 = vrot.lane.b32.xlu0 %v407, 127
    %v451 = vpop.permute.xlu0 %450
    %452 = vrot.lane.b32.xlu0 %v408, 127
    %v453 = vpop.permute.xlu0 %452
    %454 = vrot.lane.b32.xlu0 %v409, 127
    %v455 = vpop.permute.xlu0 %454
    %456 = vrot.lane.b32.xlu0 %v410, 127
    %v457 = vpop.permute.xlu0 %456
    %458 = vrot.lane.b32.xlu0 %v411, 127
    %v459 = vpop.permute.xlu0 %458
    %460 = vrot.lane.b32.xlu0 %v412, 127
    %v461 = vpop.permute.xlu0 %460
    %462 = vrot.lane.b32.xlu0 %v413, 127
    %v463 = vpop.permute.xlu0 %462
    %464 = vrot.lane.b32.xlu0 %v414, 127
    %v465 = vpop.permute.xlu0 %464
    %vm466 = vcmask 1039360
    %v467 = vsel %vm466, %v433, %v435
    %v468 = vsel %vm466, %v435, %v437
    %v469 = vsel %vm466, %v437, %v439
    %v470 = vsel %vm466, %v439, %v441
    %v471 = vsel %vm466, %v441, %v443
    %v472 = vsel %vm466, %v443, %v445
    %v473 = vsel %vm466, %v445, %v447
    %v474 = vsel %vm466, %v447, %v449
    %v475 = vsel %vm466, %v449, %v451
    %v476 = vsel %vm466, %v451, %v453
    %v477 = vsel %vm466, %v453, %v455
    %v478 = vsel %vm466, %v455, %v457
    %v479 = vsel %vm466, %v457, %v459
    %v480 = vsel %vm466, %v459, %v461
    %v481 = vsel %vm466, %v461, %v463
    %v482 = vsel %vm466, %v463, %v465
    %v499 = vadd.f32 %v287, %v467
    %v500 = vadd.f32 %v288, %v468
    %v501 = vadd.f32 %v289, %v469
    %v502 = vadd.f32 %v290, %v470
    %v503 = vadd.f32 %v291, %v471
    %v504 = vadd.f32 %v292, %v472
    %v505 = vadd.f32 %v293, %v473
    %v506 = vadd.f32 %v294, %v474
    %v507 = vadd.f32 %v295, %v475
    %v508 = vadd.f32 %v296, %v476
    %v509 = vadd.f32 %v297, %v477
    %v510 = vadd.f32 %v298, %v478
    %v511 = vadd.f32 %v299, %v479
    %v512 = vadd.f32 %v300, %v480
    %v513 = vadd.f32 %v301, %v481
    %v514 = vadd.f32 %v302, %v482
    %515 = vset.pattern.permute.xlu0 2
    %516 = vperm.xlu0 %515, %v197
    %v517 = vpop.permute.xlu0 %516
    %v519 = vmul.f32 %v517, %v316
    %v520 = vmul.f32 %v517, %v320
    %v521 = vmul.f32 %v517, %v324
    %v522 = vmul.f32 %v517, %v328
    %v523 = vmul.f32 %v517, %v332
    %v524 = vmul.f32 %v517, %v336
    %v525 = vmul.f32 %v517, %v340
    %v526 = vmul.f32 %v517, %v344
    %v527 = vmul.f32 %v517, %v348
    %v528 = vmul.f32 %v517, %v352
    %v529 = vmul.f32 %v517, %v356
    %v530 = vmul.f32 %v517, %v360
    %v531 = vmul.f32 %v517, %v364
    %v532 = vmul.f32 %v517, %v368
    %v533 = vmul.f32 %v517, %v372
    %v534 = vmul.f32 %v517, %v376
    %v535 = vmul.f32 %v517, %v380
    %553 = vrot.lane.b32.xlu0 %v519, 126
    %v554 = vpop.permute.xlu0 %553
    %555 = vrot.lane.b32.xlu0 %v520, 126
    %v556 = vpop.permute.xlu0 %555
    %557 = vrot.lane.b32.xlu0 %v521, 126
    %v558 = vpop.permute.xlu0 %557
    %559 = vrot.lane.b32.xlu0 %v522, 126
    %v560 = vpop.permute.xlu0 %559
    %561 = vrot.lane.b32.xlu0 %v523, 126
    %v562 = vpop.permute.xlu0 %561
    %563 = vrot.lane.b32.xlu0 %v524, 126
    %v564 = vpop.permute.xlu0 %563
    %565 = vrot.lane.b32.xlu0 %v525, 126
    %v566 = vpop.permute.xlu0 %565
    %567 = vrot.lane.b32.xlu0 %v526, 126
    %v568 = vpop.permute.xlu0 %567
    %569 = vrot.lane.b32.xlu0 %v527, 126
    %v570 = vpop.permute.xlu0 %569
    %571 = vrot.lane.b32.xlu0 %v528, 126
    %v572 = vpop.permute.xlu0 %571
    %573 = vrot.lane.b32.xlu0 %v529, 126
    %v574 = vpop.permute.xlu0 %573
    %575 = vrot.lane.b32.xlu0 %v530, 126
    %v576 = vpop.permute.xlu0 %575
    %577 = vrot.lane.b32.xlu0 %v531, 126
    %v578 = vpop.permute.xlu0 %577
    %579 = vrot.lane.b32.xlu0 %v532, 126
    %v580 = vpop.permute.xlu0 %579
    %581 = vrot.lane.b32.xlu0 %v533, 126
    %v582 = vpop.permute.xlu0 %581
    %583 = vrot.lane.b32.xlu0 %v534, 126
    %v584 = vpop.permute.xlu0 %583
    %585 = vrot.lane.b32.xlu0 %v535, 126
    %v586 = vpop.permute.xlu0 %585
    %vm587 = vcmask 1031168
    %v588 = vsel %vm587, %v554, %v556
    %v589 = vsel %vm587, %v556, %v558
    %v590 = vsel %vm587, %v558, %v560
    %v591 = vsel %vm587, %v560, %v562
    %v592 = vsel %vm587, %v562, %v564
    %v593 = vsel %vm587, %v564, %v566
    %v594 = vsel %vm587, %v566, %v568
    %v595 = vsel %vm587, %v568, %v570
    %v596 = vsel %vm587, %v570, %v572
    %v597 = vsel %vm587, %v572, %v574
    %v598 = vsel %vm587, %v574, %v576
    %v599 = vsel %vm587, %v576, %v578
    %v600 = vsel %vm587, %v578, %v580
    %v601 = vsel %vm587, %v580, %v582
    %v602 = vsel %vm587, %v582, %v584
    %v603 = vsel %vm587, %v584, %v586
    %v620 = vadd.f32 %v499, %v588
    %v621 = vadd.f32 %v500, %v589
    %v622 = vadd.f32 %v501, %v590
    %v623 = vadd.f32 %v502, %v591
    %v624 = vadd.f32 %v503, %v592
    %v625 = vadd.f32 %v504, %v593
    %v626 = vadd.f32 %v505, %v594
    %v627 = vadd.f32 %v506, %v595
    %v628 = vadd.f32 %v507, %v596
    %v629 = vadd.f32 %v508, %v597
    %v630 = vadd.f32 %v509, %v598
    %v631 = vadd.f32 %v510, %v599
    %v632 = vadd.f32 %v511, %v600
    %v633 = vadd.f32 %v512, %v601
    %v634 = vadd.f32 %v513, %v602
    %v635 = vadd.f32 %v514, %v603
    %636 = vset.pattern.permute.xlu0 3
    %637 = vperm.xlu0 %636, %v197
    %v638 = vpop.permute.xlu0 %637
    %v640 = vmul.f32 %v638, %v316
    %v641 = vmul.f32 %v638, %v320
    %v642 = vmul.f32 %v638, %v324
    %v643 = vmul.f32 %v638, %v328
    %v644 = vmul.f32 %v638, %v332
    %v645 = vmul.f32 %v638, %v336
    %v646 = vmul.f32 %v638, %v340
    %v647 = vmul.f32 %v638, %v344
    %v648 = vmul.f32 %v638, %v348
    %v649 = vmul.f32 %v638, %v352
    %v650 = vmul.f32 %v638, %v356
    %v651 = vmul.f32 %v638, %v360
    %v652 = vmul.f32 %v638, %v364
    %v653 = vmul.f32 %v638, %v368
    %v654 = vmul.f32 %v638, %v372
    %v655 = vmul.f32 %v638, %v376
    %v656 = vmul.f32 %v638, %v380
    %674 = vrot.lane.b32.xlu0 %v640, 125
    %v675 = vpop.permute.xlu0 %674
    %676 = vrot.lane.b32.xlu0 %v641, 125
    %v677 = vpop.permute.xlu0 %676
    %678 = vrot.lane.b32.xlu0 %v642, 125
    %v679 = vpop.permute.xlu0 %678
    %680 = vrot.lane.b32.xlu0 %v643, 125
    %v681 = vpop.permute.xlu0 %680
    %682 = vrot.lane.b32.xlu0 %v644, 125
    %v683 = vpop.permute.xlu0 %682
    %684 = vrot.lane.b32.xlu0 %v645, 125
    %v685 = vpop.permute.xlu0 %684
    %686 = vrot.lane.b32.xlu0 %v646, 125
    %v687 = vpop.permute.xlu0 %686
    %688 = vrot.lane.b32.xlu0 %v647, 125
    %v689 = vpop.permute.xlu0 %688
    %690 = vrot.lane.b32.xlu0 %v648, 125
    %v691 = vpop.permute.xlu0 %690
    %692 = vrot.lane.b32.xlu0 %v649, 125
    %v693 = vpop.permute.xlu0 %692
    %694 = vrot.lane.b32.xlu0 %v650, 125
    %v695 = vpop.permute.xlu0 %694
    %696 = vrot.lane.b32.xlu0 %v651, 125
    %v697 = vpop.permute.xlu0 %696
    %698 = vrot.lane.b32.xlu0 %v652, 125
    %v699 = vpop.permute.xlu0 %698
    %700 = vrot.lane.b32.xlu0 %v653, 125
    %v701 = vpop.permute.xlu0 %700
    %702 = vrot.lane.b32.xlu0 %v654, 125
    %v703 = vpop.permute.xlu0 %702
    %704 = vrot.lane.b32.xlu0 %v655, 125
    %v705 = vpop.permute.xlu0 %704
    %706 = vrot.lane.b32.xlu0 %v656, 125
    %v707 = vpop.permute.xlu0 %706
    %vm708 = vcmask 1022976
    %v709 = vsel %vm708, %v675, %v677
    %v710 = vsel %vm708, %v677, %v679
    %v711 = vsel %vm708, %v679, %v681
    %v712 = vsel %vm708, %v681, %v683
    %v713 = vsel %vm708, %v683, %v685
    %v714 = vsel %vm708, %v685, %v687
    %v715 = vsel %vm708, %v687, %v689
    %v716 = vsel %vm708, %v689, %v691
    %v717 = vsel %vm708, %v691, %v693
    %v718 = vsel %vm708, %v693, %v695
    %v719 = vsel %vm708, %v695, %v697
    %v720 = vsel %vm708, %v697, %v699
    %v721 = vsel %vm708, %v699, %v701
    %v722 = vsel %vm708, %v701, %v703
    %v723 = vsel %vm708, %v703, %v705
    %v724 = vsel %vm708, %v705, %v707
    %v741 = vadd.f32 %v620, %v709
    %v742 = vadd.f32 %v621, %v710
    %v743 = vadd.f32 %v622, %v711
    %v744 = vadd.f32 %v623, %v712
    %v745 = vadd.f32 %v624, %v713
    %v746 = vadd.f32 %v625, %v714
    %v747 = vadd.f32 %v626, %v715
    %v748 = vadd.f32 %v627, %v716
    %v749 = vadd.f32 %v628, %v717
    %v750 = vadd.f32 %v629, %v718
    %v751 = vadd.f32 %v630, %v719
    %v752 = vadd.f32 %v631, %v720
    %v753 = vadd.f32 %v632, %v721
    %v754 = vadd.f32 %v633, %v722
    %v755 = vadd.f32 %v634, %v723
    %v756 = vadd.f32 %v635, %v724
    %757 = vset.pattern.permute.xlu0 4
    %758 = vperm.xlu0 %757, %v197
    %v759 = vpop.permute.xlu0 %758
    %v761 = vmul.f32 %v759, %v316
    %v762 = vmul.f32 %v759, %v320
    %v763 = vmul.f32 %v759, %v324
    %v764 = vmul.f32 %v759, %v328
    %v765 = vmul.f32 %v759, %v332
    %v766 = vmul.f32 %v759, %v336
    %v767 = vmul.f32 %v759, %v340
    %v768 = vmul.f32 %v759, %v344
    %v769 = vmul.f32 %v759, %v348
    %v770 = vmul.f32 %v759, %v352
    %v771 = vmul.f32 %v759, %v356
    %v772 = vmul.f32 %v759, %v360
    %v773 = vmul.f32 %v759, %v364
    %v774 = vmul.f32 %v759, %v368
    %v775 = vmul.f32 %v759, %v372
    %v776 = vmul.f32 %v759, %v376
    %v777 = vmul.f32 %v759, %v380
    %795 = vrot.lane.b32.xlu0 %v761, 124
    %v796 = vpop.permute.xlu0 %795
    %797 = vrot.lane.b32.xlu0 %v762, 124
    %v798 = vpop.permute.xlu0 %797
    %799 = vrot.lane.b32.xlu0 %v763, 124
    %v800 = vpop.permute.xlu0 %799
    %801 = vrot.lane.b32.xlu0 %v764, 124
    %v802 = vpop.permute.xlu0 %801
    %803 = vrot.lane.b32.xlu0 %v765, 124
    %v804 = vpop.permute.xlu0 %803
    %805 = vrot.lane.b32.xlu0 %v766, 124
    %v806 = vpop.permute.xlu0 %805
    %807 = vrot.lane.b32.xlu0 %v767, 124
    %v808 = vpop.permute.xlu0 %807
    %809 = vrot.lane.b32.xlu0 %v768, 124
    %v810 = vpop.permute.xlu0 %809
    %811 = vrot.lane.b32.xlu0 %v769, 124
    %v812 = vpop.permute.xlu0 %811
    %813 = vrot.lane.b32.xlu0 %v770, 124
    %v814 = vpop.permute.xlu0 %813
    %815 = vrot.lane.b32.xlu0 %v771, 124
    %v816 = vpop.permute.xlu0 %815
    %817 = vrot.lane.b32.xlu0 %v772, 124
    %v818 = vpop.permute.xlu0 %817
    %819 = vrot.lane.b32.xlu0 %v773, 124
    %v820 = vpop.permute.xlu0 %819
    %821 = vrot.lane.b32.xlu0 %v774, 124
    %v822 = vpop.permute.xlu0 %821
    %823 = vrot.lane.b32.xlu0 %v775, 124
    %v824 = vpop.permute.xlu0 %823
    %825 = vrot.lane.b32.xlu0 %v776, 124
    %v826 = vpop.permute.xlu0 %825
    %827 = vrot.lane.b32.xlu0 %v777, 124
    %v828 = vpop.permute.xlu0 %827
    %vm829 = vcmask 1014784
    %v830 = vsel %vm829, %v796, %v798
    %v831 = vsel %vm829, %v798, %v800
    %v832 = vsel %vm829, %v800, %v802
    %v833 = vsel %vm829, %v802, %v804
    %v834 = vsel %vm829, %v804, %v806
    %v835 = vsel %vm829, %v806, %v808
    %v836 = vsel %vm829, %v808, %v810
    %v837 = vsel %vm829, %v810, %v812
    %v838 = vsel %vm829, %v812, %v814
    %v839 = vsel %vm829, %v814, %v816
    %v840 = vsel %vm829, %v816, %v818
    %v841 = vsel %vm829, %v818, %v820
    %v842 = vsel %vm829, %v820, %v822
    %v843 = vsel %vm829, %v822, %v824
    %v844 = vsel %vm829, %v824, %v826
    %v845 = vsel %vm829, %v826, %v828
    %v862 = vadd.f32 %v741, %v830
    %v863 = vadd.f32 %v742, %v831
    %v864 = vadd.f32 %v743, %v832
    %v865 = vadd.f32 %v744, %v833
    %v866 = vadd.f32 %v745, %v834
    %v867 = vadd.f32 %v746, %v835
    %v868 = vadd.f32 %v747, %v836
    %v869 = vadd.f32 %v748, %v837
    %v870 = vadd.f32 %v749, %v838
    %v871 = vadd.f32 %v750, %v839
    %v872 = vadd.f32 %v751, %v840
    %v873 = vadd.f32 %v752, %v841
    %v874 = vadd.f32 %v753, %v842
    %v875 = vadd.f32 %v754, %v843
    %v876 = vadd.f32 %v755, %v844
    %v877 = vadd.f32 %v756, %v845
    %878 = vset.pattern.permute.xlu0 5
    %879 = vperm.xlu0 %878, %v197
    %v880 = vpop.permute.xlu0 %879
    %v882 = vmul.f32 %v880, %v316
    %v883 = vmul.f32 %v880, %v320
    %v884 = vmul.f32 %v880, %v324
    %v885 = vmul.f32 %v880, %v328
    %v886 = vmul.f32 %v880, %v332
    %v887 = vmul.f32 %v880, %v336
    %v888 = vmul.f32 %v880, %v340
    %v889 = vmul.f32 %v880, %v344
    %v890 = vmul.f32 %v880, %v348
    %v891 = vmul.f32 %v880, %v352
    %v892 = vmul.f32 %v880, %v356
    %v893 = vmul.f32 %v880, %v360
    %v894 = vmul.f32 %v880, %v364
    %v895 = vmul.f32 %v880, %v368
    %v896 = vmul.f32 %v880, %v372
    %v897 = vmul.f32 %v880, %v376
    %v898 = vmul.f32 %v880, %v380
    %916 = vrot.lane.b32.xlu0 %v882, 96
    %v917 = vpop.permute.xlu0 %916
    %918 = vrot.lane.b32.xlu0 %v883, 96
    %v919 = vpop.permute.xlu0 %918
    %920 = vrot.lane.b32.xlu0 %v884, 96
    %v921 = vpop.permute.xlu0 %920
    %922 = vrot.lane.b32.xlu0 %v885, 96
    %v923 = vpop.permute.xlu0 %922
    %924 = vrot.lane.b32.xlu0 %v886, 96
    %v925 = vpop.permute.xlu0 %924
    %926 = vrot.lane.b32.xlu0 %v887, 96
    %v927 = vpop.permute.xlu0 %926
    %928 = vrot.lane.b32.xlu0 %v888, 96
    %v929 = vpop.permute.xlu0 %928
    %930 = vrot.lane.b32.xlu0 %v889, 96
    %v931 = vpop.permute.xlu0 %930
    %932 = vrot.lane.b32.xlu0 %v890, 96
    %v933 = vpop.permute.xlu0 %932
    %934 = vrot.lane.b32.xlu0 %v891, 96
    %v935 = vpop.permute.xlu0 %934
    %936 = vrot.lane.b32.xlu0 %v892, 96
    %v937 = vpop.permute.xlu0 %936
    %938 = vrot.lane.b32.xlu0 %v893, 96
    %v939 = vpop.permute.xlu0 %938
    %940 = vrot.lane.b32.xlu0 %v894, 96
    %v941 = vpop.permute.xlu0 %940
    %942 = vrot.lane.b32.xlu0 %v895, 96
    %v943 = vpop.permute.xlu0 %942
    %944 = vrot.lane.b32.xlu0 %v896, 96
    %v945 = vpop.permute.xlu0 %944
    %946 = vrot.lane.b32.xlu0 %v897, 96
    %v947 = vpop.permute.xlu0 %946
    %948 = vrot.lane.b32.xlu0 %v898, 96
    %v949 = vpop.permute.xlu0 %948
    %vm950 = vcmask 785408
    %v951 = vsel %vm950, %v917, %v919
    %v952 = vsel %vm950, %v919, %v921
    %v953 = vsel %vm950, %v921, %v923
    %v954 = vsel %vm950, %v923, %v925
    %v955 = vsel %vm950, %v925, %v927
    %v956 = vsel %vm950, %v927, %v929
    %v957 = vsel %vm950, %v929, %v931
    %v958 = vsel %vm950, %v931, %v933
    %v959 = vsel %vm950, %v933, %v935
    %v960 = vsel %vm950, %v935, %v937
    %v961 = vsel %vm950, %v937, %v939
    %v962 = vsel %vm950, %v939, %v941
    %v963 = vsel %vm950, %v941, %v943
    %v964 = vsel %vm950, %v943, %v945
    %v965 = vsel %vm950, %v945, %v947
    %v966 = vsel %vm950, %v947, %v949
    %v983 = vadd.f32 %v862, %v951
    %v984 = vadd.f32 %v863, %v952
    %v985 = vadd.f32 %v864, %v953
    %v986 = vadd.f32 %v865, %v954
    %v987 = vadd.f32 %v866, %v955
    %v988 = vadd.f32 %v867, %v956
    %v989 = vadd.f32 %v868, %v957
    %v990 = vadd.f32 %v869, %v958
    %v991 = vadd.f32 %v870, %v959
    %v992 = vadd.f32 %v871, %v960
    %v993 = vadd.f32 %v872, %v961
    %v994 = vadd.f32 %v873, %v962
    %v995 = vadd.f32 %v874, %v963
    %v996 = vadd.f32 %v875, %v964
    %v997 = vadd.f32 %v876, %v965
    %v998 = vadd.f32 %v877, %v966
    %999 = vset.pattern.permute.xlu0 6
    %1000 = vperm.xlu0 %999, %v197
    %v1001 = vpop.permute.xlu0 %1000
    %v1003 = vmul.f32 %v1001, %v316
    %v1004 = vmul.f32 %v1001, %v320
    %v1005 = vmul.f32 %v1001, %v324
    %v1006 = vmul.f32 %v1001, %v328
    %v1007 = vmul.f32 %v1001, %v332
    %v1008 = vmul.f32 %v1001, %v336
    %v1009 = vmul.f32 %v1001, %v340
    %v1010 = vmul.f32 %v1001, %v344
    %v1011 = vmul.f32 %v1001, %v348
    %v1012 = vmul.f32 %v1001, %v352
    %v1013 = vmul.f32 %v1001, %v356
    %v1014 = vmul.f32 %v1001, %v360
    %v1015 = vmul.f32 %v1001, %v364
    %v1016 = vmul.f32 %v1001, %v368
    %v1017 = vmul.f32 %v1001, %v372
    %v1018 = vmul.f32 %v1001, %v376
    %v1019 = vmul.f32 %v1001, %v380
    %1037 = vrot.lane.b32.xlu0 %v1003, 95
    %v1038 = vpop.permute.xlu0 %1037
    %1039 = vrot.lane.b32.xlu0 %v1004, 95
    %v1040 = vpop.permute.xlu0 %1039
    %1041 = vrot.lane.b32.xlu0 %v1005, 95
    %v1042 = vpop.permute.xlu0 %1041
    %1043 = vrot.lane.b32.xlu0 %v1006, 95
    %v1044 = vpop.permute.xlu0 %1043
    %1045 = vrot.lane.b32.xlu0 %v1007, 95
    %v1046 = vpop.permute.xlu0 %1045
    %1047 = vrot.lane.b32.xlu0 %v1008, 95
    %v1048 = vpop.permute.xlu0 %1047
    %1049 = vrot.lane.b32.xlu0 %v1009, 95
    %v1050 = vpop.permute.xlu0 %1049
    %1051 = vrot.lane.b32.xlu0 %v1010, 95
    %v1052 = vpop.permute.xlu0 %1051
    %1053 = vrot.lane.b32.xlu0 %v1011, 95
    %v1054 = vpop.permute.xlu0 %1053
    %1055 = vrot.lane.b32.xlu0 %v1012, 95
    %v1056 = vpop.permute.xlu0 %1055
    %1057 = vrot.lane.b32.xlu0 %v1013, 95
    %v1058 = vpop.permute.xlu0 %1057
    %1059 = vrot.lane.b32.xlu0 %v1014, 95
    %v1060 = vpop.permute.xlu0 %1059
    %1061 = vrot.lane.b32.xlu0 %v1015, 95
    %v1062 = vpop.permute.xlu0 %1061
    %1063 = vrot.lane.b32.xlu0 %v1016, 95
    %v1064 = vpop.permute.xlu0 %1063
    %1065 = vrot.lane.b32.xlu0 %v1017, 95
    %v1066 = vpop.permute.xlu0 %1065
    %1067 = vrot.lane.b32.xlu0 %v1018, 95
    %v1068 = vpop.permute.xlu0 %1067
    %1069 = vrot.lane.b32.xlu0 %v1019, 95
    %v1070 = vpop.permute.xlu0 %1069
    %vm1071 = vcmask 777216
    %v1072 = vsel %vm1071, %v1038, %v1040
    %v1073 = vsel %vm1071, %v1040, %v1042
    %v1074 = vsel %vm1071, %v1042, %v1044
    %v1075 = vsel %vm1071, %v1044, %v1046
    %v1076 = vsel %vm1071, %v1046, %v1048
    %v1077 = vsel %vm1071, %v1048, %v1050
    %v1078 = vsel %vm1071, %v1050, %v1052
    %v1079 = vsel %vm1071, %v1052, %v1054
    %v1080 = vsel %vm1071, %v1054, %v1056
    %v1081 = vsel %vm1071, %v1056, %v1058
    %v1082 = vsel %vm1071, %v1058, %v1060
    %v1083 = vsel %vm1071, %v1060, %v1062
    %v1084 = vsel %vm1071, %v1062, %v1064
    %v1085 = vsel %vm1071, %v1064, %v1066
    %v1086 = vsel %vm1071, %v1066, %v1068
    %v1087 = vsel %vm1071, %v1068, %v1070
    %v1104 = vadd.f32 %v983, %v1072
    %v1105 = vadd.f32 %v984, %v1073
    %v1106 = vadd.f32 %v985, %v1074
    %v1107 = vadd.f32 %v986, %v1075
    %v1108 = vadd.f32 %v987, %v1076
    %v1109 = vadd.f32 %v988, %v1077
    %v1110 = vadd.f32 %v989, %v1078
    %v1111 = vadd.f32 %v990, %v1079
    %v1112 = vadd.f32 %v991, %v1080
    %v1113 = vadd.f32 %v992, %v1081
    %v1114 = vadd.f32 %v993, %v1082
    %v1115 = vadd.f32 %v994, %v1083
    %v1116 = vadd.f32 %v995, %v1084
    %v1117 = vadd.f32 %v996, %v1085
    %v1118 = vadd.f32 %v997, %v1086
    %v1119 = vadd.f32 %v998, %v1087
    %1120 = vset.pattern.permute.xlu0 7
    %1121 = vperm.xlu0 %1120, %v197
    %v1122 = vpop.permute.xlu0 %1121
    %v1124 = vmul.f32 %v1122, %v316
    %v1125 = vmul.f32 %v1122, %v320
    %v1126 = vmul.f32 %v1122, %v324
    %v1127 = vmul.f32 %v1122, %v328
    %v1128 = vmul.f32 %v1122, %v332
    %v1129 = vmul.f32 %v1122, %v336
    %v1130 = vmul.f32 %v1122, %v340
    %v1131 = vmul.f32 %v1122, %v344
    %v1132 = vmul.f32 %v1122, %v348
    %v1133 = vmul.f32 %v1122, %v352
    %v1134 = vmul.f32 %v1122, %v356
    %v1135 = vmul.f32 %v1122, %v360
    %v1136 = vmul.f32 %v1122, %v364
    %v1137 = vmul.f32 %v1122, %v368
    %v1138 = vmul.f32 %v1122, %v372
    %v1139 = vmul.f32 %v1122, %v376
    %v1140 = vmul.f32 %v1122, %v380
    %1158 = vrot.lane.b32.xlu0 %v1124, 94
    %v1159 = vpop.permute.xlu0 %1158
    %1160 = vrot.lane.b32.xlu0 %v1125, 94
    %v1161 = vpop.permute.xlu0 %1160
    %1162 = vrot.lane.b32.xlu0 %v1126, 94
    %v1163 = vpop.permute.xlu0 %1162
    %1164 = vrot.lane.b32.xlu0 %v1127, 94
    %v1165 = vpop.permute.xlu0 %1164
    %1166 = vrot.lane.b32.xlu0 %v1128, 94
    %v1167 = vpop.permute.xlu0 %1166
    %1168 = vrot.lane.b32.xlu0 %v1129, 94
    %v1169 = vpop.permute.xlu0 %1168
    %1170 = vrot.lane.b32.xlu0 %v1130, 94
    %v1171 = vpop.permute.xlu0 %1170
    %1172 = vrot.lane.b32.xlu0 %v1131, 94
    %v1173 = vpop.permute.xlu0 %1172
    %1174 = vrot.lane.b32.xlu0 %v1132, 94
    %v1175 = vpop.permute.xlu0 %1174
    %1176 = vrot.lane.b32.xlu0 %v1133, 94
    %v1177 = vpop.permute.xlu0 %1176
    %1178 = vrot.lane.b32.xlu0 %v1134, 94
    %v1179 = vpop.permute.xlu0 %1178
    %1180 = vrot.lane.b32.xlu0 %v1135, 94
    %v1181 = vpop.permute.xlu0 %1180
    %1182 = vrot.lane.b32.xlu0 %v1136, 94
    %v1183 = vpop.permute.xlu0 %1182
    %1184 = vrot.lane.b32.xlu0 %v1137, 94
    %v1185 = vpop.permute.xlu0 %1184
    %1186 = vrot.lane.b32.xlu0 %v1138, 94
    %v1187 = vpop.permute.xlu0 %1186
    %1188 = vrot.lane.b32.xlu0 %v1139, 94
    %v1189 = vpop.permute.xlu0 %1188
    %1190 = vrot.lane.b32.xlu0 %v1140, 94
    %v1191 = vpop.permute.xlu0 %1190
    %vm1192 = vcmask 769024
    %v1193 = vsel %vm1192, %v1159, %v1161
    %v1194 = vsel %vm1192, %v1161, %v1163
    %v1195 = vsel %vm1192, %v1163, %v1165
    %v1196 = vsel %vm1192, %v1165, %v1167
    %v1197 = vsel %vm1192, %v1167, %v1169
    %v1198 = vsel %vm1192, %v1169, %v1171
    %v1199 = vsel %vm1192, %v1171, %v1173
    %v1200 = vsel %vm1192, %v1173, %v1175
    %v1201 = vsel %vm1192, %v1175, %v1177
    %v1202 = vsel %vm1192, %v1177, %v1179
    %v1203 = vsel %vm1192, %v1179, %v1181
    %v1204 = vsel %vm1192, %v1181, %v1183
    %v1205 = vsel %vm1192, %v1183, %v1185
    %v1206 = vsel %vm1192, %v1185, %v1187
    %v1207 = vsel %vm1192, %v1187, %v1189
    %v1208 = vsel %vm1192, %v1189, %v1191
    %v1225 = vadd.f32 %v1104, %v1193
    %v1226 = vadd.f32 %v1105, %v1194
    %v1227 = vadd.f32 %v1106, %v1195
    %v1228 = vadd.f32 %v1107, %v1196
    %v1229 = vadd.f32 %v1108, %v1197
    %v1230 = vadd.f32 %v1109, %v1198
    %v1231 = vadd.f32 %v1110, %v1199
    %v1232 = vadd.f32 %v1111, %v1200
    %v1233 = vadd.f32 %v1112, %v1201
    %v1234 = vadd.f32 %v1113, %v1202
    %v1235 = vadd.f32 %v1114, %v1203
    %v1236 = vadd.f32 %v1115, %v1204
    %v1237 = vadd.f32 %v1116, %v1205
    %v1238 = vadd.f32 %v1117, %v1206
    %v1239 = vadd.f32 %v1118, %v1207
    %v1240 = vadd.f32 %v1119, %v1208
    %1241 = vset.pattern.permute.xlu0 8
    %1242 = vperm.xlu0 %1241, %v197
    %v1243 = vpop.permute.xlu0 %1242
    %v1245 = vmul.f32 %v1243, %v316
    %v1246 = vmul.f32 %v1243, %v320
    %v1247 = vmul.f32 %v1243, %v324
    %v1248 = vmul.f32 %v1243, %v328
    %v1249 = vmul.f32 %v1243, %v332
    %v1250 = vmul.f32 %v1243, %v336
    %v1251 = vmul.f32 %v1243, %v340
    %v1252 = vmul.f32 %v1243, %v344
    %v1253 = vmul.f32 %v1243, %v348
    %v1254 = vmul.f32 %v1243, %v352
    %v1255 = vmul.f32 %v1243, %v356
    %v1256 = vmul.f32 %v1243, %v360
    %v1257 = vmul.f32 %v1243, %v364
    %v1258 = vmul.f32 %v1243, %v368
    %v1259 = vmul.f32 %v1243, %v372
    %v1260 = vmul.f32 %v1243, %v376
    %v1261 = vmul.f32 %v1243, %v380
    %1279 = vrot.lane.b32.xlu0 %v1245, 93
    %v1280 = vpop.permute.xlu0 %1279
    %1281 = vrot.lane.b32.xlu0 %v1246, 93
    %v1282 = vpop.permute.xlu0 %1281
    %1283 = vrot.lane.b32.xlu0 %v1247, 93
    %v1284 = vpop.permute.xlu0 %1283
    %1285 = vrot.lane.b32.xlu0 %v1248, 93
    %v1286 = vpop.permute.xlu0 %1285
    %1287 = vrot.lane.b32.xlu0 %v1249, 93
    %v1288 = vpop.permute.xlu0 %1287
    %1289 = vrot.lane.b32.xlu0 %v1250, 93
    %v1290 = vpop.permute.xlu0 %1289
    %1291 = vrot.lane.b32.xlu0 %v1251, 93
    %v1292 = vpop.permute.xlu0 %1291
    %1293 = vrot.lane.b32.xlu0 %v1252, 93
    %v1294 = vpop.permute.xlu0 %1293
    %1295 = vrot.lane.b32.xlu0 %v1253, 93
    %v1296 = vpop.permute.xlu0 %1295
    %1297 = vrot.lane.b32.xlu0 %v1254, 93
    %v1298 = vpop.permute.xlu0 %1297
    %1299 = vrot.lane.b32.xlu0 %v1255, 93
    %v1300 = vpop.permute.xlu0 %1299
    %1301 = vrot.lane.b32.xlu0 %v1256, 93
    %v1302 = vpop.permute.xlu0 %1301
    %1303 = vrot.lane.b32.xlu0 %v1257, 93
    %v1304 = vpop.permute.xlu0 %1303
    %1305 = vrot.lane.b32.xlu0 %v1258, 93
    %v1306 = vpop.permute.xlu0 %1305
    %1307 = vrot.lane.b32.xlu0 %v1259, 93
    %v1308 = vpop.permute.xlu0 %1307
    %1309 = vrot.lane.b32.xlu0 %v1260, 93
    %v1310 = vpop.permute.xlu0 %1309
    %1311 = vrot.lane.b32.xlu0 %v1261, 93
    %v1312 = vpop.permute.xlu0 %1311
    %vm1313 = vcmask 760832
    %v1314 = vsel %vm1313, %v1280, %v1282
    %v1315 = vsel %vm1313, %v1282, %v1284
    %v1316 = vsel %vm1313, %v1284, %v1286
    %v1317 = vsel %vm1313, %v1286, %v1288
    %v1318 = vsel %vm1313, %v1288, %v1290
    %v1319 = vsel %vm1313, %v1290, %v1292
    %v1320 = vsel %vm1313, %v1292, %v1294
    %v1321 = vsel %vm1313, %v1294, %v1296
    %v1322 = vsel %vm1313, %v1296, %v1298
    %v1323 = vsel %vm1313, %v1298, %v1300
    %v1324 = vsel %vm1313, %v1300, %v1302
    %v1325 = vsel %vm1313, %v1302, %v1304
    %v1326 = vsel %vm1313, %v1304, %v1306
    %v1327 = vsel %vm1313, %v1306, %v1308
    %v1328 = vsel %vm1313, %v1308, %v1310
    %v1329 = vsel %vm1313, %v1310, %v1312
    %v1346 = vadd.f32 %v1225, %v1314
    %v1347 = vadd.f32 %v1226, %v1315
    %v1348 = vadd.f32 %v1227, %v1316
    %v1349 = vadd.f32 %v1228, %v1317
    %v1350 = vadd.f32 %v1229, %v1318
    %v1351 = vadd.f32 %v1230, %v1319
    %v1352 = vadd.f32 %v1231, %v1320
    %v1353 = vadd.f32 %v1232, %v1321
    %v1354 = vadd.f32 %v1233, %v1322
    %v1355 = vadd.f32 %v1234, %v1323
    %v1356 = vadd.f32 %v1235, %v1324
    %v1357 = vadd.f32 %v1236, %v1325
    %v1358 = vadd.f32 %v1237, %v1326
    %v1359 = vadd.f32 %v1238, %v1327
    %v1360 = vadd.f32 %v1239, %v1328
    %v1361 = vadd.f32 %v1240, %v1329
    %1362 = vset.pattern.permute.xlu0 9
    %1363 = vperm.xlu0 %1362, %v197
    %v1364 = vpop.permute.xlu0 %1363
    %v1366 = vmul.f32 %v1364, %v316
    %v1367 = vmul.f32 %v1364, %v320
    %v1368 = vmul.f32 %v1364, %v324
    %v1369 = vmul.f32 %v1364, %v328
    %v1370 = vmul.f32 %v1364, %v332
    %v1371 = vmul.f32 %v1364, %v336
    %v1372 = vmul.f32 %v1364, %v340
    %v1373 = vmul.f32 %v1364, %v344
    %v1374 = vmul.f32 %v1364, %v348
    %v1375 = vmul.f32 %v1364, %v352
    %v1376 = vmul.f32 %v1364, %v356
    %v1377 = vmul.f32 %v1364, %v360
    %v1378 = vmul.f32 %v1364, %v364
    %v1379 = vmul.f32 %v1364, %v368
    %v1380 = vmul.f32 %v1364, %v372
    %v1381 = vmul.f32 %v1364, %v376
    %v1382 = vmul.f32 %v1364, %v380
    %1400 = vrot.lane.b32.xlu0 %v1366, 92
    %v1401 = vpop.permute.xlu0 %1400
    %1402 = vrot.lane.b32.xlu0 %v1367, 92
    %v1403 = vpop.permute.xlu0 %1402
    %1404 = vrot.lane.b32.xlu0 %v1368, 92
    %v1405 = vpop.permute.xlu0 %1404
    %1406 = vrot.lane.b32.xlu0 %v1369, 92
    %v1407 = vpop.permute.xlu0 %1406
    %1408 = vrot.lane.b32.xlu0 %v1370, 92
    %v1409 = vpop.permute.xlu0 %1408
    %1410 = vrot.lane.b32.xlu0 %v1371, 92
    %v1411 = vpop.permute.xlu0 %1410
    %1412 = vrot.lane.b32.xlu0 %v1372, 92
    %v1413 = vpop.permute.xlu0 %1412
    %1414 = vrot.lane.b32.xlu0 %v1373, 92
    %v1415 = vpop.permute.xlu0 %1414
    %1416 = vrot.lane.b32.xlu0 %v1374, 92
    %v1417 = vpop.permute.xlu0 %1416
    %1418 = vrot.lane.b32.xlu0 %v1375, 92
    %v1419 = vpop.permute.xlu0 %1418
    %1420 = vrot.lane.b32.xlu0 %v1376, 92
    %v1421 = vpop.permute.xlu0 %1420
    %1422 = vrot.lane.b32.xlu0 %v1377, 92
    %v1423 = vpop.permute.xlu0 %1422
    %1424 = vrot.lane.b32.xlu0 %v1378, 92
    %v1425 = vpop.permute.xlu0 %1424
    %1426 = vrot.lane.b32.xlu0 %v1379, 92
    %v1427 = vpop.permute.xlu0 %1426
    %1428 = vrot.lane.b32.xlu0 %v1380, 92
    %v1429 = vpop.permute.xlu0 %1428
    %1430 = vrot.lane.b32.xlu0 %v1381, 92
    %v1431 = vpop.permute.xlu0 %1430
    %1432 = vrot.lane.b32.xlu0 %v1382, 92
    %v1433 = vpop.permute.xlu0 %1432
    %vm1434 = vcmask 752640
    %v1435 = vsel %vm1434, %v1401, %v1403
    %v1436 = vsel %vm1434, %v1403, %v1405
    %v1437 = vsel %vm1434, %v1405, %v1407
    %v1438 = vsel %vm1434, %v1407, %v1409
    %v1439 = vsel %vm1434, %v1409, %v1411
    %v1440 = vsel %vm1434, %v1411, %v1413
    %v1441 = vsel %vm1434, %v1413, %v1415
    %v1442 = vsel %vm1434, %v1415, %v1417
    %v1443 = vsel %vm1434, %v1417, %v1419
    %v1444 = vsel %vm1434, %v1419, %v1421
    %v1445 = vsel %vm1434, %v1421, %v1423
    %v1446 = vsel %vm1434, %v1423, %v1425
    %v1447 = vsel %vm1434, %v1425, %v1427
    %v1448 = vsel %vm1434, %v1427, %v1429
    %v1449 = vsel %vm1434, %v1429, %v1431
    %v1450 = vsel %vm1434, %v1431, %v1433
    %v1467 = vadd.f32 %v1346, %v1435
    %v1468 = vadd.f32 %v1347, %v1436
    %v1469 = vadd.f32 %v1348, %v1437
    %v1470 = vadd.f32 %v1349, %v1438
    %v1471 = vadd.f32 %v1350, %v1439
    %v1472 = vadd.f32 %v1351, %v1440
    %v1473 = vadd.f32 %v1352, %v1441
    %v1474 = vadd.f32 %v1353, %v1442
    %v1475 = vadd.f32 %v1354, %v1443
    %v1476 = vadd.f32 %v1355, %v1444
    %v1477 = vadd.f32 %v1356, %v1445
    %v1478 = vadd.f32 %v1357, %v1446
    %v1479 = vadd.f32 %v1358, %v1447
    %v1480 = vadd.f32 %v1359, %v1448
    %v1481 = vadd.f32 %v1360, %v1449
    %v1482 = vadd.f32 %v1361, %v1450
    %1483 = vset.pattern.permute.xlu0 10
    %1484 = vperm.xlu0 %1483, %v197
    %v1485 = vpop.permute.xlu0 %1484
    %v1487 = vmul.f32 %v1485, %v316
    %v1488 = vmul.f32 %v1485, %v320
    %v1489 = vmul.f32 %v1485, %v324
    %v1490 = vmul.f32 %v1485, %v328
    %v1491 = vmul.f32 %v1485, %v332
    %v1492 = vmul.f32 %v1485, %v336
    %v1493 = vmul.f32 %v1485, %v340
    %v1494 = vmul.f32 %v1485, %v344
    %v1495 = vmul.f32 %v1485, %v348
    %v1496 = vmul.f32 %v1485, %v352
    %v1497 = vmul.f32 %v1485, %v356
    %v1498 = vmul.f32 %v1485, %v360
    %v1499 = vmul.f32 %v1485, %v364
    %v1500 = vmul.f32 %v1485, %v368
    %v1501 = vmul.f32 %v1485, %v372
    %v1502 = vmul.f32 %v1485, %v376
    %v1503 = vmul.f32 %v1485, %v380
    %1521 = vrot.lane.b32.xlu0 %v1487, 64
    %v1522 = vpop.permute.xlu0 %1521
    %1523 = vrot.lane.b32.xlu0 %v1488, 64
    %v1524 = vpop.permute.xlu0 %1523
    %1525 = vrot.lane.b32.xlu0 %v1489, 64
    %v1526 = vpop.permute.xlu0 %1525
    %1527 = vrot.lane.b32.xlu0 %v1490, 64
    %v1528 = vpop.permute.xlu0 %1527
    %1529 = vrot.lane.b32.xlu0 %v1491, 64
    %v1530 = vpop.permute.xlu0 %1529
    %1531 = vrot.lane.b32.xlu0 %v1492, 64
    %v1532 = vpop.permute.xlu0 %1531
    %1533 = vrot.lane.b32.xlu0 %v1493, 64
    %v1534 = vpop.permute.xlu0 %1533
    %1535 = vrot.lane.b32.xlu0 %v1494, 64
    %v1536 = vpop.permute.xlu0 %1535
    %1537 = vrot.lane.b32.xlu0 %v1495, 64
    %v1538 = vpop.permute.xlu0 %1537
    %1539 = vrot.lane.b32.xlu0 %v1496, 64
    %v1540 = vpop.permute.xlu0 %1539
    %1541 = vrot.lane.b32.xlu0 %v1497, 64
    %v1542 = vpop.permute.xlu0 %1541
    %1543 = vrot.lane.b32.xlu0 %v1498, 64
    %v1544 = vpop.permute.xlu0 %1543
    %1545 = vrot.lane.b32.xlu0 %v1499, 64
    %v1546 = vpop.permute.xlu0 %1545
    %1547 = vrot.lane.b32.xlu0 %v1500, 64
    %v1548 = vpop.permute.xlu0 %1547
    %1549 = vrot.lane.b32.xlu0 %v1501, 64
    %v1550 = vpop.permute.xlu0 %1549
    %1551 = vrot.lane.b32.xlu0 %v1502, 64
    %v1552 = vpop.permute.xlu0 %1551
    %1553 = vrot.lane.b32.xlu0 %v1503, 64
    %v1554 = vpop.permute.xlu0 %1553
    %vm1555 = vcmask 523264
    %v1556 = vsel %vm1555, %v1522, %v1524
    %v1557 = vsel %vm1555, %v1524, %v1526
    %v1558 = vsel %vm1555, %v1526, %v1528
    %v1559 = vsel %vm1555, %v1528, %v1530
    %v1560 = vsel %vm1555, %v1530, %v1532
    %v1561 = vsel %vm1555, %v1532, %v1534
    %v1562 = vsel %vm1555, %v1534, %v1536
    %v1563 = vsel %vm1555, %v1536, %v1538
    %v1564 = vsel %vm1555, %v1538, %v1540
    %v1565 = vsel %vm1555, %v1540, %v1542
    %v1566 = vsel %vm1555, %v1542, %v1544
    %v1567 = vsel %vm1555, %v1544, %v1546
    %v1568 = vsel %vm1555, %v1546, %v1548
    %v1569 = vsel %vm1555, %v1548, %v1550
    %v1570 = vsel %vm1555, %v1550, %v1552
    %v1571 = vsel %vm1555, %v1552, %v1554
    %v1588 = vadd.f32 %v1467, %v1556
    %v1589 = vadd.f32 %v1468, %v1557
    %v1590 = vadd.f32 %v1469, %v1558
    %v1591 = vadd.f32 %v1470, %v1559
    %v1592 = vadd.f32 %v1471, %v1560
    %v1593 = vadd.f32 %v1472, %v1561
    %v1594 = vadd.f32 %v1473, %v1562
    %v1595 = vadd.f32 %v1474, %v1563
    %v1596 = vadd.f32 %v1475, %v1564
    %v1597 = vadd.f32 %v1476, %v1565
    %v1598 = vadd.f32 %v1477, %v1566
    %v1599 = vadd.f32 %v1478, %v1567
    %v1600 = vadd.f32 %v1479, %v1568
    %v1601 = vadd.f32 %v1480, %v1569
    %v1602 = vadd.f32 %v1481, %v1570
    %v1603 = vadd.f32 %v1482, %v1571
    %1604 = vset.pattern.permute.xlu0 11
    %1605 = vperm.xlu0 %1604, %v197
    %v1606 = vpop.permute.xlu0 %1605
    %v1608 = vmul.f32 %v1606, %v316
    %v1609 = vmul.f32 %v1606, %v320
    %v1610 = vmul.f32 %v1606, %v324
    %v1611 = vmul.f32 %v1606, %v328
    %v1612 = vmul.f32 %v1606, %v332
    %v1613 = vmul.f32 %v1606, %v336
    %v1614 = vmul.f32 %v1606, %v340
    %v1615 = vmul.f32 %v1606, %v344
    %v1616 = vmul.f32 %v1606, %v348
    %v1617 = vmul.f32 %v1606, %v352
    %v1618 = vmul.f32 %v1606, %v356
    %v1619 = vmul.f32 %v1606, %v360
    %v1620 = vmul.f32 %v1606, %v364
    %v1621 = vmul.f32 %v1606, %v368
    %v1622 = vmul.f32 %v1606, %v372
    %v1623 = vmul.f32 %v1606, %v376
    %v1624 = vmul.f32 %v1606, %v380
    %1642 = vrot.lane.b32.xlu0 %v1608, 63
    %v1643 = vpop.permute.xlu0 %1642
    %1644 = vrot.lane.b32.xlu0 %v1609, 63
    %v1645 = vpop.permute.xlu0 %1644
    %1646 = vrot.lane.b32.xlu0 %v1610, 63
    %v1647 = vpop.permute.xlu0 %1646
    %1648 = vrot.lane.b32.xlu0 %v1611, 63
    %v1649 = vpop.permute.xlu0 %1648
    %1650 = vrot.lane.b32.xlu0 %v1612, 63
    %v1651 = vpop.permute.xlu0 %1650
    %1652 = vrot.lane.b32.xlu0 %v1613, 63
    %v1653 = vpop.permute.xlu0 %1652
    %1654 = vrot.lane.b32.xlu0 %v1614, 63
    %v1655 = vpop.permute.xlu0 %1654
    %1656 = vrot.lane.b32.xlu0 %v1615, 63
    %v1657 = vpop.permute.xlu0 %1656
    %1658 = vrot.lane.b32.xlu0 %v1616, 63
    %v1659 = vpop.permute.xlu0 %1658
    %1660 = vrot.lane.b32.xlu0 %v1617, 63
    %v1661 = vpop.permute.xlu0 %1660
    %1662 = vrot.lane.b32.xlu0 %v1618, 63
    %v1663 = vpop.permute.xlu0 %1662
    %1664 = vrot.lane.b32.xlu0 %v1619, 63
    %v1665 = vpop.permute.xlu0 %1664
    %1666 = vrot.lane.b32.xlu0 %v1620, 63
    %v1667 = vpop.permute.xlu0 %1666
    %1668 = vrot.lane.b32.xlu0 %v1621, 63
    %v1669 = vpop.permute.xlu0 %1668
    %1670 = vrot.lane.b32.xlu0 %v1622, 63
    %v1671 = vpop.permute.xlu0 %1670
    %1672 = vrot.lane.b32.xlu0 %v1623, 63
    %v1673 = vpop.permute.xlu0 %1672
    %1674 = vrot.lane.b32.xlu0 %v1624, 63
    %v1675 = vpop.permute.xlu0 %1674
    %vm1676 = vcmask 515072
    %v1677 = vsel %vm1676, %v1643, %v1645
    %v1678 = vsel %vm1676, %v1645, %v1647
    %v1679 = vsel %vm1676, %v1647, %v1649
    %v1680 = vsel %vm1676, %v1649, %v1651
    %v1681 = vsel %vm1676, %v1651, %v1653
    %v1682 = vsel %vm1676, %v1653, %v1655
    %v1683 = vsel %vm1676, %v1655, %v1657
    %v1684 = vsel %vm1676, %v1657, %v1659
    %v1685 = vsel %vm1676, %v1659, %v1661
    %v1686 = vsel %vm1676, %v1661, %v1663
    %v1687 = vsel %vm1676, %v1663, %v1665
    %v1688 = vsel %vm1676, %v1665, %v1667
    %v1689 = vsel %vm1676, %v1667, %v1669
    %v1690 = vsel %vm1676, %v1669, %v1671
    %v1691 = vsel %vm1676, %v1671, %v1673
    %v1692 = vsel %vm1676, %v1673, %v1675
    %v1709 = vadd.f32 %v1588, %v1677
    %v1710 = vadd.f32 %v1589, %v1678
    %v1711 = vadd.f32 %v1590, %v1679
    %v1712 = vadd.f32 %v1591, %v1680
    %v1713 = vadd.f32 %v1592, %v1681
    %v1714 = vadd.f32 %v1593, %v1682
    %v1715 = vadd.f32 %v1594, %v1683
    %v1716 = vadd.f32 %v1595, %v1684
    %v1717 = vadd.f32 %v1596, %v1685
    %v1718 = vadd.f32 %v1597, %v1686
    %v1719 = vadd.f32 %v1598, %v1687
    %v1720 = vadd.f32 %v1599, %v1688
    %v1721 = vadd.f32 %v1600, %v1689
    %v1722 = vadd.f32 %v1601, %v1690
    %v1723 = vadd.f32 %v1602, %v1691
    %v1724 = vadd.f32 %v1603, %v1692
    %1725 = vset.pattern.permute.xlu0 12
    %1726 = vperm.xlu0 %1725, %v197
    %v1727 = vpop.permute.xlu0 %1726
    %v1729 = vmul.f32 %v1727, %v316
    %v1730 = vmul.f32 %v1727, %v320
    %v1731 = vmul.f32 %v1727, %v324
    %v1732 = vmul.f32 %v1727, %v328
    %v1733 = vmul.f32 %v1727, %v332
    %v1734 = vmul.f32 %v1727, %v336
    %v1735 = vmul.f32 %v1727, %v340
    %v1736 = vmul.f32 %v1727, %v344
    %v1737 = vmul.f32 %v1727, %v348
    %v1738 = vmul.f32 %v1727, %v352
    %v1739 = vmul.f32 %v1727, %v356
    %v1740 = vmul.f32 %v1727, %v360
    %v1741 = vmul.f32 %v1727, %v364
    %v1742 = vmul.f32 %v1727, %v368
    %v1743 = vmul.f32 %v1727, %v372
    %v1744 = vmul.f32 %v1727, %v376
    %v1745 = vmul.f32 %v1727, %v380
    %1763 = vrot.lane.b32.xlu0 %v1729, 62
    %v1764 = vpop.permute.xlu0 %1763
    %1765 = vrot.lane.b32.xlu0 %v1730, 62
    %v1766 = vpop.permute.xlu0 %1765
    %1767 = vrot.lane.b32.xlu0 %v1731, 62
    %v1768 = vpop.permute.xlu0 %1767
    %1769 = vrot.lane.b32.xlu0 %v1732, 62
    %v1770 = vpop.permute.xlu0 %1769
    %1771 = vrot.lane.b32.xlu0 %v1733, 62
    %v1772 = vpop.permute.xlu0 %1771
    %1773 = vrot.lane.b32.xlu0 %v1734, 62
    %v1774 = vpop.permute.xlu0 %1773
    %1775 = vrot.lane.b32.xlu0 %v1735, 62
    %v1776 = vpop.permute.xlu0 %1775
    %1777 = vrot.lane.b32.xlu0 %v1736, 62
    %v1778 = vpop.permute.xlu0 %1777
    %1779 = vrot.lane.b32.xlu0 %v1737, 62
    %v1780 = vpop.permute.xlu0 %1779
    %1781 = vrot.lane.b32.xlu0 %v1738, 62
    %v1782 = vpop.permute.xlu0 %1781
    %1783 = vrot.lane.b32.xlu0 %v1739, 62
    %v1784 = vpop.permute.xlu0 %1783
    %1785 = vrot.lane.b32.xlu0 %v1740, 62
    %v1786 = vpop.permute.xlu0 %1785
    %1787 = vrot.lane.b32.xlu0 %v1741, 62
    %v1788 = vpop.permute.xlu0 %1787
    %1789 = vrot.lane.b32.xlu0 %v1742, 62
    %v1790 = vpop.permute.xlu0 %1789
    %1791 = vrot.lane.b32.xlu0 %v1743, 62
    %v1792 = vpop.permute.xlu0 %1791
    %1793 = vrot.lane.b32.xlu0 %v1744, 62
    %v1794 = vpop.permute.xlu0 %1793
    %1795 = vrot.lane.b32.xlu0 %v1745, 62
    %v1796 = vpop.permute.xlu0 %1795
    %vm1797 = vcmask 506880
    %v1798 = vsel %vm1797, %v1764, %v1766
    %v1799 = vsel %vm1797, %v1766, %v1768
    %v1800 = vsel %vm1797, %v1768, %v1770
    %v1801 = vsel %vm1797, %v1770, %v1772
    %v1802 = vsel %vm1797, %v1772, %v1774
    %v1803 = vsel %vm1797, %v1774, %v1776
    %v1804 = vsel %vm1797, %v1776, %v1778
    %v1805 = vsel %vm1797, %v1778, %v1780
    %v1806 = vsel %vm1797, %v1780, %v1782
    %v1807 = vsel %vm1797, %v1782, %v1784
    %v1808 = vsel %vm1797, %v1784, %v1786
    %v1809 = vsel %vm1797, %v1786, %v1788
    %v1810 = vsel %vm1797, %v1788, %v1790
    %v1811 = vsel %vm1797, %v1790, %v1792
    %v1812 = vsel %vm1797, %v1792, %v1794
    %v1813 = vsel %vm1797, %v1794, %v1796
    %v1830 = vadd.f32 %v1709, %v1798
    %v1831 = vadd.f32 %v1710, %v1799
    %v1832 = vadd.f32 %v1711, %v1800
    %v1833 = vadd.f32 %v1712, %v1801
    %v1834 = vadd.f32 %v1713, %v1802
    %v1835 = vadd.f32 %v1714, %v1803
    %v1836 = vadd.f32 %v1715, %v1804
    %v1837 = vadd.f32 %v1716, %v1805
    %v1838 = vadd.f32 %v1717, %v1806
    %v1839 = vadd.f32 %v1718, %v1807
    %v1840 = vadd.f32 %v1719, %v1808
    %v1841 = vadd.f32 %v1720, %v1809
    %v1842 = vadd.f32 %v1721, %v1810
    %v1843 = vadd.f32 %v1722, %v1811
    %v1844 = vadd.f32 %v1723, %v1812
    %v1845 = vadd.f32 %v1724, %v1813
    %1846 = vset.pattern.permute.xlu0 13
    %1847 = vperm.xlu0 %1846, %v197
    %v1848 = vpop.permute.xlu0 %1847
    %v1850 = vmul.f32 %v1848, %v316
    %v1851 = vmul.f32 %v1848, %v320
    %v1852 = vmul.f32 %v1848, %v324
    %v1853 = vmul.f32 %v1848, %v328
    %v1854 = vmul.f32 %v1848, %v332
    %v1855 = vmul.f32 %v1848, %v336
    %v1856 = vmul.f32 %v1848, %v340
    %v1857 = vmul.f32 %v1848, %v344
    %v1858 = vmul.f32 %v1848, %v348
    %v1859 = vmul.f32 %v1848, %v352
    %v1860 = vmul.f32 %v1848, %v356
    %v1861 = vmul.f32 %v1848, %v360
    %v1862 = vmul.f32 %v1848, %v364
    %v1863 = vmul.f32 %v1848, %v368
    %v1864 = vmul.f32 %v1848, %v372
    %v1865 = vmul.f32 %v1848, %v376
    %v1866 = vmul.f32 %v1848, %v380
    %1884 = vrot.lane.b32.xlu0 %v1850, 61
    %v1885 = vpop.permute.xlu0 %1884
    %1886 = vrot.lane.b32.xlu0 %v1851, 61
    %v1887 = vpop.permute.xlu0 %1886
    %1888 = vrot.lane.b32.xlu0 %v1852, 61
    %v1889 = vpop.permute.xlu0 %1888
    %1890 = vrot.lane.b32.xlu0 %v1853, 61
    %v1891 = vpop.permute.xlu0 %1890
    %1892 = vrot.lane.b32.xlu0 %v1854, 61
    %v1893 = vpop.permute.xlu0 %1892
    %1894 = vrot.lane.b32.xlu0 %v1855, 61
    %v1895 = vpop.permute.xlu0 %1894
    %1896 = vrot.lane.b32.xlu0 %v1856, 61
    %v1897 = vpop.permute.xlu0 %1896
    %1898 = vrot.lane.b32.xlu0 %v1857, 61
    %v1899 = vpop.permute.xlu0 %1898
    %1900 = vrot.lane.b32.xlu0 %v1858, 61
    %v1901 = vpop.permute.xlu0 %1900
    %1902 = vrot.lane.b32.xlu0 %v1859, 61
    %v1903 = vpop.permute.xlu0 %1902
    %1904 = vrot.lane.b32.xlu0 %v1860, 61
    %v1905 = vpop.permute.xlu0 %1904
    %1906 = vrot.lane.b32.xlu0 %v1861, 61
    %v1907 = vpop.permute.xlu0 %1906
    %1908 = vrot.lane.b32.xlu0 %v1862, 61
    %v1909 = vpop.permute.xlu0 %1908
    %1910 = vrot.lane.b32.xlu0 %v1863, 61
    %v1911 = vpop.permute.xlu0 %1910
    %1912 = vrot.lane.b32.xlu0 %v1864, 61
    %v1913 = vpop.permute.xlu0 %1912
    %1914 = vrot.lane.b32.xlu0 %v1865, 61
    %v1915 = vpop.permute.xlu0 %1914
    %1916 = vrot.lane.b32.xlu0 %v1866, 61
    %v1917 = vpop.permute.xlu0 %1916
    %vm1918 = vcmask 498688
    %v1919 = vsel %vm1918, %v1885, %v1887
    %v1920 = vsel %vm1918, %v1887, %v1889
    %v1921 = vsel %vm1918, %v1889, %v1891
    %v1922 = vsel %vm1918, %v1891, %v1893
    %v1923 = vsel %vm1918, %v1893, %v1895
    %v1924 = vsel %vm1918, %v1895, %v1897
    %v1925 = vsel %vm1918, %v1897, %v1899
    %v1926 = vsel %vm1918, %v1899, %v1901
    %v1927 = vsel %vm1918, %v1901, %v1903
    %v1928 = vsel %vm1918, %v1903, %v1905
    %v1929 = vsel %vm1918, %v1905, %v1907
    %v1930 = vsel %vm1918, %v1907, %v1909
    %v1931 = vsel %vm1918, %v1909, %v1911
    %v1932 = vsel %vm1918, %v1911, %v1913
    %v1933 = vsel %vm1918, %v1913, %v1915
    %v1934 = vsel %vm1918, %v1915, %v1917
    %v1951 = vadd.f32 %v1830, %v1919
    %v1952 = vadd.f32 %v1831, %v1920
    %v1953 = vadd.f32 %v1832, %v1921
    %v1954 = vadd.f32 %v1833, %v1922
    %v1955 = vadd.f32 %v1834, %v1923
    %v1956 = vadd.f32 %v1835, %v1924
    %v1957 = vadd.f32 %v1836, %v1925
    %v1958 = vadd.f32 %v1837, %v1926
    %v1959 = vadd.f32 %v1838, %v1927
    %v1960 = vadd.f32 %v1839, %v1928
    %v1961 = vadd.f32 %v1840, %v1929
    %v1962 = vadd.f32 %v1841, %v1930
    %v1963 = vadd.f32 %v1842, %v1931
    %v1964 = vadd.f32 %v1843, %v1932
    %v1965 = vadd.f32 %v1844, %v1933
    %v1966 = vadd.f32 %v1845, %v1934
    %1967 = vset.pattern.permute.xlu0 14
    %1968 = vperm.xlu0 %1967, %v197
    %v1969 = vpop.permute.xlu0 %1968
    %v1971 = vmul.f32 %v1969, %v316
    %v1972 = vmul.f32 %v1969, %v320
    %v1973 = vmul.f32 %v1969, %v324
    %v1974 = vmul.f32 %v1969, %v328
    %v1975 = vmul.f32 %v1969, %v332
    %v1976 = vmul.f32 %v1969, %v336
    %v1977 = vmul.f32 %v1969, %v340
    %v1978 = vmul.f32 %v1969, %v344
    %v1979 = vmul.f32 %v1969, %v348
    %v1980 = vmul.f32 %v1969, %v352
    %v1981 = vmul.f32 %v1969, %v356
    %v1982 = vmul.f32 %v1969, %v360
    %v1983 = vmul.f32 %v1969, %v364
    %v1984 = vmul.f32 %v1969, %v368
    %v1985 = vmul.f32 %v1969, %v372
    %v1986 = vmul.f32 %v1969, %v376
    %v1987 = vmul.f32 %v1969, %v380
    %2005 = vrot.lane.b32.xlu0 %v1971, 60
    %v2006 = vpop.permute.xlu0 %2005
    %2007 = vrot.lane.b32.xlu0 %v1972, 60
    %v2008 = vpop.permute.xlu0 %2007
    %2009 = vrot.lane.b32.xlu0 %v1973, 60
    %v2010 = vpop.permute.xlu0 %2009
    %2011 = vrot.lane.b32.xlu0 %v1974, 60
    %v2012 = vpop.permute.xlu0 %2011
    %2013 = vrot.lane.b32.xlu0 %v1975, 60
    %v2014 = vpop.permute.xlu0 %2013
    %2015 = vrot.lane.b32.xlu0 %v1976, 60
    %v2016 = vpop.permute.xlu0 %2015
    %2017 = vrot.lane.b32.xlu0 %v1977, 60
    %v2018 = vpop.permute.xlu0 %2017
    %2019 = vrot.lane.b32.xlu0 %v1978, 60
    %v2020 = vpop.permute.xlu0 %2019
    %2021 = vrot.lane.b32.xlu0 %v1979, 60
    %v2022 = vpop.permute.xlu0 %2021
    %2023 = vrot.lane.b32.xlu0 %v1980, 60
    %v2024 = vpop.permute.xlu0 %2023
    %2025 = vrot.lane.b32.xlu0 %v1981, 60
    %v2026 = vpop.permute.xlu0 %2025
    %2027 = vrot.lane.b32.xlu0 %v1982, 60
    %v2028 = vpop.permute.xlu0 %2027
    %2029 = vrot.lane.b32.xlu0 %v1983, 60
    %v2030 = vpop.permute.xlu0 %2029
    %2031 = vrot.lane.b32.xlu0 %v1984, 60
    %v2032 = vpop.permute.xlu0 %2031
    %2033 = vrot.lane.b32.xlu0 %v1985, 60
    %v2034 = vpop.permute.xlu0 %2033
    %2035 = vrot.lane.b32.xlu0 %v1986, 60
    %v2036 = vpop.permute.xlu0 %2035
    %2037 = vrot.lane.b32.xlu0 %v1987, 60
    %v2038 = vpop.permute.xlu0 %2037
    %vm2039 = vcmask 490496
    %v2040 = vsel %vm2039, %v2006, %v2008
    %v2041 = vsel %vm2039, %v2008, %v2010
    %v2042 = vsel %vm2039, %v2010, %v2012
    %v2043 = vsel %vm2039, %v2012, %v2014
    %v2044 = vsel %vm2039, %v2014, %v2016
    %v2045 = vsel %vm2039, %v2016, %v2018
    %v2046 = vsel %vm2039, %v2018, %v2020
    %v2047 = vsel %vm2039, %v2020, %v2022
    %v2048 = vsel %vm2039, %v2022, %v2024
    %v2049 = vsel %vm2039, %v2024, %v2026
    %v2050 = vsel %vm2039, %v2026, %v2028
    %v2051 = vsel %vm2039, %v2028, %v2030
    %v2052 = vsel %vm2039, %v2030, %v2032
    %v2053 = vsel %vm2039, %v2032, %v2034
    %v2054 = vsel %vm2039, %v2034, %v2036
    %v2055 = vsel %vm2039, %v2036, %v2038
    %v2072 = vadd.f32 %v1951, %v2040
    %v2073 = vadd.f32 %v1952, %v2041
    %v2074 = vadd.f32 %v1953, %v2042
    %v2075 = vadd.f32 %v1954, %v2043
    %v2076 = vadd.f32 %v1955, %v2044
    %v2077 = vadd.f32 %v1956, %v2045
    %v2078 = vadd.f32 %v1957, %v2046
    %v2079 = vadd.f32 %v1958, %v2047
    %v2080 = vadd.f32 %v1959, %v2048
    %v2081 = vadd.f32 %v1960, %v2049
    %v2082 = vadd.f32 %v1961, %v2050
    %v2083 = vadd.f32 %v1962, %v2051
    %v2084 = vadd.f32 %v1963, %v2052
    %v2085 = vadd.f32 %v1964, %v2053
    %v2086 = vadd.f32 %v1965, %v2054
    %v2087 = vadd.f32 %v1966, %v2055
    %2088 = vset.pattern.permute.xlu0 15
    %2089 = vperm.xlu0 %2088, %v197
    %v2090 = vpop.permute.xlu0 %2089
    %v2092 = vmul.f32 %v2090, %v316
    %v2093 = vmul.f32 %v2090, %v320
    %v2094 = vmul.f32 %v2090, %v324
    %v2095 = vmul.f32 %v2090, %v328
    %v2096 = vmul.f32 %v2090, %v332
    %v2097 = vmul.f32 %v2090, %v336
    %v2098 = vmul.f32 %v2090, %v340
    %v2099 = vmul.f32 %v2090, %v344
    %v2100 = vmul.f32 %v2090, %v348
    %v2101 = vmul.f32 %v2090, %v352
    %v2102 = vmul.f32 %v2090, %v356
    %v2103 = vmul.f32 %v2090, %v360
    %v2104 = vmul.f32 %v2090, %v364
    %v2105 = vmul.f32 %v2090, %v368
    %v2106 = vmul.f32 %v2090, %v372
    %v2107 = vmul.f32 %v2090, %v376
    %v2108 = vmul.f32 %v2090, %v380
    %2126 = vrot.lane.b32.xlu0 %v2092, 32
    %v2127 = vpop.permute.xlu0 %2126
    %2128 = vrot.lane.b32.xlu0 %v2093, 32
    %v2129 = vpop.permute.xlu0 %2128
    %2130 = vrot.lane.b32.xlu0 %v2094, 32
    %v2131 = vpop.permute.xlu0 %2130
    %2132 = vrot.lane.b32.xlu0 %v2095, 32
    %v2133 = vpop.permute.xlu0 %2132
    %2134 = vrot.lane.b32.xlu0 %v2096, 32
    %v2135 = vpop.permute.xlu0 %2134
    %2136 = vrot.lane.b32.xlu0 %v2097, 32
    %v2137 = vpop.permute.xlu0 %2136
    %2138 = vrot.lane.b32.xlu0 %v2098, 32
    %v2139 = vpop.permute.xlu0 %2138
    %2140 = vrot.lane.b32.xlu0 %v2099, 32
    %v2141 = vpop.permute.xlu0 %2140
    %2142 = vrot.lane.b32.xlu0 %v2100, 32
    %v2143 = vpop.permute.xlu0 %2142
    %2144 = vrot.lane.b32.xlu0 %v2101, 32
    %v2145 = vpop.permute.xlu0 %2144
    %2146 = vrot.lane.b32.xlu0 %v2102, 32
    %v2147 = vpop.permute.xlu0 %2146
    %2148 = vrot.lane.b32.xlu0 %v2103, 32
    %v2149 = vpop.permute.xlu0 %2148
    %2150 = vrot.lane.b32.xlu0 %v2104, 32
    %v2151 = vpop.permute.xlu0 %2150
    %2152 = vrot.lane.b32.xlu0 %v2105, 32
    %v2153 = vpop.permute.xlu0 %2152
    %2154 = vrot.lane.b32.xlu0 %v2106, 32
    %v2155 = vpop.permute.xlu0 %2154
    %2156 = vrot.lane.b32.xlu0 %v2107, 32
    %v2157 = vpop.permute.xlu0 %2156
    %2158 = vrot.lane.b32.xlu0 %v2108, 32
    %v2159 = vpop.permute.xlu0 %2158
    %vm2160 = vcmask 261120
    %v2161 = vsel %vm2160, %v2127, %v2129
    %v2162 = vsel %vm2160, %v2129, %v2131
    %v2163 = vsel %vm2160, %v2131, %v2133
    %v2164 = vsel %vm2160, %v2133, %v2135
    %v2165 = vsel %vm2160, %v2135, %v2137
    %v2166 = vsel %vm2160, %v2137, %v2139
    %v2167 = vsel %vm2160, %v2139, %v2141
    %v2168 = vsel %vm2160, %v2141, %v2143
    %v2169 = vsel %vm2160, %v2143, %v2145
    %v2170 = vsel %vm2160, %v2145, %v2147
    %v2171 = vsel %vm2160, %v2147, %v2149
    %v2172 = vsel %vm2160, %v2149, %v2151
    %v2173 = vsel %vm2160, %v2151, %v2153
    %v2174 = vsel %vm2160, %v2153, %v2155
    %v2175 = vsel %vm2160, %v2155, %v2157
    %v2176 = vsel %vm2160, %v2157, %v2159
    %v2193 = vadd.f32 %v2072, %v2161
    %v2194 = vadd.f32 %v2073, %v2162
    %v2195 = vadd.f32 %v2074, %v2163
    %v2196 = vadd.f32 %v2075, %v2164
    %v2197 = vadd.f32 %v2076, %v2165
    %v2198 = vadd.f32 %v2077, %v2166
    %v2199 = vadd.f32 %v2078, %v2167
    %v2200 = vadd.f32 %v2079, %v2168
    %v2201 = vadd.f32 %v2080, %v2169
    %v2202 = vadd.f32 %v2081, %v2170
    %v2203 = vadd.f32 %v2082, %v2171
    %v2204 = vadd.f32 %v2083, %v2172
    %v2205 = vadd.f32 %v2084, %v2173
    %v2206 = vadd.f32 %v2085, %v2174
    %v2207 = vadd.f32 %v2086, %v2175
    %v2208 = vadd.f32 %v2087, %v2176
    %2209 = vset.pattern.permute.xlu0 16
    %2210 = vperm.xlu0 %2209, %v197
    %v2211 = vpop.permute.xlu0 %2210
    %v2213 = vmul.f32 %v2211, %v316
    %v2214 = vmul.f32 %v2211, %v320
    %v2215 = vmul.f32 %v2211, %v324
    %v2216 = vmul.f32 %v2211, %v328
    %v2217 = vmul.f32 %v2211, %v332
    %v2218 = vmul.f32 %v2211, %v336
    %v2219 = vmul.f32 %v2211, %v340
    %v2220 = vmul.f32 %v2211, %v344
    %v2221 = vmul.f32 %v2211, %v348
    %v2222 = vmul.f32 %v2211, %v352
    %v2223 = vmul.f32 %v2211, %v356
    %v2224 = vmul.f32 %v2211, %v360
    %v2225 = vmul.f32 %v2211, %v364
    %v2226 = vmul.f32 %v2211, %v368
    %v2227 = vmul.f32 %v2211, %v372
    %v2228 = vmul.f32 %v2211, %v376
    %v2229 = vmul.f32 %v2211, %v380
    %2247 = vrot.lane.b32.xlu0 %v2213, 31
    %v2248 = vpop.permute.xlu0 %2247
    %2249 = vrot.lane.b32.xlu0 %v2214, 31
    %v2250 = vpop.permute.xlu0 %2249
    %2251 = vrot.lane.b32.xlu0 %v2215, 31
    %v2252 = vpop.permute.xlu0 %2251
    %2253 = vrot.lane.b32.xlu0 %v2216, 31
    %v2254 = vpop.permute.xlu0 %2253
    %2255 = vrot.lane.b32.xlu0 %v2217, 31
    %v2256 = vpop.permute.xlu0 %2255
    %2257 = vrot.lane.b32.xlu0 %v2218, 31
    %v2258 = vpop.permute.xlu0 %2257
    %2259 = vrot.lane.b32.xlu0 %v2219, 31
    %v2260 = vpop.permute.xlu0 %2259
    %2261 = vrot.lane.b32.xlu0 %v2220, 31
    %v2262 = vpop.permute.xlu0 %2261
    %2263 = vrot.lane.b32.xlu0 %v2221, 31
    %v2264 = vpop.permute.xlu0 %2263
    %2265 = vrot.lane.b32.xlu0 %v2222, 31
    %v2266 = vpop.permute.xlu0 %2265
    %2267 = vrot.lane.b32.xlu0 %v2223, 31
    %v2268 = vpop.permute.xlu0 %2267
    %2269 = vrot.lane.b32.xlu0 %v2224, 31
    %v2270 = vpop.permute.xlu0 %2269
    %2271 = vrot.lane.b32.xlu0 %v2225, 31
    %v2272 = vpop.permute.xlu0 %2271
    %2273 = vrot.lane.b32.xlu0 %v2226, 31
    %v2274 = vpop.permute.xlu0 %2273
    %2275 = vrot.lane.b32.xlu0 %v2227, 31
    %v2276 = vpop.permute.xlu0 %2275
    %2277 = vrot.lane.b32.xlu0 %v2228, 31
    %v2278 = vpop.permute.xlu0 %2277
    %2279 = vrot.lane.b32.xlu0 %v2229, 31
    %v2280 = vpop.permute.xlu0 %2279
    %vm2281 = vcmask 252928
    %v2282 = vsel %vm2281, %v2248, %v2250
    %v2283 = vsel %vm2281, %v2250, %v2252
    %v2284 = vsel %vm2281, %v2252, %v2254
    %v2285 = vsel %vm2281, %v2254, %v2256
    %v2286 = vsel %vm2281, %v2256, %v2258
    %v2287 = vsel %vm2281, %v2258, %v2260
    %v2288 = vsel %vm2281, %v2260, %v2262
    %v2289 = vsel %vm2281, %v2262, %v2264
    %v2290 = vsel %vm2281, %v2264, %v2266
    %v2291 = vsel %vm2281, %v2266, %v2268
    %v2292 = vsel %vm2281, %v2268, %v2270
    %v2293 = vsel %vm2281, %v2270, %v2272
    %v2294 = vsel %vm2281, %v2272, %v2274
    %v2295 = vsel %vm2281, %v2274, %v2276
    %v2296 = vsel %vm2281, %v2276, %v2278
    %v2297 = vsel %vm2281, %v2278, %v2280
    %v2314 = vadd.f32 %v2193, %v2282
    %v2315 = vadd.f32 %v2194, %v2283
    %v2316 = vadd.f32 %v2195, %v2284
    %v2317 = vadd.f32 %v2196, %v2285
    %v2318 = vadd.f32 %v2197, %v2286
    %v2319 = vadd.f32 %v2198, %v2287
    %v2320 = vadd.f32 %v2199, %v2288
    %v2321 = vadd.f32 %v2200, %v2289
    %v2322 = vadd.f32 %v2201, %v2290
    %v2323 = vadd.f32 %v2202, %v2291
    %v2324 = vadd.f32 %v2203, %v2292
    %v2325 = vadd.f32 %v2204, %v2293
    %v2326 = vadd.f32 %v2205, %v2294
    %v2327 = vadd.f32 %v2206, %v2295
    %v2328 = vadd.f32 %v2207, %v2296
    %v2329 = vadd.f32 %v2208, %v2297
    %2330 = vset.pattern.permute.xlu0 17
    %2331 = vperm.xlu0 %2330, %v197
    %v2332 = vpop.permute.xlu0 %2331
    %v2334 = vmul.f32 %v2332, %v316
    %v2335 = vmul.f32 %v2332, %v320
    %v2336 = vmul.f32 %v2332, %v324
    %v2337 = vmul.f32 %v2332, %v328
    %v2338 = vmul.f32 %v2332, %v332
    %v2339 = vmul.f32 %v2332, %v336
    %v2340 = vmul.f32 %v2332, %v340
    %v2341 = vmul.f32 %v2332, %v344
    %v2342 = vmul.f32 %v2332, %v348
    %v2343 = vmul.f32 %v2332, %v352
    %v2344 = vmul.f32 %v2332, %v356
    %v2345 = vmul.f32 %v2332, %v360
    %v2346 = vmul.f32 %v2332, %v364
    %v2347 = vmul.f32 %v2332, %v368
    %v2348 = vmul.f32 %v2332, %v372
    %v2349 = vmul.f32 %v2332, %v376
    %v2350 = vmul.f32 %v2332, %v380
    %2368 = vrot.lane.b32.xlu0 %v2334, 30
    %v2369 = vpop.permute.xlu0 %2368
    %2370 = vrot.lane.b32.xlu0 %v2335, 30
    %v2371 = vpop.permute.xlu0 %2370
    %2372 = vrot.lane.b32.xlu0 %v2336, 30
    %v2373 = vpop.permute.xlu0 %2372
    %2374 = vrot.lane.b32.xlu0 %v2337, 30
    %v2375 = vpop.permute.xlu0 %2374
    %2376 = vrot.lane.b32.xlu0 %v2338, 30
    %v2377 = vpop.permute.xlu0 %2376
    %2378 = vrot.lane.b32.xlu0 %v2339, 30
    %v2379 = vpop.permute.xlu0 %2378
    %2380 = vrot.lane.b32.xlu0 %v2340, 30
    %v2381 = vpop.permute.xlu0 %2380
    %2382 = vrot.lane.b32.xlu0 %v2341, 30
    %v2383 = vpop.permute.xlu0 %2382
    %2384 = vrot.lane.b32.xlu0 %v2342, 30
    %v2385 = vpop.permute.xlu0 %2384
    %2386 = vrot.lane.b32.xlu0 %v2343, 30
    %v2387 = vpop.permute.xlu0 %2386
    %2388 = vrot.lane.b32.xlu0 %v2344, 30
    %v2389 = vpop.permute.xlu0 %2388
    %2390 = vrot.lane.b32.xlu0 %v2345, 30
    %v2391 = vpop.permute.xlu0 %2390
    %2392 = vrot.lane.b32.xlu0 %v2346, 30
    %v2393 = vpop.permute.xlu0 %2392
    %2394 = vrot.lane.b32.xlu0 %v2347, 30
    %v2395 = vpop.permute.xlu0 %2394
    %2396 = vrot.lane.b32.xlu0 %v2348, 30
    %v2397 = vpop.permute.xlu0 %2396
    %2398 = vrot.lane.b32.xlu0 %v2349, 30
    %v2399 = vpop.permute.xlu0 %2398
    %2400 = vrot.lane.b32.xlu0 %v2350, 30
    %v2401 = vpop.permute.xlu0 %2400
    %vm2402 = vcmask 244736
    %v2403 = vsel %vm2402, %v2369, %v2371
    %v2404 = vsel %vm2402, %v2371, %v2373
    %v2405 = vsel %vm2402, %v2373, %v2375
    %v2406 = vsel %vm2402, %v2375, %v2377
    %v2407 = vsel %vm2402, %v2377, %v2379
    %v2408 = vsel %vm2402, %v2379, %v2381
    %v2409 = vsel %vm2402, %v2381, %v2383
    %v2410 = vsel %vm2402, %v2383, %v2385
    %v2411 = vsel %vm2402, %v2385, %v2387
    %v2412 = vsel %vm2402, %v2387, %v2389
    %v2413 = vsel %vm2402, %v2389, %v2391
    %v2414 = vsel %vm2402, %v2391, %v2393
    %v2415 = vsel %vm2402, %v2393, %v2395
    %v2416 = vsel %vm2402, %v2395, %v2397
    %v2417 = vsel %vm2402, %v2397, %v2399
    %v2418 = vsel %vm2402, %v2399, %v2401
    %v2435 = vadd.f32 %v2314, %v2403
    %v2436 = vadd.f32 %v2315, %v2404
    %v2437 = vadd.f32 %v2316, %v2405
    %v2438 = vadd.f32 %v2317, %v2406
    %v2439 = vadd.f32 %v2318, %v2407
    %v2440 = vadd.f32 %v2319, %v2408
    %v2441 = vadd.f32 %v2320, %v2409
    %v2442 = vadd.f32 %v2321, %v2410
    %v2443 = vadd.f32 %v2322, %v2411
    %v2444 = vadd.f32 %v2323, %v2412
    %v2445 = vadd.f32 %v2324, %v2413
    %v2446 = vadd.f32 %v2325, %v2414
    %v2447 = vadd.f32 %v2326, %v2415
    %v2448 = vadd.f32 %v2327, %v2416
    %v2449 = vadd.f32 %v2328, %v2417
    %v2450 = vadd.f32 %v2329, %v2418
    %2451 = vset.pattern.permute.xlu0 18
    %2452 = vperm.xlu0 %2451, %v197
    %v2453 = vpop.permute.xlu0 %2452
    %v2455 = vmul.f32 %v2453, %v316
    %v2456 = vmul.f32 %v2453, %v320
    %v2457 = vmul.f32 %v2453, %v324
    %v2458 = vmul.f32 %v2453, %v328
    %v2459 = vmul.f32 %v2453, %v332
    %v2460 = vmul.f32 %v2453, %v336
    %v2461 = vmul.f32 %v2453, %v340
    %v2462 = vmul.f32 %v2453, %v344
    %v2463 = vmul.f32 %v2453, %v348
    %v2464 = vmul.f32 %v2453, %v352
    %v2465 = vmul.f32 %v2453, %v356
    %v2466 = vmul.f32 %v2453, %v360
    %v2467 = vmul.f32 %v2453, %v364
    %v2468 = vmul.f32 %v2453, %v368
    %v2469 = vmul.f32 %v2453, %v372
    %v2470 = vmul.f32 %v2453, %v376
    %v2471 = vmul.f32 %v2453, %v380
    %2489 = vrot.lane.b32.xlu0 %v2455, 29
    %v2490 = vpop.permute.xlu0 %2489
    %2491 = vrot.lane.b32.xlu0 %v2456, 29
    %v2492 = vpop.permute.xlu0 %2491
    %2493 = vrot.lane.b32.xlu0 %v2457, 29
    %v2494 = vpop.permute.xlu0 %2493
    %2495 = vrot.lane.b32.xlu0 %v2458, 29
    %v2496 = vpop.permute.xlu0 %2495
    %2497 = vrot.lane.b32.xlu0 %v2459, 29
    %v2498 = vpop.permute.xlu0 %2497
    %2499 = vrot.lane.b32.xlu0 %v2460, 29
    %v2500 = vpop.permute.xlu0 %2499
    %2501 = vrot.lane.b32.xlu0 %v2461, 29
    %v2502 = vpop.permute.xlu0 %2501
    %2503 = vrot.lane.b32.xlu0 %v2462, 29
    %v2504 = vpop.permute.xlu0 %2503
    %2505 = vrot.lane.b32.xlu0 %v2463, 29
    %v2506 = vpop.permute.xlu0 %2505
    %2507 = vrot.lane.b32.xlu0 %v2464, 29
    %v2508 = vpop.permute.xlu0 %2507
    %2509 = vrot.lane.b32.xlu0 %v2465, 29
    %v2510 = vpop.permute.xlu0 %2509
    %2511 = vrot.lane.b32.xlu0 %v2466, 29
    %v2512 = vpop.permute.xlu0 %2511
    %2513 = vrot.lane.b32.xlu0 %v2467, 29
    %v2514 = vpop.permute.xlu0 %2513
    %2515 = vrot.lane.b32.xlu0 %v2468, 29
    %v2516 = vpop.permute.xlu0 %2515
    %2517 = vrot.lane.b32.xlu0 %v2469, 29
    %v2518 = vpop.permute.xlu0 %2517
    %2519 = vrot.lane.b32.xlu0 %v2470, 29
    %v2520 = vpop.permute.xlu0 %2519
    %2521 = vrot.lane.b32.xlu0 %v2471, 29
    %v2522 = vpop.permute.xlu0 %2521
    %vm2523 = vcmask 236544
    %v2524 = vsel %vm2523, %v2490, %v2492
    %v2525 = vsel %vm2523, %v2492, %v2494
    %v2526 = vsel %vm2523, %v2494, %v2496
    %v2527 = vsel %vm2523, %v2496, %v2498
    %v2528 = vsel %vm2523, %v2498, %v2500
    %v2529 = vsel %vm2523, %v2500, %v2502
    %v2530 = vsel %vm2523, %v2502, %v2504
    %v2531 = vsel %vm2523, %v2504, %v2506
    %v2532 = vsel %vm2523, %v2506, %v2508
    %v2533 = vsel %vm2523, %v2508, %v2510
    %v2534 = vsel %vm2523, %v2510, %v2512
    %v2535 = vsel %vm2523, %v2512, %v2514
    %v2536 = vsel %vm2523, %v2514, %v2516
    %v2537 = vsel %vm2523, %v2516, %v2518
    %v2538 = vsel %vm2523, %v2518, %v2520
    %v2539 = vsel %vm2523, %v2520, %v2522
    %v2556 = vadd.f32 %v2435, %v2524
    %v2557 = vadd.f32 %v2436, %v2525
    %v2558 = vadd.f32 %v2437, %v2526
    %v2559 = vadd.f32 %v2438, %v2527
    %v2560 = vadd.f32 %v2439, %v2528
    %v2561 = vadd.f32 %v2440, %v2529
    %v2562 = vadd.f32 %v2441, %v2530
    %v2563 = vadd.f32 %v2442, %v2531
    %v2564 = vadd.f32 %v2443, %v2532
    %v2565 = vadd.f32 %v2444, %v2533
    %v2566 = vadd.f32 %v2445, %v2534
    %v2567 = vadd.f32 %v2446, %v2535
    %v2568 = vadd.f32 %v2447, %v2536
    %v2569 = vadd.f32 %v2448, %v2537
    %v2570 = vadd.f32 %v2449, %v2538
    %v2571 = vadd.f32 %v2450, %v2539
    %2572 = vset.pattern.permute.xlu0 19
    %2573 = vperm.xlu0 %2572, %v197
    %v2574 = vpop.permute.xlu0 %2573
    %v2576 = vmul.f32 %v2574, %v316
    %v2577 = vmul.f32 %v2574, %v320
    %v2578 = vmul.f32 %v2574, %v324
    %v2579 = vmul.f32 %v2574, %v328
    %v2580 = vmul.f32 %v2574, %v332
    %v2581 = vmul.f32 %v2574, %v336
    %v2582 = vmul.f32 %v2574, %v340
    %v2583 = vmul.f32 %v2574, %v344
    %v2584 = vmul.f32 %v2574, %v348
    %v2585 = vmul.f32 %v2574, %v352
    %v2586 = vmul.f32 %v2574, %v356
    %v2587 = vmul.f32 %v2574, %v360
    %v2588 = vmul.f32 %v2574, %v364
    %v2589 = vmul.f32 %v2574, %v368
    %v2590 = vmul.f32 %v2574, %v372
    %v2591 = vmul.f32 %v2574, %v376
    %v2592 = vmul.f32 %v2574, %v380
    %2610 = vrot.lane.b32.xlu0 %v2576, 28
    %v2611 = vpop.permute.xlu0 %2610
    %2612 = vrot.lane.b32.xlu0 %v2577, 28
    %v2613 = vpop.permute.xlu0 %2612
    %2614 = vrot.lane.b32.xlu0 %v2578, 28
    %v2615 = vpop.permute.xlu0 %2614
    %2616 = vrot.lane.b32.xlu0 %v2579, 28
    %v2617 = vpop.permute.xlu0 %2616
    %2618 = vrot.lane.b32.xlu0 %v2580, 28
    %v2619 = vpop.permute.xlu0 %2618
    %2620 = vrot.lane.b32.xlu0 %v2581, 28
    %v2621 = vpop.permute.xlu0 %2620
    %2622 = vrot.lane.b32.xlu0 %v2582, 28
    %v2623 = vpop.permute.xlu0 %2622
    %2624 = vrot.lane.b32.xlu0 %v2583, 28
    %v2625 = vpop.permute.xlu0 %2624
    %2626 = vrot.lane.b32.xlu0 %v2584, 28
    %v2627 = vpop.permute.xlu0 %2626
    %2628 = vrot.lane.b32.xlu0 %v2585, 28
    %v2629 = vpop.permute.xlu0 %2628
    %2630 = vrot.lane.b32.xlu0 %v2586, 28
    %v2631 = vpop.permute.xlu0 %2630
    %2632 = vrot.lane.b32.xlu0 %v2587, 28
    %v2633 = vpop.permute.xlu0 %2632
    %2634 = vrot.lane.b32.xlu0 %v2588, 28
    %v2635 = vpop.permute.xlu0 %2634
    %2636 = vrot.lane.b32.xlu0 %v2589, 28
    %v2637 = vpop.permute.xlu0 %2636
    %2638 = vrot.lane.b32.xlu0 %v2590, 28
    %v2639 = vpop.permute.xlu0 %2638
    %2640 = vrot.lane.b32.xlu0 %v2591, 28
    %v2641 = vpop.permute.xlu0 %2640
    %2642 = vrot.lane.b32.xlu0 %v2592, 28
    %v2643 = vpop.permute.xlu0 %2642
    %vm2644 = vcmask 228352
    %v2645 = vsel %vm2644, %v2611, %v2613
    %v2646 = vsel %vm2644, %v2613, %v2615
    %v2647 = vsel %vm2644, %v2615, %v2617
    %v2648 = vsel %vm2644, %v2617, %v2619
    %v2649 = vsel %vm2644, %v2619, %v2621
    %v2650 = vsel %vm2644, %v2621, %v2623
    %v2651 = vsel %vm2644, %v2623, %v2625
    %v2652 = vsel %vm2644, %v2625, %v2627
    %v2653 = vsel %vm2644, %v2627, %v2629
    %v2654 = vsel %vm2644, %v2629, %v2631
    %v2655 = vsel %vm2644, %v2631, %v2633
    %v2656 = vsel %vm2644, %v2633, %v2635
    %v2657 = vsel %vm2644, %v2635, %v2637
    %v2658 = vsel %vm2644, %v2637, %v2639
    %v2659 = vsel %vm2644, %v2639, %v2641
    %v2660 = vsel %vm2644, %v2641, %v2643
    %v2677 = vadd.f32 %v2556, %v2645
    %v2678 = vadd.f32 %v2557, %v2646
    %v2679 = vadd.f32 %v2558, %v2647
    %v2680 = vadd.f32 %v2559, %v2648
    %v2681 = vadd.f32 %v2560, %v2649
    %v2682 = vadd.f32 %v2561, %v2650
    %v2683 = vadd.f32 %v2562, %v2651
    %v2684 = vadd.f32 %v2563, %v2652
    %v2685 = vadd.f32 %v2564, %v2653
    %v2686 = vadd.f32 %v2565, %v2654
    %v2687 = vadd.f32 %v2566, %v2655
    %v2688 = vadd.f32 %v2567, %v2656
    %v2689 = vadd.f32 %v2568, %v2657
    %v2690 = vadd.f32 %v2569, %v2658
    %v2691 = vadd.f32 %v2570, %v2659
    %v2692 = vadd.f32 %v2571, %v2660
    %v2693 = vld [vmem:[%s0 + $0x1] sm:$0xff]
    %v2694 = vld [vmem:[%s0 + $0x9] sm:$0xff]
    %2695 = vset.pattern.permute.xlu0 20
    %2696 = vperm.xlu0 %2695, %v197
    %v2697 = vpop.permute.xlu0 %2696
    %v2701 = vlaneseq
    %v2702 = vshrl.u32 %v2701, 7
    %v2703 = vsub.s32 0, %v2702
    %v2704 = vrot.slane %v2693, %v2703
    %v2705 = vlaneseq
    %v2706 = vshrl.u32 %v2705, 7
    %v2707 = vsub.s32 1, %v2706
    %v2708 = vrot.slane %v2693, %v2707
    %v2709 = vlaneseq
    %v2710 = vshrl.u32 %v2709, 7
    %v2711 = vsub.s32 2, %v2710
    %v2712 = vrot.slane %v2693, %v2711
    %v2713 = vlaneseq
    %v2714 = vshrl.u32 %v2713, 7
    %v2715 = vsub.s32 3, %v2714
    %v2716 = vrot.slane %v2693, %v2715
    %v2717 = vlaneseq
    %v2718 = vshrl.u32 %v2717, 7
    %v2719 = vsub.s32 4, %v2718
    %v2720 = vrot.slane %v2693, %v2719
    %v2721 = vlaneseq
    %v2722 = vshrl.u32 %v2721, 7
    %v2723 = vsub.s32 5, %v2722
    %v2724 = vrot.slane %v2693, %v2723
    %v2725 = vlaneseq
    %v2726 = vshrl.u32 %v2725, 7
    %v2727 = vsub.s32 6, %v2726
    %v2728 = vrot.slane %v2693, %v2727
    %v2729 = vlaneseq
    %v2730 = vshrl.u32 %v2729, 7
    %v2731 = vsub.s32 7, %v2730
    %v2732 = vrot.slane %v2693, %v2731
    %v2733 = vlaneseq
    %v2734 = vshrl.u32 %v2733, 7
    %v2735 = vsub.s32 0, %v2734
    %v2736 = vrot.slane %v2694, %v2735
    %v2737 = vlaneseq
    %v2738 = vshrl.u32 %v2737, 7
    %v2739 = vsub.s32 1, %v2738
    %v2740 = vrot.slane %v2694, %v2739
    %v2741 = vlaneseq
    %v2742 = vshrl.u32 %v2741, 7
    %v2743 = vsub.s32 2, %v2742
    %v2744 = vrot.slane %v2694, %v2743
    %v2745 = vlaneseq
    %v2746 = vshrl.u32 %v2745, 7
    %v2747 = vsub.s32 3, %v2746
    %v2748 = vrot.slane %v2694, %v2747
    %v2749 = vlaneseq
    %v2750 = vshrl.u32 %v2749, 7
    %v2751 = vsub.s32 4, %v2750
    %v2752 = vrot.slane %v2694, %v2751
    %v2753 = vlaneseq
    %v2754 = vshrl.u32 %v2753, 7
    %v2755 = vsub.s32 5, %v2754
    %v2756 = vrot.slane %v2694, %v2755
    %v2757 = vlaneseq
    %v2758 = vshrl.u32 %v2757, 7
    %v2759 = vsub.s32 6, %v2758
    %v2760 = vrot.slane %v2694, %v2759
    %v2761 = vlaneseq
    %v2762 = vshrl.u32 %v2761, 7
    %v2763 = vsub.s32 7, %v2762
    %v2764 = vrot.slane %v2694, %v2763
    %v2781 = vmul.f32 %v2697, %v2704
    %v2782 = vmul.f32 %v2697, %v2708
    %v2783 = vmul.f32 %v2697, %v2712
    %v2784 = vmul.f32 %v2697, %v2716
    %v2785 = vmul.f32 %v2697, %v2720
    %v2786 = vmul.f32 %v2697, %v2724
    %v2787 = vmul.f32 %v2697, %v2728
    %v2788 = vmul.f32 %v2697, %v2732
    %v2789 = vmul.f32 %v2697, %v2736
    %v2790 = vmul.f32 %v2697, %v2740
    %v2791 = vmul.f32 %v2697, %v2744
    %v2792 = vmul.f32 %v2697, %v2748
    %v2793 = vmul.f32 %v2697, %v2752
    %v2794 = vmul.f32 %v2697, %v2756
    %v2795 = vmul.f32 %v2697, %v2760
    %v2796 = vmul.f32 %v2697, %v2764
    %v2797 = vadd.f32 %v2677, %v2781
    %v2798 = vadd.f32 %v2678, %v2782
    %v2799 = vadd.f32 %v2679, %v2783
    %v2800 = vadd.f32 %v2680, %v2784
    %v2801 = vadd.f32 %v2681, %v2785
    %v2802 = vadd.f32 %v2682, %v2786
    %v2803 = vadd.f32 %v2683, %v2787
    %v2804 = vadd.f32 %v2684, %v2788
    %v2805 = vadd.f32 %v2685, %v2789
    %v2806 = vadd.f32 %v2686, %v2790
    %v2807 = vadd.f32 %v2687, %v2791
    %v2808 = vadd.f32 %v2688, %v2792
    %v2809 = vadd.f32 %v2689, %v2793
    %v2810 = vadd.f32 %v2690, %v2794
    %v2811 = vadd.f32 %v2691, %v2795
    %v2812 = vadd.f32 %v2692, %v2796
    %v2813 = vld [vmem:[%s0 + $0x1] sm:$0xff]
    %v2814 = vld [vmem:[%s0 + $0x9] sm:$0xff]
    %v2815 = vld [vmem:[%s0 + $0x11] sm:$0x1]
    %2816 = vset.pattern.permute.xlu0 21
    %2817 = vperm.xlu0 %2816, %v197
    %v2818 = vpop.permute.xlu0 %2817
    %v2823 = vlaneseq
    %v2824 = vshrl.u32 %v2823, 7
    %v2825 = vsub.s32 0, %v2824
    %v2826 = vrot.slane %v2813, %v2825
    %v2827 = vlaneseq
    %v2828 = vshrl.u32 %v2827, 7
    %v2829 = vsub.s32 1, %v2828
    %v2830 = vrot.slane %v2813, %v2829
    %v2831 = vlaneseq
    %v2832 = vshrl.u32 %v2831, 7
    %v2833 = vsub.s32 2, %v2832
    %v2834 = vrot.slane %v2813, %v2833
    %v2835 = vlaneseq
    %v2836 = vshrl.u32 %v2835, 7
    %v2837 = vsub.s32 3, %v2836
    %v2838 = vrot.slane %v2813, %v2837
    %v2839 = vlaneseq
    %v2840 = vshrl.u32 %v2839, 7
    %v2841 = vsub.s32 4, %v2840
    %v2842 = vrot.slane %v2813, %v2841
    %v2843 = vlaneseq
    %v2844 = vshrl.u32 %v2843, 7
    %v2845 = vsub.s32 5, %v2844
    %v2846 = vrot.slane %v2813, %v2845
    %v2847 = vlaneseq
    %v2848 = vshrl.u32 %v2847, 7
    %v2849 = vsub.s32 6, %v2848
    %v2850 = vrot.slane %v2813, %v2849
    %v2851 = vlaneseq
    %v2852 = vshrl.u32 %v2851, 7
    %v2853 = vsub.s32 7, %v2852
    %v2854 = vrot.slane %v2813, %v2853
    %v2855 = vlaneseq
    %v2856 = vshrl.u32 %v2855, 7
    %v2857 = vsub.s32 0, %v2856
    %v2858 = vrot.slane %v2814, %v2857
    %v2859 = vlaneseq
    %v2860 = vshrl.u32 %v2859, 7
    %v2861 = vsub.s32 1, %v2860
    %v2862 = vrot.slane %v2814, %v2861
    %v2863 = vlaneseq
    %v2864 = vshrl.u32 %v2863, 7
    %v2865 = vsub.s32 2, %v2864
    %v2866 = vrot.slane %v2814, %v2865
    %v2867 = vlaneseq
    %v2868 = vshrl.u32 %v2867, 7
    %v2869 = vsub.s32 3, %v2868
    %v2870 = vrot.slane %v2814, %v2869
    %v2871 = vlaneseq
    %v2872 = vshrl.u32 %v2871, 7
    %v2873 = vsub.s32 4, %v2872
    %v2874 = vrot.slane %v2814, %v2873
    %v2875 = vlaneseq
    %v2876 = vshrl.u32 %v2875, 7
    %v2877 = vsub.s32 5, %v2876
    %v2878 = vrot.slane %v2814, %v2877
    %v2879 = vlaneseq
    %v2880 = vshrl.u32 %v2879, 7
    %v2881 = vsub.s32 6, %v2880
    %v2882 = vrot.slane %v2814, %v2881
    %v2883 = vlaneseq
    %v2884 = vshrl.u32 %v2883, 7
    %v2885 = vsub.s32 7, %v2884
    %v2886 = vrot.slane %v2814, %v2885
    %v2887 = vlaneseq
    %v2888 = vshrl.u32 %v2887, 7
    %v2889 = vsub.s32 0, %v2888
    %v2890 = vrot.slane %v2815, %v2889
    %v2908 = vmul.f32 %v2818, %v2826
    %v2909 = vmul.f32 %v2818, %v2830
    %v2910 = vmul.f32 %v2818, %v2834
    %v2911 = vmul.f32 %v2818, %v2838
    %v2912 = vmul.f32 %v2818, %v2842
    %v2913 = vmul.f32 %v2818, %v2846
    %v2914 = vmul.f32 %v2818, %v2850
    %v2915 = vmul.f32 %v2818, %v2854
    %v2916 = vmul.f32 %v2818, %v2858
    %v2917 = vmul.f32 %v2818, %v2862
    %v2918 = vmul.f32 %v2818, %v2866
    %v2919 = vmul.f32 %v2818, %v2870
    %v2920 = vmul.f32 %v2818, %v2874
    %v2921 = vmul.f32 %v2818, %v2878
    %v2922 = vmul.f32 %v2818, %v2882
    %v2923 = vmul.f32 %v2818, %v2886
    %v2924 = vmul.f32 %v2818, %v2890
    %2942 = vrot.lane.b32.xlu0 %v2908, 127
    %v2943 = vpop.permute.xlu0 %2942
    %2944 = vrot.lane.b32.xlu0 %v2909, 127
    %v2945 = vpop.permute.xlu0 %2944
    %2946 = vrot.lane.b32.xlu0 %v2910, 127
    %v2947 = vpop.permute.xlu0 %2946
    %2948 = vrot.lane.b32.xlu0 %v2911, 127
    %v2949 = vpop.permute.xlu0 %2948
    %2950 = vrot.lane.b32.xlu0 %v2912, 127
    %v2951 = vpop.permute.xlu0 %2950
    %2952 = vrot.lane.b32.xlu0 %v2913, 127
    %v2953 = vpop.permute.xlu0 %2952
    %2954 = vrot.lane.b32.xlu0 %v2914, 127
    %v2955 = vpop.permute.xlu0 %2954
    %2956 = vrot.lane.b32.xlu0 %v2915, 127
    %v2957 = vpop.permute.xlu0 %2956
    %2958 = vrot.lane.b32.xlu0 %v2916, 127
    %v2959 = vpop.permute.xlu0 %2958
    %2960 = vrot.lane.b32.xlu0 %v2917, 127
    %v2961 = vpop.permute.xlu0 %2960
    %2962 = vrot.lane.b32.xlu0 %v2918, 127
    %v2963 = vpop.permute.xlu0 %2962
    %2964 = vrot.lane.b32.xlu0 %v2919, 127
    %v2965 = vpop.permute.xlu0 %2964
    %2966 = vrot.lane.b32.xlu0 %v2920, 127
    %v2967 = vpop.permute.xlu0 %2966
    %2968 = vrot.lane.b32.xlu0 %v2921, 127
    %v2969 = vpop.permute.xlu0 %2968
    %2970 = vrot.lane.b32.xlu0 %v2922, 127
    %v2971 = vpop.permute.xlu0 %2970
    %2972 = vrot.lane.b32.xlu0 %v2923, 127
    %v2973 = vpop.permute.xlu0 %2972
    %2974 = vrot.lane.b32.xlu0 %v2924, 127
    %v2975 = vpop.permute.xlu0 %2974
    %v2976 = vsel %vm466, %v2943, %v2945
    %v2977 = vsel %vm466, %v2945, %v2947
    %v2978 = vsel %vm466, %v2947, %v2949
    %v2979 = vsel %vm466, %v2949, %v2951
    %v2980 = vsel %vm466, %v2951, %v2953
    %v2981 = vsel %vm466, %v2953, %v2955
    %v2982 = vsel %vm466, %v2955, %v2957
    %v2983 = vsel %vm466, %v2957, %v2959
    %v2984 = vsel %vm466, %v2959, %v2961
    %v2985 = vsel %vm466, %v2961, %v2963
    %v2986 = vsel %vm466, %v2963, %v2965
    %v2987 = vsel %vm466, %v2965, %v2967
    %v2988 = vsel %vm466, %v2967, %v2969
    %v2989 = vsel %vm466, %v2969, %v2971
    %v2990 = vsel %vm466, %v2971, %v2973
    %v2991 = vsel %vm466, %v2973, %v2975
    %v3008 = vadd.f32 %v2797, %v2976
    %v3009 = vadd.f32 %v2798, %v2977
    %v3010 = vadd.f32 %v2799, %v2978
    %v3011 = vadd.f32 %v2800, %v2979
    %v3012 = vadd.f32 %v2801, %v2980
    %v3013 = vadd.f32 %v2802, %v2981
    %v3014 = vadd.f32 %v2803, %v2982
    %v3015 = vadd.f32 %v2804, %v2983
    %v3016 = vadd.f32 %v2805, %v2984
    %v3017 = vadd.f32 %v2806, %v2985
    %v3018 = vadd.f32 %v2807, %v2986
    %v3019 = vadd.f32 %v2808, %v2987
    %v3020 = vadd.f32 %v2809, %v2988
    %v3021 = vadd.f32 %v2810, %v2989
    %v3022 = vadd.f32 %v2811, %v2990
    %v3023 = vadd.f32 %v2812, %v2991
    %3024 = vset.pattern.permute.xlu0 22
    %3025 = vperm.xlu0 %3024, %v197
    %v3026 = vpop.permute.xlu0 %3025
    %v3028 = vmul.f32 %v3026, %v2826
    %v3029 = vmul.f32 %v3026, %v2830
    %v3030 = vmul.f32 %v3026, %v2834
    %v3031 = vmul.f32 %v3026, %v2838
    %v3032 = vmul.f32 %v3026, %v2842
    %v3033 = vmul.f32 %v3026, %v2846
    %v3034 = vmul.f32 %v3026, %v2850
    %v3035 = vmul.f32 %v3026, %v2854
    %v3036 = vmul.f32 %v3026, %v2858
    %v3037 = vmul.f32 %v3026, %v2862
    %v3038 = vmul.f32 %v3026, %v2866
    %v3039 = vmul.f32 %v3026, %v2870
    %v3040 = vmul.f32 %v3026, %v2874
    %v3041 = vmul.f32 %v3026, %v2878
    %v3042 = vmul.f32 %v3026, %v2882
    %v3043 = vmul.f32 %v3026, %v2886
    %v3044 = vmul.f32 %v3026, %v2890
    %3062 = vrot.lane.b32.xlu0 %v3028, 126
    %v3063 = vpop.permute.xlu0 %3062
    %3064 = vrot.lane.b32.xlu0 %v3029, 126
    %v3065 = vpop.permute.xlu0 %3064
    %3066 = vrot.lane.b32.xlu0 %v3030, 126
    %v3067 = vpop.permute.xlu0 %3066
    %3068 = vrot.lane.b32.xlu0 %v3031, 126
    %v3069 = vpop.permute.xlu0 %3068
    %3070 = vrot.lane.b32.xlu0 %v3032, 126
    %v3071 = vpop.permute.xlu0 %3070
    %3072 = vrot.lane.b32.xlu0 %v3033, 126
    %v3073 = vpop.permute.xlu0 %3072
    %3074 = vrot.lane.b32.xlu0 %v3034, 126
    %v3075 = vpop.permute.xlu0 %3074
    %3076 = vrot.lane.b32.xlu0 %v3035, 126
    %v3077 = vpop.permute.xlu0 %3076
    %3078 = vrot.lane.b32.xlu0 %v3036, 126
    %v3079 = vpop.permute.xlu0 %3078
    %3080 = vrot.lane.b32.xlu0 %v3037, 126
    %v3081 = vpop.permute.xlu0 %3080
    %3082 = vrot.lane.b32.xlu0 %v3038, 126
    %v3083 = vpop.permute.xlu0 %3082
    %3084 = vrot.lane.b32.xlu0 %v3039, 126
    %v3085 = vpop.permute.xlu0 %3084
    %3086 = vrot.lane.b32.xlu0 %v3040, 126
    %v3087 = vpop.permute.xlu0 %3086
    %3088 = vrot.lane.b32.xlu0 %v3041, 126
    %v3089 = vpop.permute.xlu0 %3088
    %3090 = vrot.lane.b32.xlu0 %v3042, 126
    %v3091 = vpop.permute.xlu0 %3090
    %3092 = vrot.lane.b32.xlu0 %v3043, 126
    %v3093 = vpop.permute.xlu0 %3092
    %3094 = vrot.lane.b32.xlu0 %v3044, 126
    %v3095 = vpop.permute.xlu0 %3094
    %v3096 = vsel %vm587, %v3063, %v3065
    %v3097 = vsel %vm587, %v3065, %v3067
    %v3098 = vsel %vm587, %v3067, %v3069
    %v3099 = vsel %vm587, %v3069, %v3071
    %v3100 = vsel %vm587, %v3071, %v3073
    %v3101 = vsel %vm587, %v3073, %v3075
    %v3102 = vsel %vm587, %v3075, %v3077
    %v3103 = vsel %vm587, %v3077, %v3079
    %v3104 = vsel %vm587, %v3079, %v3081
    %v3105 = vsel %vm587, %v3081, %v3083
    %v3106 = vsel %vm587, %v3083, %v3085
    %v3107 = vsel %vm587, %v3085, %v3087
    %v3108 = vsel %vm587, %v3087, %v3089
    %v3109 = vsel %vm587, %v3089, %v3091
    %v3110 = vsel %vm587, %v3091, %v3093
    %v3111 = vsel %vm587, %v3093, %v3095
    %v3128 = vadd.f32 %v3008, %v3096
    %v3129 = vadd.f32 %v3009, %v3097
    %v3130 = vadd.f32 %v3010, %v3098
    %v3131 = vadd.f32 %v3011, %v3099
    %v3132 = vadd.f32 %v3012, %v3100
    %v3133 = vadd.f32 %v3013, %v3101
    %v3134 = vadd.f32 %v3014, %v3102
    %v3135 = vadd.f32 %v3015, %v3103
    %v3136 = vadd.f32 %v3016, %v3104
    %v3137 = vadd.f32 %v3017, %v3105
    %v3138 = vadd.f32 %v3018, %v3106
    %v3139 = vadd.f32 %v3019, %v3107
    %v3140 = vadd.f32 %v3020, %v3108
    %v3141 = vadd.f32 %v3021, %v3109
    %v3142 = vadd.f32 %v3022, %v3110
    %v3143 = vadd.f32 %v3023, %v3111
    %3144 = vset.pattern.permute.xlu0 23
    %3145 = vperm.xlu0 %3144, %v197
    %v3146 = vpop.permute.xlu0 %3145
    %v3148 = vmul.f32 %v3146, %v2826
    %v3149 = vmul.f32 %v3146, %v2830
    %v3150 = vmul.f32 %v3146, %v2834
    %v3151 = vmul.f32 %v3146, %v2838
    %v3152 = vmul.f32 %v3146, %v2842
    %v3153 = vmul.f32 %v3146, %v2846
    %v3154 = vmul.f32 %v3146, %v2850
    %v3155 = vmul.f32 %v3146, %v2854
    %v3156 = vmul.f32 %v3146, %v2858
    %v3157 = vmul.f32 %v3146, %v2862
    %v3158 = vmul.f32 %v3146, %v2866
    %v3159 = vmul.f32 %v3146, %v2870
    %v3160 = vmul.f32 %v3146, %v2874
    %v3161 = vmul.f32 %v3146, %v2878
    %v3162 = vmul.f32 %v3146, %v2882
    %v3163 = vmul.f32 %v3146, %v2886
    %v3164 = vmul.f32 %v3146, %v2890
    %3182 = vrot.lane.b32.xlu0 %v3148, 125
    %v3183 = vpop.permute.xlu0 %3182
    %3184 = vrot.lane.b32.xlu0 %v3149, 125
    %v3185 = vpop.permute.xlu0 %3184
    %3186 = vrot.lane.b32.xlu0 %v3150, 125
    %v3187 = vpop.permute.xlu0 %3186
    %3188 = vrot.lane.b32.xlu0 %v3151, 125
    %v3189 = vpop.permute.xlu0 %3188
    %3190 = vrot.lane.b32.xlu0 %v3152, 125
    %v3191 = vpop.permute.xlu0 %3190
    %3192 = vrot.lane.b32.xlu0 %v3153, 125
    %v3193 = vpop.permute.xlu0 %3192
    %3194 = vrot.lane.b32.xlu0 %v3154, 125
    %v3195 = vpop.permute.xlu0 %3194
    %3196 = vrot.lane.b32.xlu0 %v3155, 125
    %v3197 = vpop.permute.xlu0 %3196
    %3198 = vrot.lane.b32.xlu0 %v3156, 125
    %v3199 = vpop.permute.xlu0 %3198
    %3200 = vrot.lane.b32.xlu0 %v3157, 125
    %v3201 = vpop.permute.xlu0 %3200
    %3202 = vrot.lane.b32.xlu0 %v3158, 125
    %v3203 = vpop.permute.xlu0 %3202
    %3204 = vrot.lane.b32.xlu0 %v3159, 125
    %v3205 = vpop.permute.xlu0 %3204
    %3206 = vrot.lane.b32.xlu0 %v3160, 125
    %v3207 = vpop.permute.xlu0 %3206
    %3208 = vrot.lane.b32.xlu0 %v3161, 125
    %v3209 = vpop.permute.xlu0 %3208
    %3210 = vrot.lane.b32.xlu0 %v3162, 125
    %v3211 = vpop.permute.xlu0 %3210
    %3212 = vrot.lane.b32.xlu0 %v3163, 125
    %v3213 = vpop.permute.xlu0 %3212
    %3214 = vrot.lane.b32.xlu0 %v3164, 125
    %v3215 = vpop.permute.xlu0 %3214
    %v3216 = vsel %vm708, %v3183, %v3185
    %v3217 = vsel %vm708, %v3185, %v3187
    %v3218 = vsel %vm708, %v3187, %v3189
    %v3219 = vsel %vm708, %v3189, %v3191
    %v3220 = vsel %vm708, %v3191, %v3193
    %v3221 = vsel %vm708, %v3193, %v3195
    %v3222 = vsel %vm708, %v3195, %v3197
    %v3223 = vsel %vm708, %v3197, %v3199
    %v3224 = vsel %vm708, %v3199, %v3201
    %v3225 = vsel %vm708, %v3201, %v3203
    %v3226 = vsel %vm708, %v3203, %v3205
    %v3227 = vsel %vm708, %v3205, %v3207
    %v3228 = vsel %vm708, %v3207, %v3209
    %v3229 = vsel %vm708, %v3209, %v3211
    %v3230 = vsel %vm708, %v3211, %v3213
    %v3231 = vsel %vm708, %v3213, %v3215
    %v3248 = vadd.f32 %v3128, %v3216
    %v3249 = vadd.f32 %v3129, %v3217
    %v3250 = vadd.f32 %v3130, %v3218
    %v3251 = vadd.f32 %v3131, %v3219
    %v3252 = vadd.f32 %v3132, %v3220
    %v3253 = vadd.f32 %v3133, %v3221
    %v3254 = vadd.f32 %v3134, %v3222
    %v3255 = vadd.f32 %v3135, %v3223
    %v3256 = vadd.f32 %v3136, %v3224
    %v3257 = vadd.f32 %v3137, %v3225
    %v3258 = vadd.f32 %v3138, %v3226
    %v3259 = vadd.f32 %v3139, %v3227
    %v3260 = vadd.f32 %v3140, %v3228
    %v3261 = vadd.f32 %v3141, %v3229
    %v3262 = vadd.f32 %v3142, %v3230
    %v3263 = vadd.f32 %v3143, %v3231
    %3264 = vset.pattern.permute.xlu0 24
    %3265 = vperm.xlu0 %3264, %v197
    %v3266 = vpop.permute.xlu0 %3265
    %v3268 = vmul.f32 %v3266, %v2826
    %v3269 = vmul.f32 %v3266, %v2830
    %v3270 = vmul.f32 %v3266, %v2834
    %v3271 = vmul.f32 %v3266, %v2838
    %v3272 = vmul.f32 %v3266, %v2842
    %v3273 = vmul.f32 %v3266, %v2846
    %v3274 = vmul.f32 %v3266, %v2850
    %v3275 = vmul.f32 %v3266, %v2854
    %v3276 = vmul.f32 %v3266, %v2858
    %v3277 = vmul.f32 %v3266, %v2862
    %v3278 = vmul.f32 %v3266, %v2866
    %v3279 = vmul.f32 %v3266, %v2870
    %v3280 = vmul.f32 %v3266, %v2874
    %v3281 = vmul.f32 %v3266, %v2878
    %v3282 = vmul.f32 %v3266, %v2882
    %v3283 = vmul.f32 %v3266, %v2886
    %v3284 = vmul.f32 %v3266, %v2890
    %3302 = vrot.lane.b32.xlu0 %v3268, 124
    %v3303 = vpop.permute.xlu0 %3302
    %3304 = vrot.lane.b32.xlu0 %v3269, 124
    %v3305 = vpop.permute.xlu0 %3304
    %3306 = vrot.lane.b32.xlu0 %v3270, 124
    %v3307 = vpop.permute.xlu0 %3306
    %3308 = vrot.lane.b32.xlu0 %v3271, 124
    %v3309 = vpop.permute.xlu0 %3308
    %3310 = vrot.lane.b32.xlu0 %v3272, 124
    %v3311 = vpop.permute.xlu0 %3310
    %3312 = vrot.lane.b32.xlu0 %v3273, 124
    %v3313 = vpop.permute.xlu0 %3312
    %3314 = vrot.lane.b32.xlu0 %v3274, 124
    %v3315 = vpop.permute.xlu0 %3314
    %3316 = vrot.lane.b32.xlu0 %v3275, 124
    %v3317 = vpop.permute.xlu0 %3316
    %3318 = vrot.lane.b32.xlu0 %v3276, 124
    %v3319 = vpop.permute.xlu0 %3318
    %3320 = vrot.lane.b32.xlu0 %v3277, 124
    %v3321 = vpop.permute.xlu0 %3320
    %3322 = vrot.lane.b32.xlu0 %v3278, 124
    %v3323 = vpop.permute.xlu0 %3322
    %3324 = vrot.lane.b32.xlu0 %v3279, 124
    %v3325 = vpop.permute.xlu0 %3324
    %3326 = vrot.lane.b32.xlu0 %v3280, 124
    %v3327 = vpop.permute.xlu0 %3326
    %3328 = vrot.lane.b32.xlu0 %v3281, 124
    %v3329 = vpop.permute.xlu0 %3328
    %3330 = vrot.lane.b32.xlu0 %v3282, 124
    %v3331 = vpop.permute.xlu0 %3330
    %3332 = vrot.lane.b32.xlu0 %v3283, 124
    %v3333 = vpop.permute.xlu0 %3332
    %3334 = vrot.lane.b32.xlu0 %v3284, 124
    %v3335 = vpop.permute.xlu0 %3334
    %v3336 = vsel %vm829, %v3303, %v3305
    %v3337 = vsel %vm829, %v3305, %v3307
    %v3338 = vsel %vm829, %v3307, %v3309
    %v3339 = vsel %vm829, %v3309, %v3311
    %v3340 = vsel %vm829, %v3311, %v3313
    %v3341 = vsel %vm829, %v3313, %v3315
    %v3342 = vsel %vm829, %v3315, %v3317
    %v3343 = vsel %vm829, %v3317, %v3319
    %v3344 = vsel %vm829, %v3319, %v3321
    %v3345 = vsel %vm829, %v3321, %v3323
    %v3346 = vsel %vm829, %v3323, %v3325
    %v3347 = vsel %vm829, %v3325, %v3327
    %v3348 = vsel %vm829, %v3327, %v3329
    %v3349 = vsel %vm829, %v3329, %v3331
    %v3350 = vsel %vm829, %v3331, %v3333
    %v3351 = vsel %vm829, %v3333, %v3335
    %v3368 = vadd.f32 %v3248, %v3336
    %v3369 = vadd.f32 %v3249, %v3337
    %v3370 = vadd.f32 %v3250, %v3338
    %v3371 = vadd.f32 %v3251, %v3339
    %v3372 = vadd.f32 %v3252, %v3340
    %v3373 = vadd.f32 %v3253, %v3341
    %v3374 = vadd.f32 %v3254, %v3342
    %v3375 = vadd.f32 %v3255, %v3343
    %v3376 = vadd.f32 %v3256, %v3344
    %v3377 = vadd.f32 %v3257, %v3345
    %v3378 = vadd.f32 %v3258, %v3346
    %v3379 = vadd.f32 %v3259, %v3347
    %v3380 = vadd.f32 %v3260, %v3348
    %v3381 = vadd.f32 %v3261, %v3349
    %v3382 = vadd.f32 %v3262, %v3350
    %v3383 = vadd.f32 %v3263, %v3351
    %v3384 = vld [vmem:[%s2] sm:$0xff]
    %3386 = vset.pattern.permute.xlu0 0
    %3387 = vperm.xlu0 %3386, %v3384
    %v3388 = vpop.permute.xlu0 %3387
    %v3390 = vadd.f32 %v3368, %v3388
    %v3391 = vadd.f32 %v3369, %v3388
    %v3392 = vadd.f32 %v3370, %v3388
    %v3393 = vadd.f32 %v3371, %v3388
    %v3394 = vadd.f32 %v3372, %v3388
    %v3395 = vadd.f32 %v3373, %v3388
    %v3396 = vadd.f32 %v3374, %v3388
    %v3397 = vadd.f32 %v3375, %v3388
    %v3398 = vadd.f32 %v3376, %v3388
    %v3399 = vadd.f32 %v3377, %v3388
    %v3400 = vadd.f32 %v3378, %v3388
    %v3401 = vadd.f32 %v3379, %v3388
    %v3402 = vadd.f32 %v3380, %v3388
    %v3403 = vadd.f32 %v3381, %v3388
    %v3404 = vadd.f32 %v3382, %v3388
    %v3405 = vadd.f32 %v3383, %v3388
    %v3406 = vmax.f32 %v3390, 0.0
    %v3407 = vmax.f32 %v3391, 0.0
    %v3408 = vmax.f32 %v3392, 0.0
    %v3409 = vmax.f32 %v3393, 0.0
    %v3410 = vmax.f32 %v3394, 0.0
    %v3411 = vmax.f32 %v3395, 0.0
    %v3412 = vmax.f32 %v3396, 0.0
    %v3413 = vmax.f32 %v3397, 0.0
    %v3414 = vmax.f32 %v3398, 0.0
    %v3415 = vmax.f32 %v3399, 0.0
    %v3416 = vmax.f32 %v3400, 0.0
    %v3417 = vmax.f32 %v3401, 0.0
    %v3418 = vmax.f32 %v3402, 0.0
    %v3419 = vmax.f32 %v3403, 0.0
    %v3420 = vmax.f32 %v3404, 0.0
    %v3421 = vmax.f32 %v3405, 0.0
    %3422 = vst [vmem:[#allocation2] sm:$0xff] %v3406
    %3423 = vst [vmem:[#allocation2 + $0x8] sm:$0xff] %v3407
    %3424 = vst [vmem:[#allocation2 + $0x10] sm:$0xff] %v3408
    %3425 = vst [vmem:[#allocation2 + $0x18] sm:$0xff] %v3409
    %3426 = vst [vmem:[#allocation2 + $0x20] sm:$0xff] %v3410
    %3427 = vst [vmem:[#allocation2 + $0x28] sm:$0xff] %v3411
    %3428 = vst [vmem:[#allocation2 + $0x30] sm:$0xff] %v3412
    %3429 = vst [vmem:[#allocation2 + $0x38] sm:$0xff] %v3413
    %3430 = vst [vmem:[#allocation2 + $0x40] sm:$0xff] %v3414
    %3431 = vst [vmem:[#allocation2 + $0x48] sm:$0xff] %v3415
    %3432 = vst [vmem:[#allocation2 + $0x50] sm:$0xff] %v3416
    %3433 = vst [vmem:[#allocation2 + $0x58] sm:$0xff] %v3417
    %3434 = vst [vmem:[#allocation2 + $0x60] sm:$0xff] %v3418
    %3435 = vst [vmem:[#allocation2 + $0x68] sm:$0xff] %v3419
    %3436 = vst [vmem:[#allocation2 + $0x70] sm:$0xff] %v3420
    %3437 = vst [vmem:[#allocation2 + $0x78] sm:$0xff] %v3421
    %v3438 = vld [vmem:[#allocation2] sm:$0xff]
    %v3439 = vld [vmem:[#allocation2 + $0x8] sm:$0xff]
    %v3440 = vld [vmem:[#allocation2 + $0x10] sm:$0xff]
    %v3441 = vld [vmem:[#allocation2 + $0x18] sm:$0xff]
    %v3442 = vld [vmem:[#allocation2 + $0x20] sm:$0xff]
    %v3443 = vld [vmem:[#allocation2 + $0x28] sm:$0xff]
    %v3444 = vld [vmem:[#allocation2 + $0x30] sm:$0xff]
    %v3445 = vld [vmem:[#allocation2 + $0x38] sm:$0xff]
    %v3446 = vld [vmem:[#allocation2 + $0x40] sm:$0xff]
    %v3447 = vld [vmem:[#allocation2 + $0x48] sm:$0xff]
    %v3448 = vld [vmem:[#allocation2 + $0x50] sm:$0xff]
    %v3449 = vld [vmem:[#allocation2 + $0x58] sm:$0xff]
    %v3450 = vld [vmem:[#allocation2 + $0x60] sm:$0xff]
    %v3451 = vld [vmem:[#allocation2 + $0x68] sm:$0xff]
    %v3452 = vld [vmem:[#allocation2 + $0x70] sm:$0xff]
    %v3453 = vld [vmem:[#allocation2 + $0x78] sm:$0xff]
    %v3454 = vld [vmem:[#allocation2] sm:$0xff]
    %v3455 = vld [vmem:[#allocation2 + $0x8] sm:$0xff]
    %v3456 = vld [vmem:[#allocation2 + $0x10] sm:$0xff]
    %v3457 = vld [vmem:[#allocation2 + $0x18] sm:$0xff]
    %v3458 = vld [vmem:[#allocation2 + $0x20] sm:$0xff]
    %v3459 = vld [vmem:[#allocation2 + $0x28] sm:$0xff]
    %v3460 = vld [vmem:[#allocation2 + $0x30] sm:$0xff]
    %v3461 = vld [vmem:[#allocation2 + $0x38] sm:$0xff]
    %v3462 = vld [vmem:[#allocation2 + $0x40] sm:$0xff]
    %v3463 = vld [vmem:[#allocation2 + $0x48] sm:$0xff]
    %v3464 = vld [vmem:[#allocation2 + $0x50] sm:$0xff]
    %v3465 = vld [vmem:[#allocation2 + $0x58] sm:$0xff]
    %v3466 = vld [vmem:[#allocation2 + $0x60] sm:$0xff]
    %v3467 = vld [vmem:[#allocation2 + $0x68] sm:$0xff]
    %v3468 = vld [vmem:[#allocation2 + $0x70] sm:$0xff]
    %v3469 = vld [vmem:[#allocation2 + $0x78] sm:$0xff]
    %v3470 = vld [vmem:[#allocation2 + $0x80] sm:$0xff]
    %3488 = vrot.lane.b32.xlu0 %v3454, 127
    %v3489 = vpop.permute.xlu0 %3488
    %3490 = vrot.lane.b32.xlu0 %v3455, 127
    %v3491 = vpop.permute.xlu0 %3490
    %3492 = vrot.lane.b32.xlu0 %v3456, 127
    %v3493 = vpop.permute.xlu0 %3492
    %3494 = vrot.lane.b32.xlu0 %v3457, 127
    %v3495 = vpop.permute.xlu0 %3494
    %3496 = vrot.lane.b32.xlu0 %v3458, 127
    %v3497 = vpop.permute.xlu0 %3496
    %3498 = vrot.lane.b32.xlu0 %v3459, 127
    %v3499 = vpop.permute.xlu0 %3498
    %3500 = vrot.lane.b32.xlu0 %v3460, 127
    %v3501 = vpop.permute.xlu0 %3500
    %3502 = vrot.lane.b32.xlu0 %v3461, 127
    %v3503 = vpop.permute.xlu0 %3502
    %3504 = vrot.lane.b32.xlu0 %v3462, 127
    %v3505 = vpop.permute.xlu0 %3504
    %3506 = vrot.lane.b32.xlu0 %v3463, 127
    %v3507 = vpop.permute.xlu0 %3506
    %3508 = vrot.lane.b32.xlu0 %v3464, 127
    %v3509 = vpop.permute.xlu0 %3508
    %3510 = vrot.lane.b32.xlu0 %v3465, 127
    %v3511 = vpop.permute.xlu0 %3510
    %3512 = vrot.lane.b32.xlu0 %v3466, 127
    %v3513 = vpop.permute.xlu0 %3512
    %3514 = vrot.lane.b32.xlu0 %v3467, 127
    %v3515 = vpop.permute.xlu0 %3514
    %3516 = vrot.lane.b32.xlu0 %v3468, 127
    %v3517 = vpop.permute.xlu0 %3516
    %3518 = vrot.lane.b32.xlu0 %v3469, 127
    %v3519 = vpop.permute.xlu0 %3518
    %3520 = vrot.lane.b32.xlu0 %v3470, 127
    %v3521 = vpop.permute.xlu0 %3520
    %v3522 = vsel %vm466, %v3489, %v3491
    %v3523 = vsel %vm466, %v3491, %v3493
    %v3524 = vsel %vm466, %v3493, %v3495
    %v3525 = vsel %vm466, %v3495, %v3497
    %v3526 = vsel %vm466, %v3497, %v3499
    %v3527 = vsel %vm466, %v3499, %v3501
    %v3528 = vsel %vm466, %v3501, %v3503
    %v3529 = vsel %vm466, %v3503, %v3505
    %v3530 = vsel %vm466, %v3505, %v3507
    %v3531 = vsel %vm466, %v3507, %v3509
    %v3532 = vsel %vm466, %v3509, %v3511
    %v3533 = vsel %vm466, %v3511, %v3513
    %v3534 = vsel %vm466, %v3513, %v3515
    %v3535 = vsel %vm466, %v3515, %v3517
    %v3536 = vsel %vm466, %v3517, %v3519
    %v3537 = vsel %vm466, %v3519, %v3521
    %v3554 = vmax.f32 %v3438, %v3522
    %v3555 = vmax.f32 %v3439, %v3523
    %v3556 = vmax.f32 %v3440, %v3524
    %v3557 = vmax.f32 %v3441, %v3525
    %v3558 = vmax.f32 %v3442, %v3526
    %v3559 = vmax.f32 %v3443, %v3527
    %v3560 = vmax.f32 %v3444, %v3528
    %v3561 = vmax.f32 %v3445, %v3529
    %v3562 = vmax.f32 %v3446, %v3530
    %v3563 = vmax.f32 %v3447, %v3531
    %v3564 = vmax.f32 %v3448, %v3532
    %v3565 = vmax.f32 %v3449, %v3533
    %v3566 = vmax.f32 %v3450, %v3534
    %v3567 = vmax.f32 %v3451, %v3535
    %v3568 = vmax.f32 %v3452, %v3536
    %v3569 = vmax.f32 %v3453, %v3537
    %v3571 = vmax.f32 %v3454, %v3522
    %v3572 = vmax.f32 %v3455, %v3523
    %v3573 = vmax.f32 %v3456, %v3524
    %v3574 = vmax.f32 %v3457, %v3525
    %v3575 = vmax.f32 %v3458, %v3526
    %v3576 = vmax.f32 %v3459, %v3527
    %v3577 = vmax.f32 %v3460, %v3528
    %v3578 = vmax.f32 %v3461, %v3529
    %v3579 = vmax.f32 %v3462, %v3530
    %v3580 = vmax.f32 %v3463, %v3531
    %v3581 = vmax.f32 %v3464, %v3532
    %v3582 = vmax.f32 %v3465, %v3533
    %v3583 = vmax.f32 %v3466, %v3534
    %v3584 = vmax.f32 %v3467, %v3535
    %v3585 = vmax.f32 %v3468, %v3536
    %v3586 = vmax.f32 %v3469, %v3537
    %v3587 = vmax.f32 %v3470, %v3521
    %3605 = vrot.lane.b32.xlu0 %v3571, 96
    %v3606 = vpop.permute.xlu0 %3605
    %3607 = vrot.lane.b32.xlu0 %v3572, 96
    %v3608 = vpop.permute.xlu0 %3607
    %3609 = vrot.lane.b32.xlu0 %v3573, 96
    %v3610 = vpop.permute.xlu0 %3609
    %3611 = vrot.lane.b32.xlu0 %v3574, 96
    %v3612 = vpop.permute.xlu0 %3611
    %3613 = vrot.lane.b32.xlu0 %v3575, 96
    %v3614 = vpop.permute.xlu0 %3613
    %3615 = vrot.lane.b32.xlu0 %v3576, 96
    %v3616 = vpop.permute.xlu0 %3615
    %3617 = vrot.lane.b32.xlu0 %v3577, 96
    %v3618 = vpop.permute.xlu0 %3617
    %3619 = vrot.lane.b32.xlu0 %v3578, 96
    %v3620 = vpop.permute.xlu0 %3619
    %3621 = vrot.lane.b32.xlu0 %v3579, 96
    %v3622 = vpop.permute.xlu0 %3621
    %3623 = vrot.lane.b32.xlu0 %v3580, 96
    %v3624 = vpop.permute.xlu0 %3623
    %3625 = vrot.lane.b32.xlu0 %v3581, 96
    %v3626 = vpop.permute.xlu0 %3625
    %3627 = vrot.lane.b32.xlu0 %v3582, 96
    %v3628 = vpop.permute.xlu0 %3627
    %3629 = vrot.lane.b32.xlu0 %v3583, 96
    %v3630 = vpop.permute.xlu0 %3629
    %3631 = vrot.lane.b32.xlu0 %v3584, 96
    %v3632 = vpop.permute.xlu0 %3631
    %3633 = vrot.lane.b32.xlu0 %v3585, 96
    %v3634 = vpop.permute.xlu0 %3633
    %3635 = vrot.lane.b32.xlu0 %v3586, 96
    %v3636 = vpop.permute.xlu0 %3635
    %3637 = vrot.lane.b32.xlu0 %v3587, 96
    %v3638 = vpop.permute.xlu0 %3637
    %v3639 = vsel %vm950, %v3606, %v3608
    %v3640 = vsel %vm950, %v3608, %v3610
    %v3641 = vsel %vm950, %v3610, %v3612
    %v3642 = vsel %vm950, %v3612, %v3614
    %v3643 = vsel %vm950, %v3614, %v3616
    %v3644 = vsel %vm950, %v3616, %v3618
    %v3645 = vsel %vm950, %v3618, %v3620
    %v3646 = vsel %vm950, %v3620, %v3622
    %v3647 = vsel %vm950, %v3622, %v3624
    %v3648 = vsel %vm950, %v3624, %v3626
    %v3649 = vsel %vm950, %v3626, %v3628
    %v3650 = vsel %vm950, %v3628, %v3630
    %v3651 = vsel %vm950, %v3630, %v3632
    %v3652 = vsel %vm950, %v3632, %v3634
    %v3653 = vsel %vm950, %v3634, %v3636
    %v3654 = vsel %vm950, %v3636, %v3638
    %v3671 = vmax.f32 %v3554, %v3639
    %v3672 = vmax.f32 %v3555, %v3640
    %v3673 = vmax.f32 %v3556, %v3641
    %v3674 = vmax.f32 %v3557, %v3642
    %v3675 = vmax.f32 %v3558, %v3643
    %v3676 = vmax.f32 %v3559, %v3644
    %v3677 = vmax.f32 %v3560, %v3645
    %v3678 = vmax.f32 %v3561, %v3646
    %v3679 = vmax.f32 %v3562, %v3647
    %v3680 = vmax.f32 %v3563, %v3648
    %v3681 = vmax.f32 %v3564, %v3649
    %v3682 = vmax.f32 %v3565, %v3650
    %v3683 = vmax.f32 %v3566, %v3651
    %v3684 = vmax.f32 %v3567, %v3652
    %v3685 = vmax.f32 %v3568, %v3653
    %v3686 = vmax.f32 %v3569, %v3654
    %3687 = vst [vmem:[#allocation3] sm:$0xff] %v3671
    %3688 = vst [vmem:[#allocation3 + $0x8] sm:$0xff] %v3672
    %3689 = vst [vmem:[#allocation3 + $0x10] sm:$0xff] %v3673
    %3690 = vst [vmem:[#allocation3 + $0x18] sm:$0xff] %v3674
    %3691 = vst [vmem:[#allocation3 + $0x20] sm:$0xff] %v3675
    %3692 = vst [vmem:[#allocation3 + $0x28] sm:$0xff] %v3676
    %3693 = vst [vmem:[#allocation3 + $0x30] sm:$0xff] %v3677
    %3694 = vst [vmem:[#allocation3 + $0x38] sm:$0xff] %v3678
    %3695 = vst [vmem:[#allocation3 + $0x40] sm:$0xff] %v3679
    %3696 = vst [vmem:[#allocation3 + $0x48] sm:$0xff] %v3680
    %3697 = vst [vmem:[#allocation3 + $0x50] sm:$0xff] %v3681
    %3698 = vst [vmem:[#allocation3 + $0x58] sm:$0xff] %v3682
    %3699 = vst [vmem:[#allocation3 + $0x60] sm:$0xff] %v3683
    %3700 = vst [vmem:[#allocation3 + $0x68] sm:$0xff] %v3684
    %3701 = vst [vmem:[#allocation3 + $0x70] sm:$0xff] %v3685
    %3702 = vst [vmem:[#allocation3 + $0x78] sm:$0xff] %v3686
    %v3703 = vld [vmem:[#allocation3] sm:$0xff]
    %v3704 = vld [vmem:[#allocation3 + $0x8] sm:$0xff]
    %v3705 = vld [vmem:[#allocation3 + $0x10] sm:$0xff]
    %v3706 = vld [vmem:[#allocation3 + $0x18] sm:$0xff]
    %v3707 = vld [vmem:[#allocation3 + $0x20] sm:$0xff]
    %v3708 = vld [vmem:[#allocation3 + $0x28] sm:$0xff]
    %v3709 = vld [vmem:[#allocation3 + $0x30] sm:$0xff]
    %v3710 = vld [vmem:[#allocation3 + $0x38] sm:$0xff]
    %v3711 = vld [vmem:[#allocation3 + $0x40] sm:$0xff]
    %v3712 = vld [vmem:[#allocation3 + $0x48] sm:$0xff]
    %v3713 = vld [vmem:[#allocation3 + $0x50] sm:$0xff]
    %v3714 = vld [vmem:[#allocation3 + $0x58] sm:$0xff]
    %v3715 = vld [vmem:[#allocation3 + $0x60] sm:$0xff]
    %v3716 = vld [vmem:[#allocation3 + $0x68] sm:$0xff]
    %v3717 = vld [vmem:[#allocation3 + $0x70] sm:$0xff]
    %v3718 = vld [vmem:[#allocation3 + $0x78] sm:$0xff]
    %3719 = vst [vmem:[#allocation4] sm:$0xff] %v3703
    %3720 = vst [vmem:[#allocation4 + $0x8] sm:$0xff] %v3704
    %3721 = vst [vmem:[#allocation4 + $0x10] sm:$0xff] %v3705
    %3722 = vst [vmem:[#allocation4 + $0x18] sm:$0xff] %v3706
    %3723 = vst [vmem:[#allocation4 + $0x20] sm:$0xff] %v3707
    %3724 = vst [vmem:[#allocation4 + $0x28] sm:$0xff] %v3708
    %3725 = vst [vmem:[#allocation4 + $0x30] sm:$0xff] %v3709
    %3726 = vst [vmem:[#allocation4 + $0x38] sm:$0xff] %v3710
    %3727 = vst [vmem:[#allocation4 + $0x40] sm:$0xff] %v3711
    %3728 = vst [vmem:[#allocation4 + $0x48] sm:$0xff] %v3712
    %3729 = vst [vmem:[#allocation4 + $0x50] sm:$0xff] %v3713
    %3730 = vst [vmem:[#allocation4 + $0x58] sm:$0xff] %v3714
    %3731 = vst [vmem:[#allocation4 + $0x60] sm:$0xff] %v3715
    %3732 = vst [vmem:[#allocation4 + $0x68] sm:$0xff] %v3716
    %3733 = vst [vmem:[#allocation4 + $0x70] sm:$0xff] %v3717
    %3734 = vst [vmem:[#allocation4 + $0x78] sm:$0xff] %v3718
    %v3735 = vld [vmem:[#allocation3] sm:$0xff]
    %v3736 = vld [vmem:[#allocation3 + $0x8] sm:$0xff]
    %v3737 = vld [vmem:[#allocation3 + $0x10] sm:$0xff]
    %v3738 = vld [vmem:[#allocation3 + $0x18] sm:$0xff]
    %v3739 = vld [vmem:[#allocation3 + $0x20] sm:$0xff]
    %v3740 = vld [vmem:[#allocation3 + $0x28] sm:$0xff]
    %v3741 = vld [vmem:[#allocation3 + $0x30] sm:$0xff]
    %v3742 = vld [vmem:[#allocation3 + $0x38] sm:$0xff]
    %v3743 = vld [vmem:[#allocation3 + $0x40] sm:$0xff]
    %v3744 = vld [vmem:[#allocation3 + $0x48] sm:$0xff]
    %v3745 = vld [vmem:[#allocation3 + $0x50] sm:$0xff]
    %v3746 = vld [vmem:[#allocation3 + $0x58] sm:$0xff]
    %v3747 = vld [vmem:[#allocation3 + $0x60] sm:$0xff]
    %v3748 = vld [vmem:[#allocation3 + $0x68] sm:$0xff]
    %v3749 = vld [vmem:[#allocation3 + $0x70] sm:$0xff]
    %v3750 = vld [vmem:[#allocation3 + $0x78] sm:$0xff]
    %v3751 = vld [vmem:[#allocation3 + $0x80] sm:$0xff]
    %3769 = vrot.lane.b32.xlu0 %v3735, 126
    %v3770 = vpop.permute.xlu0 %3769
    %3771 = vrot.lane.b32.xlu0 %v3736, 126
    %v3772 = vpop.permute.xlu0 %3771
    %3773 = vrot.lane.b32.xlu0 %v3737, 126
    %v3774 = vpop.permute.xlu0 %3773
    %3775 = vrot.lane.b32.xlu0 %v3738, 126
    %v3776 = vpop.permute.xlu0 %3775
    %3777 = vrot.lane.b32.xlu0 %v3739, 126
    %v3778 = vpop.permute.xlu0 %3777
    %3779 = vrot.lane.b32.xlu0 %v3740, 126
    %v3780 = vpop.permute.xlu0 %3779
    %3781 = vrot.lane.b32.xlu0 %v3741, 126
    %v3782 = vpop.permute.xlu0 %3781
    %3783 = vrot.lane.b32.xlu0 %v3742, 126
    %v3784 = vpop.permute.xlu0 %3783
    %3785 = vrot.lane.b32.xlu0 %v3743, 126
    %v3786 = vpop.permute.xlu0 %3785
    %3787 = vrot.lane.b32.xlu0 %v3744, 126
    %v3788 = vpop.permute.xlu0 %3787
    %3789 = vrot.lane.b32.xlu0 %v3745, 126
    %v3790 = vpop.permute.xlu0 %3789
    %3791 = vrot.lane.b32.xlu0 %v3746, 126
    %v3792 = vpop.permute.xlu0 %3791
    %3793 = vrot.lane.b32.xlu0 %v3747, 126
    %v3794 = vpop.permute.xlu0 %3793
    %3795 = vrot.lane.b32.xlu0 %v3748, 126
    %v3796 = vpop.permute.xlu0 %3795
    %3797 = vrot.lane.b32.xlu0 %v3749, 126
    %v3798 = vpop.permute.xlu0 %3797
    %3799 = vrot.lane.b32.xlu0 %v3750, 126
    %v3800 = vpop.permute.xlu0 %3799
    %3801 = vrot.lane.b32.xlu0 %v3751, 126
    %v3802 = vpop.permute.xlu0 %3801
    %v3803 = vsel %vm587, %v3770, %v3772
    %v3804 = vsel %vm587, %v3772, %v3774
    %v3805 = vsel %vm587, %v3774, %v3776
    %v3806 = vsel %vm587, %v3776, %v3778
    %v3807 = vsel %vm587, %v3778, %v3780
    %v3808 = vsel %vm587, %v3780, %v3782
    %v3809 = vsel %vm587, %v3782, %v3784
    %v3810 = vsel %vm587, %v3784, %v3786
    %v3811 = vsel %vm587, %v3786, %v3788
    %v3812 = vsel %vm587, %v3788, %v3790
    %v3813 = vsel %vm587, %v3790, %v3792
    %v3814 = vsel %vm587, %v3792, %v3794
    %v3815 = vsel %vm587, %v3794, %v3796
    %v3816 = vsel %vm587, %v3796, %v3798
    %v3817 = vsel %vm587, %v3798, %v3800
    %v3818 = vsel %vm587, %v3800, %v3802
    %3835 = vst [vmem:[#allocation4 + $0x80] sm:$0xff] %v3803
    %3836 = vst [vmem:[#allocation4 + $0x88] sm:$0xff] %v3804
    %3837 = vst [vmem:[#allocation4 + $0x90] sm:$0xff] %v3805
    %3838 = vst [vmem:[#allocation4 + $0x98] sm:$0xff] %v3806
    %3839 = vst [vmem:[#allocation4 + $0xa0] sm:$0xff] %v3807
    %3840 = vst [vmem:[#allocation4 + $0xa8] sm:$0xff] %v3808
    %3841 = vst [vmem:[#allocation4 + $0xb0] sm:$0xff] %v3809
    %3842 = vst [vmem:[#allocation4 + $0xb8] sm:$0xff] %v3810
    %3843 = vst [vmem:[#allocation4 + $0xc0] sm:$0xff] %v3811
    %3844 = vst [vmem:[#allocation4 + $0xc8] sm:$0xff] %v3812
    %3845 = vst [vmem:[#allocation4 + $0xd0] sm:$0xff] %v3813
    %3846 = vst [vmem:[#allocation4 + $0xd8] sm:$0xff] %v3814
    %3847 = vst [vmem:[#allocation4 + $0xe0] sm:$0xff] %v3815
    %3848 = vst [vmem:[#allocation4 + $0xe8] sm:$0xff] %v3816
    %3849 = vst [vmem:[#allocation4 + $0xf0] sm:$0xff] %v3817
    %3850 = vst [vmem:[#allocation4 + $0xf8] sm:$0xff] %v3818
    %v3851 = vld [vmem:[#allocation3] sm:$0xff]
    %v3852 = vld [vmem:[#allocation3 + $0x8] sm:$0xff]
    %v3853 = vld [vmem:[#allocation3 + $0x10] sm:$0xff]
    %v3854 = vld [vmem:[#allocation3 + $0x18] sm:$0xff]
    %v3855 = vld [vmem:[#allocation3 + $0x20] sm:$0xff]
    %v3856 = vld [vmem:[#allocation3 + $0x28] sm:$0xff]
    %v3857 = vld [vmem:[#allocation3 + $0x30] sm:$0xff]
    %v3858 = vld [vmem:[#allocation3 + $0x38] sm:$0xff]
    %v3859 = vld [vmem:[#allocation3 + $0x40] sm:$0xff]
    %v3860 = vld [vmem:[#allocation3 + $0x48] sm:$0xff]
    %v3861 = vld [vmem:[#allocation3 + $0x50] sm:$0xff]
    %v3862 = vld [vmem:[#allocation3 + $0x58] sm:$0xff]
    %v3863 = vld [vmem:[#allocation3 + $0x60] sm:$0xff]
    %v3864 = vld [vmem:[#allocation3 + $0x68] sm:$0xff]
    %v3865 = vld [vmem:[#allocation3 + $0x70] sm:$0xff]
    %v3866 = vld [vmem:[#allocation3 + $0x78] sm:$0xff]
    %v3867 = vld [vmem:[#allocation3 + $0x80] sm:$0xff]
    %3885 = vrot.lane.b32.xlu0 %v3851, 124
    %v3886 = vpop.permute.xlu0 %3885
    %3887 = vrot.lane.b32.xlu0 %v3852, 124
    %v3888 = vpop.permute.xlu0 %3887
    %3889 = vrot.lane.b32.xlu0 %v3853, 124
    %v3890 = vpop.permute.xlu0 %3889
    %3891 = vrot.lane.b32.xlu0 %v3854, 124
    %v3892 = vpop.permute.xlu0 %3891
    %3893 = vrot.lane.b32.xlu0 %v3855, 124
    %v3894 = vpop.permute.xlu0 %3893
    %3895 = vrot.lane.b32.xlu0 %v3856, 124
    %v3896 = vpop.permute.xlu0 %3895
    %3897 = vrot.lane.b32.xlu0 %v3857, 124
    %v3898 = vpop.permute.xlu0 %3897
    %3899 = vrot.lane.b32.xlu0 %v3858, 124
    %v3900 = vpop.permute.xlu0 %3899
    %3901 = vrot.lane.b32.xlu0 %v3859, 124
    %v3902 = vpop.permute.xlu0 %3901
    %3903 = vrot.lane.b32.xlu0 %v3860, 124
    %v3904 = vpop.permute.xlu0 %3903
    %3905 = vrot.lane.b32.xlu0 %v3861, 124
    %v3906 = vpop.permute.xlu0 %3905
    %3907 = vrot.lane.b32.xlu0 %v3862, 124
    %v3908 = vpop.permute.xlu0 %3907
    %3909 = vrot.lane.b32.xlu0 %v3863, 124
    %v3910 = vpop.permute.xlu0 %3909
    %3911 = vrot.lane.b32.xlu0 %v3864, 124
    %v3912 = vpop.permute.xlu0 %3911
    %3913 = vrot.lane.b32.xlu0 %v3865, 124
    %v3914 = vpop.permute.xlu0 %3913
    %3915 = vrot.lane.b32.xlu0 %v3866, 124
    %v3916 = vpop.permute.xlu0 %3915
    %3917 = vrot.lane.b32.xlu0 %v3867, 124
    %v3918 = vpop.permute.xlu0 %3917
    %v3919 = vsel %vm829, %v3886, %v3888
    %v3920 = vsel %vm829, %v3888, %v3890
    %v3921 = vsel %vm829, %v3890, %v3892
    %v3922 = vsel %vm829, %v3892, %v3894
    %v3923 = vsel %vm829, %v3894, %v3896
    %v3924 = vsel %vm829, %v3896, %v3898
    %v3925 = vsel %vm829, %v3898, %v3900
    %v3926 = vsel %vm829, %v3900, %v3902
    %v3927 = vsel %vm829, %v3902, %v3904
    %v3928 = vsel %vm829, %v3904, %v3906
    %v3929 = vsel %vm829, %v3906, %v3908
    %v3930 = vsel %vm829, %v3908, %v3910
    %v3931 = vsel %vm829, %v3910, %v3912
    %v3932 = vsel %vm829, %v3912, %v3914
    %v3933 = vsel %vm829, %v3914, %v3916
    %v3934 = vsel %vm829, %v3916, %v3918
    %3951 = vst [vmem:[#allocation4 + $0x100] sm:$0xff] %v3919
    %3952 = vst [vmem:[#allocation4 + $0x108] sm:$0xff] %v3920
    %3953 = vst [vmem:[#allocation4 + $0x110] sm:$0xff] %v3921
    %3954 = vst [vmem:[#allocation4 + $0x118] sm:$0xff] %v3922
    %3955 = vst [vmem:[#allocation4 + $0x120] sm:$0xff] %v3923
    %3956 = vst [vmem:[#allocation4 + $0x128] sm:$0xff] %v3924
    %3957 = vst [vmem:[#allocation4 + $0x130] sm:$0xff] %v3925
    %3958 = vst [vmem:[#allocation4 + $0x138] sm:$0xff] %v3926
    %3959 = vst [vmem:[#allocation4 + $0x140] sm:$0xff] %v3927
    %3960 = vst [vmem:[#allocation4 + $0x148] sm:$0xff] %v3928
    %3961 = vst [vmem:[#allocation4 + $0x150] sm:$0xff] %v3929
    %3962 = vst [vmem:[#allocation4 + $0x158] sm:$0xff] %v3930
    %3963 = vst [vmem:[#allocation4 + $0x160] sm:$0xff] %v3931
    %3964 = vst [vmem:[#allocation4 + $0x168] sm:$0xff] %v3932
    %3965 = vst [vmem:[#allocation4 + $0x170] sm:$0xff] %v3933
    %3966 = vst [vmem:[#allocation4 + $0x178] sm:$0xff] %v3934
    %v3967 = vld [vmem:[#allocation3] sm:$0xff]
    %v3968 = vld [vmem:[#allocation3 + $0x8] sm:$0xff]
    %v3969 = vld [vmem:[#allocation3 + $0x10] sm:$0xff]
    %v3970 = vld [vmem:[#allocation3 + $0x18] sm:$0xff]
    %v3971 = vld [vmem:[#allocation3 + $0x20] sm:$0xff]
    %v3972 = vld [vmem:[#allocation3 + $0x28] sm:$0xff]
    %v3973 = vld [vmem:[#allocation3 + $0x30] sm:$0xff]
    %v3974 = vld [vmem:[#allocation3 + $0x38] sm:$0xff]
    %v3975 = vld [vmem:[#allocation3 + $0x40] sm:$0xff]
    %v3976 = vld [vmem:[#allocation3 + $0x48] sm:$0xff]
    %v3977 = vld [vmem:[#allocation3 + $0x50] sm:$0xff]
    %v3978 = vld [vmem:[#allocation3 + $0x58] sm:$0xff]
    %v3979 = vld [vmem:[#allocation3 + $0x60] sm:$0xff]
    %v3980 = vld [vmem:[#allocation3 + $0x68] sm:$0xff]
    %v3981 = vld [vmem:[#allocation3 + $0x70] sm:$0xff]
    %v3982 = vld [vmem:[#allocation3 + $0x78] sm:$0xff]
    %v3983 = vld [vmem:[#allocation3 + $0x80] sm:$0xff]
    %4001 = vrot.lane.b32.xlu0 %v3967, 122
    %v4002 = vpop.permute.xlu0 %4001
    %4003 = vrot.lane.b32.xlu0 %v3968, 122
    %v4004 = vpop.permute.xlu0 %4003
    %4005 = vrot.lane.b32.xlu0 %v3969, 122
    %v4006 = vpop.permute.xlu0 %4005
    %4007 = vrot.lane.b32.xlu0 %v3970, 122
    %v4008 = vpop.permute.xlu0 %4007
    %4009 = vrot.lane.b32.xlu0 %v3971, 122
    %v4010 = vpop.permute.xlu0 %4009
    %4011 = vrot.lane.b32.xlu0 %v3972, 122
    %v4012 = vpop.permute.xlu0 %4011
    %4013 = vrot.lane.b32.xlu0 %v3973, 122
    %v4014 = vpop.permute.xlu0 %4013
    %4015 = vrot.lane.b32.xlu0 %v3974, 122
    %v4016 = vpop.permute.xlu0 %4015
    %4017 = vrot.lane.b32.xlu0 %v3975, 122
    %v4018 = vpop.permute.xlu0 %4017
    %4019 = vrot.lane.b32.xlu0 %v3976, 122
    %v4020 = vpop.permute.xlu0 %4019
    %4021 = vrot.lane.b32.xlu0 %v3977, 122
    %v4022 = vpop.permute.xlu0 %4021
    %4023 = vrot.lane.b32.xlu0 %v3978, 122
    %v4024 = vpop.permute.xlu0 %4023
    %4025 = vrot.lane.b32.xlu0 %v3979, 122
    %v4026 = vpop.permute.xlu0 %4025
    %4027 = vrot.lane.b32.xlu0 %v3980, 122
    %v4028 = vpop.permute.xlu0 %4027
    %4029 = vrot.lane.b32.xlu0 %v3981, 122
    %v4030 = vpop.permute.xlu0 %4029
    %4031 = vrot.lane.b32.xlu0 %v3982, 122
    %v4032 = vpop.permute.xlu0 %4031
    %4033 = vrot.lane.b32.xlu0 %v3983, 122
    %v4034 = vpop.permute.xlu0 %4033
    %vm4035 = vcmask 998400
    %v4036 = vsel %vm4035, %v4002, %v4004
    %v4037 = vsel %vm4035, %v4004, %v4006
    %v4038 = vsel %vm4035, %v4006, %v4008
    %v4039 = vsel %vm4035, %v4008, %v4010
    %v4040 = vsel %vm4035, %v4010, %v4012
    %v4041 = vsel %vm4035, %v4012, %v4014
    %v4042 = vsel %vm4035, %v4014, %v4016
    %v4043 = vsel %vm4035, %v4016, %v4018
    %v4044 = vsel %vm4035, %v4018, %v4020
    %v4045 = vsel %vm4035, %v4020, %v4022
    %v4046 = vsel %vm4035, %v4022, %v4024
    %v4047 = vsel %vm4035, %v4024, %v4026
    %v4048 = vsel %vm4035, %v4026, %v4028
    %v4049 = vsel %vm4035, %v4028, %v4030
    %v4050 = vsel %vm4035, %v4030, %v4032
    %v4051 = vsel %vm4035, %v4032, %v4034
    %4068 = vst [vmem:[#allocation4 + $0x180] sm:$0xff] %v4036
    %4069 = vst [vmem:[#allocation4 + $0x188] sm:$0xff] %v4037
    %4070 = vst [vmem:[#allocation4 + $0x190] sm:$0xff] %v4038
    %4071 = vst [vmem:[#allocation4 + $0x198] sm:$0xff] %v4039
    %4072 = vst [vmem:[#allocation4 + $0x1a0] sm:$0xff] %v4040
    %4073 = vst [vmem:[#allocation4 + $0x1a8] sm:$0xff] %v4041
    %4074 = vst [vmem:[#allocation4 + $0x1b0] sm:$0xff] %v4042
    %4075 = vst [vmem:[#allocation4 + $0x1b8] sm:$0xff] %v4043
    %4076 = vst [vmem:[#allocation4 + $0x1c0] sm:$0xff] %v4044
    %4077 = vst [vmem:[#allocation4 + $0x1c8] sm:$0xff] %v4045
    %4078 = vst [vmem:[#allocation4 + $0x1d0] sm:$0xff] %v4046
    %4079 = vst [vmem:[#allocation4 + $0x1d8] sm:$0xff] %v4047
    %4080 = vst [vmem:[#allocation4 + $0x1e0] sm:$0xff] %v4048
    %4081 = vst [vmem:[#allocation4 + $0x1e8] sm:$0xff] %v4049
    %4082 = vst [vmem:[#allocation4 + $0x1f0] sm:$0xff] %v4050
    %4083 = vst [vmem:[#allocation4 + $0x1f8] sm:$0xff] %v4051
    %v4084 = vld [vmem:[#allocation3] sm:$0xff]
    %v4085 = vld [vmem:[#allocation3 + $0x8] sm:$0xff]
    %v4086 = vld [vmem:[#allocation3 + $0x10] sm:$0xff]
    %v4087 = vld [vmem:[#allocation3 + $0x18] sm:$0xff]
    %v4088 = vld [vmem:[#allocation3 + $0x20] sm:$0xff]
    %v4089 = vld [vmem:[#allocation3 + $0x28] sm:$0xff]
    %v4090 = vld [vmem:[#allocation3 + $0x30] sm:$0xff]
    %v4091 = vld [vmem:[#allocation3 + $0x38] sm:$0xff]
    %v4092 = vld [vmem:[#allocation3 + $0x40] sm:$0xff]
    %v4093 = vld [vmem:[#allocation3 + $0x48] sm:$0xff]
    %v4094 = vld [vmem:[#allocation3 + $0x50] sm:$0xff]
    %v4095 = vld [vmem:[#allocation3 + $0x58] sm:$0xff]
    %v4096 = vld [vmem:[#allocation3 + $0x60] sm:$0xff]
    %v4097 = vld [vmem:[#allocation3 + $0x68] sm:$0xff]
    %v4098 = vld [vmem:[#allocation3 + $0x70] sm:$0xff]
    %v4099 = vld [vmem:[#allocation3 + $0x78] sm:$0xff]
    %v4100 = vld [vmem:[#allocation3 + $0x80] sm:$0xff]
    %4118 = vrot.lane.b32.xlu0 %v4084, 120
    %v4119 = vpop.permute.xlu0 %4118
    %4120 = vrot.lane.b32.xlu0 %v4085, 120
    %v4121 = vpop.permute.xlu0 %4120
    %4122 = vrot.lane.b32.xlu0 %v4086, 120
    %v4123 = vpop.permute.xlu0 %4122
    %4124 = vrot.lane.b32.xlu0 %v4087, 120
    %v4125 = vpop.permute.xlu0 %4124
    %4126 = vrot.lane.b32.xlu0 %v4088, 120
    %v4127 = vpop.permute.xlu0 %4126
    %4128 = vrot.lane.b32.xlu0 %v4089, 120
    %v4129 = vpop.permute.xlu0 %4128
    %4130 = vrot.lane.b32.xlu0 %v4090, 120
    %v4131 = vpop.permute.xlu0 %4130
    %4132 = vrot.lane.b32.xlu0 %v4091, 120
    %v4133 = vpop.permute.xlu0 %4132
    %4134 = vrot.lane.b32.xlu0 %v4092, 120
    %v4135 = vpop.permute.xlu0 %4134
    %4136 = vrot.lane.b32.xlu0 %v4093, 120
    %v4137 = vpop.permute.xlu0 %4136
    %4138 = vrot.lane.b32.xlu0 %v4094, 120
    %v4139 = vpop.permute.xlu0 %4138
    %4140 = vrot.lane.b32.xlu0 %v4095, 120
    %v4141 = vpop.permute.xlu0 %4140
    %4142 = vrot.lane.b32.xlu0 %v4096, 120
    %v4143 = vpop.permute.xlu0 %4142
    %4144 = vrot.lane.b32.xlu0 %v4097, 120
    %v4145 = vpop.permute.xlu0 %4144
    %4146 = vrot.lane.b32.xlu0 %v4098, 120
    %v4147 = vpop.permute.xlu0 %4146
    %4148 = vrot.lane.b32.xlu0 %v4099, 120
    %v4149 = vpop.permute.xlu0 %4148
    %4150 = vrot.lane.b32.xlu0 %v4100, 120
    %v4151 = vpop.permute.xlu0 %4150
    %vm4152 = vcmask 982016
    %v4153 = vsel %vm4152, %v4119, %v4121
    %v4154 = vsel %vm4152, %v4121, %v4123
    %v4155 = vsel %vm4152, %v4123, %v4125
    %v4156 = vsel %vm4152, %v4125, %v4127
    %v4157 = vsel %vm4152, %v4127, %v4129
    %v4158 = vsel %vm4152, %v4129, %v4131
    %v4159 = vsel %vm4152, %v4131, %v4133
    %v4160 = vsel %vm4152, %v4133, %v4135
    %v4161 = vsel %vm4152, %v4135, %v4137
    %v4162 = vsel %vm4152, %v4137, %v4139
    %v4163 = vsel %vm4152, %v4139, %v4141
    %v4164 = vsel %vm4152, %v4141, %v4143
    %v4165 = vsel %vm4152, %v4143, %v4145
    %v4166 = vsel %vm4152, %v4145, %v4147
    %v4167 = vsel %vm4152, %v4147, %v4149
    %v4168 = vsel %vm4152, %v4149, %v4151
    %4185 = vst [vmem:[#allocation4 + $0x200] sm:$0xff] %v4153
    %4186 = vst [vmem:[#allocation4 + $0x208] sm:$0xff] %v4154
    %4187 = vst [vmem:[#allocation4 + $0x210] sm:$0xff] %v4155
    %4188 = vst [vmem:[#allocation4 + $0x218] sm:$0xff] %v4156
    %4189 = vst [vmem:[#allocation4 + $0x220] sm:$0xff] %v4157
    %4190 = vst [vmem:[#allocation4 + $0x228] sm:$0xff] %v4158
    %4191 = vst [vmem:[#allocation4 + $0x230] sm:$0xff] %v4159
    %4192 = vst [vmem:[#allocation4 + $0x238] sm:$0xff] %v4160
    %4193 = vst [vmem:[#allocation4 + $0x240] sm:$0xff] %v4161
    %4194 = vst [vmem:[#allocation4 + $0x248] sm:$0xff] %v4162
    %4195 = vst [vmem:[#allocation4 + $0x250] sm:$0xff] %v4163
    %4196 = vst [vmem:[#allocation4 + $0x258] sm:$0xff] %v4164
    %4197 = vst [vmem:[#allocation4 + $0x260] sm:$0xff] %v4165
    %4198 = vst [vmem:[#allocation4 + $0x268] sm:$0xff] %v4166
    %4199 = vst [vmem:[#allocation4 + $0x270] sm:$0xff] %v4167
    %4200 = vst [vmem:[#allocation4 + $0x278] sm:$0xff] %v4168
    %v4201 = vld [vmem:[#allocation3] sm:$0xff]
    %v4202 = vld [vmem:[#allocation3 + $0x8] sm:$0xff]
    %v4203 = vld [vmem:[#allocation3 + $0x10] sm:$0xff]
    %v4204 = vld [vmem:[#allocation3 + $0x18] sm:$0xff]
    %v4205 = vld [vmem:[#allocation3 + $0x20] sm:$0xff]
    %v4206 = vld [vmem:[#allocation3 + $0x28] sm:$0xff]
    %v4207 = vld [vmem:[#allocation3 + $0x30] sm:$0xff]
    %v4208 = vld [vmem:[#allocation3 + $0x38] sm:$0xff]
    %v4209 = vld [vmem:[#allocation3 + $0x40] sm:$0xff]
    %v4210 = vld [vmem:[#allocation3 + $0x48] sm:$0xff]
    %v4211 = vld [vmem:[#allocation3 + $0x50] sm:$0xff]
    %v4212 = vld [vmem:[#allocation3 + $0x58] sm:$0xff]
    %v4213 = vld [vmem:[#allocation3 + $0x60] sm:$0xff]
    %v4214 = vld [vmem:[#allocation3 + $0x68] sm:$0xff]
    %v4215 = vld [vmem:[#allocation3 + $0x70] sm:$0xff]
    %v4216 = vld [vmem:[#allocation3 + $0x78] sm:$0xff]
    %v4217 = vld [vmem:[#allocation3 + $0x80] sm:$0xff]
    %4235 = vrot.lane.b32.xlu0 %v4201, 64
    %v4236 = vpop.permute.xlu0 %4235
    %4237 = vrot.lane.b32.xlu0 %v4202, 64
    %v4238 = vpop.permute.xlu0 %4237
    %4239 = vrot.lane.b32.xlu0 %v4203, 64
    %v4240 = vpop.permute.xlu0 %4239
    %4241 = vrot.lane.b32.xlu0 %v4204, 64
    %v4242 = vpop.permute.xlu0 %4241
    %4243 = vrot.lane.b32.xlu0 %v4205, 64
    %v4244 = vpop.permute.xlu0 %4243
    %4245 = vrot.lane.b32.xlu0 %v4206, 64
    %v4246 = vpop.permute.xlu0 %4245
    %4247 = vrot.lane.b32.xlu0 %v4207, 64
    %v4248 = vpop.permute.xlu0 %4247
    %4249 = vrot.lane.b32.xlu0 %v4208, 64
    %v4250 = vpop.permute.xlu0 %4249
    %4251 = vrot.lane.b32.xlu0 %v4209, 64
    %v4252 = vpop.permute.xlu0 %4251
    %4253 = vrot.lane.b32.xlu0 %v4210, 64
    %v4254 = vpop.permute.xlu0 %4253
    %4255 = vrot.lane.b32.xlu0 %v4211, 64
    %v4256 = vpop.permute.xlu0 %4255
    %4257 = vrot.lane.b32.xlu0 %v4212, 64
    %v4258 = vpop.permute.xlu0 %4257
    %4259 = vrot.lane.b32.xlu0 %v4213, 64
    %v4260 = vpop.permute.xlu0 %4259
    %4261 = vrot.lane.b32.xlu0 %v4214, 64
    %v4262 = vpop.permute.xlu0 %4261
    %4263 = vrot.lane.b32.xlu0 %v4215, 64
    %v4264 = vpop.permute.xlu0 %4263
    %4265 = vrot.lane.b32.xlu0 %v4216, 64
    %v4266 = vpop.permute.xlu0 %4265
    %4267 = vrot.lane.b32.xlu0 %v4217, 64
    %v4268 = vpop.permute.xlu0 %4267
    %v4269 = vsel %vm1555, %v4236, %v4238
    %v4270 = vsel %vm1555, %v4238, %v4240
    %v4271 = vsel %vm1555, %v4240, %v4242
    %v4272 = vsel %vm1555, %v4242, %v4244
    %v4273 = vsel %vm1555, %v4244, %v4246
    %v4274 = vsel %vm1555, %v4246, %v4248
    %v4275 = vsel %vm1555, %v4248, %v4250
    %v4276 = vsel %vm1555, %v4250, %v4252
    %v4277 = vsel %vm1555, %v4252, %v4254
    %v4278 = vsel %vm1555, %v4254, %v4256
    %v4279 = vsel %vm1555, %v4256, %v4258
    %v4280 = vsel %vm1555, %v4258, %v4260
    %v4281 = vsel %vm1555, %v4260, %v4262
    %v4282 = vsel %vm1555, %v4262, %v4264
    %v4283 = vsel %vm1555, %v4264, %v4266
    %v4284 = vsel %vm1555, %v4266, %v4268
    %4301 = vst [vmem:[#allocation4 + $0x280] sm:$0xff] %v4269
    %4302 = vst [vmem:[#allocation4 + $0x288] sm:$0xff] %v4270
    %4303 = vst [vmem:[#allocation4 + $0x290] sm:$0xff] %v4271
    %4304 = vst [vmem:[#allocation4 + $0x298] sm:$0xff] %v4272
    %4305 = vst [vmem:[#allocation4 + $0x2a0] sm:$0xff] %v4273
    %4306 = vst [vmem:[#allocation4 + $0x2a8] sm:$0xff] %v4274
    %4307 = vst [vmem:[#allocation4 + $0x2b0] sm:$0xff] %v4275
    %4308 = vst [vmem:[#allocation4 + $0x2b8] sm:$0xff] %v4276
    %4309 = vst [vmem:[#allocation4 + $0x2c0] sm:$0xff] %v4277
    %4310 = vst [vmem:[#allocation4 + $0x2c8] sm:$0xff] %v4278
    %4311 = vst [vmem:[#allocation4 + $0x2d0] sm:$0xff] %v4279
    %4312 = vst [vmem:[#allocation4 + $0x2d8] sm:$0xff] %v4280
    %4313 = vst [vmem:[#allocation4 + $0x2e0] sm:$0xff] %v4281
    %4314 = vst [vmem:[#allocation4 + $0x2e8] sm:$0xff] %v4282
    %4315 = vst [vmem:[#allocation4 + $0x2f0] sm:$0xff] %v4283
    %4316 = vst [vmem:[#allocation4 + $0x2f8] sm:$0xff] %v4284
    %v4317 = vld [vmem:[#allocation3] sm:$0xff]
    %v4318 = vld [vmem:[#allocation3 + $0x8] sm:$0xff]
    %v4319 = vld [vmem:[#allocation3 + $0x10] sm:$0xff]
    %v4320 = vld [vmem:[#allocation3 + $0x18] sm:$0xff]
    %v4321 = vld [vmem:[#allocation3 + $0x20] sm:$0xff]
    %v4322 = vld [vmem:[#allocation3 + $0x28] sm:$0xff]
    %v4323 = vld [vmem:[#allocation3 + $0x30] sm:$0xff]
    %v4324 = vld [vmem:[#allocation3 + $0x38] sm:$0xff]
    %v4325 = vld [vmem:[#allocation3 + $0x40] sm:$0xff]
    %v4326 = vld [vmem:[#allocation3 + $0x48] sm:$0xff]
    %v4327 = vld [vmem:[#allocation3 + $0x50] sm:$0xff]
    %v4328 = vld [vmem:[#allocation3 + $0x58] sm:$0xff]
    %v4329 = vld [vmem:[#allocation3 + $0x60] sm:$0xff]
    %v4330 = vld [vmem:[#allocation3 + $0x68] sm:$0xff]
    %v4331 = vld [vmem:[#allocation3 + $0x70] sm:$0xff]
    %v4332 = vld [vmem:[#allocation3 + $0x78] sm:$0xff]
    %v4333 = vld [vmem:[#allocation3 + $0x80] sm:$0xff]
    %4351 = vrot.lane.b32.xlu0 %v4317, 62
    %v4352 = vpop.permute.xlu0 %4351
    %4353 = vrot.lane.b32.xlu0 %v4318, 62
    %v4354 = vpop.permute.xlu0 %4353
    %4355 = vrot.lane.b32.xlu0 %v4319, 62
    %v4356 = vpop.permute.xlu0 %4355
    %4357 = vrot.lane.b32.xlu0 %v4320, 62
    %v4358 = vpop.permute.xlu0 %4357
    %4359 = vrot.lane.b32.xlu0 %v4321, 62
    %v4360 = vpop.permute.xlu0 %4359
    %4361 = vrot.lane.b32.xlu0 %v4322, 62
    %v4362 = vpop.permute.xlu0 %4361
    %4363 = vrot.lane.b32.xlu0 %v4323, 62
    %v4364 = vpop.permute.xlu0 %4363
    %4365 = vrot.lane.b32.xlu0 %v4324, 62
    %v4366 = vpop.permute.xlu0 %4365
    %4367 = vrot.lane.b32.xlu0 %v4325, 62
    %v4368 = vpop.permute.xlu0 %4367
    %4369 = vrot.lane.b32.xlu0 %v4326, 62
    %v4370 = vpop.permute.xlu0 %4369
    %4371 = vrot.lane.b32.xlu0 %v4327, 62
    %v4372 = vpop.permute.xlu0 %4371
    %4373 = vrot.lane.b32.xlu0 %v4328, 62
    %v4374 = vpop.permute.xlu0 %4373
    %4375 = vrot.lane.b32.xlu0 %v4329, 62
    %v4376 = vpop.permute.xlu0 %4375
    %4377 = vrot.lane.b32.xlu0 %v4330, 62
    %v4378 = vpop.permute.xlu0 %4377
    %4379 = vrot.lane.b32.xlu0 %v4331, 62
    %v4380 = vpop.permute.xlu0 %4379
    %4381 = vrot.lane.b32.xlu0 %v4332, 62
    %v4382 = vpop.permute.xlu0 %4381
    %4383 = vrot.lane.b32.xlu0 %v4333, 62
    %v4384 = vpop.permute.xlu0 %4383
    %v4385 = vsel %vm1797, %v4352, %v4354
    %v4386 = vsel %vm1797, %v4354, %v4356
    %v4387 = vsel %vm1797, %v4356, %v4358
    %v4388 = vsel %vm1797, %v4358, %v4360
    %v4389 = vsel %vm1797, %v4360, %v4362
    %v4390 = vsel %vm1797, %v4362, %v4364
    %v4391 = vsel %vm1797, %v4364, %v4366
    %v4392 = vsel %vm1797, %v4366, %v4368
    %v4393 = vsel %vm1797, %v4368, %v4370
    %v4394 = vsel %vm1797, %v4370, %v4372
    %v4395 = vsel %vm1797, %v4372, %v4374
    %v4396 = vsel %vm1797, %v4374, %v4376
    %v4397 = vsel %vm1797, %v4376, %v4378
    %v4398 = vsel %vm1797, %v4378, %v4380
    %v4399 = vsel %vm1797, %v4380, %v4382
    %v4400 = vsel %vm1797, %v4382, %v4384
    %4417 = vst [vmem:[#allocation4 + $0x300] sm:$0xff] %v4385
    %4418 = vst [vmem:[#allocation4 + $0x308] sm:$0xff] %v4386
    %4419 = vst [vmem:[#allocation4 + $0x310] sm:$0xff] %v4387
    %4420 = vst [vmem:[#allocation4 + $0x318] sm:$0xff] %v4388
    %4421 = vst [vmem:[#allocation4 + $0x320] sm:$0xff] %v4389
    %4422 = vst [vmem:[#allocation4 + $0x328] sm:$0xff] %v4390
    %4423 = vst [vmem:[#allocation4 + $0x330] sm:$0xff] %v4391
    %4424 = vst [vmem:[#allocation4 + $0x338] sm:$0xff] %v4392
    %4425 = vst [vmem:[#allocation4 + $0x340] sm:$0xff] %v4393
    %4426 = vst [vmem:[#allocation4 + $0x348] sm:$0xff] %v4394
    %4427 = vst [vmem:[#allocation4 + $0x350] sm:$0xff] %v4395
    %4428 = vst [vmem:[#allocation4 + $0x358] sm:$0xff] %v4396
    %4429 = vst [vmem:[#allocation4 + $0x360] sm:$0xff] %v4397
    %4430 = vst [vmem:[#allocation4 + $0x368] sm:$0xff] %v4398
    %4431 = vst [vmem:[#allocation4 + $0x370] sm:$0xff] %v4399
    %4432 = vst [vmem:[#allocation4 + $0x378] sm:$0xff] %v4400
    %v4433 = vld [vmem:[#allocation3] sm:$0xff]
    %v4434 = vld [vmem:[#allocation3 + $0x8] sm:$0xff]
    %v4435 = vld [vmem:[#allocation3 + $0x10] sm:$0xff]
    %v4436 = vld [vmem:[#allocation3 + $0x18] sm:$0xff]
    %v4437 = vld [vmem:[#allocation3 + $0x20] sm:$0xff]
    %v4438 = vld [vmem:[#allocation3 + $0x28] sm:$0xff]
    %v4439 = vld [vmem:[#allocation3 + $0x30] sm:$0xff]
    %v4440 = vld [vmem:[#allocation3 + $0x38] sm:$0xff]
    %v4441 = vld [vmem:[#allocation3 + $0x40] sm:$0xff]
    %v4442 = vld [vmem:[#allocation3 + $0x48] sm:$0xff]
    %v4443 = vld [vmem:[#allocation3 + $0x50] sm:$0xff]
    %v4444 = vld [vmem:[#allocation3 + $0x58] sm:$0xff]
    %v4445 = vld [vmem:[#allocation3 + $0x60] sm:$0xff]
    %v4446 = vld [vmem:[#allocation3 + $0x68] sm:$0xff]
    %v4447 = vld [vmem:[#allocation3 + $0x70] sm:$0xff]
    %v4448 = vld [vmem:[#allocation3 + $0x78] sm:$0xff]
    %v4449 = vld [vmem:[#allocation3 + $0x80] sm:$0xff]
    %4467 = vrot.lane.b32.xlu0 %v4433, 60
    %v4468 = vpop.permute.xlu0 %4467
    %4469 = vrot.lane.b32.xlu0 %v4434, 60
    %v4470 = vpop.permute.xlu0 %4469
    %4471 = vrot.lane.b32.xlu0 %v4435, 60
    %v4472 = vpop.permute.xlu0 %4471
    %4473 = vrot.lane.b32.xlu0 %v4436, 60
    %v4474 = vpop.permute.xlu0 %4473
    %4475 = vrot.lane.b32.xlu0 %v4437, 60
    %v4476 = vpop.permute.xlu0 %4475
    %4477 = vrot.lane.b32.xlu0 %v4438, 60
    %v4478 = vpop.permute.xlu0 %4477
    %4479 = vrot.lane.b32.xlu0 %v4439, 60
    %v4480 = vpop.permute.xlu0 %4479
    %4481 = vrot.lane.b32.xlu0 %v4440, 60
    %v4482 = vpop.permute.xlu0 %4481
    %4483 = vrot.lane.b32.xlu0 %v4441, 60
    %v4484 = vpop.permute.xlu0 %4483
    %4485 = vrot.lane.b32.xlu0 %v4442, 60
    %v4486 = vpop.permute.xlu0 %4485
    %4487 = vrot.lane.b32.xlu0 %v4443, 60
    %v4488 = vpop.permute.xlu0 %4487
    %4489 = vrot.lane.b32.xlu0 %v4444, 60
    %v4490 = vpop.permute.xlu0 %4489
    %4491 = vrot.lane.b32.xlu0 %v4445, 60
    %v4492 = vpop.permute.xlu0 %4491
    %4493 = vrot.lane.b32.xlu0 %v4446, 60
    %v4494 = vpop.permute.xlu0 %4493
    %4495 = vrot.lane.b32.xlu0 %v4447, 60
    %v4496 = vpop.permute.xlu0 %4495
    %4497 = vrot.lane.b32.xlu0 %v4448, 60
    %v4498 = vpop.permute.xlu0 %4497
    %4499 = vrot.lane.b32.xlu0 %v4449, 60
    %v4500 = vpop.permute.xlu0 %4499
    %v4501 = vsel %vm2039, %v4468, %v4470
    %v4502 = vsel %vm2039, %v4470, %v4472
    %v4503 = vsel %vm2039, %v4472, %v4474
    %v4504 = vsel %vm2039, %v4474, %v4476
    %v4505 = vsel %vm2039, %v4476, %v4478
    %v4506 = vsel %vm2039, %v4478, %v4480
    %v4507 = vsel %vm2039, %v4480, %v4482
    %v4508 = vsel %vm2039, %v4482, %v4484
    %v4509 = vsel %vm2039, %v4484, %v4486
    %v4510 = vsel %vm2039, %v4486, %v4488
    %v4511 = vsel %vm2039, %v4488, %v4490
    %v4512 = vsel %vm2039, %v4490, %v4492
    %v4513 = vsel %vm2039, %v4492, %v4494
    %v4514 = vsel %vm2039, %v4494, %v4496
    %v4515 = vsel %vm2039, %v4496, %v4498
    %v4516 = vsel %vm2039, %v4498, %v4500
    %4533 = vst [vmem:[#allocation4 + $0x380] sm:$0xff] %v4501
    %4534 = vst [vmem:[#allocation4 + $0x388] sm:$0xff] %v4502
    %4535 = vst [vmem:[#allocation4 + $0x390] sm:$0xff] %v4503
    %4536 = vst [vmem:[#allocation4 + $0x398] sm:$0xff] %v4504
    %4537 = vst [vmem:[#allocation4 + $0x3a0] sm:$0xff] %v4505
    %4538 = vst [vmem:[#allocation4 + $0x3a8] sm:$0xff] %v4506
    %4539 = vst [vmem:[#allocation4 + $0x3b0] sm:$0xff] %v4507
    %4540 = vst [vmem:[#allocation4 + $0x3b8] sm:$0xff] %v4508
    %4541 = vst [vmem:[#allocation4 + $0x3c0] sm:$0xff] %v4509
    %4542 = vst [vmem:[#allocation4 + $0x3c8] sm:$0xff] %v4510
    %4543 = vst [vmem:[#allocation4 + $0x3d0] sm:$0xff] %v4511
    %4544 = vst [vmem:[#allocation4 + $0x3d8] sm:$0xff] %v4512
    %4545 = vst [vmem:[#allocation4 + $0x3e0] sm:$0xff] %v4513
    %4546 = vst [vmem:[#allocation4 + $0x3e8] sm:$0xff] %v4514
    %4547 = vst [vmem:[#allocation4 + $0x3f0] sm:$0xff] %v4515
    %4548 = vst [vmem:[#allocation4 + $0x3f8] sm:$0xff] %v4516
    %v4549 = vld [vmem:[#allocation3] sm:$0xff]
    %v4550 = vld [vmem:[#allocation3 + $0x8] sm:$0xff]
    %v4551 = vld [vmem:[#allocation3 + $0x10] sm:$0xff]
    %v4552 = vld [vmem:[#allocation3 + $0x18] sm:$0xff]
    %v4553 = vld [vmem:[#allocation3 + $0x20] sm:$0xff]
    %v4554 = vld [vmem:[#allocation3 + $0x28] sm:$0xff]
    %v4555 = vld [vmem:[#allocation3 + $0x30] sm:$0xff]
    %v4556 = vld [vmem:[#allocation3 + $0x38] sm:$0xff]
    %v4557 = vld [vmem:[#allocation3 + $0x40] sm:$0xff]
    %v4558 = vld [vmem:[#allocation3 + $0x48] sm:$0xff]
    %v4559 = vld [vmem:[#allocation3 + $0x50] sm:$0xff]
    %v4560 = vld [vmem:[#allocation3 + $0x58] sm:$0xff]
    %v4561 = vld [vmem:[#allocation3 + $0x60] sm:$0xff]
    %v4562 = vld [vmem:[#allocation3 + $0x68] sm:$0xff]
    %v4563 = vld [vmem:[#allocation3 + $0x70] sm:$0xff]
    %v4564 = vld [vmem:[#allocation3 + $0x78] sm:$0xff]
    %v4565 = vld [vmem:[#allocation3 + $0x80] sm:$0xff]
    %4583 = vrot.lane.b32.xlu0 %v4549, 58
    %v4584 = vpop.permute.xlu0 %4583
    %4585 = vrot.lane.b32.xlu0 %v4550, 58
    %v4586 = vpop.permute.xlu0 %4585
    %4587 = vrot.lane.b32.xlu0 %v4551, 58
    %v4588 = vpop.permute.xlu0 %4587
    %4589 = vrot.lane.b32.xlu0 %v4552, 58
    %v4590 = vpop.permute.xlu0 %4589
    %4591 = vrot.lane.b32.xlu0 %v4553, 58
    %v4592 = vpop.permute.xlu0 %4591
    %4593 = vrot.lane.b32.xlu0 %v4554, 58
    %v4594 = vpop.permute.xlu0 %4593
    %4595 = vrot.lane.b32.xlu0 %v4555, 58
    %v4596 = vpop.permute.xlu0 %4595
    %4597 = vrot.lane.b32.xlu0 %v4556, 58
    %v4598 = vpop.permute.xlu0 %4597
    %4599 = vrot.lane.b32.xlu0 %v4557, 58
    %v4600 = vpop.permute.xlu0 %4599
    %4601 = vrot.lane.b32.xlu0 %v4558, 58
    %v4602 = vpop.permute.xlu0 %4601
    %4603 = vrot.lane.b32.xlu0 %v4559, 58
    %v4604 = vpop.permute.xlu0 %4603
    %4605 = vrot.lane.b32.xlu0 %v4560, 58
    %v4606 = vpop.permute.xlu0 %4605
    %4607 = vrot.lane.b32.xlu0 %v4561, 58
    %v4608 = vpop.permute.xlu0 %4607
    %4609 = vrot.lane.b32.xlu0 %v4562, 58
    %v4610 = vpop.permute.xlu0 %4609
    %4611 = vrot.lane.b32.xlu0 %v4563, 58
    %v4612 = vpop.permute.xlu0 %4611
    %4613 = vrot.lane.b32.xlu0 %v4564, 58
    %v4614 = vpop.permute.xlu0 %4613
    %4615 = vrot.lane.b32.xlu0 %v4565, 58
    %v4616 = vpop.permute.xlu0 %4615
    %vm4617 = vcmask 474112
    %v4618 = vsel %vm4617, %v4584, %v4586
    %v4619 = vsel %vm4617, %v4586, %v4588
    %v4620 = vsel %vm4617, %v4588, %v4590
    %v4621 = vsel %vm4617, %v4590, %v4592
    %v4622 = vsel %vm4617, %v4592, %v4594
    %v4623 = vsel %vm4617, %v4594, %v4596
    %v4624 = vsel %vm4617, %v4596, %v4598
    %v4625 = vsel %vm4617, %v4598, %v4600
    %v4626 = vsel %vm4617, %v4600, %v4602
    %v4627 = vsel %vm4617, %v4602, %v4604
    %v4628 = vsel %vm4617, %v4604, %v4606
    %v4629 = vsel %vm4617, %v4606, %v4608
    %v4630 = vsel %vm4617, %v4608, %v4610
    %v4631 = vsel %vm4617, %v4610, %v4612
    %v4632 = vsel %vm4617, %v4612, %v4614
    %v4633 = vsel %vm4617, %v4614, %v4616
    %4650 = vst [vmem:[#allocation4 + $0x400] sm:$0xff] %v4618
    %4651 = vst [vmem:[#allocation4 + $0x408] sm:$0xff] %v4619
    %4652 = vst [vmem:[#allocation4 + $0x410] sm:$0xff] %v4620
    %4653 = vst [vmem:[#allocation4 + $0x418] sm:$0xff] %v4621
    %4654 = vst [vmem:[#allocation4 + $0x420] sm:$0xff] %v4622
    %4655 = vst [vmem:[#allocation4 + $0x428] sm:$0xff] %v4623
    %4656 = vst [vmem:[#allocation4 + $0x430] sm:$0xff] %v4624
    %4657 = vst [vmem:[#allocation4 + $0x438] sm:$0xff] %v4625
    %4658 = vst [vmem:[#allocation4 + $0x440] sm:$0xff] %v4626
    %4659 = vst [vmem:[#allocation4 + $0x448] sm:$0xff] %v4627
    %4660 = vst [vmem:[#allocation4 + $0x450] sm:$0xff] %v4628
    %4661 = vst [vmem:[#allocation4 + $0x458] sm:$0xff] %v4629
    %4662 = vst [vmem:[#allocation4 + $0x460] sm:$0xff] %v4630
    %4663 = vst [vmem:[#allocation4 + $0x468] sm:$0xff] %v4631
    %4664 = vst [vmem:[#allocation4 + $0x470] sm:$0xff] %v4632
    %4665 = vst [vmem:[#allocation4 + $0x478] sm:$0xff] %v4633
    %v4666 = vld [vmem:[#allocation3] sm:$0xff]
    %v4667 = vld [vmem:[#allocation3 + $0x8] sm:$0xff]
    %v4668 = vld [vmem:[#allocation3 + $0x10] sm:$0xff]
    %v4669 = vld [vmem:[#allocation3 + $0x18] sm:$0xff]
    %v4670 = vld [vmem:[#allocation3 + $0x20] sm:$0xff]
    %v4671 = vld [vmem:[#allocation3 + $0x28] sm:$0xff]
    %v4672 = vld [vmem:[#allocation3 + $0x30] sm:$0xff]
    %v4673 = vld [vmem:[#allocation3 + $0x38] sm:$0xff]
    %v4674 = vld [vmem:[#allocation3 + $0x40] sm:$0xff]
    %v4675 = vld [vmem:[#allocation3 + $0x48] sm:$0xff]
    %v4676 = vld [vmem:[#allocation3 + $0x50] sm:$0xff]
    %v4677 = vld [vmem:[#allocation3 + $0x58] sm:$0xff]
    %v4678 = vld [vmem:[#allocation3 + $0x60] sm:$0xff]
    %v4679 = vld [vmem:[#allocation3 + $0x68] sm:$0xff]
    %v4680 = vld [vmem:[#allocation3 + $0x70] sm:$0xff]
    %v4681 = vld [vmem:[#allocation3 + $0x78] sm:$0xff]
    %v4682 = vld [vmem:[#allocation3 + $0x80] sm:$0xff]
    %4700 = vrot.lane.b32.xlu0 %v4666, 56
    %v4701 = vpop.permute.xlu0 %4700
    %4702 = vrot.lane.b32.xlu0 %v4667, 56
    %v4703 = vpop.permute.xlu0 %4702
    %4704 = vrot.lane.b32.xlu0 %v4668, 56
    %v4705 = vpop.permute.xlu0 %4704
    %4706 = vrot.lane.b32.xlu0 %v4669, 56
    %v4707 = vpop.permute.xlu0 %4706
    %4708 = vrot.lane.b32.xlu0 %v4670, 56
    %v4709 = vpop.permute.xlu0 %4708
    %4710 = vrot.lane.b32.xlu0 %v4671, 56
    %v4711 = vpop.permute.xlu0 %4710
    %4712 = vrot.lane.b32.xlu0 %v4672, 56
    %v4713 = vpop.permute.xlu0 %4712
    %4714 = vrot.lane.b32.xlu0 %v4673, 56
    %v4715 = vpop.permute.xlu0 %4714
    %4716 = vrot.lane.b32.xlu0 %v4674, 56
    %v4717 = vpop.permute.xlu0 %4716
    %4718 = vrot.lane.b32.xlu0 %v4675, 56
    %v4719 = vpop.permute.xlu0 %4718
    %4720 = vrot.lane.b32.xlu0 %v4676, 56
    %v4721 = vpop.permute.xlu0 %4720
    %4722 = vrot.lane.b32.xlu0 %v4677, 56
    %v4723 = vpop.permute.xlu0 %4722
    %4724 = vrot.lane.b32.xlu0 %v4678, 56
    %v4725 = vpop.permute.xlu0 %4724
    %4726 = vrot.lane.b32.xlu0 %v4679, 56
    %v4727 = vpop.permute.xlu0 %4726
    %4728 = vrot.lane.b32.xlu0 %v4680, 56
    %v4729 = vpop.permute.xlu0 %4728
    %4730 = vrot.lane.b32.xlu0 %v4681, 56
    %v4731 = vpop.permute.xlu0 %4730
    %4732 = vrot.lane.b32.xlu0 %v4682, 56
    %v4733 = vpop.permute.xlu0 %4732
    %vm4734 = vcmask 457728
    %v4735 = vsel %vm4734, %v4701, %v4703
    %v4736 = vsel %vm4734, %v4703, %v4705
    %v4737 = vsel %vm4734, %v4705, %v4707
    %v4738 = vsel %vm4734, %v4707, %v4709
    %v4739 = vsel %vm4734, %v4709, %v4711
    %v4740 = vsel %vm4734, %v4711, %v4713
    %v4741 = vsel %vm4734, %v4713, %v4715
    %v4742 = vsel %vm4734, %v4715, %v4717
    %v4743 = vsel %vm4734, %v4717, %v4719
    %v4744 = vsel %vm4734, %v4719, %v4721
    %v4745 = vsel %vm4734, %v4721, %v4723
    %v4746 = vsel %vm4734, %v4723, %v4725
    %v4747 = vsel %vm4734, %v4725, %v4727
    %v4748 = vsel %vm4734, %v4727, %v4729
    %v4749 = vsel %vm4734, %v4729, %v4731
    %v4750 = vsel %vm4734, %v4731, %v4733
    %4767 = vst [vmem:[#allocation4 + $0x480] sm:$0xff] %v4735
    %4768 = vst [vmem:[#allocation4 + $0x488] sm:$0xff] %v4736
    %4769 = vst [vmem:[#allocation4 + $0x490] sm:$0xff] %v4737
    %4770 = vst [vmem:[#allocation4 + $0x498] sm:$0xff] %v4738
    %4771 = vst [vmem:[#allocation4 + $0x4a0] sm:$0xff] %v4739
    %4772 = vst [vmem:[#allocation4 + $0x4a8] sm:$0xff] %v4740
    %4773 = vst [vmem:[#allocation4 + $0x4b0] sm:$0xff] %v4741
    %4774 = vst [vmem:[#allocation4 + $0x4b8] sm:$0xff] %v4742
    %4775 = vst [vmem:[#allocation4 + $0x4c0] sm:$0xff] %v4743
    %4776 = vst [vmem:[#allocation4 + $0x4c8] sm:$0xff] %v4744
    %4777 = vst [vmem:[#allocation4 + $0x4d0] sm:$0xff] %v4745
    %4778 = vst [vmem:[#allocation4 + $0x4d8] sm:$0xff] %v4746
    %4779 = vst [vmem:[#allocation4 + $0x4e0] sm:$0xff] %v4747
    %4780 = vst [vmem:[#allocation4 + $0x4e8] sm:$0xff] %v4748
    %4781 = vst [vmem:[#allocation4 + $0x4f0] sm:$0xff] %v4749
    %4782 = vst [vmem:[#allocation4 + $0x4f8] sm:$0xff] %v4750
    %v4783 = vld [vmem:[#allocation3 + $0x8] sm:$0xff]
    %v4784 = vld [vmem:[#allocation3 + $0x10] sm:$0xff]
    %v4785 = vld [vmem:[#allocation3 + $0x18] sm:$0xff]
    %v4786 = vld [vmem:[#allocation3 + $0x20] sm:$0xff]
    %v4787 = vld [vmem:[#allocation3 + $0x28] sm:$0xff]
    %v4788 = vld [vmem:[#allocation3 + $0x30] sm:$0xff]
    %v4789 = vld [vmem:[#allocation3 + $0x38] sm:$0xff]
    %v4790 = vld [vmem:[#allocation3 + $0x40] sm:$0xff]
    %v4791 = vld [vmem:[#allocation3 + $0x48] sm:$0xff]
    %v4792 = vld [vmem:[#allocation3 + $0x50] sm:$0xff]
    %v4793 = vld [vmem:[#allocation3 + $0x58] sm:$0xff]
    %v4794 = vld [vmem:[#allocation3 + $0x60] sm:$0xff]
    %v4795 = vld [vmem:[#allocation3 + $0x68] sm:$0xff]
    %v4796 = vld [vmem:[#allocation3 + $0x70] sm:$0xff]
    %v4797 = vld [vmem:[#allocation3 + $0x78] sm:$0xff]
    %v4798 = vld [vmem:[#allocation3 + $0x80] sm:$0xff]
    %4799 = vst [vmem:[#allocation4 + $0x500] sm:$0xff] %v4783
    %4800 = vst [vmem:[#allocation4 + $0x508] sm:$0xff] %v4784
    %4801 = vst [vmem:[#allocation4 + $0x510] sm:$0xff] %v4785
    %4802 = vst [vmem:[#allocation4 + $0x518] sm:$0xff] %v4786
    %4803 = vst [vmem:[#allocation4 + $0x520] sm:$0xff] %v4787
    %4804 = vst [vmem:[#allocation4 + $0x528] sm:$0xff] %v4788
    %4805 = vst [vmem:[#allocation4 + $0x530] sm:$0xff] %v4789
    %4806 = vst [vmem:[#allocation4 + $0x538] sm:$0xff] %v4790
    %4807 = vst [vmem:[#allocation4 + $0x540] sm:$0xff] %v4791
    %4808 = vst [vmem:[#allocation4 + $0x548] sm:$0xff] %v4792
    %4809 = vst [vmem:[#allocation4 + $0x550] sm:$0xff] %v4793
    %4810 = vst [vmem:[#allocation4 + $0x558] sm:$0xff] %v4794
    %4811 = vst [vmem:[#allocation4 + $0x560] sm:$0xff] %v4795
    %4812 = vst [vmem:[#allocation4 + $0x568] sm:$0xff] %v4796
    %4813 = vst [vmem:[#allocation4 + $0x570] sm:$0xff] %v4797
    %4814 = vst [vmem:[#allocation4 + $0x578] sm:$0xff] %v4798
    %v4815 = vld [vmem:[#allocation3 + $0x8] sm:$0xff]
    %v4816 = vld [vmem:[#allocation3 + $0x10] sm:$0xff]
    %v4817 = vld [vmem:[#allocation3 + $0x18] sm:$0xff]
    %v4818 = vld [vmem:[#allocation3 + $0x20] sm:$0xff]
    %v4819 = vld [vmem:[#allocation3 + $0x28] sm:$0xff]
    %v4820 = vld [vmem:[#allocation3 + $0x30] sm:$0xff]
    %v4821 = vld [vmem:[#allocation3 + $0x38] sm:$0xff]
    %v4822 = vld [vmem:[#allocation3 + $0x40] sm:$0xff]
    %v4823 = vld [vmem:[#allocation3 + $0x48] sm:$0xff]
    %v4824 = vld [vmem:[#allocation3 + $0x50] sm:$0xff]
    %v4825 = vld [vmem:[#allocation3 + $0x58] sm:$0xff]
    %v4826 = vld [vmem:[#allocation3 + $0x60] sm:$0xff]
    %v4827 = vld [vmem:[#allocation3 + $0x68] sm:$0xff]
    %v4828 = vld [vmem:[#allocation3 + $0x70] sm:$0xff]
    %v4829 = vld [vmem:[#allocation3 + $0x78] sm:$0xff]
    %v4830 = vld [vmem:[#allocation3 + $0x80] sm:$0xff]
    %v4831 = vld [vmem:[#allocation3 + $0x88] sm:$0xff]
    %4849 = vrot.lane.b32.xlu0 %v4815, 126
    %v4850 = vpop.permute.xlu0 %4849
    %4851 = vrot.lane.b32.xlu0 %v4816, 126
    %v4852 = vpop.permute.xlu0 %4851
    %4853 = vrot.lane.b32.xlu0 %v4817, 126
    %v4854 = vpop.permute.xlu0 %4853
    %4855 = vrot.lane.b32.xlu0 %v4818, 126
    %v4856 = vpop.permute.xlu0 %4855
    %4857 = vrot.lane.b32.xlu0 %v4819, 126
    %v4858 = vpop.permute.xlu0 %4857
    %4859 = vrot.lane.b32.xlu0 %v4820, 126
    %v4860 = vpop.permute.xlu0 %4859
    %4861 = vrot.lane.b32.xlu0 %v4821, 126
    %v4862 = vpop.permute.xlu0 %4861
    %4863 = vrot.lane.b32.xlu0 %v4822, 126
    %v4864 = vpop.permute.xlu0 %4863
    %4865 = vrot.lane.b32.xlu0 %v4823, 126
    %v4866 = vpop.permute.xlu0 %4865
    %4867 = vrot.lane.b32.xlu0 %v4824, 126
    %v4868 = vpop.permute.xlu0 %4867
    %4869 = vrot.lane.b32.xlu0 %v4825, 126
    %v4870 = vpop.permute.xlu0 %4869
    %4871 = vrot.lane.b32.xlu0 %v4826, 126
    %v4872 = vpop.permute.xlu0 %4871
    %4873 = vrot.lane.b32.xlu0 %v4827, 126
    %v4874 = vpop.permute.xlu0 %4873
    %4875 = vrot.lane.b32.xlu0 %v4828, 126
    %v4876 = vpop.permute.xlu0 %4875
    %4877 = vrot.lane.b32.xlu0 %v4829, 126
    %v4878 = vpop.permute.xlu0 %4877
    %4879 = vrot.lane.b32.xlu0 %v4830, 126
    %v4880 = vpop.permute.xlu0 %4879
    %4881 = vrot.lane.b32.xlu0 %v4831, 126
    %v4882 = vpop.permute.xlu0 %4881
    %v4883 = vsel %vm587, %v4850, %v4852
    %v4884 = vsel %vm587, %v4852, %v4854
    %v4885 = vsel %vm587, %v4854, %v4856
    %v4886 = vsel %vm587, %v4856, %v4858
    %v4887 = vsel %vm587, %v4858, %v4860
    %v4888 = vsel %vm587, %v4860, %v4862
    %v4889 = vsel %vm587, %v4862, %v4864
    %v4890 = vsel %vm587, %v4864, %v4866
    %v4891 = vsel %vm587, %v4866, %v4868
    %v4892 = vsel %vm587, %v4868, %v4870
    %v4893 = vsel %vm587, %v4870, %v4872
    %v4894 = vsel %vm587, %v4872, %v4874
    %v4895 = vsel %vm587, %v4874, %v4876
    %v4896 = vsel %vm587, %v4876, %v4878
    %v4897 = vsel %vm587, %v4878, %v4880
    %v4898 = vsel %vm587, %v4880, %v4882
    %4915 = vst [vmem:[#allocation4 + $0x580] sm:$0xff] %v4883
    %4916 = vst [vmem:[#allocation4 + $0x588] sm:$0xff] %v4884
    %4917 = vst [vmem:[#allocation4 + $0x590] sm:$0xff] %v4885
    %4918 = vst [vmem:[#allocation4 + $0x598] sm:$0xff] %v4886
    %4919 = vst [vmem:[#allocation4 + $0x5a0] sm:$0xff] %v4887
    %4920 = vst [vmem:[#allocation4 + $0x5a8] sm:$0xff] %v4888
    %4921 = vst [vmem:[#allocation4 + $0x5b0] sm:$0xff] %v4889
    %4922 = vst [vmem:[#allocation4 + $0x5b8] sm:$0xff] %v4890
    %4923 = vst [vmem:[#allocation4 + $0x5c0] sm:$0xff] %v4891
    %4924 = vst [vmem:[#allocation4 + $0x5c8] sm:$0xff] %v4892
    %4925 = vst [vmem:[#allocation4 + $0x5d0] sm:$0xff] %v4893
    %4926 = vst [vmem:[#allocation4 + $0x5d8] sm:$0xff] %v4894
    %4927 = vst [vmem:[#allocation4 + $0x5e0] sm:$0xff] %v4895
    %4928 = vst [vmem:[#allocation4 + $0x5e8] sm:$0xff] %v4896
    %4929 = vst [vmem:[#allocation4 + $0x5f0] sm:$0xff] %v4897
    %4930 = vst [vmem:[#allocation4 + $0x5f8] sm:$0xff] %v4898
    %v4931 = vld [vmem:[#allocation3 + $0x8] sm:$0xff]
    %v4932 = vld [vmem:[#allocation3 + $0x10] sm:$0xff]
    %v4933 = vld [vmem:[#allocation3 + $0x18] sm:$0xff]
    %v4934 = vld [vmem:[#allocation3 + $0x20] sm:$0xff]
    %v4935 = vld [vmem:[#allocation3 + $0x28] sm:$0xff]
    %v4936 = vld [vmem:[#allocation3 + $0x30] sm:$0xff]
    %v4937 = vld [vmem:[#allocation3 + $0x38] sm:$0xff]
    %v4938 = vld [vmem:[#allocation3 + $0x40] sm:$0xff]
    %v4939 = vld [vmem:[#allocation3 + $0x48] sm:$0xff]
    %v4940 = vld [vmem:[#allocation3 + $0x50] sm:$0xff]
    %v4941 = vld [vmem:[#allocation3 + $0x58] sm:$0xff]
    %v4942 = vld [vmem:[#allocation3 + $0x60] sm:$0xff]
    %v4943 = vld [vmem:[#allocation3 + $0x68] sm:$0xff]
    %v4944 = vld [vmem:[#allocation3 + $0x70] sm:$0xff]
    %v4945 = vld [vmem:[#allocation3 + $0x78] sm:$0xff]
    %v4946 = vld [vmem:[#allocation3 + $0x80] sm:$0xff]
    %v4947 = vld [vmem:[#allocation3 + $0x88] sm:$0xff]
    %4965 = vrot.lane.b32.xlu0 %v4931, 124
    %v4966 = vpop.permute.xlu0 %4965
    %4967 = vrot.lane.b32.xlu0 %v4932, 124
    %v4968 = vpop.permute.xlu0 %4967
    %4969 = vrot.lane.b32.xlu0 %v4933, 124
    %v4970 = vpop.permute.xlu0 %4969
    %4971 = vrot.lane.b32.xlu0 %v4934, 124
    %v4972 = vpop.permute.xlu0 %4971
    %4973 = vrot.lane.b32.xlu0 %v4935, 124
    %v4974 = vpop.permute.xlu0 %4973
    %4975 = vrot.lane.b32.xlu0 %v4936, 124
    %v4976 = vpop.permute.xlu0 %4975
    %4977 = vrot.lane.b32.xlu0 %v4937, 124
    %v4978 = vpop.permute.xlu0 %4977
    %4979 = vrot.lane.b32.xlu0 %v4938, 124
    %v4980 = vpop.permute.xlu0 %4979
    %4981 = vrot.lane.b32.xlu0 %v4939, 124
    %v4982 = vpop.permute.xlu0 %4981
    %4983 = vrot.lane.b32.xlu0 %v4940, 124
    %v4984 = vpop.permute.xlu0 %4983
    %4985 = vrot.lane.b32.xlu0 %v4941, 124
    %v4986 = vpop.permute.xlu0 %4985
    %4987 = vrot.lane.b32.xlu0 %v4942, 124
    %v4988 = vpop.permute.xlu0 %4987
    %4989 = vrot.lane.b32.xlu0 %v4943, 124
    %v4990 = vpop.permute.xlu0 %4989
    %4991 = vrot.lane.b32.xlu0 %v4944, 124
    %v4992 = vpop.permute.xlu0 %4991
    %4993 = vrot.lane.b32.xlu0 %v4945, 124
    %v4994 = vpop.permute.xlu0 %4993
    %4995 = vrot.lane.b32.xlu0 %v4946, 124
    %v4996 = vpop.permute.xlu0 %4995
    %4997 = vrot.lane.b32.xlu0 %v4947, 124
    %v4998 = vpop.permute.xlu0 %4997
    %v4999 = vsel %vm829, %v4966, %v4968
    %v5000 = vsel %vm829, %v4968, %v4970
    %v5001 = vsel %vm829, %v4970, %v4972
    %v5002 = vsel %vm829, %v4972, %v4974
    %v5003 = vsel %vm829, %v4974, %v4976
    %v5004 = vsel %vm829, %v4976, %v4978
    %v5005 = vsel %vm829, %v4978, %v4980
    %v5006 = vsel %vm829, %v4980, %v4982
    %v5007 = vsel %vm829, %v4982, %v4984
    %v5008 = vsel %vm829, %v4984, %v4986
    %v5009 = vsel %vm829, %v4986, %v4988
    %v5010 = vsel %vm829, %v4988, %v4990
    %v5011 = vsel %vm829, %v4990, %v4992
    %v5012 = vsel %vm829, %v4992, %v4994
    %v5013 = vsel %vm829, %v4994, %v4996
    %v5014 = vsel %vm829, %v4996, %v4998
    %5031 = vst [vmem:[#allocation4 + $0x600] sm:$0xff] %v4999
    %5032 = vst [vmem:[#allocation4 + $0x608] sm:$0xff] %v5000
    %5033 = vst [vmem:[#allocation4 + $0x610] sm:$0xff] %v5001
    %5034 = vst [vmem:[#allocation4 + $0x618] sm:$0xff] %v5002
    %5035 = vst [vmem:[#allocation4 + $0x620] sm:$0xff] %v5003
    %5036 = vst [vmem:[#allocation4 + $0x628] sm:$0xff] %v5004
    %5037 = vst [vmem:[#allocation4 + $0x630] sm:$0xff] %v5005
    %5038 = vst [vmem:[#allocation4 + $0x638] sm:$0xff] %v5006
    %5039 = vst [vmem:[#allocation4 + $0x640] sm:$0xff] %v5007
    %5040 = vst [vmem:[#allocation4 + $0x648] sm:$0xff] %v5008
    %5041 = vst [vmem:[#allocation4 + $0x650] sm:$0xff] %v5009
    %5042 = vst [vmem:[#allocation4 + $0x658] sm:$0xff] %v5010
    %5043 = vst [vmem:[#allocation4 + $0x660] sm:$0xff] %v5011
    %5044 = vst [vmem:[#allocation4 + $0x668] sm:$0xff] %v5012
    %5045 = vst [vmem:[#allocation4 + $0x670] sm:$0xff] %v5013
    %5046 = vst [vmem:[#allocation4 + $0x678] sm:$0xff] %v5014
    %v5047 = vld [vmem:[#allocation3 + $0x8] sm:$0xff]
    %v5048 = vld [vmem:[#allocation3 + $0x10] sm:$0xff]
    %v5049 = vld [vmem:[#allocation3 + $0x18] sm:$0xff]
    %v5050 = vld [vmem:[#allocation3 + $0x20] sm:$0xff]
    %v5051 = vld [vmem:[#allocation3 + $0x28] sm:$0xff]
    %v5052 = vld [vmem:[#allocation3 + $0x30] sm:$0xff]
    %v5053 = vld [vmem:[#allocation3 + $0x38] sm:$0xff]
    %v5054 = vld [vmem:[#allocation3 + $0x40] sm:$0xff]
    %v5055 = vld [vmem:[#allocation3 + $0x48] sm:$0xff]
    %v5056 = vld [vmem:[#allocation3 + $0x50] sm:$0xff]
    %v5057 = vld [vmem:[#allocation3 + $0x58] sm:$0xff]
    %v5058 = vld [vmem:[#allocation3 + $0x60] sm:$0xff]
    %v5059 = vld [vmem:[#allocation3 + $0x68] sm:$0xff]
    %v5060 = vld [vmem:[#allocation3 + $0x70] sm:$0xff]
    %v5061 = vld [vmem:[#allocation3 + $0x78] sm:$0xff]
    %v5062 = vld [vmem:[#allocation3 + $0x80] sm:$0xff]
    %v5063 = vld [vmem:[#allocation3 + $0x88] sm:$0xff]
    %5081 = vrot.lane.b32.xlu0 %v5047, 122
    %v5082 = vpop.permute.xlu0 %5081
    %5083 = vrot.lane.b32.xlu0 %v5048, 122
    %v5084 = vpop.permute.xlu0 %5083
    %5085 = vrot.lane.b32.xlu0 %v5049, 122
    %v5086 = vpop.permute.xlu0 %5085
    %5087 = vrot.lane.b32.xlu0 %v5050, 122
    %v5088 = vpop.permute.xlu0 %5087
    %5089 = vrot.lane.b32.xlu0 %v5051, 122
    %v5090 = vpop.permute.xlu0 %5089
    %5091 = vrot.lane.b32.xlu0 %v5052, 122
    %v5092 = vpop.permute.xlu0 %5091
    %5093 = vrot.lane.b32.xlu0 %v5053, 122
    %v5094 = vpop.permute.xlu0 %5093
    %5095 = vrot.lane.b32.xlu0 %v5054, 122
    %v5096 = vpop.permute.xlu0 %5095
    %5097 = vrot.lane.b32.xlu0 %v5055, 122
    %v5098 = vpop.permute.xlu0 %5097
    %5099 = vrot.lane.b32.xlu0 %v5056, 122
    %v5100 = vpop.permute.xlu0 %5099
    %5101 = vrot.lane.b32.xlu0 %v5057, 122
    %v5102 = vpop.permute.xlu0 %5101
    %5103 = vrot.lane.b32.xlu0 %v5058, 122
    %v5104 = vpop.permute.xlu0 %5103
    %5105 = vrot.lane.b32.xlu0 %v5059, 122
    %v5106 = vpop.permute.xlu0 %5105
    %5107 = vrot.lane.b32.xlu0 %v5060, 122
    %v5108 = vpop.permute.xlu0 %5107
    %5109 = vrot.lane.b32.xlu0 %v5061, 122
    %v5110 = vpop.permute.xlu0 %5109
    %5111 = vrot.lane.b32.xlu0 %v5062, 122
    %v5112 = vpop.permute.xlu0 %5111
    %5113 = vrot.lane.b32.xlu0 %v5063, 122
    %v5114 = vpop.permute.xlu0 %5113
    %v5115 = vsel %vm4035, %v5082, %v5084
    %v5116 = vsel %vm4035, %v5084, %v5086
    %v5117 = vsel %vm4035, %v5086, %v5088
    %v5118 = vsel %vm4035, %v5088, %v5090
    %v5119 = vsel %vm4035, %v5090, %v5092
    %v5120 = vsel %vm4035, %v5092, %v5094
    %v5121 = vsel %vm4035, %v5094, %v5096
    %v5122 = vsel %vm4035, %v5096, %v5098
    %v5123 = vsel %vm4035, %v5098, %v5100
    %v5124 = vsel %vm4035, %v5100, %v5102
    %v5125 = vsel %vm4035, %v5102, %v5104
    %v5126 = vsel %vm4035, %v5104, %v5106
    %v5127 = vsel %vm4035, %v5106, %v5108
    %v5128 = vsel %vm4035, %v5108, %v5110
    %v5129 = vsel %vm4035, %v5110, %v5112
    %v5130 = vsel %vm4035, %v5112, %v5114
    %5147 = vst [vmem:[#allocation4 + $0x680] sm:$0xff] %v5115
    %5148 = vst [vmem:[#allocation4 + $0x688] sm:$0xff] %v5116
    %5149 = vst [vmem:[#allocation4 + $0x690] sm:$0xff] %v5117
    %5150 = vst [vmem:[#allocation4 + $0x698] sm:$0xff] %v5118
    %5151 = vst [vmem:[#allocation4 + $0x6a0] sm:$0xff] %v5119
    %5152 = vst [vmem:[#allocation4 + $0x6a8] sm:$0xff] %v5120
    %5153 = vst [vmem:[#allocation4 + $0x6b0] sm:$0xff] %v5121
    %5154 = vst [vmem:[#allocation4 + $0x6b8] sm:$0xff] %v5122
    %5155 = vst [vmem:[#allocation4 + $0x6c0] sm:$0xff] %v5123
    %5156 = vst [vmem:[#allocation4 + $0x6c8] sm:$0xff] %v5124
    %5157 = vst [vmem:[#allocation4 + $0x6d0] sm:$0xff] %v5125
    %5158 = vst [vmem:[#allocation4 + $0x6d8] sm:$0xff] %v5126
    %5159 = vst [vmem:[#allocation4 + $0x6e0] sm:$0xff] %v5127
    %5160 = vst [vmem:[#allocation4 + $0x6e8] sm:$0xff] %v5128
    %5161 = vst [vmem:[#allocation4 + $0x6f0] sm:$0xff] %v5129
    %5162 = vst [vmem:[#allocation4 + $0x6f8] sm:$0xff] %v5130
    %v5163 = vld [vmem:[#allocation3 + $0x8] sm:$0xff]
    %v5164 = vld [vmem:[#allocation3 + $0x10] sm:$0xff]
    %v5165 = vld [vmem:[#allocation3 + $0x18] sm:$0xff]
    %v5166 = vld [vmem:[#allocation3 + $0x20] sm:$0xff]
    %v5167 = vld [vmem:[#allocation3 + $0x28] sm:$0xff]
    %v5168 = vld [vmem:[#allocation3 + $0x30] sm:$0xff]
    %v5169 = vld [vmem:[#allocation3 + $0x38] sm:$0xff]
    %v5170 = vld [vmem:[#allocation3 + $0x40] sm:$0xff]
    %v5171 = vld [vmem:[#allocation3 + $0x48] sm:$0xff]
    %v5172 = vld [vmem:[#allocation3 + $0x50] sm:$0xff]
    %v5173 = vld [vmem:[#allocation3 + $0x58] sm:$0xff]
    %v5174 = vld [vmem:[#allocation3 + $0x60] sm:$0xff]
    %v5175 = vld [vmem:[#allocation3 + $0x68] sm:$0xff]
    %v5176 = vld [vmem:[#allocation3 + $0x70] sm:$0xff]
    %v5177 = vld [vmem:[#allocation3 + $0x78] sm:$0xff]
    %v5178 = vld [vmem:[#allocation3 + $0x80] sm:$0xff]
    %v5179 = vld [vmem:[#allocation3 + $0x88] sm:$0xff]
    %5197 = vrot.lane.b32.xlu0 %v5163, 120
    %v5198 = vpop.permute.xlu0 %5197
    %5199 = vrot.lane.b32.xlu0 %v5164, 120
    %v5200 = vpop.permute.xlu0 %5199
    %5201 = vrot.lane.b32.xlu0 %v5165, 120
    %v5202 = vpop.permute.xlu0 %5201
    %5203 = vrot.lane.b32.xlu0 %v5166, 120
    %v5204 = vpop.permute.xlu0 %5203
    %5205 = vrot.lane.b32.xlu0 %v5167, 120
    %v5206 = vpop.permute.xlu0 %5205
    %5207 = vrot.lane.b32.xlu0 %v5168, 120
    %v5208 = vpop.permute.xlu0 %5207
    %5209 = vrot.lane.b32.xlu0 %v5169, 120
    %v5210 = vpop.permute.xlu0 %5209
    %5211 = vrot.lane.b32.xlu0 %v5170, 120
    %v5212 = vpop.permute.xlu0 %5211
    %5213 = vrot.lane.b32.xlu0 %v5171, 120
    %v5214 = vpop.permute.xlu0 %5213
    %5215 = vrot.lane.b32.xlu0 %v5172, 120
    %v5216 = vpop.permute.xlu0 %5215
    %5217 = vrot.lane.b32.xlu0 %v5173, 120
    %v5218 = vpop.permute.xlu0 %5217
    %5219 = vrot.lane.b32.xlu0 %v5174, 120
    %v5220 = vpop.permute.xlu0 %5219
    %5221 = vrot.lane.b32.xlu0 %v5175, 120
    %v5222 = vpop.permute.xlu0 %5221
    %5223 = vrot.lane.b32.xlu0 %v5176, 120
    %v5224 = vpop.permute.xlu0 %5223
    %5225 = vrot.lane.b32.xlu0 %v5177, 120
    %v5226 = vpop.permute.xlu0 %5225
    %5227 = vrot.lane.b32.xlu0 %v5178, 120
    %v5228 = vpop.permute.xlu0 %5227
    %5229 = vrot.lane.b32.xlu0 %v5179, 120
    %v5230 = vpop.permute.xlu0 %5229
    %v5231 = vsel %vm4152, %v5198, %v5200
    %v5232 = vsel %vm4152, %v5200, %v5202
    %v5233 = vsel %vm4152, %v5202, %v5204
    %v5234 = vsel %vm4152, %v5204, %v5206
    %v5235 = vsel %vm4152, %v5206, %v5208
    %v5236 = vsel %vm4152, %v5208, %v5210
    %v5237 = vsel %vm4152, %v5210, %v5212
    %v5238 = vsel %vm4152, %v5212, %v5214
    %v5239 = vsel %vm4152, %v5214, %v5216
    %v5240 = vsel %vm4152, %v5216, %v5218
    %v5241 = vsel %vm4152, %v5218, %v5220
    %v5242 = vsel %vm4152, %v5220, %v5222
    %v5243 = vsel %vm4152, %v5222, %v5224
    %v5244 = vsel %vm4152, %v5224, %v5226
    %v5245 = vsel %vm4152, %v5226, %v5228
    %v5246 = vsel %vm4152, %v5228, %v5230
    %5263 = vst [vmem:[#allocation4 + $0x700] sm:$0xff] %v5231
    %5264 = vst [vmem:[#allocation4 + $0x708] sm:$0xff] %v5232
    %5265 = vst [vmem:[#allocation4 + $0x710] sm:$0xff] %v5233
    %5266 = vst [vmem:[#allocation4 + $0x718] sm:$0xff] %v5234
    %5267 = vst [vmem:[#allocation4 + $0x720] sm:$0xff] %v5235
    %5268 = vst [vmem:[#allocation4 + $0x728] sm:$0xff] %v5236
    %5269 = vst [vmem:[#allocation4 + $0x730] sm:$0xff] %v5237
    %5270 = vst [vmem:[#allocation4 + $0x738] sm:$0xff] %v5238
    %5271 = vst [vmem:[#allocation4 + $0x740] sm:$0xff] %v5239
    %5272 = vst [vmem:[#allocation4 + $0x748] sm:$0xff] %v5240
    %5273 = vst [vmem:[#allocation4 + $0x750] sm:$0xff] %v5241
    %5274 = vst [vmem:[#allocation4 + $0x758] sm:$0xff] %v5242
    %5275 = vst [vmem:[#allocation4 + $0x760] sm:$0xff] %v5243
    %5276 = vst [vmem:[#allocation4 + $0x768] sm:$0xff] %v5244
    %5277 = vst [vmem:[#allocation4 + $0x770] sm:$0xff] %v5245
    %5278 = vst [vmem:[#allocation4 + $0x778] sm:$0xff] %v5246
    %v5279 = vld [vmem:[#allocation3 + $0x8] sm:$0xff]
    %v5280 = vld [vmem:[#allocation3 + $0x10] sm:$0xff]
    %v5281 = vld [vmem:[#allocation3 + $0x18] sm:$0xff]
    %v5282 = vld [vmem:[#allocation3 + $0x20] sm:$0xff]
    %v5283 = vld [vmem:[#allocation3 + $0x28] sm:$0xff]
    %v5284 = vld [vmem:[#allocation3 + $0x30] sm:$0xff]
    %v5285 = vld [vmem:[#allocation3 + $0x38] sm:$0xff]
    %v5286 = vld [vmem:[#allocation3 + $0x40] sm:$0xff]
    %v5287 = vld [vmem:[#allocation3 + $0x48] sm:$0xff]
    %v5288 = vld [vmem:[#allocation3 + $0x50] sm:$0xff]
    %v5289 = vld [vmem:[#allocation3 + $0x58] sm:$0xff]
    %v5290 = vld [vmem:[#allocation3 + $0x60] sm:$0xff]
    %v5291 = vld [vmem:[#allocation3 + $0x68] sm:$0xff]
    %v5292 = vld [vmem:[#allocation3 + $0x70] sm:$0xff]
    %v5293 = vld [vmem:[#allocation3 + $0x78] sm:$0xff]
    %v5294 = vld [vmem:[#allocation3 + $0x80] sm:$0xff]
    %v5295 = vld [vmem:[#allocation3 + $0x88] sm:$0xff]
    %5313 = vrot.lane.b32.xlu0 %v5279, 64
    %v5314 = vpop.permute.xlu0 %5313
    %5315 = vrot.lane.b32.xlu0 %v5280, 64
    %v5316 = vpop.permute.xlu0 %5315
    %5317 = vrot.lane.b32.xlu0 %v5281, 64
    %v5318 = vpop.permute.xlu0 %5317
    %5319 = vrot.lane.b32.xlu0 %v5282, 64
    %v5320 = vpop.permute.xlu0 %5319
    %5321 = vrot.lane.b32.xlu0 %v5283, 64
    %v5322 = vpop.permute.xlu0 %5321
    %5323 = vrot.lane.b32.xlu0 %v5284, 64
    %v5324 = vpop.permute.xlu0 %5323
    %5325 = vrot.lane.b32.xlu0 %v5285, 64
    %v5326 = vpop.permute.xlu0 %5325
    %5327 = vrot.lane.b32.xlu0 %v5286, 64
    %v5328 = vpop.permute.xlu0 %5327
    %5329 = vrot.lane.b32.xlu0 %v5287, 64
    %v5330 = vpop.permute.xlu0 %5329
    %5331 = vrot.lane.b32.xlu0 %v5288, 64
    %v5332 = vpop.permute.xlu0 %5331
    %5333 = vrot.lane.b32.xlu0 %v5289, 64
    %v5334 = vpop.permute.xlu0 %5333
    %5335 = vrot.lane.b32.xlu0 %v5290, 64
    %v5336 = vpop.permute.xlu0 %5335
    %5337 = vrot.lane.b32.xlu0 %v5291, 64
    %v5338 = vpop.permute.xlu0 %5337
    %5339 = vrot.lane.b32.xlu0 %v5292, 64
    %v5340 = vpop.permute.xlu0 %5339
    %5341 = vrot.lane.b32.xlu0 %v5293, 64
    %v5342 = vpop.permute.xlu0 %5341
    %5343 = vrot.lane.b32.xlu0 %v5294, 64
    %v5344 = vpop.permute.xlu0 %5343
    %5345 = vrot.lane.b32.xlu0 %v5295, 64
    %v5346 = vpop.permute.xlu0 %5345
    %v5347 = vsel %vm1555, %v5314, %v5316
    %v5348 = vsel %vm1555, %v5316, %v5318
    %v5349 = vsel %vm1555, %v5318, %v5320
    %v5350 = vsel %vm1555, %v5320, %v5322
    %v5351 = vsel %vm1555, %v5322, %v5324
    %v5352 = vsel %vm1555, %v5324, %v5326
    %v5353 = vsel %vm1555, %v5326, %v5328
    %v5354 = vsel %vm1555, %v5328, %v5330
    %v5355 = vsel %vm1555, %v5330, %v5332
    %v5356 = vsel %vm1555, %v5332, %v5334
    %v5357 = vsel %vm1555, %v5334, %v5336
    %v5358 = vsel %vm1555, %v5336, %v5338
    %v5359 = vsel %vm1555, %v5338, %v5340
    %v5360 = vsel %vm1555, %v5340, %v5342
    %v5361 = vsel %vm1555, %v5342, %v5344
    %v5362 = vsel %vm1555, %v5344, %v5346
    %5379 = vst [vmem:[#allocation4 + $0x780] sm:$0xff] %v5347
    %5380 = vst [vmem:[#allocation4 + $0x788] sm:$0xff] %v5348
    %5381 = vst [vmem:[#allocation4 + $0x790] sm:$0xff] %v5349
    %5382 = vst [vmem:[#allocation4 + $0x798] sm:$0xff] %v5350
    %5383 = vst [vmem:[#allocation4 + $0x7a0] sm:$0xff] %v5351
    %5384 = vst [vmem:[#allocation4 + $0x7a8] sm:$0xff] %v5352
    %5385 = vst [vmem:[#allocation4 + $0x7b0] sm:$0xff] %v5353
    %5386 = vst [vmem:[#allocation4 + $0x7b8] sm:$0xff] %v5354
    %5387 = vst [vmem:[#allocation4 + $0x7c0] sm:$0xff] %v5355
    %5388 = vst [vmem:[#allocation4 + $0x7c8] sm:$0xff] %v5356
    %5389 = vst [vmem:[#allocation4 + $0x7d0] sm:$0xff] %v5357
    %5390 = vst [vmem:[#allocation4 + $0x7d8] sm:$0xff] %v5358
    %5391 = vst [vmem:[#allocation4 + $0x7e0] sm:$0xff] %v5359
    %5392 = vst [vmem:[#allocation4 + $0x7e8] sm:$0xff] %v5360
    %5393 = vst [vmem:[#allocation4 + $0x7f0] sm:$0xff] %v5361
    %5394 = vst [vmem:[#allocation4 + $0x7f8] sm:$0xff] %v5362
    %v5395 = vld [vmem:[#allocation3 + $0x8] sm:$0xff]
    %v5396 = vld [vmem:[#allocation3 + $0x10] sm:$0xff]
    %v5397 = vld [vmem:[#allocation3 + $0x18] sm:$0xff]
    %v5398 = vld [vmem:[#allocation3 + $0x20] sm:$0xff]
    %v5399 = vld [vmem:[#allocation3 + $0x28] sm:$0xff]
    %v5400 = vld [vmem:[#allocation3 + $0x30] sm:$0xff]
    %v5401 = vld [vmem:[#allocation3 + $0x38] sm:$0xff]
    %v5402 = vld [vmem:[#allocation3 + $0x40] sm:$0xff]
    %v5403 = vld [vmem:[#allocation3 + $0x48] sm:$0xff]
    %v5404 = vld [vmem:[#allocation3 + $0x50] sm:$0xff]
    %v5405 = vld [vmem:[#allocation3 + $0x58] sm:$0xff]
    %v5406 = vld [vmem:[#allocation3 + $0x60] sm:$0xff]
    %v5407 = vld [vmem:[#allocation3 + $0x68] sm:$0xff]
    %v5408 = vld [vmem:[#allocation3 + $0x70] sm:$0xff]
    %v5409 = vld [vmem:[#allocation3 + $0x78] sm:$0xff]
    %v5410 = vld [vmem:[#allocation3 + $0x80] sm:$0xff]
    %v5411 = vld [vmem:[#allocation3 + $0x88] sm:$0xff]
    %5429 = vrot.lane.b32.xlu0 %v5395, 62
    %v5430 = vpop.permute.xlu0 %5429
    %5431 = vrot.lane.b32.xlu0 %v5396, 62
    %v5432 = vpop.permute.xlu0 %5431
    %5433 = vrot.lane.b32.xlu0 %v5397, 62
    %v5434 = vpop.permute.xlu0 %5433
    %5435 = vrot.lane.b32.xlu0 %v5398, 62
    %v5436 = vpop.permute.xlu0 %5435
    %5437 = vrot.lane.b32.xlu0 %v5399, 62
    %v5438 = vpop.permute.xlu0 %5437
    %5439 = vrot.lane.b32.xlu0 %v5400, 62
    %v5440 = vpop.permute.xlu0 %5439
    %5441 = vrot.lane.b32.xlu0 %v5401, 62
    %v5442 = vpop.permute.xlu0 %5441
    %5443 = vrot.lane.b32.xlu0 %v5402, 62
    %v5444 = vpop.permute.xlu0 %5443
    %5445 = vrot.lane.b32.xlu0 %v5403, 62
    %v5446 = vpop.permute.xlu0 %5445
    %5447 = vrot.lane.b32.xlu0 %v5404, 62
    %v5448 = vpop.permute.xlu0 %5447
    %5449 = vrot.lane.b32.xlu0 %v5405, 62
    %v5450 = vpop.permute.xlu0 %5449
    %5451 = vrot.lane.b32.xlu0 %v5406, 62
    %v5452 = vpop.permute.xlu0 %5451
    %5453 = vrot.lane.b32.xlu0 %v5407, 62
    %v5454 = vpop.permute.xlu0 %5453
    %5455 = vrot.lane.b32.xlu0 %v5408, 62
    %v5456 = vpop.permute.xlu0 %5455
    %5457 = vrot.lane.b32.xlu0 %v5409, 62
    %v5458 = vpop.permute.xlu0 %5457
    %5459 = vrot.lane.b32.xlu0 %v5410, 62
    %v5460 = vpop.permute.xlu0 %5459
    %5461 = vrot.lane.b32.xlu0 %v5411, 62
    %v5462 = vpop.permute.xlu0 %5461
    %v5463 = vsel %vm1797, %v5430, %v5432
    %v5464 = vsel %vm1797, %v5432, %v5434
    %v5465 = vsel %vm1797, %v5434, %v5436
    %v5466 = vsel %vm1797, %v5436, %v5438
    %v5467 = vsel %vm1797, %v5438, %v5440
    %v5468 = vsel %vm1797, %v5440, %v5442
    %v5469 = vsel %vm1797, %v5442, %v5444
    %v5470 = vsel %vm1797, %v5444, %v5446
    %v5471 = vsel %vm1797, %v5446, %v5448
    %v5472 = vsel %vm1797, %v5448, %v5450
    %v5473 = vsel %vm1797, %v5450, %v5452
    %v5474 = vsel %vm1797, %v5452, %v5454
    %v5475 = vsel %vm1797, %v5454, %v5456
    %v5476 = vsel %vm1797, %v5456, %v5458
    %v5477 = vsel %vm1797, %v5458, %v5460
    %v5478 = vsel %vm1797, %v5460, %v5462
    %5495 = vst [vmem:[#allocation4 + $0x800] sm:$0xff] %v5463
    %5496 = vst [vmem:[#allocation4 + $0x808] sm:$0xff] %v5464
    %5497 = vst [vmem:[#allocation4 + $0x810] sm:$0xff] %v5465
    %5498 = vst [vmem:[#allocation4 + $0x818] sm:$0xff] %v5466
    %5499 = vst [vmem:[#allocation4 + $0x820] sm:$0xff] %v5467
    %5500 = vst [vmem:[#allocation4 + $0x828] sm:$0xff] %v5468
    %5501 = vst [vmem:[#allocation4 + $0x830] sm:$0xff] %v5469
    %5502 = vst [vmem:[#allocation4 + $0x838] sm:$0xff] %v5470
    %5503 = vst [vmem:[#allocation4 + $0x840] sm:$0xff] %v5471
    %5504 = vst [vmem:[#allocation4 + $0x848] sm:$0xff] %v5472
    %5505 = vst [vmem:[#allocation4 + $0x850] sm:$0xff] %v5473
    %5506 = vst [vmem:[#allocation4 + $0x858] sm:$0xff] %v5474
    %5507 = vst [vmem:[#allocation4 + $0x860] sm:$0xff] %v5475
    %5508 = vst [vmem:[#allocation4 + $0x868] sm:$0xff] %v5476
    %5509 = vst [vmem:[#allocation4 + $0x870] sm:$0xff] %v5477
    %5510 = vst [vmem:[#allocation4 + $0x878] sm:$0xff] %v5478
    %v5511 = vld [vmem:[#allocation3 + $0x8] sm:$0xff]
    %v5512 = vld [vmem:[#allocation3 + $0x10] sm:$0xff]
    %v5513 = vld [vmem:[#allocation3 + $0x18] sm:$0xff]
    %v5514 = vld [vmem:[#allocation3 + $0x20] sm:$0xff]
    %v5515 = vld [vmem:[#allocation3 + $0x28] sm:$0xff]
    %v5516 = vld [vmem:[#allocation3 + $0x30] sm:$0xff]
    %v5517 = vld [vmem:[#allocation3 + $0x38] sm:$0xff]
    %v5518 = vld [vmem:[#allocation3 + $0x40] sm:$0xff]
    %v5519 = vld [vmem:[#allocation3 + $0x48] sm:$0xff]
    %v5520 = vld [vmem:[#allocation3 + $0x50] sm:$0xff]
    %v5521 = vld [vmem:[#allocation3 + $0x58] sm:$0xff]
    %v5522 = vld [vmem:[#allocation3 + $0x60] sm:$0xff]
    %v5523 = vld [vmem:[#allocation3 + $0x68] sm:$0xff]
    %v5524 = vld [vmem:[#allocation3 + $0x70] sm:$0xff]
    %v5525 = vld [vmem:[#allocation3 + $0x78] sm:$0xff]
    %v5526 = vld [vmem:[#allocation3 + $0x80] sm:$0xff]
    %v5527 = vld [vmem:[#allocation3 + $0x88] sm:$0xff]
    %5545 = vrot.lane.b32.xlu0 %v5511, 60
    %v5546 = vpop.permute.xlu0 %5545
    %5547 = vrot.lane.b32.xlu0 %v5512, 60
    %v5548 = vpop.permute.xlu0 %5547
    %5549 = vrot.lane.b32.xlu0 %v5513, 60
    %v5550 = vpop.permute.xlu0 %5549
    %5551 = vrot.lane.b32.xlu0 %v5514, 60
    %v5552 = vpop.permute.xlu0 %5551
    %5553 = vrot.lane.b32.xlu0 %v5515, 60
    %v5554 = vpop.permute.xlu0 %5553
    %5555 = vrot.lane.b32.xlu0 %v5516, 60
    %v5556 = vpop.permute.xlu0 %5555
    %5557 = vrot.lane.b32.xlu0 %v5517, 60
    %v5558 = vpop.permute.xlu0 %5557
    %5559 = vrot.lane.b32.xlu0 %v5518, 60
    %v5560 = vpop.permute.xlu0 %5559
    %5561 = vrot.lane.b32.xlu0 %v5519, 60
    %v5562 = vpop.permute.xlu0 %5561
    %5563 = vrot.lane.b32.xlu0 %v5520, 60
    %v5564 = vpop.permute.xlu0 %5563
    %5565 = vrot.lane.b32.xlu0 %v5521, 60
    %v5566 = vpop.permute.xlu0 %5565
    %5567 = vrot.lane.b32.xlu0 %v5522, 60
    %v5568 = vpop.permute.xlu0 %5567
    %5569 = vrot.lane.b32.xlu0 %v5523, 60
    %v5570 = vpop.permute.xlu0 %5569
    %5571 = vrot.lane.b32.xlu0 %v5524, 60
    %v5572 = vpop.permute.xlu0 %5571
    %5573 = vrot.lane.b32.xlu0 %v5525, 60
    %v5574 = vpop.permute.xlu0 %5573
    %5575 = vrot.lane.b32.xlu0 %v5526, 60
    %v5576 = vpop.permute.xlu0 %5575
    %5577 = vrot.lane.b32.xlu0 %v5527, 60
    %v5578 = vpop.permute.xlu0 %5577
    %v5579 = vsel %vm2039, %v5546, %v5548
    %v5580 = vsel %vm2039, %v5548, %v5550
    %v5581 = vsel %vm2039, %v5550, %v5552
    %v5582 = vsel %vm2039, %v5552, %v5554
    %v5583 = vsel %vm2039, %v5554, %v5556
    %v5584 = vsel %vm2039, %v5556, %v5558
    %v5585 = vsel %vm2039, %v5558, %v5560
    %v5586 = vsel %vm2039, %v5560, %v5562
    %v5587 = vsel %vm2039, %v5562, %v5564
    %v5588 = vsel %vm2039, %v5564, %v5566
    %v5589 = vsel %vm2039, %v5566, %v5568
    %v5590 = vsel %vm2039, %v5568, %v5570
    %v5591 = vsel %vm2039, %v5570, %v5572
    %v5592 = vsel %vm2039, %v5572, %v5574
    %v5593 = vsel %vm2039, %v5574, %v5576
    %v5594 = vsel %vm2039, %v5576, %v5578
    %5611 = vst [vmem:[#allocation4 + $0x880] sm:$0xff] %v5579
    %5612 = vst [vmem:[#allocation4 + $0x888] sm:$0xff] %v5580
    %5613 = vst [vmem:[#allocation4 + $0x890] sm:$0xff] %v5581
    %5614 = vst [vmem:[#allocation4 + $0x898] sm:$0xff] %v5582
    %5615 = vst [vmem:[#allocation4 + $0x8a0] sm:$0xff] %v5583
    %5616 = vst [vmem:[#allocation4 + $0x8a8] sm:$0xff] %v5584
    %5617 = vst [vmem:[#allocation4 + $0x8b0] sm:$0xff] %v5585
    %5618 = vst [vmem:[#allocation4 + $0x8b8] sm:$0xff] %v5586
    %5619 = vst [vmem:[#allocation4 + $0x8c0] sm:$0xff] %v5587
    %5620 = vst [vmem:[#allocation4 + $0x8c8] sm:$0xff] %v5588
    %5621 = vst [vmem:[#allocation4 + $0x8d0] sm:$0xff] %v5589
    %5622 = vst [vmem:[#allocation4 + $0x8d8] sm:$0xff] %v5590
    %5623 = vst [vmem:[#allocation4 + $0x8e0] sm:$0xff] %v5591
    %5624 = vst [vmem:[#allocation4 + $0x8e8] sm:$0xff] %v5592
    %5625 = vst [vmem:[#allocation4 + $0x8f0] sm:$0xff] %v5593
    %5626 = vst [vmem:[#allocation4 + $0x8f8] sm:$0xff] %v5594
    %v5627 = vld [vmem:[#allocation3 + $0x8] sm:$0xff]
    %v5628 = vld [vmem:[#allocation3 + $0x10] sm:$0xff]
    %v5629 = vld [vmem:[#allocation3 + $0x18] sm:$0xff]
    %v5630 = vld [vmem:[#allocation3 + $0x20] sm:$0xff]
    %v5631 = vld [vmem:[#allocation3 + $0x28] sm:$0xff]
    %v5632 = vld [vmem:[#allocation3 + $0x30] sm:$0xff]
    %v5633 = vld [vmem:[#allocation3 + $0x38] sm:$0xff]
    %v5634 = vld [vmem:[#allocation3 + $0x40] sm:$0xff]
    %v5635 = vld [vmem:[#allocation3 + $0x48] sm:$0xff]
    %v5636 = vld [vmem:[#allocation3 + $0x50] sm:$0xff]
    %v5637 = vld [vmem:[#allocation3 + $0x58] sm:$0xff]
    %v5638 = vld [vmem:[#allocation3 + $0x60] sm:$0xff]
    %v5639 = vld [vmem:[#allocation3 + $0x68] sm:$0xff]
    %v5640 = vld [vmem:[#allocation3 + $0x70] sm:$0xff]
    %v5641 = vld [vmem:[#allocation3 + $0x78] sm:$0xff]
    %v5642 = vld [vmem:[#allocation3 + $0x80] sm:$0xff]
    %v5643 = vld [vmem:[#allocation3 + $0x88] sm:$0xff]
    %5661 = vrot.lane.b32.xlu0 %v5627, 58
    %v5662 = vpop.permute.xlu0 %5661
    %5663 = vrot.lane.b32.xlu0 %v5628, 58
    %v5664 = vpop.permute.xlu0 %5663
    %5665 = vrot.lane.b32.xlu0 %v5629, 58
    %v5666 = vpop.permute.xlu0 %5665
    %5667 = vrot.lane.b32.xlu0 %v5630, 58
    %v5668 = vpop.permute.xlu0 %5667
    %5669 = vrot.lane.b32.xlu0 %v5631, 58
    %v5670 = vpop.permute.xlu0 %5669
    %5671 = vrot.lane.b32.xlu0 %v5632, 58
    %v5672 = vpop.permute.xlu0 %5671
    %5673 = vrot.lane.b32.xlu0 %v5633, 58
    %v5674 = vpop.permute.xlu0 %5673
    %5675 = vrot.lane.b32.xlu0 %v5634, 58
    %v5676 = vpop.permute.xlu0 %5675
    %5677 = vrot.lane.b32.xlu0 %v5635, 58
    %v5678 = vpop.permute.xlu0 %5677
    %5679 = vrot.lane.b32.xlu0 %v5636, 58
    %v5680 = vpop.permute.xlu0 %5679
    %5681 = vrot.lane.b32.xlu0 %v5637, 58
    %v5682 = vpop.permute.xlu0 %5681
    %5683 = vrot.lane.b32.xlu0 %v5638, 58
    %v5684 = vpop.permute.xlu0 %5683
    %5685 = vrot.lane.b32.xlu0 %v5639, 58
    %v5686 = vpop.permute.xlu0 %5685
    %5687 = vrot.lane.b32.xlu0 %v5640, 58
    %v5688 = vpop.permute.xlu0 %5687
    %5689 = vrot.lane.b32.xlu0 %v5641, 58
    %v5690 = vpop.permute.xlu0 %5689
    %5691 = vrot.lane.b32.xlu0 %v5642, 58
    %v5692 = vpop.permute.xlu0 %5691
    %5693 = vrot.lane.b32.xlu0 %v5643, 58
    %v5694 = vpop.permute.xlu0 %5693
    %v5695 = vsel %vm4617, %v5662, %v5664
    %v5696 = vsel %vm4617, %v5664, %v5666
    %v5697 = vsel %vm4617, %v5666, %v5668
    %v5698 = vsel %vm4617, %v5668, %v5670
    %v5699 = vsel %vm4617, %v5670, %v5672
    %v5700 = vsel %vm4617, %v5672, %v5674
    %v5701 = vsel %vm4617, %v5674, %v5676
    %v5702 = vsel %vm4617, %v5676, %v5678
    %v5703 = vsel %vm4617, %v5678, %v5680
    %v5704 = vsel %vm4617, %v5680, %v5682
    %v5705 = vsel %vm4617, %v5682, %v5684
    %v5706 = vsel %vm4617, %v5684, %v5686
    %v5707 = vsel %vm4617, %v5686, %v5688
    %v5708 = vsel %vm4617, %v5688, %v5690
    %v5709 = vsel %vm4617, %v5690, %v5692
    %v5710 = vsel %vm4617, %v5692, %v5694
    %5727 = vst [vmem:[#allocation4 + $0x900] sm:$0xff] %v5695
    %5728 = vst [vmem:[#allocation4 + $0x908] sm:$0xff] %v5696
    %5729 = vst [vmem:[#allocation4 + $0x910] sm:$0xff] %v5697
    %5730 = vst [vmem:[#allocation4 + $0x918] sm:$0xff] %v5698
    %5731 = vst [vmem:[#allocation4 + $0x920] sm:$0xff] %v5699
    %5732 = vst [vmem:[#allocation4 + $0x928] sm:$0xff] %v5700
    %5733 = vst [vmem:[#allocation4 + $0x930] sm:$0xff] %v5701
    %5734 = vst [vmem:[#allocation4 + $0x938] sm:$0xff] %v5702
    %5735 = vst [vmem:[#allocation4 + $0x940] sm:$0xff] %v5703
    %5736 = vst [vmem:[#allocation4 + $0x948] sm:$0xff] %v5704
    %5737 = vst [vmem:[#allocation4 + $0x950] sm:$0xff] %v5705
    %5738 = vst [vmem:[#allocation4 + $0x958] sm:$0xff] %v5706
    %5739 = vst [vmem:[#allocation4 + $0x960] sm:$0xff] %v5707
    %5740 = vst [vmem:[#allocation4 + $0x968] sm:$0xff] %v5708
    %5741 = vst [vmem:[#allocation4 + $0x970] sm:$0xff] %v5709
    %5742 = vst [vmem:[#allocation4 + $0x978] sm:$0xff] %v5710
    %v5743 = vld [vmem:[#allocation3 + $0x8] sm:$0xff]
    %v5744 = vld [vmem:[#allocation3 + $0x10] sm:$0xff]
    %v5745 = vld [vmem:[#allocation3 + $0x18] sm:$0xff]
    %v5746 = vld [vmem:[#allocation3 + $0x20] sm:$0xff]
    %v5747 = vld [vmem:[#allocation3 + $0x28] sm:$0xff]
    %v5748 = vld [vmem:[#allocation3 + $0x30] sm:$0xff]
    %v5749 = vld [vmem:[#allocation3 + $0x38] sm:$0xff]
    %v5750 = vld [vmem:[#allocation3 + $0x40] sm:$0xff]
    %v5751 = vld [vmem:[#allocation3 + $0x48] sm:$0xff]
    %v5752 = vld [vmem:[#allocation3 + $0x50] sm:$0xff]
    %v5753 = vld [vmem:[#allocation3 + $0x58] sm:$0xff]
    %v5754 = vld [vmem:[#allocation3 + $0x60] sm:$0xff]
    %v5755 = vld [vmem:[#allocation3 + $0x68] sm:$0xff]
    %v5756 = vld [vmem:[#allocation3 + $0x70] sm:$0xff]
    %v5757 = vld [vmem:[#allocation3 + $0x78] sm:$0xff]
    %v5758 = vld [vmem:[#allocation3 + $0x80] sm:$0xff]
    %v5759 = vld [vmem:[#allocation3 + $0x88] sm:$0xff]
    %5777 = vrot.lane.b32.xlu0 %v5743, 56
    %v5778 = vpop.permute.xlu0 %5777
    %5779 = vrot.lane.b32.xlu0 %v5744, 56
    %v5780 = vpop.permute.xlu0 %5779
    %5781 = vrot.lane.b32.xlu0 %v5745, 56
    %v5782 = vpop.permute.xlu0 %5781
    %5783 = vrot.lane.b32.xlu0 %v5746, 56
    %v5784 = vpop.permute.xlu0 %5783
    %5785 = vrot.lane.b32.xlu0 %v5747, 56
    %v5786 = vpop.permute.xlu0 %5785
    %5787 = vrot.lane.b32.xlu0 %v5748, 56
    %v5788 = vpop.permute.xlu0 %5787
    %5789 = vrot.lane.b32.xlu0 %v5749, 56
    %v5790 = vpop.permute.xlu0 %5789
    %5791 = vrot.lane.b32.xlu0 %v5750, 56
    %v5792 = vpop.permute.xlu0 %5791
    %5793 = vrot.lane.b32.xlu0 %v5751, 56
    %v5794 = vpop.permute.xlu0 %5793
    %5795 = vrot.lane.b32.xlu0 %v5752, 56
    %v5796 = vpop.permute.xlu0 %5795
    %5797 = vrot.lane.b32.xlu0 %v5753, 56
    %v5798 = vpop.permute.xlu0 %5797
    %5799 = vrot.lane.b32.xlu0 %v5754, 56
    %v5800 = vpop.permute.xlu0 %5799
    %5801 = vrot.lane.b32.xlu0 %v5755, 56
    %v5802 = vpop.permute.xlu0 %5801
    %5803 = vrot.lane.b32.xlu0 %v5756, 56
    %v5804 = vpop.permute.xlu0 %5803
    %5805 = vrot.lane.b32.xlu0 %v5757, 56
    %v5806 = vpop.permute.xlu0 %5805
    %5807 = vrot.lane.b32.xlu0 %v5758, 56
    %v5808 = vpop.permute.xlu0 %5807
    %5809 = vrot.lane.b32.xlu0 %v5759, 56
    %v5810 = vpop.permute.xlu0 %5809
    %v5811 = vsel %vm4734, %v5778, %v5780
    %v5812 = vsel %vm4734, %v5780, %v5782
    %v5813 = vsel %vm4734, %v5782, %v5784
    %v5814 = vsel %vm4734, %v5784, %v5786
    %v5815 = vsel %vm4734, %v5786, %v5788
    %v5816 = vsel %vm4734, %v5788, %v5790
    %v5817 = vsel %vm4734, %v5790, %v5792
    %v5818 = vsel %vm4734, %v5792, %v5794
    %v5819 = vsel %vm4734, %v5794, %v5796
    %v5820 = vsel %vm4734, %v5796, %v5798
    %v5821 = vsel %vm4734, %v5798, %v5800
    %v5822 = vsel %vm4734, %v5800, %v5802
    %v5823 = vsel %vm4734, %v5802, %v5804
    %v5824 = vsel %vm4734, %v5804, %v5806
    %v5825 = vsel %vm4734, %v5806, %v5808
    %v5826 = vsel %vm4734, %v5808, %v5810
    %5843 = vst [vmem:[#allocation4 + $0x980] sm:$0xff] %v5811
    %5844 = vst [vmem:[#allocation4 + $0x988] sm:$0xff] %v5812
    %5845 = vst [vmem:[#allocation4 + $0x990] sm:$0xff] %v5813
    %5846 = vst [vmem:[#allocation4 + $0x998] sm:$0xff] %v5814
    %5847 = vst [vmem:[#allocation4 + $0x9a0] sm:$0xff] %v5815
    %5848 = vst [vmem:[#allocation4 + $0x9a8] sm:$0xff] %v5816
    %5849 = vst [vmem:[#allocation4 + $0x9b0] sm:$0xff] %v5817
    %5850 = vst [vmem:[#allocation4 + $0x9b8] sm:$0xff] %v5818
    %5851 = vst [vmem:[#allocation4 + $0x9c0] sm:$0xff] %v5819
    %5852 = vst [vmem:[#allocation4 + $0x9c8] sm:$0xff] %v5820
    %5853 = vst [vmem:[#allocation4 + $0x9d0] sm:$0xff] %v5821
    %5854 = vst [vmem:[#allocation4 + $0x9d8] sm:$0xff] %v5822
    %5855 = vst [vmem:[#allocation4 + $0x9e0] sm:$0xff] %v5823
    %5856 = vst [vmem:[#allocation4 + $0x9e8] sm:$0xff] %v5824
    %5857 = vst [vmem:[#allocation4 + $0x9f0] sm:$0xff] %v5825
    %5858 = vst [vmem:[#allocation4 + $0x9f8] sm:$0xff] %v5826
    %v5859 = vld [vmem:[#allocation3 + $0x10] sm:$0xff]
    %v5860 = vld [vmem:[#allocation3 + $0x18] sm:$0xff]
    %v5861 = vld [vmem:[#allocation3 + $0x20] sm:$0xff]
    %v5862 = vld [vmem:[#allocation3 + $0x28] sm:$0xff]
    %v5863 = vld [vmem:[#allocation3 + $0x30] sm:$0xff]
    %v5864 = vld [vmem:[#allocation3 + $0x38] sm:$0xff]
    %v5865 = vld [vmem:[#allocation3 + $0x40] sm:$0xff]
    %v5866 = vld [vmem:[#allocation3 + $0x48] sm:$0xff]
    %v5867 = vld [vmem:[#allocation3 + $0x50] sm:$0xff]
    %v5868 = vld [vmem:[#allocation3 + $0x58] sm:$0xff]
    %v5869 = vld [vmem:[#allocation3 + $0x60] sm:$0xff]
    %v5870 = vld [vmem:[#allocation3 + $0x68] sm:$0xff]
    %v5871 = vld [vmem:[#allocation3 + $0x70] sm:$0xff]
    %v5872 = vld [vmem:[#allocation3 + $0x78] sm:$0xff]
    %v5873 = vld [vmem:[#allocation3 + $0x80] sm:$0xff]
    %v5874 = vld [vmem:[#allocation3 + $0x88] sm:$0xff]
    %5875 = vst [vmem:[#allocation4 + $0xa00] sm:$0xff] %v5859
    %5876 = vst [vmem:[#allocation4 + $0xa08] sm:$0xff] %v5860
    %5877 = vst [vmem:[#allocation4 + $0xa10] sm:$0xff] %v5861
    %5878 = vst [vmem:[#allocation4 + $0xa18] sm:$0xff] %v5862
    %5879 = vst [vmem:[#allocation4 + $0xa20] sm:$0xff] %v5863
    %5880 = vst [vmem:[#allocation4 + $0xa28] sm:$0xff] %v5864
    %5881 = vst [vmem:[#allocation4 + $0xa30] sm:$0xff] %v5865
    %5882 = vst [vmem:[#allocation4 + $0xa38] sm:$0xff] %v5866
    %5883 = vst [vmem:[#allocation4 + $0xa40] sm:$0xff] %v5867
    %5884 = vst [vmem:[#allocation4 + $0xa48] sm:$0xff] %v5868
    %5885 = vst [vmem:[#allocation4 + $0xa50] sm:$0xff] %v5869
    %5886 = vst [vmem:[#allocation4 + $0xa58] sm:$0xff] %v5870
    %5887 = vst [vmem:[#allocation4 + $0xa60] sm:$0xff] %v5871
    %5888 = vst [vmem:[#allocation4 + $0xa68] sm:$0xff] %v5872
    %5889 = vst [vmem:[#allocation4 + $0xa70] sm:$0xff] %v5873
    %5890 = vst [vmem:[#allocation4 + $0xa78] sm:$0xff] %v5874
    %v5891 = vld [vmem:[#allocation3 + $0x10] sm:$0xff]
    %v5892 = vld [vmem:[#allocation3 + $0x18] sm:$0xff]
    %v5893 = vld [vmem:[#allocation3 + $0x20] sm:$0xff]
    %v5894 = vld [vmem:[#allocation3 + $0x28] sm:$0xff]
    %v5895 = vld [vmem:[#allocation3 + $0x30] sm:$0xff]
    %v5896 = vld [vmem:[#allocation3 + $0x38] sm:$0xff]
    %v5897 = vld [vmem:[#allocation3 + $0x40] sm:$0xff]
    %v5898 = vld [vmem:[#allocation3 + $0x48] sm:$0xff]
    %v5899 = vld [vmem:[#allocation3 + $0x50] sm:$0xff]
    %v5900 = vld [vmem:[#allocation3 + $0x58] sm:$0xff]
    %v5901 = vld [vmem:[#allocation3 + $0x60] sm:$0xff]
    %v5902 = vld [vmem:[#allocation3 + $0x68] sm:$0xff]
    %v5903 = vld [vmem:[#allocation3 + $0x70] sm:$0xff]
    %v5904 = vld [vmem:[#allocation3 + $0x78] sm:$0xff]
    %v5905 = vld [vmem:[#allocation3 + $0x80] sm:$0xff]
    %v5906 = vld [vmem:[#allocation3 + $0x88] sm:$0xff]
    %v5907 = vld [vmem:[#allocation3 + $0x90] sm:$0xff]
    %5925 = vrot.lane.b32.xlu0 %v5891, 126
    %v5926 = vpop.permute.xlu0 %5925
    %5927 = vrot.lane.b32.xlu0 %v5892, 126
    %v5928 = vpop.permute.xlu0 %5927
    %5929 = vrot.lane.b32.xlu0 %v5893, 126
    %v5930 = vpop.permute.xlu0 %5929
    %5931 = vrot.lane.b32.xlu0 %v5894, 126
    %v5932 = vpop.permute.xlu0 %5931
    %5933 = vrot.lane.b32.xlu0 %v5895, 126
    %v5934 = vpop.permute.xlu0 %5933
    %5935 = vrot.lane.b32.xlu0 %v5896, 126
    %v5936 = vpop.permute.xlu0 %5935
    %5937 = vrot.lane.b32.xlu0 %v5897, 126
    %v5938 = vpop.permute.xlu0 %5937
    %5939 = vrot.lane.b32.xlu0 %v5898, 126
    %v5940 = vpop.permute.xlu0 %5939
    %5941 = vrot.lane.b32.xlu0 %v5899, 126
    %v5942 = vpop.permute.xlu0 %5941
    %5943 = vrot.lane.b32.xlu0 %v5900, 126
    %v5944 = vpop.permute.xlu0 %5943
    %5945 = vrot.lane.b32.xlu0 %v5901, 126
    %v5946 = vpop.permute.xlu0 %5945
    %5947 = vrot.lane.b32.xlu0 %v5902, 126
    %v5948 = vpop.permute.xlu0 %5947
    %5949 = vrot.lane.b32.xlu0 %v5903, 126
    %v5950 = vpop.permute.xlu0 %5949
    %5951 = vrot.lane.b32.xlu0 %v5904, 126
    %v5952 = vpop.permute.xlu0 %5951
    %5953 = vrot.lane.b32.xlu0 %v5905, 126
    %v5954 = vpop.permute.xlu0 %5953
    %5955 = vrot.lane.b32.xlu0 %v5906, 126
    %v5956 = vpop.permute.xlu0 %5955
    %5957 = vrot.lane.b32.xlu0 %v5907, 126
    %v5958 = vpop.permute.xlu0 %5957
    %v5959 = vsel %vm587, %v5926, %v5928
    %v5960 = vsel %vm587, %v5928, %v5930
    %v5961 = vsel %vm587, %v5930, %v5932
    %v5962 = vsel %vm587, %v5932, %v5934
    %v5963 = vsel %vm587, %v5934, %v5936
    %v5964 = vsel %vm587, %v5936, %v5938
    %v5965 = vsel %vm587, %v5938, %v5940
    %v5966 = vsel %vm587, %v5940, %v5942
    %v5967 = vsel %vm587, %v5942, %v5944
    %v5968 = vsel %vm587, %v5944, %v5946
    %v5969 = vsel %vm587, %v5946, %v5948
    %v5970 = vsel %vm587, %v5948, %v5950
    %v5971 = vsel %vm587, %v5950, %v5952
    %v5972 = vsel %vm587, %v5952, %v5954
    %v5973 = vsel %vm587, %v5954, %v5956
    %v5974 = vsel %vm587, %v5956, %v5958
    %5991 = vst [vmem:[#allocation4 + $0xa80] sm:$0xff] %v5959
    %5992 = vst [vmem:[#allocation4 + $0xa88] sm:$0xff] %v5960
    %5993 = vst [vmem:[#allocation4 + $0xa90] sm:$0xff] %v5961
    %5994 = vst [vmem:[#allocation4 + $0xa98] sm:$0xff] %v5962
    %5995 = vst [vmem:[#allocation4 + $0xaa0] sm:$0xff] %v5963
    %5996 = vst [vmem:[#allocation4 + $0xaa8] sm:$0xff] %v5964
    %5997 = vst [vmem:[#allocation4 + $0xab0] sm:$0xff] %v5965
    %5998 = vst [vmem:[#allocation4 + $0xab8] sm:$0xff] %v5966
    %5999 = vst [vmem:[#allocation4 + $0xac0] sm:$0xff] %v5967
    %6000 = vst [vmem:[#allocation4 + $0xac8] sm:$0xff] %v5968
    %6001 = vst [vmem:[#allocation4 + $0xad0] sm:$0xff] %v5969
    %6002 = vst [vmem:[#allocation4 + $0xad8] sm:$0xff] %v5970
    %6003 = vst [vmem:[#allocation4 + $0xae0] sm:$0xff] %v5971
    %6004 = vst [vmem:[#allocation4 + $0xae8] sm:$0xff] %v5972
    %6005 = vst [vmem:[#allocation4 + $0xaf0] sm:$0xff] %v5973
    %6006 = vst [vmem:[#allocation4 + $0xaf8] sm:$0xff] %v5974
    %v6007 = vld [vmem:[#allocation3 + $0x10] sm:$0xff]
    %v6008 = vld [vmem:[#allocation3 + $0x18] sm:$0xff]
    %v6009 = vld [vmem:[#allocation3 + $0x20] sm:$0xff]
    %v6010 = vld [vmem:[#allocation3 + $0x28] sm:$0xff]
    %v6011 = vld [vmem:[#allocation3 + $0x30] sm:$0xff]
    %v6012 = vld [vmem:[#allocation3 + $0x38] sm:$0xff]
    %v6013 = vld [vmem:[#allocation3 + $0x40] sm:$0xff]
    %v6014 = vld [vmem:[#allocation3 + $0x48] sm:$0xff]
    %v6015 = vld [vmem:[#allocation3 + $0x50] sm:$0xff]
    %v6016 = vld [vmem:[#allocation3 + $0x58] sm:$0xff]
    %v6017 = vld [vmem:[#allocation3 + $0x60] sm:$0xff]
    %v6018 = vld [vmem:[#allocation3 + $0x68] sm:$0xff]
    %v6019 = vld [vmem:[#allocation3 + $0x70] sm:$0xff]
    %v6020 = vld [vmem:[#allocation3 + $0x78] sm:$0xff]
    %v6021 = vld [vmem:[#allocation3 + $0x80] sm:$0xff]
    %v6022 = vld [vmem:[#allocation3 + $0x88] sm:$0xff]
    %v6023 = vld [vmem:[#allocation3 + $0x90] sm:$0xff]
    %6041 = vrot.lane.b32.xlu0 %v6007, 124
    %v6042 = vpop.permute.xlu0 %6041
    %6043 = vrot.lane.b32.xlu0 %v6008, 124
    %v6044 = vpop.permute.xlu0 %6043
    %6045 = vrot.lane.b32.xlu0 %v6009, 124
    %v6046 = vpop.permute.xlu0 %6045
    %6047 = vrot.lane.b32.xlu0 %v6010, 124
    %v6048 = vpop.permute.xlu0 %6047
    %6049 = vrot.lane.b32.xlu0 %v6011, 124
    %v6050 = vpop.permute.xlu0 %6049
    %6051 = vrot.lane.b32.xlu0 %v6012, 124
    %v6052 = vpop.permute.xlu0 %6051
    %6053 = vrot.lane.b32.xlu0 %v6013, 124
    %v6054 = vpop.permute.xlu0 %6053
    %6055 = vrot.lane.b32.xlu0 %v6014, 124
    %v6056 = vpop.permute.xlu0 %6055
    %6057 = vrot.lane.b32.xlu0 %v6015, 124
    %v6058 = vpop.permute.xlu0 %6057
    %6059 = vrot.lane.b32.xlu0 %v6016, 124
    %v6060 = vpop.permute.xlu0 %6059
    %6061 = vrot.lane.b32.xlu0 %v6017, 124
    %v6062 = vpop.permute.xlu0 %6061
    %6063 = vrot.lane.b32.xlu0 %v6018, 124
    %v6064 = vpop.permute.xlu0 %6063
    %6065 = vrot.lane.b32.xlu0 %v6019, 124
    %v6066 = vpop.permute.xlu0 %6065
    %6067 = vrot.lane.b32.xlu0 %v6020, 124
    %v6068 = vpop.permute.xlu0 %6067
    %6069 = vrot.lane.b32.xlu0 %v6021, 124
    %v6070 = vpop.permute.xlu0 %6069
    %6071 = vrot.lane.b32.xlu0 %v6022, 124
    %v6072 = vpop.permute.xlu0 %6071
    %6073 = vrot.lane.b32.xlu0 %v6023, 124
    %v6074 = vpop.permute.xlu0 %6073
    %v6075 = vsel %vm829, %v6042, %v6044
    %v6076 = vsel %vm829, %v6044, %v6046
    %v6077 = vsel %vm829, %v6046, %v6048
    %v6078 = vsel %vm829, %v6048, %v6050
    %v6079 = vsel %vm829, %v6050, %v6052
    %v6080 = vsel %vm829, %v6052, %v6054
    %v6081 = vsel %vm829, %v6054, %v6056
    %v6082 = vsel %vm829, %v6056, %v6058
    %v6083 = vsel %vm829, %v6058, %v6060
    %v6084 = vsel %vm829, %v6060, %v6062
    %v6085 = vsel %vm829, %v6062, %v6064
    %v6086 = vsel %vm829, %v6064, %v6066
    %v6087 = vsel %vm829, %v6066, %v6068
    %v6088 = vsel %vm829, %v6068, %v6070
    %v6089 = vsel %vm829, %v6070, %v6072
    %v6090 = vsel %vm829, %v6072, %v6074
    %6107 = vst [vmem:[#allocation4 + $0xb00] sm:$0xff] %v6075
    %6108 = vst [vmem:[#allocation4 + $0xb08] sm:$0xff] %v6076
    %6109 = vst [vmem:[#allocation4 + $0xb10] sm:$0xff] %v6077
    %6110 = vst [vmem:[#allocation4 + $0xb18] sm:$0xff] %v6078
    %6111 = vst [vmem:[#allocation4 + $0xb20] sm:$0xff] %v6079
    %6112 = vst [vmem:[#allocation4 + $0xb28] sm:$0xff] %v6080
    %6113 = vst [vmem:[#allocation4 + $0xb30] sm:$0xff] %v6081
    %6114 = vst [vmem:[#allocation4 + $0xb38] sm:$0xff] %v6082
    %6115 = vst [vmem:[#allocation4 + $0xb40] sm:$0xff] %v6083
    %6116 = vst [vmem:[#allocation4 + $0xb48] sm:$0xff] %v6084
    %6117 = vst [vmem:[#allocation4 + $0xb50] sm:$0xff] %v6085
    %6118 = vst [vmem:[#allocation4 + $0xb58] sm:$0xff] %v6086
    %6119 = vst [vmem:[#allocation4 + $0xb60] sm:$0xff] %v6087
    %6120 = vst [vmem:[#allocation4 + $0xb68] sm:$0xff] %v6088
    %6121 = vst [vmem:[#allocation4 + $0xb70] sm:$0xff] %v6089
    %6122 = vst [vmem:[#allocation4 + $0xb78] sm:$0xff] %v6090
    %v6123 = vld [vmem:[#allocation3 + $0x10] sm:$0xff]
    %v6124 = vld [vmem:[#allocation3 + $0x18] sm:$0xff]
    %v6125 = vld [vmem:[#allocation3 + $0x20] sm:$0xff]
    %v6126 = vld [vmem:[#allocation3 + $0x28] sm:$0xff]
    %v6127 = vld [vmem:[#allocation3 + $0x30] sm:$0xff]
    %v6128 = vld [vmem:[#allocation3 + $0x38] sm:$0xff]
    %v6129 = vld [vmem:[#allocation3 + $0x40] sm:$0xff]
    %v6130 = vld [vmem:[#allocation3 + $0x48] sm:$0xff]
    %v6131 = vld [vmem:[#allocation3 + $0x50] sm:$0xff]
    %v6132 = vld [vmem:[#allocation3 + $0x58] sm:$0xff]
    %v6133 = vld [vmem:[#allocation3 + $0x60] sm:$0xff]
    %v6134 = vld [vmem:[#allocation3 + $0x68] sm:$0xff]
    %v6135 = vld [vmem:[#allocation3 + $0x70] sm:$0xff]
    %v6136 = vld [vmem:[#allocation3 + $0x78] sm:$0xff]
    %v6137 = vld [vmem:[#allocation3 + $0x80] sm:$0xff]
    %v6138 = vld [vmem:[#allocation3 + $0x88] sm:$0xff]
    %v6139 = vld [vmem:[#allocation3 + $0x90] sm:$0xff]
    %6157 = vrot.lane.b32.xlu0 %v6123, 122
    %v6158 = vpop.permute.xlu0 %6157
    %6159 = vrot.lane.b32.xlu0 %v6124, 122
    %v6160 = vpop.permute.xlu0 %6159
    %6161 = vrot.lane.b32.xlu0 %v6125, 122
    %v6162 = vpop.permute.xlu0 %6161
    %6163 = vrot.lane.b32.xlu0 %v6126, 122
    %v6164 = vpop.permute.xlu0 %6163
    %6165 = vrot.lane.b32.xlu0 %v6127, 122
    %v6166 = vpop.permute.xlu0 %6165
    %6167 = vrot.lane.b32.xlu0 %v6128, 122
    %v6168 = vpop.permute.xlu0 %6167
    %6169 = vrot.lane.b32.xlu0 %v6129, 122
    %v6170 = vpop.permute.xlu0 %6169
    %6171 = vrot.lane.b32.xlu0 %v6130, 122
    %v6172 = vpop.permute.xlu0 %6171
    %6173 = vrot.lane.b32.xlu0 %v6131, 122
    %v6174 = vpop.permute.xlu0 %6173
    %6175 = vrot.lane.b32.xlu0 %v6132, 122
    %v6176 = vpop.permute.xlu0 %6175
    %6177 = vrot.lane.b32.xlu0 %v6133, 122
    %v6178 = vpop.permute.xlu0 %6177
    %6179 = vrot.lane.b32.xlu0 %v6134, 122
    %v6180 = vpop.permute.xlu0 %6179
    %6181 = vrot.lane.b32.xlu0 %v6135, 122
    %v6182 = vpop.permute.xlu0 %6181
    %6183 = vrot.lane.b32.xlu0 %v6136, 122
    %v6184 = vpop.permute.xlu0 %6183
    %6185 = vrot.lane.b32.xlu0 %v6137, 122
    %v6186 = vpop.permute.xlu0 %6185
    %6187 = vrot.lane.b32.xlu0 %v6138, 122
    %v6188 = vpop.permute.xlu0 %6187
    %6189 = vrot.lane.b32.xlu0 %v6139, 122
    %v6190 = vpop.permute.xlu0 %6189
    %v6191 = vsel %vm4035, %v6158, %v6160
    %v6192 = vsel %vm4035, %v6160, %v6162
    %v6193 = vsel %vm4035, %v6162, %v6164
    %v6194 = vsel %vm4035, %v6164, %v6166
    %v6195 = vsel %vm4035, %v6166, %v6168
    %v6196 = vsel %vm4035, %v6168, %v6170
    %v6197 = vsel %vm4035, %v6170, %v6172
    %v6198 = vsel %vm4035, %v6172, %v6174
    %v6199 = vsel %vm4035, %v6174, %v6176
    %v6200 = vsel %vm4035, %v6176, %v6178
    %v6201 = vsel %vm4035, %v6178, %v6180
    %v6202 = vsel %vm4035, %v6180, %v6182
    %v6203 = vsel %vm4035, %v6182, %v6184
    %v6204 = vsel %vm4035, %v6184, %v6186
    %v6205 = vsel %vm4035, %v6186, %v6188
    %v6206 = vsel %vm4035, %v6188, %v6190
    %6223 = vst [vmem:[#allocation4 + $0xb80] sm:$0xff] %v6191
    %6224 = vst [vmem:[#allocation4 + $0xb88] sm:$0xff] %v6192
    %6225 = vst [vmem:[#allocation4 + $0xb90] sm:$0xff] %v6193
    %6226 = vst [vmem:[#allocation4 + $0xb98] sm:$0xff] %v6194
    %6227 = vst [vmem:[#allocation4 + $0xba0] sm:$0xff] %v6195
    %6228 = vst [vmem:[#allocation4 + $0xba8] sm:$0xff] %v6196
    %6229 = vst [vmem:[#allocation4 + $0xbb0] sm:$0xff] %v6197
    %6230 = vst [vmem:[#allocation4 + $0xbb8] sm:$0xff] %v6198
    %6231 = vst [vmem:[#allocation4 + $0xbc0] sm:$0xff] %v6199
    %6232 = vst [vmem:[#allocation4 + $0xbc8] sm:$0xff] %v6200
    %6233 = vst [vmem:[#allocation4 + $0xbd0] sm:$0xff] %v6201
    %6234 = vst [vmem:[#allocation4 + $0xbd8] sm:$0xff] %v6202
    %6235 = vst [vmem:[#allocation4 + $0xbe0] sm:$0xff] %v6203
    %6236 = vst [vmem:[#allocation4 + $0xbe8] sm:$0xff] %v6204
    %6237 = vst [vmem:[#allocation4 + $0xbf0] sm:$0xff] %v6205
    %6238 = vst [vmem:[#allocation4 + $0xbf8] sm:$0xff] %v6206
    %v6239 = vld [vmem:[#allocation3 + $0x10] sm:$0xff]
    %v6240 = vld [vmem:[#allocation3 + $0x18] sm:$0xff]
    %v6241 = vld [vmem:[#allocation3 + $0x20] sm:$0xff]
    %v6242 = vld [vmem:[#allocation3 + $0x28] sm:$0xff]
    %v6243 = vld [vmem:[#allocation3 + $0x30] sm:$0xff]
    %v6244 = vld [vmem:[#allocation3 + $0x38] sm:$0xff]
    %v6245 = vld [vmem:[#allocation3 + $0x40] sm:$0xff]
    %v6246 = vld [vmem:[#allocation3 + $0x48] sm:$0xff]
    %v6247 = vld [vmem:[#allocation3 + $0x50] sm:$0xff]
    %v6248 = vld [vmem:[#allocation3 + $0x58] sm:$0xff]
    %v6249 = vld [vmem:[#allocation3 + $0x60] sm:$0xff]
    %v6250 = vld [vmem:[#allocation3 + $0x68] sm:$0xff]
    %v6251 = vld [vmem:[#allocation3 + $0x70] sm:$0xff]
    %v6252 = vld [vmem:[#allocation3 + $0x78] sm:$0xff]
    %v6253 = vld [vmem:[#allocation3 + $0x80] sm:$0xff]
    %v6254 = vld [vmem:[#allocation3 + $0x88] sm:$0xff]
    %v6255 = vld [vmem:[#allocation3 + $0x90] sm:$0xff]
    %6273 = vrot.lane.b32.xlu0 %v6239, 120
    %v6274 = vpop.permute.xlu0 %6273
    %6275 = vrot.lane.b32.xlu0 %v6240, 120
    %v6276 = vpop.permute.xlu0 %6275
    %6277 = vrot.lane.b32.xlu0 %v6241, 120
    %v6278 = vpop.permute.xlu0 %6277
    %6279 = vrot.lane.b32.xlu0 %v6242, 120
    %v6280 = vpop.permute.xlu0 %6279
    %6281 = vrot.lane.b32.xlu0 %v6243, 120
    %v6282 = vpop.permute.xlu0 %6281
    %6283 = vrot.lane.b32.xlu0 %v6244, 120
    %v6284 = vpop.permute.xlu0 %6283
    %6285 = vrot.lane.b32.xlu0 %v6245, 120
    %v6286 = vpop.permute.xlu0 %6285
    %6287 = vrot.lane.b32.xlu0 %v6246, 120
    %v6288 = vpop.permute.xlu0 %6287
    %6289 = vrot.lane.b32.xlu0 %v6247, 120
    %v6290 = vpop.permute.xlu0 %6289
    %6291 = vrot.lane.b32.xlu0 %v6248, 120
    %v6292 = vpop.permute.xlu0 %6291
    %6293 = vrot.lane.b32.xlu0 %v6249, 120
    %v6294 = vpop.permute.xlu0 %6293
    %6295 = vrot.lane.b32.xlu0 %v6250, 120
    %v6296 = vpop.permute.xlu0 %6295
    %6297 = vrot.lane.b32.xlu0 %v6251, 120
    %v6298 = vpop.permute.xlu0 %6297
    %6299 = vrot.lane.b32.xlu0 %v6252, 120
    %v6300 = vpop.permute.xlu0 %6299
    %6301 = vrot.lane.b32.xlu0 %v6253, 120
    %v6302 = vpop.permute.xlu0 %6301
    %6303 = vrot.lane.b32.xlu0 %v6254, 120
    %v6304 = vpop.permute.xlu0 %6303
    %6305 = vrot.lane.b32.xlu0 %v6255, 120
    %v6306 = vpop.permute.xlu0 %6305
    %v6307 = vsel %vm4152, %v6274, %v6276
    %v6308 = vsel %vm4152, %v6276, %v6278
    %v6309 = vsel %vm4152, %v6278, %v6280
    %v6310 = vsel %vm4152, %v6280, %v6282
    %v6311 = vsel %vm4152, %v6282, %v6284
    %v6312 = vsel %vm4152, %v6284, %v6286
    %v6313 = vsel %vm4152, %v6286, %v6288
    %v6314 = vsel %vm4152, %v6288, %v6290
    %v6315 = vsel %vm4152, %v6290, %v6292
    %v6316 = vsel %vm4152, %v6292, %v6294
    %v6317 = vsel %vm4152, %v6294, %v6296
    %v6318 = vsel %vm4152, %v6296, %v6298
    %v6319 = vsel %vm4152, %v6298, %v6300
    %v6320 = vsel %vm4152, %v6300, %v6302
    %v6321 = vsel %vm4152, %v6302, %v6304
    %v6322 = vsel %vm4152, %v6304, %v6306
    %6339 = vst [vmem:[#allocation4 + $0xc00] sm:$0xff] %v6307
    %6340 = vst [vmem:[#allocation4 + $0xc08] sm:$0xff] %v6308
    %6341 = vst [vmem:[#allocation4 + $0xc10] sm:$0xff] %v6309
    %6342 = vst [vmem:[#allocation4 + $0xc18] sm:$0xff] %v6310
    %6343 = vst [vmem:[#allocation4 + $0xc20] sm:$0xff] %v6311
    %6344 = vst [vmem:[#allocation4 + $0xc28] sm:$0xff] %v6312
    %6345 = vst [vmem:[#allocation4 + $0xc30] sm:$0xff] %v6313
    %6346 = vst [vmem:[#allocation4 + $0xc38] sm:$0xff] %v6314
    %6347 = vst [vmem:[#allocation4 + $0xc40] sm:$0xff] %v6315
    %6348 = vst [vmem:[#allocation4 + $0xc48] sm:$0xff] %v6316
    %6349 = vst [vmem:[#allocation4 + $0xc50] sm:$0xff] %v6317
    %6350 = vst [vmem:[#allocation4 + $0xc58] sm:$0xff] %v6318
    %6351 = vst [vmem:[#allocation4 + $0xc60] sm:$0xff] %v6319
    %6352 = vst [vmem:[#allocation4 + $0xc68] sm:$0xff] %v6320
    %6353 = vst [vmem:[#allocation4 + $0xc70] sm:$0xff] %v6321
    %6354 = vst [vmem:[#allocation4 + $0xc78] sm:$0xff] %v6322
    %v6355 = vld [vmem:[%s3] sm:$0xff]
    %v6356 = vld [vmem:[%s3 + $0x8] sm:$0xff]
    %v6357 = vld [vmem:[%s3 + $0x10] sm:$0xff]
    %v6358 = vld [vmem:[%s3 + $0x18] sm:$0xff]
    %v6359 = vld [vmem:[#allocation4] sm:$0xff]
    %v6360 = vld [vmem:[#allocation4 + $0x8] sm:$0xff]
    %v6361 = vld [vmem:[#allocation4 + $0x10] sm:$0xff]
    %v6362 = vld [vmem:[#allocation4 + $0x18] sm:$0xff]
    %v6363 = vld [vmem:[#allocation4 + $0x20] sm:$0xff]
    %v6364 = vld [vmem:[#allocation4 + $0x28] sm:$0xff]
    %v6365 = vld [vmem:[#allocation4 + $0x30] sm:$0xff]
    %v6366 = vld [vmem:[#allocation4 + $0x38] sm:$0xff]
    %v6367 = vld [vmem:[#allocation4 + $0x40] sm:$0xff]
    %v6368 = vld [vmem:[#allocation4 + $0x48] sm:$0xff]
    %v6369 = vld [vmem:[#allocation4 + $0x50] sm:$0xff]
    %v6370 = vld [vmem:[#allocation4 + $0x58] sm:$0xff]
    %v6371 = vld [vmem:[#allocation4 + $0x60] sm:$0xff]
    %v6372 = vld [vmem:[#allocation4 + $0x68] sm:$0xff]
    %v6373 = vld [vmem:[#allocation4 + $0x70] sm:$0xff]
    %v6374 = vld [vmem:[#allocation4 + $0x78] sm:$0xff]
    %v6375 = vld [vmem:[#allocation4 + $0x80] sm:$0xff]
    %v6376 = vld [vmem:[#allocation4 + $0x88] sm:$0xff]
    %v6377 = vld [vmem:[#allocation4 + $0x90] sm:$0xff]
    %v6378 = vld [vmem:[#allocation4 + $0x98] sm:$0xff]
    %v6379 = vld [vmem:[#allocation4 + $0xa0] sm:$0xff]
    %v6380 = vld [vmem:[#allocation4 + $0xa8] sm:$0xff]
    %v6381 = vld [vmem:[#allocation4 + $0xb0] sm:$0xff]
    %v6382 = vld [vmem:[#allocation4 + $0xb8] sm:$0xff]
    %v6383 = vld [vmem:[#allocation4 + $0xc0] sm:$0xff]
    %v6384 = vld [vmem:[#allocation4 + $0xc8] sm:$0xff]
    %v6385 = vld [vmem:[#allocation4 + $0xd0] sm:$0xff]
    %v6386 = vld [vmem:[#allocation4 + $0xd8] sm:$0xff]
    %v6387 = vld [vmem:[#allocation4 + $0xe0] sm:$0xff]
    %v6388 = vld [vmem:[#allocation4 + $0xe8] sm:$0xff]
    %v6389 = vld [vmem:[#allocation4 + $0xf0] sm:$0xff]
    %v6390 = vld [vmem:[#allocation4 + $0xf8] sm:$0xff]
    %v6391 = vld [vmem:[#allocation4 + $0x100] sm:$0xff]
    %v6392 = vld [vmem:[#allocation4 + $0x108] sm:$0xff]
    %v6393 = vld [vmem:[#allocation4 + $0x110] sm:$0xff]
    %v6394 = vld [vmem:[#allocation4 + $0x118] sm:$0xff]
    %v6395 = vld [vmem:[#allocation4 + $0x120] sm:$0xff]
    %v6396 = vld [vmem:[#allocation4 + $0x128] sm:$0xff]
    %v6397 = vld [vmem:[#allocation4 + $0x130] sm:$0xff]
    %v6398 = vld [vmem:[#allocation4 + $0x138] sm:$0xff]
    %v6399 = vld [vmem:[#allocation4 + $0x140] sm:$0xff]
    %v6400 = vld [vmem:[#allocation4 + $0x148] sm:$0xff]
    %v6401 = vld [vmem:[#allocation4 + $0x150] sm:$0xff]
    %v6402 = vld [vmem:[#allocation4 + $0x158] sm:$0xff]
    %v6403 = vld [vmem:[#allocation4 + $0x160] sm:$0xff]
    %v6404 = vld [vmem:[#allocation4 + $0x168] sm:$0xff]
    %v6405 = vld [vmem:[#allocation4 + $0x170] sm:$0xff]
    %v6406 = vld [vmem:[#allocation4 + $0x178] sm:$0xff]
    %v6407 = vld [vmem:[#allocation4 + $0x180] sm:$0xff]
    %v6408 = vld [vmem:[#allocation4 + $0x188] sm:$0xff]
    %v6409 = vld [vmem:[#allocation4 + $0x190] sm:$0xff]
    %v6410 = vld [vmem:[#allocation4 + $0x198] sm:$0xff]
    %v6411 = vld [vmem:[#allocation4 + $0x1a0] sm:$0xff]
    %v6412 = vld [vmem:[#allocation4 + $0x1a8] sm:$0xff]
    %v6413 = vld [vmem:[#allocation4 + $0x1b0] sm:$0xff]
    %v6414 = vld [vmem:[#allocation4 + $0x1b8] sm:$0xff]
    %v6415 = vld [vmem:[#allocation4 + $0x1c0] sm:$0xff]
    %v6416 = vld [vmem:[#allocation4 + $0x1c8] sm:$0xff]
    %v6417 = vld [vmem:[#allocation4 + $0x1d0] sm:$0xff]
    %v6418 = vld [vmem:[#allocation4 + $0x1d8] sm:$0xff]
    %v6419 = vld [vmem:[#allocation4 + $0x1e0] sm:$0xff]
    %v6420 = vld [vmem:[#allocation4 + $0x1e8] sm:$0xff]
    %v6421 = vld [vmem:[#allocation4 + $0x1f0] sm:$0xff]
    %v6422 = vld [vmem:[#allocation4 + $0x1f8] sm:$0xff]
    %v6423 = vld [vmem:[#allocation4 + $0x200] sm:$0xff]
    %v6424 = vld [vmem:[#allocation4 + $0x208] sm:$0xff]
    %v6425 = vld [vmem:[#allocation4 + $0x210] sm:$0xff]
    %v6426 = vld [vmem:[#allocation4 + $0x218] sm:$0xff]
    %v6427 = vld [vmem:[#allocation4 + $0x220] sm:$0xff]
    %v6428 = vld [vmem:[#allocation4 + $0x228] sm:$0xff]
    %v6429 = vld [vmem:[#allocation4 + $0x230] sm:$0xff]
    %v6430 = vld [vmem:[#allocation4 + $0x238] sm:$0xff]
    %v6431 = vld [vmem:[#allocation4 + $0x240] sm:$0xff]
    %v6432 = vld [vmem:[#allocation4 + $0x248] sm:$0xff]
    %v6433 = vld [vmem:[#allocation4 + $0x250] sm:$0xff]
    %v6434 = vld [vmem:[#allocation4 + $0x258] sm:$0xff]
    %v6435 = vld [vmem:[#allocation4 + $0x260] sm:$0xff]
    %v6436 = vld [vmem:[#allocation4 + $0x268] sm:$0xff]
    %v6437 = vld [vmem:[#allocation4 + $0x270] sm:$0xff]
    %v6438 = vld [vmem:[#allocation4 + $0x278] sm:$0xff]
    %v6439 = vld [vmem:[#allocation4 + $0x280] sm:$0xff]
    %v6440 = vld [vmem:[#allocation4 + $0x288] sm:$0xff]
    %v6441 = vld [vmem:[#allocation4 + $0x290] sm:$0xff]
    %v6442 = vld [vmem:[#allocation4 + $0x298] sm:$0xff]
    %v6443 = vld [vmem:[#allocation4 + $0x2a0] sm:$0xff]
    %v6444 = vld [vmem:[#allocation4 + $0x2a8] sm:$0xff]
    %v6445 = vld [vmem:[#allocation4 + $0x2b0] sm:$0xff]
    %v6446 = vld [vmem:[#allocation4 + $0x2b8] sm:$0xff]
    %v6447 = vld [vmem:[#allocation4 + $0x2c0] sm:$0xff]
    %v6448 = vld [vmem:[#allocation4 + $0x2c8] sm:$0xff]
    %v6449 = vld [vmem:[#allocation4 + $0x2d0] sm:$0xff]
    %v6450 = vld [vmem:[#allocation4 + $0x2d8] sm:$0xff]
    %v6451 = vld [vmem:[#allocation4 + $0x2e0] sm:$0xff]
    %v6452 = vld [vmem:[#allocation4 + $0x2e8] sm:$0xff]
    %v6453 = vld [vmem:[#allocation4 + $0x2f0] sm:$0xff]
    %v6454 = vld [vmem:[#allocation4 + $0x2f8] sm:$0xff]
    %v6455 = vld [vmem:[#allocation4 + $0x300] sm:$0xff]
    %v6456 = vld [vmem:[#allocation4 + $0x308] sm:$0xff]
    %v6457 = vld [vmem:[#allocation4 + $0x310] sm:$0xff]
    %v6458 = vld [vmem:[#allocation4 + $0x318] sm:$0xff]
    %v6459 = vld [vmem:[#allocation4 + $0x320] sm:$0xff]
    %v6460 = vld [vmem:[#allocation4 + $0x328] sm:$0xff]
    %v6461 = vld [vmem:[#allocation4 + $0x330] sm:$0xff]
    %v6462 = vld [vmem:[#allocation4 + $0x338] sm:$0xff]
    %v6463 = vld [vmem:[#allocation4 + $0x340] sm:$0xff]
    %v6464 = vld [vmem:[#allocation4 + $0x348] sm:$0xff]
    %v6465 = vld [vmem:[#allocation4 + $0x350] sm:$0xff]
    %v6466 = vld [vmem:[#allocation4 + $0x358] sm:$0xff]
    %v6467 = vld [vmem:[#allocation4 + $0x360] sm:$0xff]
    %v6468 = vld [vmem:[#allocation4 + $0x368] sm:$0xff]
    %v6469 = vld [vmem:[#allocation4 + $0x370] sm:$0xff]
    %v6470 = vld [vmem:[#allocation4 + $0x378] sm:$0xff]
    %v6471 = vld [vmem:[#allocation4 + $0x380] sm:$0xff]
    %v6472 = vld [vmem:[#allocation4 + $0x388] sm:$0xff]
    %v6473 = vld [vmem:[#allocation4 + $0x390] sm:$0xff]
    %v6474 = vld [vmem:[#allocation4 + $0x398] sm:$0xff]
    %v6475 = vld [vmem:[#allocation4 + $0x3a0] sm:$0xff]
    %v6476 = vld [vmem:[#allocation4 + $0x3a8] sm:$0xff]
    %v6477 = vld [vmem:[#allocation4 + $0x3b0] sm:$0xff]
    %v6478 = vld [vmem:[#allocation4 + $0x3b8] sm:$0xff]
    %v6479 = vld [vmem:[#allocation4 + $0x3c0] sm:$0xff]
    %v6480 = vld [vmem:[#allocation4 + $0x3c8] sm:$0xff]
    %v6481 = vld [vmem:[#allocation4 + $0x3d0] sm:$0xff]
    %v6482 = vld [vmem:[#allocation4 + $0x3d8] sm:$0xff]
    %v6483 = vld [vmem:[#allocation4 + $0x3e0] sm:$0xff]
    %v6484 = vld [vmem:[#allocation4 + $0x3e8] sm:$0xff]
    %v6485 = vld [vmem:[#allocation4 + $0x3f0] sm:$0xff]
    %v6486 = vld [vmem:[#allocation4 + $0x3f8] sm:$0xff]
    %v6487 = vld [vmem:[#allocation4 + $0x400] sm:$0xff]
    %v6488 = vld [vmem:[#allocation4 + $0x408] sm:$0xff]
    %v6489 = vld [vmem:[#allocation4 + $0x410] sm:$0xff]
    %v6490 = vld [vmem:[#allocation4 + $0x418] sm:$0xff]
    %v6491 = vld [vmem:[#allocation4 + $0x420] sm:$0xff]
    %v6492 = vld [vmem:[#allocation4 + $0x428] sm:$0xff]
    %v6493 = vld [vmem:[#allocation4 + $0x430] sm:$0xff]
    %v6494 = vld [vmem:[#allocation4 + $0x438] sm:$0xff]
    %v6495 = vld [vmem:[#allocation4 + $0x440] sm:$0xff]
    %v6496 = vld [vmem:[#allocation4 + $0x448] sm:$0xff]
    %v6497 = vld [vmem:[#allocation4 + $0x450] sm:$0xff]
    %v6498 = vld [vmem:[#allocation4 + $0x458] sm:$0xff]
    %v6499 = vld [vmem:[#allocation4 + $0x460] sm:$0xff]
    %v6500 = vld [vmem:[#allocation4 + $0x468] sm:$0xff]
    %v6501 = vld [vmem:[#allocation4 + $0x470] sm:$0xff]
    %v6502 = vld [vmem:[#allocation4 + $0x478] sm:$0xff]
    %v6503 = vld [vmem:[#allocation4 + $0x480] sm:$0xff]
    %v6504 = vld [vmem:[#allocation4 + $0x488] sm:$0xff]
    %v6505 = vld [vmem:[#allocation4 + $0x490] sm:$0xff]
    %v6506 = vld [vmem:[#allocation4 + $0x498] sm:$0xff]
    %v6507 = vld [vmem:[#allocation4 + $0x4a0] sm:$0xff]
    %v6508 = vld [vmem:[#allocation4 + $0x4a8] sm:$0xff]
    %v6509 = vld [vmem:[#allocation4 + $0x4b0] sm:$0xff]
    %v6510 = vld [vmem:[#allocation4 + $0x4b8] sm:$0xff]
    %v6511 = vld [vmem:[#allocation4 + $0x4c0] sm:$0xff]
    %v6512 = vld [vmem:[#allocation4 + $0x4c8] sm:$0xff]
    %v6513 = vld [vmem:[#allocation4 + $0x4d0] sm:$0xff]
    %v6514 = vld [vmem:[#allocation4 + $0x4d8] sm:$0xff]
    %v6515 = vld [vmem:[#allocation4 + $0x4e0] sm:$0xff]
    %v6516 = vld [vmem:[#allocation4 + $0x4e8] sm:$0xff]
    %v6517 = vld [vmem:[#allocation4 + $0x4f0] sm:$0xff]
    %v6518 = vld [vmem:[#allocation4 + $0x4f8] sm:$0xff]
    %v6519 = vld [vmem:[#allocation4 + $0x500] sm:$0xff]
    %v6520 = vld [vmem:[#allocation4 + $0x508] sm:$0xff]
    %v6521 = vld [vmem:[#allocation4 + $0x510] sm:$0xff]
    %v6522 = vld [vmem:[#allocation4 + $0x518] sm:$0xff]
    %v6523 = vld [vmem:[#allocation4 + $0x520] sm:$0xff]
    %v6524 = vld [vmem:[#allocation4 + $0x528] sm:$0xff]
    %v6525 = vld [vmem:[#allocation4 + $0x530] sm:$0xff]
    %v6526 = vld [vmem:[#allocation4 + $0x538] sm:$0xff]
    %v6527 = vld [vmem:[#allocation4 + $0x540] sm:$0xff]
    %v6528 = vld [vmem:[#allocation4 + $0x548] sm:$0xff]
    %v6529 = vld [vmem:[#allocation4 + $0x550] sm:$0xff]
    %v6530 = vld [vmem:[#allocation4 + $0x558] sm:$0xff]
    %v6531 = vld [vmem:[#allocation4 + $0x560] sm:$0xff]
    %v6532 = vld [vmem:[#allocation4 + $0x568] sm:$0xff]
    %v6533 = vld [vmem:[#allocation4 + $0x570] sm:$0xff]
    %v6534 = vld [vmem:[#allocation4 + $0x578] sm:$0xff]
    %v6535 = vld [vmem:[#allocation4 + $0x580] sm:$0xff]
    %v6536 = vld [vmem:[#allocation4 + $0x588] sm:$0xff]
    %v6537 = vld [vmem:[#allocation4 + $0x590] sm:$0xff]
    %v6538 = vld [vmem:[#allocation4 + $0x598] sm:$0xff]
    %v6539 = vld [vmem:[#allocation4 + $0x5a0] sm:$0xff]
    %v6540 = vld [vmem:[#allocation4 + $0x5a8] sm:$0xff]
    %v6541 = vld [vmem:[#allocation4 + $0x5b0] sm:$0xff]
    %v6542 = vld [vmem:[#allocation4 + $0x5b8] sm:$0xff]
    %v6543 = vld [vmem:[#allocation4 + $0x5c0] sm:$0xff]
    %v6544 = vld [vmem:[#allocation4 + $0x5c8] sm:$0xff]
    %v6545 = vld [vmem:[#allocation4 + $0x5d0] sm:$0xff]
    %v6546 = vld [vmem:[#allocation4 + $0x5d8] sm:$0xff]
    %v6547 = vld [vmem:[#allocation4 + $0x5e0] sm:$0xff]
    %v6548 = vld [vmem:[#allocation4 + $0x5e8] sm:$0xff]
    %v6549 = vld [vmem:[#allocation4 + $0x5f0] sm:$0xff]
    %v6550 = vld [vmem:[#allocation4 + $0x5f8] sm:$0xff]
    %v6551 = vld [vmem:[#allocation4 + $0x600] sm:$0xff]
    %v6552 = vld [vmem:[#allocation4 + $0x608] sm:$0xff]
    %v6553 = vld [vmem:[#allocation4 + $0x610] sm:$0xff]
    %v6554 = vld [vmem:[#allocation4 + $0x618] sm:$0xff]
    %v6555 = vld [vmem:[#allocation4 + $0x620] sm:$0xff]
    %v6556 = vld [vmem:[#allocation4 + $0x628] sm:$0xff]
    %v6557 = vld [vmem:[#allocation4 + $0x630] sm:$0xff]
    %v6558 = vld [vmem:[#allocation4 + $0x638] sm:$0xff]
    %v6559 = vld [vmem:[#allocation4 + $0x640] sm:$0xff]
    %v6560 = vld [vmem:[#allocation4 + $0x648] sm:$0xff]
    %v6561 = vld [vmem:[#allocation4 + $0x650] sm:$0xff]
    %v6562 = vld [vmem:[#allocation4 + $0x658] sm:$0xff]
    %v6563 = vld [vmem:[#allocation4 + $0x660] sm:$0xff]
    %v6564 = vld [vmem:[#allocation4 + $0x668] sm:$0xff]
    %v6565 = vld [vmem:[#allocation4 + $0x670] sm:$0xff]
    %v6566 = vld [vmem:[#allocation4 + $0x678] sm:$0xff]
    %v6567 = vld [vmem:[#allocation4 + $0x680] sm:$0xff]
    %v6568 = vld [vmem:[#allocation4 + $0x688] sm:$0xff]
    %v6569 = vld [vmem:[#allocation4 + $0x690] sm:$0xff]
    %v6570 = vld [vmem:[#allocation4 + $0x698] sm:$0xff]
    %v6571 = vld [vmem:[#allocation4 + $0x6a0] sm:$0xff]
    %v6572 = vld [vmem:[#allocation4 + $0x6a8] sm:$0xff]
    %v6573 = vld [vmem:[#allocation4 + $0x6b0] sm:$0xff]
    %v6574 = vld [vmem:[#allocation4 + $0x6b8] sm:$0xff]
    %v6575 = vld [vmem:[#allocation4 + $0x6c0] sm:$0xff]
    %v6576 = vld [vmem:[#allocation4 + $0x6c8] sm:$0xff]
    %v6577 = vld [vmem:[#allocation4 + $0x6d0] sm:$0xff]
    %v6578 = vld [vmem:[#allocation4 + $0x6d8] sm:$0xff]
    %v6579 = vld [vmem:[#allocation4 + $0x6e0] sm:$0xff]
    %v6580 = vld [vmem:[#allocation4 + $0x6e8] sm:$0xff]
    %v6581 = vld [vmem:[#allocation4 + $0x6f0] sm:$0xff]
    %v6582 = vld [vmem:[#allocation4 + $0x6f8] sm:$0xff]
    %v6583 = vld [vmem:[#allocation4 + $0x700] sm:$0xff]
    %v6584 = vld [vmem:[#allocation4 + $0x708] sm:$0xff]
    %v6585 = vld [vmem:[#allocation4 + $0x710] sm:$0xff]
    %v6586 = vld [vmem:[#allocation4 + $0x718] sm:$0xff]
    %v6587 = vld [vmem:[#allocation4 + $0x720] sm:$0xff]
    %v6588 = vld [vmem:[#allocation4 + $0x728] sm:$0xff]
    %v6589 = vld [vmem:[#allocation4 + $0x730] sm:$0xff]
    %v6590 = vld [vmem:[#allocation4 + $0x738] sm:$0xff]
    %v6591 = vld [vmem:[#allocation4 + $0x740] sm:$0xff]
    %v6592 = vld [vmem:[#allocation4 + $0x748] sm:$0xff]
    %v6593 = vld [vmem:[#allocation4 + $0x750] sm:$0xff]
    %v6594 = vld [vmem:[#allocation4 + $0x758] sm:$0xff]
    %v6595 = vld [vmem:[#allocation4 + $0x760] sm:$0xff]
    %v6596 = vld [vmem:[#allocation4 + $0x768] sm:$0xff]
    %v6597 = vld [vmem:[#allocation4 + $0x770] sm:$0xff]
    %v6598 = vld [vmem:[#allocation4 + $0x778] sm:$0xff]
    %v6599 = vld [vmem:[#allocation4 + $0x780] sm:$0xff]
    %v6600 = vld [vmem:[#allocation4 + $0x788] sm:$0xff]
    %v6601 = vld [vmem:[#allocation4 + $0x790] sm:$0xff]
    %v6602 = vld [vmem:[#allocation4 + $0x798] sm:$0xff]
    %v6603 = vld [vmem:[#allocation4 + $0x7a0] sm:$0xff]
    %v6604 = vld [vmem:[#allocation4 + $0x7a8] sm:$0xff]
    %v6605 = vld [vmem:[#allocation4 + $0x7b0] sm:$0xff]
    %v6606 = vld [vmem:[#allocation4 + $0x7b8] sm:$0xff]
    %v6607 = vld [vmem:[#allocation4 + $0x7c0] sm:$0xff]
    %v6608 = vld [vmem:[#allocation4 + $0x7c8] sm:$0xff]
    %v6609 = vld [vmem:[#allocation4 + $0x7d0] sm:$0xff]
    %v6610 = vld [vmem:[#allocation4 + $0x7d8] sm:$0xff]
    %v6611 = vld [vmem:[#allocation4 + $0x7e0] sm:$0xff]
    %v6612 = vld [vmem:[#allocation4 + $0x7e8] sm:$0xff]
    %v6613 = vld [vmem:[#allocation4 + $0x7f0] sm:$0xff]
    %v6614 = vld [vmem:[#allocation4 + $0x7f8] sm:$0xff]
    %v6615 = vld [vmem:[#allocation4 + $0x800] sm:$0xff]
    %v6616 = vld [vmem:[#allocation4 + $0x808] sm:$0xff]
    %v6617 = vld [vmem:[#allocation4 + $0x810] sm:$0xff]
    %v6618 = vld [vmem:[#allocation4 + $0x818] sm:$0xff]
    %v6619 = vld [vmem:[#allocation4 + $0x820] sm:$0xff]
    %v6620 = vld [vmem:[#allocation4 + $0x828] sm:$0xff]
    %v6621 = vld [vmem:[#allocation4 + $0x830] sm:$0xff]
    %v6622 = vld [vmem:[#allocation4 + $0x838] sm:$0xff]
    %v6623 = vld [vmem:[#allocation4 + $0x840] sm:$0xff]
    %v6624 = vld [vmem:[#allocation4 + $0x848] sm:$0xff]
    %v6625 = vld [vmem:[#allocation4 + $0x850] sm:$0xff]
    %v6626 = vld [vmem:[#allocation4 + $0x858] sm:$0xff]
    %v6627 = vld [vmem:[#allocation4 + $0x860] sm:$0xff]
    %v6628 = vld [vmem:[#allocation4 + $0x868] sm:$0xff]
    %v6629 = vld [vmem:[#allocation4 + $0x870] sm:$0xff]
    %v6630 = vld [vmem:[#allocation4 + $0x878] sm:$0xff]
    %v6631 = vld [vmem:[#allocation4 + $0x880] sm:$0xff]
    %v6632 = vld [vmem:[#allocation4 + $0x888] sm:$0xff]
    %v6633 = vld [vmem:[#allocation4 + $0x890] sm:$0xff]
    %v6634 = vld [vmem:[#allocation4 + $0x898] sm:$0xff]
    %v6635 = vld [vmem:[#allocation4 + $0x8a0] sm:$0xff]
    %v6636 = vld [vmem:[#allocation4 + $0x8a8] sm:$0xff]
    %v6637 = vld [vmem:[#allocation4 + $0x8b0] sm:$0xff]
    %v6638 = vld [vmem:[#allocation4 + $0x8b8] sm:$0xff]
    %v6639 = vld [vmem:[#allocation4 + $0x8c0] sm:$0xff]
    %v6640 = vld [vmem:[#allocation4 + $0x8c8] sm:$0xff]
    %v6641 = vld [vmem:[#allocation4 + $0x8d0] sm:$0xff]
    %v6642 = vld [vmem:[#allocation4 + $0x8d8] sm:$0xff]
    %v6643 = vld [vmem:[#allocation4 + $0x8e0] sm:$0xff]
    %v6644 = vld [vmem:[#allocation4 + $0x8e8] sm:$0xff]
    %v6645 = vld [vmem:[#allocation4 + $0x8f0] sm:$0xff]
    %v6646 = vld [vmem:[#allocation4 + $0x8f8] sm:$0xff]
    %v6647 = vld [vmem:[#allocation4 + $0x900] sm:$0xff]
    %v6648 = vld [vmem:[#allocation4 + $0x908] sm:$0xff]
    %v6649 = vld [vmem:[#allocation4 + $0x910] sm:$0xff]
    %v6650 = vld [vmem:[#allocation4 + $0x918] sm:$0xff]
    %v6651 = vld [vmem:[#allocation4 + $0x920] sm:$0xff]
    %v6652 = vld [vmem:[#allocation4 + $0x928] sm:$0xff]
    %v6653 = vld [vmem:[#allocation4 + $0x930] sm:$0xff]
    %v6654 = vld [vmem:[#allocation4 + $0x938] sm:$0xff]
    %v6655 = vld [vmem:[#allocation4 + $0x940] sm:$0xff]
    %v6656 = vld [vmem:[#allocation4 + $0x948] sm:$0xff]
    %v6657 = vld [vmem:[#allocation4 + $0x950] sm:$0xff]
    %v6658 = vld [vmem:[#allocation4 + $0x958] sm:$0xff]
    %v6659 = vld [vmem:[#allocation4 + $0x960] sm:$0xff]
    %v6660 = vld [vmem:[#allocation4 + $0x968] sm:$0xff]
    %v6661 = vld [vmem:[#allocation4 + $0x970] sm:$0xff]
    %v6662 = vld [vmem:[#allocation4 + $0x978] sm:$0xff]
    %v6663 = vld [vmem:[#allocation4 + $0x980] sm:$0xff]
    %v6664 = vld [vmem:[#allocation4 + $0x988] sm:$0xff]
    %v6665 = vld [vmem:[#allocation4 + $0x990] sm:$0xff]
    %v6666 = vld [vmem:[#allocation4 + $0x998] sm:$0xff]
    %v6667 = vld [vmem:[#allocation4 + $0x9a0] sm:$0xff]
    %v6668 = vld [vmem:[#allocation4 + $0x9a8] sm:$0xff]
    %v6669 = vld [vmem:[#allocation4 + $0x9b0] sm:$0xff]
    %v6670 = vld [vmem:[#allocation4 + $0x9b8] sm:$0xff]
    %v6671 = vld [vmem:[#allocation4 + $0x9c0] sm:$0xff]
    %v6672 = vld [vmem:[#allocation4 + $0x9c8] sm:$0xff]
    %v6673 = vld [vmem:[#allocation4 + $0x9d0] sm:$0xff]
    %v6674 = vld [vmem:[#allocation4 + $0x9d8] sm:$0xff]
    %v6675 = vld [vmem:[#allocation4 + $0x9e0] sm:$0xff]
    %v6676 = vld [vmem:[#allocation4 + $0x9e8] sm:$0xff]
    %v6677 = vld [vmem:[#allocation4 + $0x9f0] sm:$0xff]
    %v6678 = vld [vmem:[#allocation4 + $0x9f8] sm:$0xff]
    %v6679 = vld [vmem:[#allocation4 + $0xa00] sm:$0xff]
    %v6680 = vld [vmem:[#allocation4 + $0xa08] sm:$0xff]
    %v6681 = vld [vmem:[#allocation4 + $0xa10] sm:$0xff]
    %v6682 = vld [vmem:[#allocation4 + $0xa18] sm:$0xff]
    %v6683 = vld [vmem:[#allocation4 + $0xa20] sm:$0xff]
    %v6684 = vld [vmem:[#allocation4 + $0xa28] sm:$0xff]
    %v6685 = vld [vmem:[#allocation4 + $0xa30] sm:$0xff]
    %v6686 = vld [vmem:[#allocation4 + $0xa38] sm:$0xff]
    %v6687 = vld [vmem:[#allocation4 + $0xa40] sm:$0xff]
    %v6688 = vld [vmem:[#allocation4 + $0xa48] sm:$0xff]
    %v6689 = vld [vmem:[#allocation4 + $0xa50] sm:$0xff]
    %v6690 = vld [vmem:[#allocation4 + $0xa58] sm:$0xff]
    %v6691 = vld [vmem:[#allocation4 + $0xa60] sm:$0xff]
    %v6692 = vld [vmem:[#allocation4 + $0xa68] sm:$0xff]
    %v6693 = vld [vmem:[#allocation4 + $0xa70] sm:$0xff]
    %v6694 = vld [vmem:[#allocation4 + $0xa78] sm:$0xff]
    %v6695 = vld [vmem:[#allocation4 + $0xa80] sm:$0xff]
    %v6696 = vld [vmem:[#allocation4 + $0xa88] sm:$0xff]
    %v6697 = vld [vmem:[#allocation4 + $0xa90] sm:$0xff]
    %v6698 = vld [vmem:[#allocation4 + $0xa98] sm:$0xff]
    %v6699 = vld [vmem:[#allocation4 + $0xaa0] sm:$0xff]
    %v6700 = vld [vmem:[#allocation4 + $0xaa8] sm:$0xff]
    %v6701 = vld [vmem:[#allocation4 + $0xab0] sm:$0xff]
    %v6702 = vld [vmem:[#allocation4 + $0xab8] sm:$0xff]
    %v6703 = vld [vmem:[#allocation4 + $0xac0] sm:$0xff]
    %v6704 = vld [vmem:[#allocation4 + $0xac8] sm:$0xff]
    %v6705 = vld [vmem:[#allocation4 + $0xad0] sm:$0xff]
    %v6706 = vld [vmem:[#allocation4 + $0xad8] sm:$0xff]
    %v6707 = vld [vmem:[#allocation4 + $0xae0] sm:$0xff]
    %v6708 = vld [vmem:[#allocation4 + $0xae8] sm:$0xff]
    %v6709 = vld [vmem:[#allocation4 + $0xaf0] sm:$0xff]
    %v6710 = vld [vmem:[#allocation4 + $0xaf8] sm:$0xff]
    %v6711 = vld [vmem:[#allocation4 + $0xb00] sm:$0xff]
    %v6712 = vld [vmem:[#allocation4 + $0xb08] sm:$0xff]
    %v6713 = vld [vmem:[#allocation4 + $0xb10] sm:$0xff]
    %v6714 = vld [vmem:[#allocation4 + $0xb18] sm:$0xff]
    %v6715 = vld [vmem:[#allocation4 + $0xb20] sm:$0xff]
    %v6716 = vld [vmem:[#allocation4 + $0xb28] sm:$0xff]
    %v6717 = vld [vmem:[#allocation4 + $0xb30] sm:$0xff]
    %v6718 = vld [vmem:[#allocation4 + $0xb38] sm:$0xff]
    %v6719 = vld [vmem:[#allocation4 + $0xb40] sm:$0xff]
    %v6720 = vld [vmem:[#allocation4 + $0xb48] sm:$0xff]
    %v6721 = vld [vmem:[#allocation4 + $0xb50] sm:$0xff]
    %v6722 = vld [vmem:[#allocation4 + $0xb58] sm:$0xff]
    %v6723 = vld [vmem:[#allocation4 + $0xb60] sm:$0xff]
    %v6724 = vld [vmem:[#allocation4 + $0xb68] sm:$0xff]
    %v6725 = vld [vmem:[#allocation4 + $0xb70] sm:$0xff]
    %v6726 = vld [vmem:[#allocation4 + $0xb78] sm:$0xff]
    %v6727 = vld [vmem:[#allocation4 + $0xb80] sm:$0xff]
    %v6728 = vld [vmem:[#allocation4 + $0xb88] sm:$0xff]
    %v6729 = vld [vmem:[#allocation4 + $0xb90] sm:$0xff]
    %v6730 = vld [vmem:[#allocation4 + $0xb98] sm:$0xff]
    %v6731 = vld [vmem:[#allocation4 + $0xba0] sm:$0xff]
    %v6732 = vld [vmem:[#allocation4 + $0xba8] sm:$0xff]
    %v6733 = vld [vmem:[#allocation4 + $0xbb0] sm:$0xff]
    %v6734 = vld [vmem:[#allocation4 + $0xbb8] sm:$0xff]
    %v6735 = vld [vmem:[#allocation4 + $0xbc0] sm:$0xff]
    %v6736 = vld [vmem:[#allocation4 + $0xbc8] sm:$0xff]
    %v6737 = vld [vmem:[#allocation4 + $0xbd0] sm:$0xff]
    %v6738 = vld [vmem:[#allocation4 + $0xbd8] sm:$0xff]
    %v6739 = vld [vmem:[#allocation4 + $0xbe0] sm:$0xff]
    %v6740 = vld [vmem:[#allocation4 + $0xbe8] sm:$0xff]
    %v6741 = vld [vmem:[#allocation4 + $0xbf0] sm:$0xff]
    %v6742 = vld [vmem:[#allocation4 + $0xbf8] sm:$0xff]
    %v6743 = vld [vmem:[#allocation4 + $0xc00] sm:$0xff]
    %v6744 = vld [vmem:[#allocation4 + $0xc08] sm:$0xff]
    %v6745 = vld [vmem:[#allocation4 + $0xc10] sm:$0xff]
    %v6746 = vld [vmem:[#allocation4 + $0xc18] sm:$0xff]
    %v6747 = vld [vmem:[#allocation4 + $0xc20] sm:$0xff]
    %v6748 = vld [vmem:[#allocation4 + $0xc28] sm:$0xff]
    %v6749 = vld [vmem:[#allocation4 + $0xc30] sm:$0xff]
    %v6750 = vld [vmem:[#allocation4 + $0xc38] sm:$0xff]
    %v6751 = vld [vmem:[#allocation4 + $0xc40] sm:$0xff]
    %v6752 = vld [vmem:[#allocation4 + $0xc48] sm:$0xff]
    %v6753 = vld [vmem:[#allocation4 + $0xc50] sm:$0xff]
    %v6754 = vld [vmem:[#allocation4 + $0xc58] sm:$0xff]
    %v6755 = vld [vmem:[#allocation4 + $0xc60] sm:$0xff]
    %v6756 = vld [vmem:[#allocation4 + $0xc68] sm:$0xff]
    %v6757 = vld [vmem:[#allocation4 + $0xc70] sm:$0xff]
    %v6758 = vld [vmem:[#allocation4 + $0xc78] sm:$0xff]
    %v6759 = vld [vmem:[%s4] sm:$0xff]
    %v6760 = vld [vmem:[%s4 + $0x8] sm:$0xff]
    %6762 = vset.pattern.permute.xlu0 0
    %6763 = vperm.xlu0 %6762, %v6759
    %v6764 = vpop.permute.xlu0 %6763
    %6767 = vset.pattern.permute.xlu0 0
    %6768 = vperm.xlu0 %6767, %v6760
    %v6769 = vpop.permute.xlu0 %6768
    %vm6771 = vcmask 588800
    %v6773 = vsel %vm6771, %v6356, 0
    %v6776 = vsel %vm6771, %v6358, 0
    %6778 = vmatprep.subr.mxu0 %v6600
    %6779 = vmatpush1.msra.mxu0 %v6599
    %6780 = vmatprep.subr.mxu0 %v6584
    %6781 = vmatpush1.msra.mxu0 %v6583
    %6782 = vmatprep.subr.mxu0 %v6568
    %6783 = vmatpush1.msra.mxu0 %v6567
    %6784 = vmatprep.subr.mxu0 %v6552
    %6785 = vmatpush1.msra.mxu0 %v6551
    %6786 = vmatprep.subr.mxu0 %v6536
    %6787 = vmatpush1.msra.mxu0 %v6535
    %6788 = vmatprep.subr.mxu0 %v6520
    %6789 = vmatpush1.msra.mxu0 %v6519
    %6790 = vmatprep.subr.mxu0 %v6504
    %6791 = vmatpush1.msra.mxu0 %v6503
    %6792 = vmatprep.subr.mxu0 %v6488
    %6793 = vmatpush1.msra.mxu0 %v6487
    %6794 = vmatprep.subr.mxu0 %v6472
    %6795 = vmatpush1.msra.mxu0 %v6471
    %6796 = vmatprep.subr.mxu0 %v6456
    %6797 = vmatpush1.msra.mxu0 %v6455
    %6798 = vmatprep.subr.mxu0 %v6440
    %6799 = vmatpush1.msra.mxu0 %v6439
    %6800 = vmatprep.subr.mxu0 %v6424
    %6801 = vmatpush1.msra.mxu0 %v6423
    %6802 = vmatprep.subr.mxu0 %v6408
    %6803 = vmatpush1.msra.mxu0 %v6407
    %6804 = vmatprep.subr.mxu0 %v6392
    %6805 = vmatpush1.msra.mxu0 %v6391
    %6806 = vmatprep.subr.mxu0 %v6376
    %6807 = vmatpush1.msra.mxu0 %v6375
    %6808 = vmatprep.subr.mxu0 %v6360
    %6809 = vmatpush1.msra.mxu0 %v6359
    %6810 = vmatprep.subr.mxu0 0.0
    %6811 = vmatpush2.msra.mxu0 0.0
    %6812 = vmatprep.subr.mxu0 0.0
    %6813 = vmatpush2.msra.mxu0 0.0
    %6814 = vmatprep.subr.mxu0 0.0
    %6815 = vmatpush2.msra.mxu0 0.0
    %6816 = vmatprep.subr.mxu0 0.0
    %6817 = vmatpush2.msra.mxu0 0.0
    %6818 = vmatprep.subr.mxu0 0.0
    %6819 = vmatpush2.msra.mxu0 0.0
    %6820 = vmatprep.subr.mxu0 0.0
    %6821 = vmatpush2.msra.mxu0 0.0
    %6822 = vmatprep.subr.mxu0 0.0
    %6823 = vmatpush2.msra.mxu0 0.0
    %6824 = vmatprep.subr.mxu0 %v6744
    %6825 = vmatpush2.msra.mxu0 %v6743
    %6826 = vmatprep.subr.mxu0 %v6728
    %6827 = vmatpush2.msra.mxu0 %v6727
    %6828 = vmatprep.subr.mxu0 %v6712
    %6829 = vmatpush2.msra.mxu0 %v6711
    %6830 = vmatprep.subr.mxu0 %v6696
    %6831 = vmatpush2.msra.mxu0 %v6695
    %6832 = vmatprep.subr.mxu0 %v6680
    %6833 = vmatpush2.msra.mxu0 %v6679
    %6834 = vmatprep.subr.mxu0 %v6664
    %6835 = vmatpush2.msra.mxu0 %v6663
    %6836 = vmatprep.subr.mxu0 %v6648
    %6837 = vmatpush2.msra.mxu0 %v6647
    %6838 = vmatprep.subr.mxu0 %v6632
    %6839 = vmatpush2.msra.mxu0 %v6631
    %6840 = vmatprep.subr.mxu0 %v6616
    %6841 = vmatpush2.msra.mxu0 %v6615
    %6842 = vmatprep.mubr.f32.mxu0 %v6773
    %6843 = vmatmul.mubr.f32.gmra.mxu0 %v6355
    %v6844 = vpop.f32.mrf.mxu0
    %v6845 = vadd.f32 %v6764, %v6844
    %v6846 = vpop.f32.mrf.mxu0
    %v6847 = vadd.f32 %v6764, %v6846
    %6848 = vmatprep.mubr.f32.mxu0 %v6776
    %6849 = vmatmul.mubr.f32.gmra.mxu0 %v6357
    %v6850 = vpop.f32.mrf.mxu0
    %v6851 = vadd.f32 %v6769, %v6850
    %v6852 = vpop.f32.mrf.mxu0
    %v6853 = vadd.f32 %v6769, %v6852
    %6854 = vdwg.mxu0
    %6855 = vmatprep.subr.mxu0 %v6602
    %6856 = vmatpush1.msra.mxu0 %v6601
    %6857 = vmatprep.subr.mxu0 %v6586
    %6858 = vmatpush1.msra.mxu0 %v6585
    %6859 = vmatprep.subr.mxu0 %v6570
    %6860 = vmatpush1.msra.mxu0 %v6569
    %6861 = vmatprep.subr.mxu0 %v6554
    %6862 = vmatpush1.msra.mxu0 %v6553
    %6863 = vmatprep.subr.mxu0 %v6538
    %6864 = vmatpush1.msra.mxu0 %v6537
    %6865 = vmatprep.subr.mxu0 %v6522
    %6866 = vmatpush1.msra.mxu0 %v6521
    %6867 = vmatprep.subr.mxu0 %v6506
    %6868 = vmatpush1.msra.mxu0 %v6505
    %6869 = vmatprep.subr.mxu0 %v6490
    %6870 = vmatpush1.msra.mxu0 %v6489
    %6871 = vmatprep.subr.mxu0 %v6474
    %6872 = vmatpush1.msra.mxu0 %v6473
    %6873 = vmatprep.subr.mxu0 %v6458
    %6874 = vmatpush1.msra.mxu0 %v6457
    %6875 = vmatprep.subr.mxu0 %v6442
    %6876 = vmatpush1.msra.mxu0 %v6441
    %6877 = vmatprep.subr.mxu0 %v6426
    %6878 = vmatpush1.msra.mxu0 %v6425
    %6879 = vmatprep.subr.mxu0 %v6410
    %6880 = vmatpush1.msra.mxu0 %v6409
    %6881 = vmatprep.subr.mxu0 %v6394
    %6882 = vmatpush1.msra.mxu0 %v6393
    %6883 = vmatprep.subr.mxu0 %v6378
    %6884 = vmatpush1.msra.mxu0 %v6377
    %6885 = vmatprep.subr.mxu0 %v6362
    %6886 = vmatpush1.msra.mxu0 %v6361
    %6887 = vmatprep.subr.mxu0 0.0
    %6888 = vmatpush2.msra.mxu0 0.0
    %6889 = vmatprep.subr.mxu0 0.0
    %6890 = vmatpush2.msra.mxu0 0.0
    %6891 = vmatprep.subr.mxu0 0.0
    %6892 = vmatpush2.msra.mxu0 0.0
    %6893 = vmatprep.subr.mxu0 0.0
    %6894 = vmatpush2.msra.mxu0 0.0
    %6895 = vmatprep.subr.mxu0 0.0
    %6896 = vmatpush2.msra.mxu0 0.0
    %6897 = vmatprep.subr.mxu0 0.0
    %6898 = vmatpush2.msra.mxu0 0.0
    %6899 = vmatprep.subr.mxu0 0.0
    %6900 = vmatpush2.msra.mxu0 0.0
    %6901 = vmatprep.subr.mxu0 %v6746
    %6902 = vmatpush2.msra.mxu0 %v6745
    %6903 = vmatprep.subr.mxu0 %v6730
    %6904 = vmatpush2.msra.mxu0 %v6729
    %6905 = vmatprep.subr.mxu0 %v6714
    %6906 = vmatpush2.msra.mxu0 %v6713
    %6907 = vmatprep.subr.mxu0 %v6698
    %6908 = vmatpush2.msra.mxu0 %v6697
    %6909 = vmatprep.subr.mxu0 %v6682
    %6910 = vmatpush2.msra.mxu0 %v6681
    %6911 = vmatprep.subr.mxu0 %v6666
    %6912 = vmatpush2.msra.mxu0 %v6665
    %6913 = vmatprep.subr.mxu0 %v6650
    %6914 = vmatpush2.msra.mxu0 %v6649
    %6915 = vmatprep.subr.mxu0 %v6634
    %6916 = vmatpush2.msra.mxu0 %v6633
    %6917 = vmatprep.subr.mxu0 %v6618
    %6918 = vmatpush2.msra.mxu0 %v6617
    %6919 = vmatprep.mubr.f32.mxu0 %v6773
    %6920 = vmatmul.mubr.f32.gmra.mxu0 %v6355
    %v6921 = vpop.f32.mrf.mxu0
    %v6922 = vadd.f32 %v6764, %v6921
    %v6923 = vpop.f32.mrf.mxu0
    %v6924 = vadd.f32 %v6764, %v6923
    %6925 = vmatprep.mubr.f32.mxu0 %v6776
    %6926 = vmatmul.mubr.f32.gmra.mxu0 %v6357
    %v6927 = vpop.f32.mrf.mxu0
    %v6928 = vadd.f32 %v6769, %v6927
    %v6929 = vpop.f32.mrf.mxu0
    %v6930 = vadd.f32 %v6769, %v6929
    %6931 = vdwg.mxu0
    %6932 = vmatprep.subr.mxu0 %v6604
    %6933 = vmatpush1.msra.mxu0 %v6603
    %6934 = vmatprep.subr.mxu0 %v6588
    %6935 = vmatpush1.msra.mxu0 %v6587
    %6936 = vmatprep.subr.mxu0 %v6572
    %6937 = vmatpush1.msra.mxu0 %v6571
    %6938 = vmatprep.subr.mxu0 %v6556
    %6939 = vmatpush1.msra.mxu0 %v6555
    %6940 = vmatprep.subr.mxu0 %v6540
    %6941 = vmatpush1.msra.mxu0 %v6539
    %6942 = vmatprep.subr.mxu0 %v6524
    %6943 = vmatpush1.msra.mxu0 %v6523
    %6944 = vmatprep.subr.mxu0 %v6508
    %6945 = vmatpush1.msra.mxu0 %v6507
    %6946 = vmatprep.subr.mxu0 %v6492
    %6947 = vmatpush1.msra.mxu0 %v6491
    %6948 = vmatprep.subr.mxu0 %v6476
    %6949 = vmatpush1.msra.mxu0 %v6475
    %6950 = vmatprep.subr.mxu0 %v6460
    %6951 = vmatpush1.msra.mxu0 %v6459
    %6952 = vmatprep.subr.mxu0 %v6444
    %6953 = vmatpush1.msra.mxu0 %v6443
    %6954 = vmatprep.subr.mxu0 %v6428
    %6955 = vmatpush1.msra.mxu0 %v6427
    %6956 = vmatprep.subr.mxu0 %v6412
    %6957 = vmatpush1.msra.mxu0 %v6411
    %6958 = vmatprep.subr.mxu0 %v6396
    %6959 = vmatpush1.msra.mxu0 %v6395
    %6960 = vmatprep.subr.mxu0 %v6380
    %6961 = vmatpush1.msra.mxu0 %v6379
    %6962 = vmatprep.subr.mxu0 %v6364
    %6963 = vmatpush1.msra.mxu0 %v6363
    %6964 = vmatprep.subr.mxu0 0.0
    %6965 = vmatpush2.msra.mxu0 0.0
    %6966 = vmatprep.subr.mxu0 0.0
    %6967 = vmatpush2.msra.mxu0 0.0
    %6968 = vmatprep.subr.mxu0 0.0
    %6969 = vmatpush2.msra.mxu0 0.0
    %6970 = vmatprep.subr.mxu0 0.0
    %6971 = vmatpush2.msra.mxu0 0.0
    %6972 = vmatprep.subr.mxu0 0.0
    %6973 = vmatpush2.msra.mxu0 0.0
    %6974 = vmatprep.subr.mxu0 0.0
    %6975 = vmatpush2.msra.mxu0 0.0
    %6976 = vmatprep.subr.mxu0 0.0
    %6977 = vmatpush2.msra.mxu0 0.0
    %6978 = vmatprep.subr.mxu0 %v6748
    %6979 = vmatpush2.msra.mxu0 %v6747
    %6980 = vmatprep.subr.mxu0 %v6732
    %6981 = vmatpush2.msra.mxu0 %v6731
    %6982 = vmatprep.subr.mxu0 %v6716
    %6983 = vmatpush2.msra.mxu0 %v6715
    %6984 = vmatprep.subr.mxu0 %v6700
    %6985 = vmatpush2.msra.mxu0 %v6699
    %6986 = vmatprep.subr.mxu0 %v6684
    %6987 = vmatpush2.msra.mxu0 %v6683
    %6988 = vmatprep.subr.mxu0 %v6668
    %6989 = vmatpush2.msra.mxu0 %v6667
    %6990 = vmatprep.subr.mxu0 %v6652
    %6991 = vmatpush2.msra.mxu0 %v6651
    %6992 = vmatprep.subr.mxu0 %v6636
    %6993 = vmatpush2.msra.mxu0 %v6635
    %6994 = vmatprep.subr.mxu0 %v6620
    %6995 = vmatpush2.msra.mxu0 %v6619
    %6996 = vmatprep.mubr.f32.mxu0 %v6773
    %6997 = vmatmul.mubr.f32.gmra.mxu0 %v6355
    %v6998 = vpop.f32.mrf.mxu0
    %v6999 = vadd.f32 %v6764, %v6998
    %v7000 = vpop.f32.mrf.mxu0
    %v7001 = vadd.f32 %v6764, %v7000
    %7002 = vmatprep.mubr.f32.mxu0 %v6776
    %7003 = vmatmul.mubr.f32.gmra.mxu0 %v6357
    %v7004 = vpop.f32.mrf.mxu0
    %v7005 = vadd.f32 %v6769, %v7004
    %v7006 = vpop.f32.mrf.mxu0
    %v7007 = vadd.f32 %v6769, %v7006
    %7008 = vdwg.mxu0
    %7009 = vmatprep.subr.mxu0 %v6606
    %7010 = vmatpush1.msra.mxu0 %v6605
    %7011 = vmatprep.subr.mxu0 %v6590
    %7012 = vmatpush1.msra.mxu0 %v6589
    %7013 = vmatprep.subr.mxu0 %v6574
    %7014 = vmatpush1.msra.mxu0 %v6573
    %7015 = vmatprep.subr.mxu0 %v6558
    %7016 = vmatpush1.msra.mxu0 %v6557
    %7017 = vmatprep.subr.mxu0 %v6542
    %7018 = vmatpush1.msra.mxu0 %v6541
    %7019 = vmatprep.subr.mxu0 %v6526
    %7020 = vmatpush1.msra.mxu0 %v6525
    %7021 = vmatprep.subr.mxu0 %v6510
    %7022 = vmatpush1.msra.mxu0 %v6509
    %7023 = vmatprep.subr.mxu0 %v6494
    %7024 = vmatpush1.msra.mxu0 %v6493
    %7025 = vmatprep.subr.mxu0 %v6478
    %7026 = vmatpush1.msra.mxu0 %v6477
    %7027 = vmatprep.subr.mxu0 %v6462
    %7028 = vmatpush1.msra.mxu0 %v6461
    %7029 = vmatprep.subr.mxu0 %v6446
    %7030 = vmatpush1.msra.mxu0 %v6445
    %7031 = vmatprep.subr.mxu0 %v6430
    %7032 = vmatpush1.msra.mxu0 %v6429
    %7033 = vmatprep.subr.mxu0 %v6414
    %7034 = vmatpush1.msra.mxu0 %v6413
    %7035 = vmatprep.subr.mxu0 %v6398
    %7036 = vmatpush1.msra.mxu0 %v6397
    %7037 = vmatprep.subr.mxu0 %v6382
    %7038 = vmatpush1.msra.mxu0 %v6381
    %7039 = vmatprep.subr.mxu0 %v6366
    %7040 = vmatpush1.msra.mxu0 %v6365
    %7041 = vmatprep.subr.mxu0 0.0
    %7042 = vmatpush2.msra.mxu0 0.0
    %7043 = vmatprep.subr.mxu0 0.0
    %7044 = vmatpush2.msra.mxu0 0.0
    %7045 = vmatprep.subr.mxu0 0.0
    %7046 = vmatpush2.msra.mxu0 0.0
    %7047 = vmatprep.subr.mxu0 0.0
    %7048 = vmatpush2.msra.mxu0 0.0
    %7049 = vmatprep.subr.mxu0 0.0
    %7050 = vmatpush2.msra.mxu0 0.0
    %7051 = vmatprep.subr.mxu0 0.0
    %7052 = vmatpush2.msra.mxu0 0.0
    %7053 = vmatprep.subr.mxu0 0.0
    %7054 = vmatpush2.msra.mxu0 0.0
    %7055 = vmatprep.subr.mxu0 %v6750
    %7056 = vmatpush2.msra.mxu0 %v6749
    %7057 = vmatprep.subr.mxu0 %v6734
    %7058 = vmatpush2.msra.mxu0 %v6733
    %7059 = vmatprep.subr.mxu0 %v6718
    %7060 = vmatpush2.msra.mxu0 %v6717
    %7061 = vmatprep.subr.mxu0 %v6702
    %7062 = vmatpush2.msra.mxu0 %v6701
    %7063 = vmatprep.subr.mxu0 %v6686
    %7064 = vmatpush2.msra.mxu0 %v6685
    %7065 = vmatprep.subr.mxu0 %v6670
    %7066 = vmatpush2.msra.mxu0 %v6669
    %7067 = vmatprep.subr.mxu0 %v6654
    %7068 = vmatpush2.msra.mxu0 %v6653
    %7069 = vmatprep.subr.mxu0 %v6638
    %7070 = vmatpush2.msra.mxu0 %v6637
    %7071 = vmatprep.subr.mxu0 %v6622
    %7072 = vmatpush2.msra.mxu0 %v6621
    %7073 = vmatprep.mubr.f32.mxu0 %v6773
    %7074 = vmatmul.mubr.f32.gmra.mxu0 %v6355
    %v7075 = vpop.f32.mrf.mxu0
    %v7076 = vadd.f32 %v6764, %v7075
    %v7077 = vpop.f32.mrf.mxu0
    %v7078 = vadd.f32 %v6764, %v7077
    %7079 = vmatprep.mubr.f32.mxu0 %v6776
    %7080 = vmatmul.mubr.f32.gmra.mxu0 %v6357
    %v7081 = vpop.f32.mrf.mxu0
    %v7082 = vadd.f32 %v6769, %v7081
    %v7083 = vpop.f32.mrf.mxu0
    %v7084 = vadd.f32 %v6769, %v7083
    %7085 = vdwg.mxu0
    %7086 = vmatprep.subr.mxu0 %v6608
    %7087 = vmatpush1.msra.mxu0 %v6607
    %7088 = vmatprep.subr.mxu0 %v6592
    %7089 = vmatpush1.msra.mxu0 %v6591
    %7090 = vmatprep.subr.mxu0 %v6576
    %7091 = vmatpush1.msra.mxu0 %v6575
    %7092 = vmatprep.subr.mxu0 %v6560
    %7093 = vmatpush1.msra.mxu0 %v6559
    %7094 = vmatprep.subr.mxu0 %v6544
    %7095 = vmatpush1.msra.mxu0 %v6543
    %7096 = vmatprep.subr.mxu0 %v6528
    %7097 = vmatpush1.msra.mxu0 %v6527
    %7098 = vmatprep.subr.mxu0 %v6512
    %7099 = vmatpush1.msra.mxu0 %v6511
    %7100 = vmatprep.subr.mxu0 %v6496
    %7101 = vmatpush1.msra.mxu0 %v6495
    %7102 = vmatprep.subr.mxu0 %v6480
    %7103 = vmatpush1.msra.mxu0 %v6479
    %7104 = vmatprep.subr.mxu0 %v6464
    %7105 = vmatpush1.msra.mxu0 %v6463
    %7106 = vmatprep.subr.mxu0 %v6448
    %7107 = vmatpush1.msra.mxu0 %v6447
    %7108 = vmatprep.subr.mxu0 %v6432
    %7109 = vmatpush1.msra.mxu0 %v6431
    %7110 = vmatprep.subr.mxu0 %v6416
    %7111 = vmatpush1.msra.mxu0 %v6415
    %7112 = vmatprep.subr.mxu0 %v6400
    %7113 = vmatpush1.msra.mxu0 %v6399
    %7114 = vmatprep.subr.mxu0 %v6384
    %7115 = vmatpush1.msra.mxu0 %v6383
    %7116 = vmatprep.subr.mxu0 %v6368
    %7117 = vmatpush1.msra.mxu0 %v6367
    %7118 = vmatprep.subr.mxu0 0.0
    %7119 = vmatpush2.msra.mxu0 0.0
    %7120 = vmatprep.subr.mxu0 0.0
    %7121 = vmatpush2.msra.mxu0 0.0
    %7122 = vmatprep.subr.mxu0 0.0
    %7123 = vmatpush2.msra.mxu0 0.0
    %7124 = vmatprep.subr.mxu0 0.0
    %7125 = vmatpush2.msra.mxu0 0.0
    %7126 = vmatprep.subr.mxu0 0.0
    %7127 = vmatpush2.msra.mxu0 0.0
    %7128 = vmatprep.subr.mxu0 0.0
    %7129 = vmatpush2.msra.mxu0 0.0
    %7130 = vmatprep.subr.mxu0 0.0
    %7131 = vmatpush2.msra.mxu0 0.0
    %7132 = vmatprep.subr.mxu0 %v6752
    %7133 = vmatpush2.msra.mxu0 %v6751
    %7134 = vmatprep.subr.mxu0 %v6736
    %7135 = vmatpush2.msra.mxu0 %v6735
    %7136 = vmatprep.subr.mxu0 %v6720
    %7137 = vmatpush2.msra.mxu0 %v6719
    %7138 = vmatprep.subr.mxu0 %v6704
    %7139 = vmatpush2.msra.mxu0 %v6703
    %7140 = vmatprep.subr.mxu0 %v6688
    %7141 = vmatpush2.msra.mxu0 %v6687
    %7142 = vmatprep.subr.mxu0 %v6672
    %7143 = vmatpush2.msra.mxu0 %v6671
    %7144 = vmatprep.subr.mxu0 %v6656
    %7145 = vmatpush2.msra.mxu0 %v6655
    %7146 = vmatprep.subr.mxu0 %v6640
    %7147 = vmatpush2.msra.mxu0 %v6639
    %7148 = vmatprep.subr.mxu0 %v6624
    %7149 = vmatpush2.msra.mxu0 %v6623
    %7150 = vmatprep.mubr.f32.mxu0 %v6773
    %7151 = vmatmul.mubr.f32.gmra.mxu0 %v6355
    %v7152 = vpop.f32.mrf.mxu0
    %v7153 = vadd.f32 %v6764, %v7152
    %v7154 = vpop.f32.mrf.mxu0
    %v7155 = vadd.f32 %v6764, %v7154
    %7156 = vmatprep.mubr.f32.mxu0 %v6776
    %7157 = vmatmul.mubr.f32.gmra.mxu0 %v6357
    %v7158 = vpop.f32.mrf.mxu0
    %v7159 = vadd.f32 %v6769, %v7158
    %v7160 = vpop.f32.mrf.mxu0
    %v7161 = vadd.f32 %v6769, %v7160
    %7162 = vdwg.mxu0
    %7163 = vmatprep.subr.mxu0 %v6610
    %7164 = vmatpush1.msra.mxu0 %v6609
    %7165 = vmatprep.subr.mxu0 %v6594
    %7166 = vmatpush1.msra.mxu0 %v6593
    %7167 = vmatprep.subr.mxu0 %v6578
    %7168 = vmatpush1.msra.mxu0 %v6577
    %7169 = vmatprep.subr.mxu0 %v6562
    %7170 = vmatpush1.msra.mxu0 %v6561
    %7171 = vmatprep.subr.mxu0 %v6546
    %7172 = vmatpush1.msra.mxu0 %v6545
    %7173 = vmatprep.subr.mxu0 %v6530
    %7174 = vmatpush1.msra.mxu0 %v6529
    %7175 = vmatprep.subr.mxu0 %v6514
    %7176 = vmatpush1.msra.mxu0 %v6513
    %7177 = vmatprep.subr.mxu0 %v6498
    %7178 = vmatpush1.msra.mxu0 %v6497
    %7179 = vmatprep.subr.mxu0 %v6482
    %7180 = vmatpush1.msra.mxu0 %v6481
    %7181 = vmatprep.subr.mxu0 %v6466
    %7182 = vmatpush1.msra.mxu0 %v6465
    %7183 = vmatprep.subr.mxu0 %v6450
    %7184 = vmatpush1.msra.mxu0 %v6449
    %7185 = vmatprep.subr.mxu0 %v6434
    %7186 = vmatpush1.msra.mxu0 %v6433
    %7187 = vmatprep.subr.mxu0 %v6418
    %7188 = vmatpush1.msra.mxu0 %v6417
    %7189 = vmatprep.subr.mxu0 %v6402
    %7190 = vmatpush1.msra.mxu0 %v6401
    %7191 = vmatprep.subr.mxu0 %v6386
    %7192 = vmatpush1.msra.mxu0 %v6385
    %7193 = vmatprep.subr.mxu0 %v6370
    %7194 = vmatpush1.msra.mxu0 %v6369
    %7195 = vmatprep.subr.mxu0 0.0
    %7196 = vmatpush2.msra.mxu0 0.0
    %7197 = vmatprep.subr.mxu0 0.0
    %7198 = vmatpush2.msra.mxu0 0.0
    %7199 = vmatprep.subr.mxu0 0.0
    %7200 = vmatpush2.msra.mxu0 0.0
    %7201 = vmatprep.subr.mxu0 0.0
    %7202 = vmatpush2.msra.mxu0 0.0
    %7203 = vmatprep.subr.mxu0 0.0
    %7204 = vmatpush2.msra.mxu0 0.0
    %7205 = vmatprep.subr.mxu0 0.0
    %7206 = vmatpush2.msra.mxu0 0.0
    %7207 = vmatprep.subr.mxu0 0.0
    %7208 = vmatpush2.msra.mxu0 0.0
    %7209 = vmatprep.subr.mxu0 %v6754
    %7210 = vmatpush2.msra.mxu0 %v6753
    %7211 = vmatprep.subr.mxu0 %v6738
    %7212 = vmatpush2.msra.mxu0 %v6737
    %7213 = vmatprep.subr.mxu0 %v6722
    %7214 = vmatpush2.msra.mxu0 %v6721
    %7215 = vmatprep.subr.mxu0 %v6706
    %7216 = vmatpush2.msra.mxu0 %v6705
    %7217 = vmatprep.subr.mxu0 %v6690
    %7218 = vmatpush2.msra.mxu0 %v6689
    %7219 = vmatprep.subr.mxu0 %v6674
    %7220 = vmatpush2.msra.mxu0 %v6673
    %7221 = vmatprep.subr.mxu0 %v6658
    %7222 = vmatpush2.msra.mxu0 %v6657
    %7223 = vmatprep.subr.mxu0 %v6642
    %7224 = vmatpush2.msra.mxu0 %v6641
    %7225 = vmatprep.subr.mxu0 %v6626
    %7226 = vmatpush2.msra.mxu0 %v6625
    %7227 = vmatprep.mubr.f32.mxu0 %v6773
    %7228 = vmatmul.mubr.f32.gmra.mxu0 %v6355
    %v7229 = vpop.f32.mrf.mxu0
    %v7230 = vadd.f32 %v6764, %v7229
    %v7231 = vpop.f32.mrf.mxu0
    %v7232 = vadd.f32 %v6764, %v7231
    %7233 = vmatprep.mubr.f32.mxu0 %v6776
    %7234 = vmatmul.mubr.f32.gmra.mxu0 %v6357
    %v7235 = vpop.f32.mrf.mxu0
    %v7236 = vadd.f32 %v6769, %v7235
    %v7237 = vpop.f32.mrf.mxu0
    %v7238 = vadd.f32 %v6769, %v7237
    %7239 = vdwg.mxu0
    %7240 = vmatprep.subr.mxu0 %v6612
    %7241 = vmatpush1.msra.mxu0 %v6611
    %7242 = vmatprep.subr.mxu0 %v6596
    %7243 = vmatpush1.msra.mxu0 %v6595
    %7244 = vmatprep.subr.mxu0 %v6580
    %7245 = vmatpush1.msra.mxu0 %v6579
    %7246 = vmatprep.subr.mxu0 %v6564
    %7247 = vmatpush1.msra.mxu0 %v6563
    %7248 = vmatprep.subr.mxu0 %v6548
    %7249 = vmatpush1.msra.mxu0 %v6547
    %7250 = vmatprep.subr.mxu0 %v6532
    %7251 = vmatpush1.msra.mxu0 %v6531
    %7252 = vmatprep.subr.mxu0 %v6516
    %7253 = vmatpush1.msra.mxu0 %v6515
    %7254 = vmatprep.subr.mxu0 %v6500
    %7255 = vmatpush1.msra.mxu0 %v6499
    %7256 = vmatprep.subr.mxu0 %v6484
    %7257 = vmatpush1.msra.mxu0 %v6483
    %7258 = vmatprep.subr.mxu0 %v6468
    %7259 = vmatpush1.msra.mxu0 %v6467
    %7260 = vmatprep.subr.mxu0 %v6452
    %7261 = vmatpush1.msra.mxu0 %v6451
    %7262 = vmatprep.subr.mxu0 %v6436
    %7263 = vmatpush1.msra.mxu0 %v6435
    %7264 = vmatprep.subr.mxu0 %v6420
    %7265 = vmatpush1.msra.mxu0 %v6419
    %7266 = vmatprep.subr.mxu0 %v6404
    %7267 = vmatpush1.msra.mxu0 %v6403
    %7268 = vmatprep.subr.mxu0 %v6388
    %7269 = vmatpush1.msra.mxu0 %v6387
    %7270 = vmatprep.subr.mxu0 %v6372
    %7271 = vmatpush1.msra.mxu0 %v6371
    %7272 = vmatprep.subr.mxu0 0.0
    %7273 = vmatpush2.msra.mxu0 0.0
    %7274 = vmatprep.subr.mxu0 0.0
    %7275 = vmatpush2.msra.mxu0 0.0
    %7276 = vmatprep.subr.mxu0 0.0
    %7277 = vmatpush2.msra.mxu0 0.0
    %7278 = vmatprep.subr.mxu0 0.0
    %7279 = vmatpush2.msra.mxu0 0.0
    %7280 = vmatprep.subr.mxu0 0.0
    %7281 = vmatpush2.msra.mxu0 0.0
    %7282 = vmatprep.subr.mxu0 0.0
    %7283 = vmatpush2.msra.mxu0 0.0
    %7284 = vmatprep.subr.mxu0 0.0
    %7285 = vmatpush2.msra.mxu0 0.0
    %7286 = vmatprep.subr.mxu0 %v6756
    %7287 = vmatpush2.msra.mxu0 %v6755
    %7288 = vmatprep.subr.mxu0 %v6740
    %7289 = vmatpush2.msra.mxu0 %v6739
    %7290 = vmatprep.subr.mxu0 %v6724
    %7291 = vmatpush2.msra.mxu0 %v6723
    %7292 = vmatprep.subr.mxu0 %v6708
    %7293 = vmatpush2.msra.mxu0 %v6707
    %7294 = vmatprep.subr.mxu0 %v6692
    %7295 = vmatpush2.msra.mxu0 %v6691
    %7296 = vmatprep.subr.mxu0 %v6676
    %7297 = vmatpush2.msra.mxu0 %v6675
    %7298 = vmatprep.subr.mxu0 %v6660
    %7299 = vmatpush2.msra.mxu0 %v6659
    %7300 = vmatprep.subr.mxu0 %v6644
    %7301 = vmatpush2.msra.mxu0 %v6643
    %7302 = vmatprep.subr.mxu0 %v6628
    %7303 = vmatpush2.msra.mxu0 %v6627
    %7304 = vmatprep.mubr.f32.mxu0 %v6773
    %7305 = vmatmul.mubr.f32.gmra.mxu0 %v6355
    %v7306 = vpop.f32.mrf.mxu0
    %v7307 = vadd.f32 %v6764, %v7306
    %v7308 = vpop.f32.mrf.mxu0
    %v7309 = vadd.f32 %v6764, %v7308
    %7310 = vmatprep.mubr.f32.mxu0 %v6776
    %7311 = vmatmul.mubr.f32.gmra.mxu0 %v6357
    %v7312 = vpop.f32.mrf.mxu0
    %v7313 = vadd.f32 %v6769, %v7312
    %v7314 = vpop.f32.mrf.mxu0
    %v7315 = vadd.f32 %v6769, %v7314
    %7316 = vdwg.mxu0
    %7317 = vmatprep.subr.mxu0 %v6614
    %7318 = vmatpush1.msra.mxu0 %v6613
    %7319 = vmatprep.subr.mxu0 %v6598
    %7320 = vmatpush1.msra.mxu0 %v6597
    %7321 = vmatprep.subr.mxu0 %v6582
    %7322 = vmatpush1.msra.mxu0 %v6581
    %7323 = vmatprep.subr.mxu0 %v6566
    %7324 = vmatpush1.msra.mxu0 %v6565
    %7325 = vmatprep.subr.mxu0 %v6550
    %7326 = vmatpush1.msra.mxu0 %v6549
    %7327 = vmatprep.subr.mxu0 %v6534
    %7328 = vmatpush1.msra.mxu0 %v6533
    %7329 = vmatprep.subr.mxu0 %v6518
    %7330 = vmatpush1.msra.mxu0 %v6517
    %7331 = vmatprep.subr.mxu0 %v6502
    %7332 = vmatpush1.msra.mxu0 %v6501
    %7333 = vmatprep.subr.mxu0 %v6486
    %7334 = vmatpush1.msra.mxu0 %v6485
    %7335 = vmatprep.subr.mxu0 %v6470
    %7336 = vmatpush1.msra.mxu0 %v6469
    %7337 = vmatprep.subr.mxu0 %v6454
    %7338 = vmatpush1.msra.mxu0 %v6453
    %7339 = vmatprep.subr.mxu0 %v6438
    %7340 = vmatpush1.msra.mxu0 %v6437
    %7341 = vmatprep.subr.mxu0 %v6422
    %7342 = vmatpush1.msra.mxu0 %v6421
    %7343 = vmatprep.subr.mxu0 %v6406
    %7344 = vmatpush1.msra.mxu0 %v6405
    %7345 = vmatprep.subr.mxu0 %v6390
    %7346 = vmatpush1.msra.mxu0 %v6389
    %7347 = vmatprep.subr.mxu0 %v6374
    %7348 = vmatpush1.msra.mxu0 %v6373
    %7349 = vmatprep.subr.mxu0 0.0
    %7350 = vmatpush2.msra.mxu0 0.0
    %7351 = vmatprep.subr.mxu0 0.0
    %7352 = vmatpush2.msra.mxu0 0.0
    %7353 = vmatprep.subr.mxu0 0.0
    %7354 = vmatpush2.msra.mxu0 0.0
    %7355 = vmatprep.subr.mxu0 0.0
    %7356 = vmatpush2.msra.mxu0 0.0
    %7357 = vmatprep.subr.mxu0 0.0
    %7358 = vmatpush2.msra.mxu0 0.0
    %7359 = vmatprep.subr.mxu0 0.0
    %7360 = vmatpush2.msra.mxu0 0.0
    %7361 = vmatprep.subr.mxu0 0.0
    %7362 = vmatpush2.msra.mxu0 0.0
    %7363 = vmatprep.subr.mxu0 %v6758
    %7364 = vmatpush2.msra.mxu0 %v6757
    %7365 = vmatprep.subr.mxu0 %v6742
    %7366 = vmatpush2.msra.mxu0 %v6741
    %7367 = vmatprep.subr.mxu0 %v6726
    %7368 = vmatpush2.msra.mxu0 %v6725
    %7369 = vmatprep.subr.mxu0 %v6710
    %7370 = vmatpush2.msra.mxu0 %v6709
    %7371 = vmatprep.subr.mxu0 %v6694
    %7372 = vmatpush2.msra.mxu0 %v6693
    %7373 = vmatprep.subr.mxu0 %v6678
    %7374 = vmatpush2.msra.mxu0 %v6677
    %7375 = vmatprep.subr.mxu0 %v6662
    %7376 = vmatpush2.msra.mxu0 %v6661
    %7377 = vmatprep.subr.mxu0 %v6646
    %7378 = vmatpush2.msra.mxu0 %v6645
    %7379 = vmatprep.subr.mxu0 %v6630
    %7380 = vmatpush2.msra.mxu0 %v6629
    %7381 = vmatprep.mubr.f32.mxu0 %v6773
    %7382 = vmatmul.mubr.f32.gmra.mxu0 %v6355
    %v7383 = vpop.f32.mrf.mxu0
    %v7384 = vadd.f32 %v6764, %v7383
    %v7385 = vpop.f32.mrf.mxu0
    %v7386 = vadd.f32 %v6764, %v7385
    %7387 = vmatprep.mubr.f32.mxu0 %v6776
    %7388 = vmatmul.mubr.f32.gmra.mxu0 %v6357
    %v7389 = vpop.f32.mrf.mxu0
    %v7390 = vadd.f32 %v6769, %v7389
    %v7391 = vpop.f32.mrf.mxu0
    %v7392 = vadd.f32 %v6769, %v7391
    %7393 = vdwg.mxu0
    %v7394 = vmax.f32 %v6845, 0.0
    %v7395 = vmax.f32 %v6847, 0.0
    %v7396 = vmax.f32 %v6922, 0.0
    %v7397 = vmax.f32 %v6924, 0.0
    %v7398 = vmax.f32 %v6999, 0.0
    %v7399 = vmax.f32 %v7001, 0.0
    %v7400 = vmax.f32 %v7076, 0.0
    %v7401 = vmax.f32 %v7078, 0.0
    %v7402 = vmax.f32 %v7153, 0.0
    %v7403 = vmax.f32 %v7155, 0.0
    %v7404 = vmax.f32 %v7230, 0.0
    %v7405 = vmax.f32 %v7232, 0.0
    %v7406 = vmax.f32 %v7307, 0.0
    %v7407 = vmax.f32 %v7309, 0.0
    %v7408 = vmax.f32 %v7384, 0.0
    %v7409 = vmax.f32 %v7386, 0.0
    %v7410 = vmax.f32 %v6851, 0.0
    %v7411 = vmax.f32 %v6853, 0.0
    %v7412 = vmax.f32 %v6928, 0.0
    %v7413 = vmax.f32 %v6930, 0.0
    %v7414 = vmax.f32 %v7005, 0.0
    %v7415 = vmax.f32 %v7007, 0.0
    %v7416 = vmax.f32 %v7082, 0.0
    %v7417 = vmax.f32 %v7084, 0.0
    %v7418 = vmax.f32 %v7159, 0.0
    %v7419 = vmax.f32 %v7161, 0.0
    %v7420 = vmax.f32 %v7236, 0.0
    %v7421 = vmax.f32 %v7238, 0.0
    %v7422 = vmax.f32 %v7313, 0.0
    %v7423 = vmax.f32 %v7315, 0.0
    %v7424 = vmax.f32 %v7390, 0.0
    %v7425 = vmax.f32 %v7392, 0.0
    %7426 = vst [vmem:[#allocation5] sm:$0xff] %v7394
    %7427 = vst [vmem:[#allocation5 + $0x8] sm:$0xff] %v7395
    %7428 = vst [vmem:[#allocation5 + $0x10] sm:$0xff] %v7396
    %7429 = vst [vmem:[#allocation5 + $0x18] sm:$0xff] %v7397
    %7430 = vst [vmem:[#allocation5 + $0x20] sm:$0xff] %v7398
    %7431 = vst [vmem:[#allocation5 + $0x28] sm:$0xff] %v7399
    %7432 = vst [vmem:[#allocation5 + $0x30] sm:$0xff] %v7400
    %7433 = vst [vmem:[#allocation5 + $0x38] sm:$0xff] %v7401
    %7434 = vst [vmem:[#allocation5 + $0x40] sm:$0xff] %v7402
    %7435 = vst [vmem:[#allocation5 + $0x48] sm:$0xff] %v7403
    %7436 = vst [vmem:[#allocation5 + $0x50] sm:$0xff] %v7404
    %7437 = vst [vmem:[#allocation5 + $0x58] sm:$0xff] %v7405
    %7438 = vst [vmem:[#allocation5 + $0x60] sm:$0xff] %v7406
    %7439 = vst [vmem:[#allocation5 + $0x68] sm:$0xff] %v7407
    %7440 = vst [vmem:[#allocation5 + $0x70] sm:$0xff] %v7408
    %7441 = vst [vmem:[#allocation5 + $0x78] sm:$0xff] %v7409
    %7442 = vst [vmem:[#allocation5 + $0x88] sm:$0xff] %v7410
    %7443 = vst [vmem:[#allocation5 + $0x90] sm:$0xff] %v7411
    %7444 = vst [vmem:[#allocation5 + $0x98] sm:$0xff] %v7412
    %7445 = vst [vmem:[#allocation5 + $0xa0] sm:$0xff] %v7413
    %7446 = vst [vmem:[#allocation5 + $0xa8] sm:$0xff] %v7414
    %7447 = vst [vmem:[#allocation5 + $0xb0] sm:$0xff] %v7415
    %7448 = vst [vmem:[#allocation5 + $0xb8] sm:$0xff] %v7416
    %7449 = vst [vmem:[#allocation5 + $0xc0] sm:$0xff] %v7417
    %7450 = vst [vmem:[#allocation5 + $0xc8] sm:$0xff] %v7418
    %7451 = vst [vmem:[#allocation5 + $0xd0] sm:$0xff] %v7419
    %7452 = vst [vmem:[#allocation5 + $0xd8] sm:$0xff] %v7420
    %7453 = vst [vmem:[#allocation5 + $0xe0] sm:$0xff] %v7421
    %7454 = vst [vmem:[#allocation5 + $0xe8] sm:$0xff] %v7422
    %7455 = vst [vmem:[#allocation5 + $0xf0] sm:$0xff] %v7423
    %7456 = vst [vmem:[#allocation5 + $0xf8] sm:$0xff] %v7424
    %7457 = vst [vmem:[#allocation5 + $0x100] sm:$0xff] %v7425
    %v7458 = vld [vmem:[#allocation5] sm:$0xff]
    %v7459 = vld [vmem:[#allocation5 + $0x8] sm:$0xff]
    %v7460 = vld [vmem:[#allocation5 + $0x10] sm:$0xff]
    %v7461 = vld [vmem:[#allocation5 + $0x18] sm:$0xff]
    %v7462 = vld [vmem:[#allocation5 + $0x20] sm:$0xff]
    %v7463 = vld [vmem:[#allocation5 + $0x28] sm:$0xff]
    %v7464 = vld [vmem:[#allocation5 + $0x30] sm:$0xff]
    %v7465 = vld [vmem:[#allocation5 + $0x38] sm:$0xff]
    %v7466 = vld [vmem:[#allocation5 + $0x40] sm:$0xff]
    %v7467 = vld [vmem:[#allocation5 + $0x48] sm:$0xff]
    %v7468 = vld [vmem:[#allocation5 + $0x50] sm:$0xff]
    %v7469 = vld [vmem:[#allocation5 + $0x58] sm:$0xff]
    %v7470 = vld [vmem:[#allocation5 + $0x60] sm:$0xff]
    %v7471 = vld [vmem:[#allocation5 + $0x68] sm:$0xff]
    %v7472 = vld [vmem:[#allocation5 + $0x70] sm:$0xff]
    %v7473 = vld [vmem:[#allocation5 + $0x78] sm:$0xff]
    %v7474 = vld [vmem:[#allocation5 + $0x88] sm:$0xff]
    %v7475 = vld [vmem:[#allocation5 + $0x90] sm:$0xff]
    %v7476 = vld [vmem:[#allocation5 + $0x98] sm:$0xff]
    %v7477 = vld [vmem:[#allocation5 + $0xa0] sm:$0xff]
    %v7478 = vld [vmem:[#allocation5 + $0xa8] sm:$0xff]
    %v7479 = vld [vmem:[#allocation5 + $0xb0] sm:$0xff]
    %v7480 = vld [vmem:[#allocation5 + $0xb8] sm:$0xff]
    %v7481 = vld [vmem:[#allocation5 + $0xc0] sm:$0xff]
    %v7482 = vld [vmem:[#allocation5 + $0xc8] sm:$0xff]
    %v7483 = vld [vmem:[#allocation5 + $0xd0] sm:$0xff]
    %v7484 = vld [vmem:[#allocation5 + $0xd8] sm:$0xff]
    %v7485 = vld [vmem:[#allocation5 + $0xe0] sm:$0xff]
    %v7486 = vld [vmem:[#allocation5 + $0xe8] sm:$0xff]
    %v7487 = vld [vmem:[#allocation5 + $0xf0] sm:$0xff]
    %v7488 = vld [vmem:[#allocation5 + $0xf8] sm:$0xff]
    %v7489 = vld [vmem:[#allocation5 + $0x100] sm:$0xff]
    %v7490 = vld [vmem:[#allocation5] sm:$0xff]
    %v7491 = vld [vmem:[#allocation5 + $0x8] sm:$0xff]
    %v7492 = vld [vmem:[#allocation5 + $0x10] sm:$0xff]
    %v7493 = vld [vmem:[#allocation5 + $0x18] sm:$0xff]
    %v7494 = vld [vmem:[#allocation5 + $0x20] sm:$0xff]
    %v7495 = vld [vmem:[#allocation5 + $0x28] sm:$0xff]
    %v7496 = vld [vmem:[#allocation5 + $0x30] sm:$0xff]
    %v7497 = vld [vmem:[#allocation5 + $0x38] sm:$0xff]
    %v7498 = vld [vmem:[#allocation5 + $0x40] sm:$0xff]
    %v7499 = vld [vmem:[#allocation5 + $0x48] sm:$0xff]
    %v7500 = vld [vmem:[#allocation5 + $0x50] sm:$0xff]
    %v7501 = vld [vmem:[#allocation5 + $0x58] sm:$0xff]
    %v7502 = vld [vmem:[#allocation5 + $0x60] sm:$0xff]
    %v7503 = vld [vmem:[#allocation5 + $0x68] sm:$0xff]
    %v7504 = vld [vmem:[#allocation5 + $0x70] sm:$0xff]
    %v7505 = vld [vmem:[#allocation5 + $0x78] sm:$0xff]
    %v7506 = vld [vmem:[#allocation5 + $0x80] sm:$0xff]
    %v7507 = vld [vmem:[#allocation5 + $0x88] sm:$0xff]
    %v7508 = vld [vmem:[#allocation5 + $0x90] sm:$0xff]
    %v7509 = vld [vmem:[#allocation5 + $0x98] sm:$0xff]
    %v7510 = vld [vmem:[#allocation5 + $0xa0] sm:$0xff]
    %v7511 = vld [vmem:[#allocation5 + $0xa8] sm:$0xff]
    %v7512 = vld [vmem:[#allocation5 + $0xb0] sm:$0xff]
    %v7513 = vld [vmem:[#allocation5 + $0xb8] sm:$0xff]
    %v7514 = vld [vmem:[#allocation5 + $0xc0] sm:$0xff]
    %v7515 = vld [vmem:[#allocation5 + $0xc8] sm:$0xff]
    %v7516 = vld [vmem:[#allocation5 + $0xd0] sm:$0xff]
    %v7517 = vld [vmem:[#allocation5 + $0xd8] sm:$0xff]
    %v7518 = vld [vmem:[#allocation5 + $0xe0] sm:$0xff]
    %v7519 = vld [vmem:[#allocation5 + $0xe8] sm:$0xff]
    %v7520 = vld [vmem:[#allocation5 + $0xf0] sm:$0xff]
    %v7521 = vld [vmem:[#allocation5 + $0xf8] sm:$0xff]
    %v7522 = vld [vmem:[#allocation5 + $0x100] sm:$0xff]
    %v7523 = vld [vmem:[#allocation5 + $0x108] sm:$0xff]
    %7558 = vrot.lane.b32.xlu0 %v7490, 126
    %v7559 = vpop.permute.xlu0 %7558
    %7560 = vrot.lane.b32.xlu0 %v7491, 126
    %v7561 = vpop.permute.xlu0 %7560
    %7562 = vrot.lane.b32.xlu0 %v7492, 126
    %v7563 = vpop.permute.xlu0 %7562
    %7564 = vrot.lane.b32.xlu0 %v7493, 126
    %v7565 = vpop.permute.xlu0 %7564
    %7566 = vrot.lane.b32.xlu0 %v7494, 126
    %v7567 = vpop.permute.xlu0 %7566
    %7568 = vrot.lane.b32.xlu0 %v7495, 126
    %v7569 = vpop.permute.xlu0 %7568
    %7570 = vrot.lane.b32.xlu0 %v7496, 126
    %v7571 = vpop.permute.xlu0 %7570
    %7572 = vrot.lane.b32.xlu0 %v7497, 126
    %v7573 = vpop.permute.xlu0 %7572
    %7574 = vrot.lane.b32.xlu0 %v7498, 126
    %v7575 = vpop.permute.xlu0 %7574
    %7576 = vrot.lane.b32.xlu0 %v7499, 126
    %v7577 = vpop.permute.xlu0 %7576
    %7578 = vrot.lane.b32.xlu0 %v7500, 126
    %v7579 = vpop.permute.xlu0 %7578
    %7580 = vrot.lane.b32.xlu0 %v7501, 126
    %v7581 = vpop.permute.xlu0 %7580
    %7582 = vrot.lane.b32.xlu0 %v7502, 126
    %v7583 = vpop.permute.xlu0 %7582
    %7584 = vrot.lane.b32.xlu0 %v7503, 126
    %v7585 = vpop.permute.xlu0 %7584
    %7586 = vrot.lane.b32.xlu0 %v7504, 126
    %v7587 = vpop.permute.xlu0 %7586
    %7588 = vrot.lane.b32.xlu0 %v7505, 126
    %v7589 = vpop.permute.xlu0 %7588
    %7590 = vrot.lane.b32.xlu0 %v7506, 126
    %v7591 = vpop.permute.xlu0 %7590
    %7592 = vrot.lane.b32.xlu0 %v7507, 126
    %v7593 = vpop.permute.xlu0 %7592
    %7594 = vrot.lane.b32.xlu0 %v7508, 126
    %v7595 = vpop.permute.xlu0 %7594
    %7596 = vrot.lane.b32.xlu0 %v7509, 126
    %v7597 = vpop.permute.xlu0 %7596
    %7598 = vrot.lane.b32.xlu0 %v7510, 126
    %v7599 = vpop.permute.xlu0 %7598
    %7600 = vrot.lane.b32.xlu0 %v7511, 126
    %v7601 = vpop.permute.xlu0 %7600
    %7602 = vrot.lane.b32.xlu0 %v7512, 126
    %v7603 = vpop.permute.xlu0 %7602
    %7604 = vrot.lane.b32.xlu0 %v7513, 126
    %v7605 = vpop.permute.xlu0 %7604
    %7606 = vrot.lane.b32.xlu0 %v7514, 126
    %v7607 = vpop.permute.xlu0 %7606
    %7608 = vrot.lane.b32.xlu0 %v7515, 126
    %v7609 = vpop.permute.xlu0 %7608
    %7610 = vrot.lane.b32.xlu0 %v7516, 126
    %v7611 = vpop.permute.xlu0 %7610
    %7612 = vrot.lane.b32.xlu0 %v7517, 126
    %v7613 = vpop.permute.xlu0 %7612
    %7614 = vrot.lane.b32.xlu0 %v7518, 126
    %v7615 = vpop.permute.xlu0 %7614
    %7616 = vrot.lane.b32.xlu0 %v7519, 126
    %v7617 = vpop.permute.xlu0 %7616
    %7618 = vrot.lane.b32.xlu0 %v7520, 126
    %v7619 = vpop.permute.xlu0 %7618
    %7620 = vrot.lane.b32.xlu0 %v7521, 126
    %v7621 = vpop.permute.xlu0 %7620
    %7622 = vrot.lane.b32.xlu0 %v7522, 126
    %v7623 = vpop.permute.xlu0 %7622
    %7624 = vrot.lane.b32.xlu0 %v7523, 126
    %v7625 = vpop.permute.xlu0 %7624
    %v7626 = vsel %vm587, %v7559, %v7561
    %v7627 = vsel %vm587, %v7561, %v7563
    %v7628 = vsel %vm587, %v7563, %v7565
    %v7629 = vsel %vm587, %v7565, %v7567
    %v7630 = vsel %vm587, %v7567, %v7569
    %v7631 = vsel %vm587, %v7569, %v7571
    %v7632 = vsel %vm587, %v7571, %v7573
    %v7633 = vsel %vm587, %v7573, %v7575
    %v7634 = vsel %vm587, %v7575, %v7577
    %v7635 = vsel %vm587, %v7577, %v7579
    %v7636 = vsel %vm587, %v7579, %v7581
    %v7637 = vsel %vm587, %v7581, %v7583
    %v7638 = vsel %vm587, %v7583, %v7585
    %v7639 = vsel %vm587, %v7585, %v7587
    %v7640 = vsel %vm587, %v7587, %v7589
    %v7641 = vsel %vm587, %v7589, %v7591
    %v7642 = vsel %vm587, %v7593, %v7595
    %v7643 = vsel %vm587, %v7595, %v7597
    %v7644 = vsel %vm587, %v7597, %v7599
    %v7645 = vsel %vm587, %v7599, %v7601
    %v7646 = vsel %vm587, %v7601, %v7603
    %v7647 = vsel %vm587, %v7603, %v7605
    %v7648 = vsel %vm587, %v7605, %v7607
    %v7649 = vsel %vm587, %v7607, %v7609
    %v7650 = vsel %vm587, %v7609, %v7611
    %v7651 = vsel %vm587, %v7611, %v7613
    %v7652 = vsel %vm587, %v7613, %v7615
    %v7653 = vsel %vm587, %v7615, %v7617
    %v7654 = vsel %vm587, %v7617, %v7619
    %v7655 = vsel %vm587, %v7619, %v7621
    %v7656 = vsel %vm587, %v7621, %v7623
    %v7657 = vsel %vm587, %v7623, %v7625
    %v7690 = vmax.f32 %v7458, %v7626
    %v7691 = vmax.f32 %v7459, %v7627
    %v7692 = vmax.f32 %v7460, %v7628
    %v7693 = vmax.f32 %v7461, %v7629
    %v7694 = vmax.f32 %v7462, %v7630
    %v7695 = vmax.f32 %v7463, %v7631
    %v7696 = vmax.f32 %v7464, %v7632
    %v7697 = vmax.f32 %v7465, %v7633
    %v7698 = vmax.f32 %v7466, %v7634
    %v7699 = vmax.f32 %v7467, %v7635
    %v7700 = vmax.f32 %v7468, %v7636
    %v7701 = vmax.f32 %v7469, %v7637
    %v7702 = vmax.f32 %v7470, %v7638
    %v7703 = vmax.f32 %v7471, %v7639
    %v7704 = vmax.f32 %v7472, %v7640
    %v7705 = vmax.f32 %v7473, %v7641
    %v7706 = vmax.f32 %v7474, %v7642
    %v7707 = vmax.f32 %v7475, %v7643
    %v7708 = vmax.f32 %v7476, %v7644
    %v7709 = vmax.f32 %v7477, %v7645
    %v7710 = vmax.f32 %v7478, %v7646
    %v7711 = vmax.f32 %v7479, %v7647
    %v7712 = vmax.f32 %v7480, %v7648
    %v7713 = vmax.f32 %v7481, %v7649
    %v7714 = vmax.f32 %v7482, %v7650
    %v7715 = vmax.f32 %v7483, %v7651
    %v7716 = vmax.f32 %v7484, %v7652
    %v7717 = vmax.f32 %v7485, %v7653
    %v7718 = vmax.f32 %v7486, %v7654
    %v7719 = vmax.f32 %v7487, %v7655
    %v7720 = vmax.f32 %v7488, %v7656
    %v7721 = vmax.f32 %v7489, %v7657
    %v7724 = vmax.f32 %v7490, %v7626
    %v7725 = vmax.f32 %v7491, %v7627
    %v7726 = vmax.f32 %v7492, %v7628
    %v7727 = vmax.f32 %v7493, %v7629
    %v7728 = vmax.f32 %v7494, %v7630
    %v7729 = vmax.f32 %v7495, %v7631
    %v7730 = vmax.f32 %v7496, %v7632
    %v7731 = vmax.f32 %v7497, %v7633
    %v7732 = vmax.f32 %v7498, %v7634
    %v7733 = vmax.f32 %v7499, %v7635
    %v7734 = vmax.f32 %v7500, %v7636
    %v7735 = vmax.f32 %v7501, %v7637
    %v7736 = vmax.f32 %v7502, %v7638
    %v7737 = vmax.f32 %v7503, %v7639
    %v7738 = vmax.f32 %v7504, %v7640
    %v7739 = vmax.f32 %v7505, %v7641
    %v7740 = vmax.f32 %v7506, %v7591
    %v7741 = vmax.f32 %v7507, %v7642
    %v7742 = vmax.f32 %v7508, %v7643
    %v7743 = vmax.f32 %v7509, %v7644
    %v7744 = vmax.f32 %v7510, %v7645
    %v7745 = vmax.f32 %v7511, %v7646
    %v7746 = vmax.f32 %v7512, %v7647
    %v7747 = vmax.f32 %v7513, %v7648
    %v7748 = vmax.f32 %v7514, %v7649
    %v7749 = vmax.f32 %v7515, %v7650
    %v7750 = vmax.f32 %v7516, %v7651
    %v7751 = vmax.f32 %v7517, %v7652
    %v7752 = vmax.f32 %v7518, %v7653
    %v7753 = vmax.f32 %v7519, %v7654
    %v7754 = vmax.f32 %v7520, %v7655
    %v7755 = vmax.f32 %v7521, %v7656
    %v7756 = vmax.f32 %v7522, %v7657
    %v7757 = vmax.f32 %v7523, %v7625
    %7792 = vrot.lane.b32.xlu0 %v7724, 64
    %v7793 = vpop.permute.xlu0 %7792
    %7794 = vrot.lane.b32.xlu0 %v7725, 64
    %v7795 = vpop.permute.xlu0 %7794
    %7796 = vrot.lane.b32.xlu0 %v7726, 64
    %v7797 = vpop.permute.xlu0 %7796
    %7798 = vrot.lane.b32.xlu0 %v7727, 64
    %v7799 = vpop.permute.xlu0 %7798
    %7800 = vrot.lane.b32.xlu0 %v7728, 64
    %v7801 = vpop.permute.xlu0 %7800
    %7802 = vrot.lane.b32.xlu0 %v7729, 64
    %v7803 = vpop.permute.xlu0 %7802
    %7804 = vrot.lane.b32.xlu0 %v7730, 64
    %v7805 = vpop.permute.xlu0 %7804
    %7806 = vrot.lane.b32.xlu0 %v7731, 64
    %v7807 = vpop.permute.xlu0 %7806
    %7808 = vrot.lane.b32.xlu0 %v7732, 64
    %v7809 = vpop.permute.xlu0 %7808
    %7810 = vrot.lane.b32.xlu0 %v7733, 64
    %v7811 = vpop.permute.xlu0 %7810
    %7812 = vrot.lane.b32.xlu0 %v7734, 64
    %v7813 = vpop.permute.xlu0 %7812
    %7814 = vrot.lane.b32.xlu0 %v7735, 64
    %v7815 = vpop.permute.xlu0 %7814
    %7816 = vrot.lane.b32.xlu0 %v7736, 64
    %v7817 = vpop.permute.xlu0 %7816
    %7818 = vrot.lane.b32.xlu0 %v7737, 64
    %v7819 = vpop.permute.xlu0 %7818
    %7820 = vrot.lane.b32.xlu0 %v7738, 64
    %v7821 = vpop.permute.xlu0 %7820
    %7822 = vrot.lane.b32.xlu0 %v7739, 64
    %v7823 = vpop.permute.xlu0 %7822
    %7824 = vrot.lane.b32.xlu0 %v7740, 64
    %v7825 = vpop.permute.xlu0 %7824
    %7826 = vrot.lane.b32.xlu0 %v7741, 64
    %v7827 = vpop.permute.xlu0 %7826
    %7828 = vrot.lane.b32.xlu0 %v7742, 64
    %v7829 = vpop.permute.xlu0 %7828
    %7830 = vrot.lane.b32.xlu0 %v7743, 64
    %v7831 = vpop.permute.xlu0 %7830
    %7832 = vrot.lane.b32.xlu0 %v7744, 64
    %v7833 = vpop.permute.xlu0 %7832
    %7834 = vrot.lane.b32.xlu0 %v7745, 64
    %v7835 = vpop.permute.xlu0 %7834
    %7836 = vrot.lane.b32.xlu0 %v7746, 64
    %v7837 = vpop.permute.xlu0 %7836
    %7838 = vrot.lane.b32.xlu0 %v7747, 64
    %v7839 = vpop.permute.xlu0 %7838
    %7840 = vrot.lane.b32.xlu0 %v7748, 64
    %v7841 = vpop.permute.xlu0 %7840
    %7842 = vrot.lane.b32.xlu0 %v7749, 64
    %v7843 = vpop.permute.xlu0 %7842
    %7844 = vrot.lane.b32.xlu0 %v7750, 64
    %v7845 = vpop.permute.xlu0 %7844
    %7846 = vrot.lane.b32.xlu0 %v7751, 64
    %v7847 = vpop.permute.xlu0 %7846
    %7848 = vrot.lane.b32.xlu0 %v7752, 64
    %v7849 = vpop.permute.xlu0 %7848
    %7850 = vrot.lane.b32.xlu0 %v7753, 64
    %v7851 = vpop.permute.xlu0 %7850
    %7852 = vrot.lane.b32.xlu0 %v7754, 64
    %v7853 = vpop.permute.xlu0 %7852
    %7854 = vrot.lane.b32.xlu0 %v7755, 64
    %v7855 = vpop.permute.xlu0 %7854
    %7856 = vrot.lane.b32.xlu0 %v7756, 64
    %v7857 = vpop.permute.xlu0 %7856
    %7858 = vrot.lane.b32.xlu0 %v7757, 64
    %v7859 = vpop.permute.xlu0 %7858
    %v7860 = vsel %vm1555, %v7793, %v7795
    %v7861 = vsel %vm1555, %v7795, %v7797
    %v7862 = vsel %vm1555, %v7797, %v7799
    %v7863 = vsel %vm1555, %v7799, %v7801
    %v7864 = vsel %vm1555, %v7801, %v7803
    %v7865 = vsel %vm1555, %v7803, %v7805
    %v7866 = vsel %vm1555, %v7805, %v7807
    %v7867 = vsel %vm1555, %v7807, %v7809
    %v7868 = vsel %vm1555, %v7809, %v7811
    %v7869 = vsel %vm1555, %v7811, %v7813
    %v7870 = vsel %vm1555, %v7813, %v7815
    %v7871 = vsel %vm1555, %v7815, %v7817
    %v7872 = vsel %vm1555, %v7817, %v7819
    %v7873 = vsel %vm1555, %v7819, %v7821
    %v7874 = vsel %vm1555, %v7821, %v7823
    %v7875 = vsel %vm1555, %v7823, %v7825
    %v7876 = vsel %vm1555, %v7827, %v7829
    %v7877 = vsel %vm1555, %v7829, %v7831
    %v7878 = vsel %vm1555, %v7831, %v7833
    %v7879 = vsel %vm1555, %v7833, %v7835
    %v7880 = vsel %vm1555, %v7835, %v7837
    %v7881 = vsel %vm1555, %v7837, %v7839
    %v7882 = vsel %vm1555, %v7839, %v7841
    %v7883 = vsel %vm1555, %v7841, %v7843
    %v7884 = vsel %vm1555, %v7843, %v7845
    %v7885 = vsel %vm1555, %v7845, %v7847
    %v7886 = vsel %vm1555, %v7847, %v7849
    %v7887 = vsel %vm1555, %v7849, %v7851
    %v7888 = vsel %vm1555, %v7851, %v7853
    %v7889 = vsel %vm1555, %v7853, %v7855
    %v7890 = vsel %vm1555, %v7855, %v7857
    %v7891 = vsel %vm1555, %v7857, %v7859
    %v7924 = vmax.f32 %v7690, %v7860
    %v7925 = vmax.f32 %v7691, %v7861
    %v7926 = vmax.f32 %v7692, %v7862
    %v7927 = vmax.f32 %v7693, %v7863
    %v7928 = vmax.f32 %v7694, %v7864
    %v7929 = vmax.f32 %v7695, %v7865
    %v7930 = vmax.f32 %v7696, %v7866
    %v7931 = vmax.f32 %v7697, %v7867
    %v7932 = vmax.f32 %v7698, %v7868
    %v7933 = vmax.f32 %v7699, %v7869
    %v7934 = vmax.f32 %v7700, %v7870
    %v7935 = vmax.f32 %v7701, %v7871
    %v7936 = vmax.f32 %v7702, %v7872
    %v7937 = vmax.f32 %v7703, %v7873
    %v7938 = vmax.f32 %v7704, %v7874
    %v7939 = vmax.f32 %v7705, %v7875
    %v7940 = vmax.f32 %v7706, %v7876
    %v7941 = vmax.f32 %v7707, %v7877
    %v7942 = vmax.f32 %v7708, %v7878
    %v7943 = vmax.f32 %v7709, %v7879
    %v7944 = vmax.f32 %v7710, %v7880
    %v7945 = vmax.f32 %v7711, %v7881
    %v7946 = vmax.f32 %v7712, %v7882
    %v7947 = vmax.f32 %v7713, %v7883
    %v7948 = vmax.f32 %v7714, %v7884
    %v7949 = vmax.f32 %v7715, %v7885
    %v7950 = vmax.f32 %v7716, %v7886
    %v7951 = vmax.f32 %v7717, %v7887
    %v7952 = vmax.f32 %v7718, %v7888
    %v7953 = vmax.f32 %v7719, %v7889
    %v7954 = vmax.f32 %v7720, %v7890
    %v7955 = vmax.f32 %v7721, %v7891
    %7956 = vst [vmem:[#allocation6] sm:$0xff] %v7924
    %7957 = vst [vmem:[#allocation6 + $0x8] sm:$0xff] %v7925
    %7958 = vst [vmem:[#allocation6 + $0x10] sm:$0xff] %v7926
    %7959 = vst [vmem:[#allocation6 + $0x18] sm:$0xff] %v7927
    %7960 = vst [vmem:[#allocation6 + $0x20] sm:$0xff] %v7928
    %7961 = vst [vmem:[#allocation6 + $0x28] sm:$0xff] %v7929
    %7962 = vst [vmem:[#allocation6 + $0x30] sm:$0xff] %v7930
    %7963 = vst [vmem:[#allocation6 + $0x38] sm:$0xff] %v7931
    %7964 = vst [vmem:[#allocation6 + $0x40] sm:$0xff] %v7932
    %7965 = vst [vmem:[#allocation6 + $0x48] sm:$0xff] %v7933
    %7966 = vst [vmem:[#allocation6 + $0x50] sm:$0xff] %v7934
    %7967 = vst [vmem:[#allocation6 + $0x58] sm:$0xff] %v7935
    %7968 = vst [vmem:[#allocation6 + $0x60] sm:$0xff] %v7936
    %7969 = vst [vmem:[#allocation6 + $0x68] sm:$0xff] %v7937
    %7970 = vst [vmem:[#allocation6 + $0x70] sm:$0xff] %v7938
    %7971 = vst [vmem:[#allocation6 + $0x78] sm:$0xff] %v7939
    %7972 = vst [vmem:[#allocation6 + $0x80] sm:$0xff] %v7940
    %7973 = vst [vmem:[#allocation6 + $0x88] sm:$0xff] %v7941
    %7974 = vst [vmem:[#allocation6 + $0x90] sm:$0xff] %v7942
    %7975 = vst [vmem:[#allocation6 + $0x98] sm:$0xff] %v7943
    %7976 = vst [vmem:[#allocation6 + $0xa0] sm:$0xff] %v7944
    %7977 = vst [vmem:[#allocation6 + $0xa8] sm:$0xff] %v7945
    %7978 = vst [vmem:[#allocation6 + $0xb0] sm:$0xff] %v7946
    %7979 = vst [vmem:[#allocation6 + $0xb8] sm:$0xff] %v7947
    %7980 = vst [vmem:[#allocation6 + $0xc0] sm:$0xff] %v7948
    %7981 = vst [vmem:[#allocation6 + $0xc8] sm:$0xff] %v7949
    %7982 = vst [vmem:[#allocation6 + $0xd0] sm:$0xff] %v7950
    %7983 = vst [vmem:[#allocation6 + $0xd8] sm:$0xff] %v7951
    %7984 = vst [vmem:[#allocation6 + $0xe0] sm:$0xff] %v7952
    %7985 = vst [vmem:[#allocation6 + $0xe8] sm:$0xff] %v7953
    %7986 = vst [vmem:[#allocation6 + $0xf0] sm:$0xff] %v7954
    %7987 = vst [vmem:[#allocation6 + $0xf8] sm:$0xff] %v7955
    %s7988 = smul.u32 2048, 1
    %s7989 = sshll.u32 %s7988, 4
    %7990 = dma.done [#allocation10], %s7989
    %v7991 = vld [vmem:[#allocation6] sm:$0xff]
    %v7992 = vld [vmem:[#allocation6 + $0x8] sm:$0xff]
    %v7993 = vld [vmem:[#allocation6 + $0x10] sm:$0xff]
    %v7994 = vld [vmem:[#allocation6 + $0x18] sm:$0xff]
    %v7995 = vld [vmem:[#allocation6 + $0x20] sm:$0xff]
    %v7996 = vld [vmem:[#allocation6 + $0x28] sm:$0xff]
    %v7997 = vld [vmem:[#allocation6 + $0x30] sm:$0xff]
    %v7998 = vld [vmem:[#allocation6 + $0x38] sm:$0xff]
    %v7999 = vld [vmem:[#allocation6 + $0x40] sm:$0xff]
    %v8000 = vld [vmem:[#allocation6 + $0x48] sm:$0xff]
    %v8001 = vld [vmem:[#allocation6 + $0x50] sm:$0xff]
    %v8002 = vld [vmem:[#allocation6 + $0x58] sm:$0xff]
    %v8003 = vld [vmem:[#allocation6 + $0x60] sm:$0xff]
    %v8004 = vld [vmem:[#allocation6 + $0x68] sm:$0xff]
    %v8005 = vld [vmem:[#allocation6 + $0x70] sm:$0xff]
    %v8006 = vld [vmem:[#allocation6 + $0x78] sm:$0xff]
    %v8007 = vld [vmem:[#allocation6 + $0x80] sm:$0xff]
    %v8008 = vld [vmem:[#allocation6 + $0x88] sm:$0xff]
    %v8009 = vld [vmem:[#allocation6 + $0x90] sm:$0xff]
    %v8010 = vld [vmem:[#allocation6 + $0x98] sm:$0xff]
    %v8011 = vld [vmem:[#allocation6 + $0xa0] sm:$0xff]
    %v8012 = vld [vmem:[#allocation6 + $0xa8] sm:$0xff]
    %v8013 = vld [vmem:[#allocation6 + $0xb0] sm:$0xff]
    %v8014 = vld [vmem:[#allocation6 + $0xb8] sm:$0xff]
    %v8015 = vld [vmem:[#allocation6 + $0xc0] sm:$0xff]
    %v8016 = vld [vmem:[#allocation6 + $0xc8] sm:$0xff]
    %v8017 = vld [vmem:[#allocation6 + $0xd0] sm:$0xff]
    %v8018 = vld [vmem:[#allocation6 + $0xd8] sm:$0xff]
    %v8019 = vld [vmem:[#allocation6 + $0xe0] sm:$0xff]
    %v8020 = vld [vmem:[#allocation6 + $0xe8] sm:$0xff]
    %v8021 = vld [vmem:[#allocation6 + $0xf0] sm:$0xff]
    %v8022 = vld [vmem:[#allocation6 + $0xf8] sm:$0xff]
    %v8023 = vld [vmem:[#allocation8] sm:$0xff]
    %v8024 = vld [vmem:[#allocation8 + $0x8] sm:$0xff]
    %v8025 = vld [vmem:[#allocation8 + $0x10] sm:$0xff]
    %v8026 = vld [vmem:[#allocation8 + $0x18] sm:$0xff]
    %v8027 = vld [vmem:[#allocation8 + $0x20] sm:$0xff]
    %v8028 = vld [vmem:[#allocation8 + $0x28] sm:$0xff]
    %v8029 = vld [vmem:[#allocation8 + $0x30] sm:$0xff]
    %v8030 = vld [vmem:[#allocation8 + $0x38] sm:$0xff]
    %v8031 = vld [vmem:[#allocation8 + $0x40] sm:$0xff]
    %v8032 = vld [vmem:[#allocation8 + $0x48] sm:$0xff]
    %v8033 = vld [vmem:[#allocation8 + $0x50] sm:$0xff]
    %v8034 = vld [vmem:[#allocation8 + $0x58] sm:$0xff]
    %v8035 = vld [vmem:[#allocation8 + $0x60] sm:$0xff]
    %v8036 = vld [vmem:[#allocation8 + $0x68] sm:$0xff]
    %v8037 = vld [vmem:[#allocation8 + $0x70] sm:$0xff]
    %v8038 = vld [vmem:[#allocation8 + $0x78] sm:$0xff]
    %v8039 = vld [vmem:[#allocation8 + $0x80] sm:$0xff]
    %v8040 = vld [vmem:[#allocation8 + $0x88] sm:$0xff]
    %v8041 = vld [vmem:[#allocation8 + $0x90] sm:$0xff]
    %v8042 = vld [vmem:[#allocation8 + $0x98] sm:$0xff]
    %v8043 = vld [vmem:[#allocation8 + $0xa0] sm:$0xff]
    %v8044 = vld [vmem:[#allocation8 + $0xa8] sm:$0xff]
    %v8045 = vld [vmem:[#allocation8 + $0xb0] sm:$0xff]
    %v8046 = vld [vmem:[#allocation8 + $0xb8] sm:$0xff]
    %v8047 = vld [vmem:[#allocation8 + $0xc0] sm:$0xff]
    %v8048 = vld [vmem:[#allocation8 + $0xc8] sm:$0xff]
    %v8049 = vld [vmem:[#allocation8 + $0xd0] sm:$0xff]
    %v8050 = vld [vmem:[#allocation8 + $0xd8] sm:$0xff]
    %v8051 = vld [vmem:[#allocation8 + $0xe0] sm:$0xff]
    %v8052 = vld [vmem:[#allocation8 + $0xe8] sm:$0xff]
    %v8053 = vld [vmem:[#allocation8 + $0xf0] sm:$0xff]
    %v8054 = vld [vmem:[#allocation8 + $0xf8] sm:$0xff]
    %v8055 = vld [vmem:[#allocation8 + $0x100] sm:$0xff]
    %v8056 = vld [vmem:[#allocation8 + $0x108] sm:$0xff]
    %v8057 = vld [vmem:[#allocation8 + $0x110] sm:$0xff]
    %v8058 = vld [vmem:[#allocation8 + $0x118] sm:$0xff]
    %v8059 = vld [vmem:[#allocation8 + $0x120] sm:$0xff]
    %v8060 = vld [vmem:[#allocation8 + $0x128] sm:$0xff]
    %v8061 = vld [vmem:[#allocation8 + $0x130] sm:$0xff]
    %v8062 = vld [vmem:[#allocation8 + $0x138] sm:$0xff]
    %v8063 = vld [vmem:[#allocation8 + $0x140] sm:$0xff]
    %v8064 = vld [vmem:[#allocation8 + $0x148] sm:$0xff]
    %v8065 = vld [vmem:[#allocation8 + $0x150] sm:$0xff]
    %v8066 = vld [vmem:[#allocation8 + $0x158] sm:$0xff]
    %v8067 = vld [vmem:[#allocation8 + $0x160] sm:$0xff]
    %v8068 = vld [vmem:[#allocation8 + $0x168] sm:$0xff]
    %v8069 = vld [vmem:[#allocation8 + $0x170] sm:$0xff]
    %v8070 = vld [vmem:[#allocation8 + $0x178] sm:$0xff]
    %v8071 = vld [vmem:[#allocation8 + $0x180] sm:$0xff]
    %v8072 = vld [vmem:[#allocation8 + $0x188] sm:$0xff]
    %v8073 = vld [vmem:[#allocation8 + $0x190] sm:$0xff]
    %v8074 = vld [vmem:[#allocation8 + $0x198] sm:$0xff]
    %v8075 = vld [vmem:[#allocation8 + $0x1a0] sm:$0xff]
    %v8076 = vld [vmem:[#allocation8 + $0x1a8] sm:$0xff]
    %v8077 = vld [vmem:[#allocation8 + $0x1b0] sm:$0xff]
    %v8078 = vld [vmem:[#allocation8 + $0x1b8] sm:$0xff]
    %v8079 = vld [vmem:[#allocation8 + $0x1c0] sm:$0xff]
    %v8080 = vld [vmem:[#allocation8 + $0x1c8] sm:$0xff]
    %v8081 = vld [vmem:[#allocation8 + $0x1d0] sm:$0xff]
    %v8082 = vld [vmem:[#allocation8 + $0x1d8] sm:$0xff]
    %v8083 = vld [vmem:[#allocation8 + $0x1e0] sm:$0xff]
    %v8084 = vld [vmem:[#allocation8 + $0x1e8] sm:$0xff]
    %v8085 = vld [vmem:[#allocation8 + $0x1f0] sm:$0xff]
    %v8086 = vld [vmem:[#allocation8 + $0x1f8] sm:$0xff]
    %v8087 = vld [vmem:[#allocation8 + $0x200] sm:$0xff]
    %v8088 = vld [vmem:[#allocation8 + $0x208] sm:$0xff]
    %v8089 = vld [vmem:[#allocation8 + $0x210] sm:$0xff]
    %v8090 = vld [vmem:[#allocation8 + $0x218] sm:$0xff]
    %v8091 = vld [vmem:[#allocation8 + $0x220] sm:$0xff]
    %v8092 = vld [vmem:[#allocation8 + $0x228] sm:$0xff]
    %v8093 = vld [vmem:[#allocation8 + $0x230] sm:$0xff]
    %v8094 = vld [vmem:[#allocation8 + $0x238] sm:$0xff]
    %v8095 = vld [vmem:[#allocation8 + $0x240] sm:$0xff]
    %v8096 = vld [vmem:[#allocation8 + $0x248] sm:$0xff]
    %v8097 = vld [vmem:[#allocation8 + $0x250] sm:$0xff]
    %v8098 = vld [vmem:[#allocation8 + $0x258] sm:$0xff]
    %v8099 = vld [vmem:[#allocation8 + $0x260] sm:$0xff]
    %v8100 = vld [vmem:[#allocation8 + $0x268] sm:$0xff]
    %v8101 = vld [vmem:[#allocation8 + $0x270] sm:$0xff]
    %v8102 = vld [vmem:[#allocation8 + $0x278] sm:$0xff]
    %v8103 = vld [vmem:[#allocation8 + $0x280] sm:$0xff]
    %v8104 = vld [vmem:[#allocation8 + $0x288] sm:$0xff]
    %v8105 = vld [vmem:[#allocation8 + $0x290] sm:$0xff]
    %v8106 = vld [vmem:[#allocation8 + $0x298] sm:$0xff]
    %v8107 = vld [vmem:[#allocation8 + $0x2a0] sm:$0xff]
    %v8108 = vld [vmem:[#allocation8 + $0x2a8] sm:$0xff]
    %v8109 = vld [vmem:[#allocation8 + $0x2b0] sm:$0xff]
    %v8110 = vld [vmem:[#allocation8 + $0x2b8] sm:$0xff]
    %v8111 = vld [vmem:[#allocation8 + $0x2c0] sm:$0xff]
    %v8112 = vld [vmem:[#allocation8 + $0x2c8] sm:$0xff]
    %v8113 = vld [vmem:[#allocation8 + $0x2d0] sm:$0xff]
    %v8114 = vld [vmem:[#allocation8 + $0x2d8] sm:$0xff]
    %v8115 = vld [vmem:[#allocation8 + $0x2e0] sm:$0xff]
    %v8116 = vld [vmem:[#allocation8 + $0x2e8] sm:$0xff]
    %v8117 = vld [vmem:[#allocation8 + $0x2f0] sm:$0xff]
    %v8118 = vld [vmem:[#allocation8 + $0x2f8] sm:$0xff]
    %v8119 = vld [vmem:[#allocation8 + $0x300] sm:$0xff]
    %v8120 = vld [vmem:[#allocation8 + $0x308] sm:$0xff]
    %v8121 = vld [vmem:[#allocation8 + $0x310] sm:$0xff]
    %v8122 = vld [vmem:[#allocation8 + $0x318] sm:$0xff]
    %v8123 = vld [vmem:[#allocation8 + $0x320] sm:$0xff]
    %v8124 = vld [vmem:[#allocation8 + $0x328] sm:$0xff]
    %v8125 = vld [vmem:[#allocation8 + $0x330] sm:$0xff]
    %v8126 = vld [vmem:[#allocation8 + $0x338] sm:$0xff]
    %v8127 = vld [vmem:[#allocation8 + $0x340] sm:$0xff]
    %v8128 = vld [vmem:[#allocation8 + $0x348] sm:$0xff]
    %v8129 = vld [vmem:[#allocation8 + $0x350] sm:$0xff]
    %v8130 = vld [vmem:[#allocation8 + $0x358] sm:$0xff]
    %v8131 = vld [vmem:[#allocation8 + $0x360] sm:$0xff]
    %v8132 = vld [vmem:[#allocation8 + $0x368] sm:$0xff]
    %v8133 = vld [vmem:[#allocation8 + $0x370] sm:$0xff]
    %v8134 = vld [vmem:[#allocation8 + $0x378] sm:$0xff]
    %v8135 = vld [vmem:[#allocation8 + $0x380] sm:$0xff]
    %v8136 = vld [vmem:[#allocation8 + $0x388] sm:$0xff]
    %v8137 = vld [vmem:[#allocation8 + $0x390] sm:$0xff]
    %v8138 = vld [vmem:[#allocation8 + $0x398] sm:$0xff]
    %v8139 = vld [vmem:[#allocation8 + $0x3a0] sm:$0xff]
    %v8140 = vld [vmem:[#allocation8 + $0x3a8] sm:$0xff]
    %v8141 = vld [vmem:[#allocation8 + $0x3b0] sm:$0xff]
    %v8142 = vld [vmem:[#allocation8 + $0x3b8] sm:$0xff]
    %v8143 = vld [vmem:[#allocation8 + $0x3c0] sm:$0xff]
    %v8144 = vld [vmem:[#allocation8 + $0x3c8] sm:$0xff]
    %v8145 = vld [vmem:[#allocation8 + $0x3d0] sm:$0xff]
    %v8146 = vld [vmem:[#allocation8 + $0x3d8] sm:$0xff]
    %v8147 = vld [vmem:[#allocation8 + $0x3e0] sm:$0xff]
    %v8148 = vld [vmem:[#allocation8 + $0x3e8] sm:$0xff]
    %v8149 = vld [vmem:[#allocation8 + $0x3f0] sm:$0xff]
    %v8150 = vld [vmem:[#allocation8 + $0x3f8] sm:$0xff]
    %v8151 = vld [vmem:[#allocation8 + $0x400] sm:$0xff]
    %v8152 = vld [vmem:[#allocation8 + $0x408] sm:$0xff]
    %v8153 = vld [vmem:[#allocation8 + $0x410] sm:$0xff]
    %v8154 = vld [vmem:[#allocation8 + $0x418] sm:$0xff]
    %v8155 = vld [vmem:[#allocation8 + $0x420] sm:$0xff]
    %v8156 = vld [vmem:[#allocation8 + $0x428] sm:$0xff]
    %v8157 = vld [vmem:[#allocation8 + $0x430] sm:$0xff]
    %v8158 = vld [vmem:[#allocation8 + $0x438] sm:$0xff]
    %v8159 = vld [vmem:[#allocation8 + $0x440] sm:$0xff]
    %v8160 = vld [vmem:[#allocation8 + $0x448] sm:$0xff]
    %v8161 = vld [vmem:[#allocation8 + $0x450] sm:$0xff]
    %v8162 = vld [vmem:[#allocation8 + $0x458] sm:$0xff]
    %v8163 = vld [vmem:[#allocation8 + $0x460] sm:$0xff]
    %v8164 = vld [vmem:[#allocation8 + $0x468] sm:$0xff]
    %v8165 = vld [vmem:[#allocation8 + $0x470] sm:$0xff]
    %v8166 = vld [vmem:[#allocation8 + $0x478] sm:$0xff]
    %v8167 = vld [vmem:[#allocation8 + $0x480] sm:$0xff]
    %v8168 = vld [vmem:[#allocation8 + $0x488] sm:$0xff]
    %v8169 = vld [vmem:[#allocation8 + $0x490] sm:$0xff]
    %v8170 = vld [vmem:[#allocation8 + $0x498] sm:$0xff]
    %v8171 = vld [vmem:[#allocation8 + $0x4a0] sm:$0xff]
    %v8172 = vld [vmem:[#allocation8 + $0x4a8] sm:$0xff]
    %v8173 = vld [vmem:[#allocation8 + $0x4b0] sm:$0xff]
    %v8174 = vld [vmem:[#allocation8 + $0x4b8] sm:$0xff]
    %v8175 = vld [vmem:[#allocation8 + $0x4c0] sm:$0xff]
    %v8176 = vld [vmem:[#allocation8 + $0x4c8] sm:$0xff]
    %v8177 = vld [vmem:[#allocation8 + $0x4d0] sm:$0xff]
    %v8178 = vld [vmem:[#allocation8 + $0x4d8] sm:$0xff]
    %v8179 = vld [vmem:[#allocation8 + $0x4e0] sm:$0xff]
    %v8180 = vld [vmem:[#allocation8 + $0x4e8] sm:$0xff]
    %v8181 = vld [vmem:[#allocation8 + $0x4f0] sm:$0xff]
    %v8182 = vld [vmem:[#allocation8 + $0x4f8] sm:$0xff]
    %v8183 = vld [vmem:[#allocation8 + $0x500] sm:$0xff]
    %v8184 = vld [vmem:[#allocation8 + $0x508] sm:$0xff]
    %v8185 = vld [vmem:[#allocation8 + $0x510] sm:$0xff]
    %v8186 = vld [vmem:[#allocation8 + $0x518] sm:$0xff]
    %v8187 = vld [vmem:[#allocation8 + $0x520] sm:$0xff]
    %v8188 = vld [vmem:[#allocation8 + $0x528] sm:$0xff]
    %v8189 = vld [vmem:[#allocation8 + $0x530] sm:$0xff]
    %v8190 = vld [vmem:[#allocation8 + $0x538] sm:$0xff]
    %v8191 = vld [vmem:[#allocation8 + $0x540] sm:$0xff]
    %v8192 = vld [vmem:[#allocation8 + $0x548] sm:$0xff]
    %v8193 = vld [vmem:[#allocation8 + $0x550] sm:$0xff]
    %v8194 = vld [vmem:[#allocation8 + $0x558] sm:$0xff]
    %v8195 = vld [vmem:[#allocation8 + $0x560] sm:$0xff]
    %v8196 = vld [vmem:[#allocation8 + $0x568] sm:$0xff]
    %v8197 = vld [vmem:[#allocation8 + $0x570] sm:$0xff]
    %v8198 = vld [vmem:[#allocation8 + $0x578] sm:$0xff]
    %v8199 = vld [vmem:[#allocation8 + $0x580] sm:$0xff]
    %v8200 = vld [vmem:[#allocation8 + $0x588] sm:$0xff]
    %v8201 = vld [vmem:[#allocation8 + $0x590] sm:$0xff]
    %v8202 = vld [vmem:[#allocation8 + $0x598] sm:$0xff]
    %v8203 = vld [vmem:[#allocation8 + $0x5a0] sm:$0xff]
    %v8204 = vld [vmem:[#allocation8 + $0x5a8] sm:$0xff]
    %v8205 = vld [vmem:[#allocation8 + $0x5b0] sm:$0xff]
    %v8206 = vld [vmem:[#allocation8 + $0x5b8] sm:$0xff]
    %v8207 = vld [vmem:[#allocation8 + $0x5c0] sm:$0xff]
    %v8208 = vld [vmem:[#allocation8 + $0x5c8] sm:$0xff]
    %v8209 = vld [vmem:[#allocation8 + $0x5d0] sm:$0xff]
    %v8210 = vld [vmem:[#allocation8 + $0x5d8] sm:$0xff]
    %v8211 = vld [vmem:[#allocation8 + $0x5e0] sm:$0xff]
    %v8212 = vld [vmem:[#allocation8 + $0x5e8] sm:$0xff]
    %v8213 = vld [vmem:[#allocation8 + $0x5f0] sm:$0xff]
    %v8214 = vld [vmem:[#allocation8 + $0x5f8] sm:$0xff]
    %v8215 = vld [vmem:[#allocation8 + $0x600] sm:$0xff]
    %v8216 = vld [vmem:[#allocation8 + $0x608] sm:$0xff]
    %v8217 = vld [vmem:[#allocation8 + $0x610] sm:$0xff]
    %v8218 = vld [vmem:[#allocation8 + $0x618] sm:$0xff]
    %v8219 = vld [vmem:[#allocation8 + $0x620] sm:$0xff]
    %v8220 = vld [vmem:[#allocation8 + $0x628] sm:$0xff]
    %v8221 = vld [vmem:[#allocation8 + $0x630] sm:$0xff]
    %v8222 = vld [vmem:[#allocation8 + $0x638] sm:$0xff]
    %v8223 = vld [vmem:[#allocation8 + $0x640] sm:$0xff]
    %v8224 = vld [vmem:[#allocation8 + $0x648] sm:$0xff]
    %v8225 = vld [vmem:[#allocation8 + $0x650] sm:$0xff]
    %v8226 = vld [vmem:[#allocation8 + $0x658] sm:$0xff]
    %v8227 = vld [vmem:[#allocation8 + $0x660] sm:$0xff]
    %v8228 = vld [vmem:[#allocation8 + $0x668] sm:$0xff]
    %v8229 = vld [vmem:[#allocation8 + $0x670] sm:$0xff]
    %v8230 = vld [vmem:[#allocation8 + $0x678] sm:$0xff]
    %v8231 = vld [vmem:[#allocation8 + $0x680] sm:$0xff]
    %v8232 = vld [vmem:[#allocation8 + $0x688] sm:$0xff]
    %v8233 = vld [vmem:[#allocation8 + $0x690] sm:$0xff]
    %v8234 = vld [vmem:[#allocation8 + $0x698] sm:$0xff]
    %v8235 = vld [vmem:[#allocation8 + $0x6a0] sm:$0xff]
    %v8236 = vld [vmem:[#allocation8 + $0x6a8] sm:$0xff]
    %v8237 = vld [vmem:[#allocation8 + $0x6b0] sm:$0xff]
    %v8238 = vld [vmem:[#allocation8 + $0x6b8] sm:$0xff]
    %v8239 = vld [vmem:[#allocation8 + $0x6c0] sm:$0xff]
    %v8240 = vld [vmem:[#allocation8 + $0x6c8] sm:$0xff]
    %v8241 = vld [vmem:[#allocation8 + $0x6d0] sm:$0xff]
    %v8242 = vld [vmem:[#allocation8 + $0x6d8] sm:$0xff]
    %v8243 = vld [vmem:[#allocation8 + $0x6e0] sm:$0xff]
    %v8244 = vld [vmem:[#allocation8 + $0x6e8] sm:$0xff]
    %v8245 = vld [vmem:[#allocation8 + $0x6f0] sm:$0xff]
    %v8246 = vld [vmem:[#allocation8 + $0x6f8] sm:$0xff]
    %v8247 = vld [vmem:[#allocation8 + $0x700] sm:$0xff]
    %v8248 = vld [vmem:[#allocation8 + $0x708] sm:$0xff]
    %v8249 = vld [vmem:[#allocation8 + $0x710] sm:$0xff]
    %v8250 = vld [vmem:[#allocation8 + $0x718] sm:$0xff]
    %v8251 = vld [vmem:[#allocation8 + $0x720] sm:$0xff]
    %v8252 = vld [vmem:[#allocation8 + $0x728] sm:$0xff]
    %v8253 = vld [vmem:[#allocation8 + $0x730] sm:$0xff]
    %v8254 = vld [vmem:[#allocation8 + $0x738] sm:$0xff]
    %v8255 = vld [vmem:[#allocation8 + $0x740] sm:$0xff]
    %v8256 = vld [vmem:[#allocation8 + $0x748] sm:$0xff]
    %v8257 = vld [vmem:[#allocation8 + $0x750] sm:$0xff]
    %v8258 = vld [vmem:[#allocation8 + $0x758] sm:$0xff]
    %v8259 = vld [vmem:[#allocation8 + $0x760] sm:$0xff]
    %v8260 = vld [vmem:[#allocation8 + $0x768] sm:$0xff]
    %v8261 = vld [vmem:[#allocation8 + $0x770] sm:$0xff]
    %v8262 = vld [vmem:[#allocation8 + $0x778] sm:$0xff]
    %v8263 = vld [vmem:[#allocation8 + $0x780] sm:$0xff]
    %v8264 = vld [vmem:[#allocation8 + $0x788] sm:$0xff]
    %v8265 = vld [vmem:[#allocation8 + $0x790] sm:$0xff]
    %v8266 = vld [vmem:[#allocation8 + $0x798] sm:$0xff]
    %v8267 = vld [vmem:[#allocation8 + $0x7a0] sm:$0xff]
    %v8268 = vld [vmem:[#allocation8 + $0x7a8] sm:$0xff]
    %v8269 = vld [vmem:[#allocation8 + $0x7b0] sm:$0xff]
    %v8270 = vld [vmem:[#allocation8 + $0x7b8] sm:$0xff]
    %v8271 = vld [vmem:[#allocation8 + $0x7c0] sm:$0xff]
    %v8272 = vld [vmem:[#allocation8 + $0x7c8] sm:$0xff]
    %v8273 = vld [vmem:[#allocation8 + $0x7d0] sm:$0xff]
    %v8274 = vld [vmem:[#allocation8 + $0x7d8] sm:$0xff]
    %v8275 = vld [vmem:[#allocation8 + $0x7e0] sm:$0xff]
    %v8276 = vld [vmem:[#allocation8 + $0x7e8] sm:$0xff]
    %v8277 = vld [vmem:[#allocation8 + $0x7f0] sm:$0xff]
    %v8278 = vld [vmem:[#allocation8 + $0x7f8] sm:$0xff]
    %8279 = vmatprep.subr.mxu0 0.0
    %8280 = vmatpush1.msra.mxu0 %v8038
    %8281 = vmatprep.subr.mxu0 0.0
    %8282 = vmatpush1.msra.mxu0 %v8037
    %8283 = vmatprep.subr.mxu0 0.0
    %8284 = vmatpush1.msra.mxu0 %v8036
    %8285 = vmatprep.subr.mxu0 0.0
    %8286 = vmatpush1.msra.mxu0 %v8035
    %8287 = vmatprep.subr.mxu0 0.0
    %8288 = vmatpush1.msra.mxu0 %v8034
    %8289 = vmatprep.subr.mxu0 0.0
    %8290 = vmatpush1.msra.mxu0 %v8033
    %8291 = vmatprep.subr.mxu0 0.0
    %8292 = vmatpush1.msra.mxu0 %v8032
    %8293 = vmatprep.subr.mxu0 0.0
    %8294 = vmatpush1.msra.mxu0 %v8031
    %8295 = vmatprep.subr.mxu0 0.0
    %8296 = vmatpush1.msra.mxu0 %v8030
    %8297 = vmatprep.subr.mxu0 0.0
    %8298 = vmatpush1.msra.mxu0 %v8029
    %8299 = vmatprep.subr.mxu0 0.0
    %8300 = vmatpush1.msra.mxu0 %v8028
    %8301 = vmatprep.subr.mxu0 0.0
    %8302 = vmatpush1.msra.mxu0 %v8027
    %8303 = vmatprep.subr.mxu0 0.0
    %8304 = vmatpush1.msra.mxu0 %v8026
    %8305 = vmatprep.subr.mxu0 0.0
    %8306 = vmatpush1.msra.mxu0 %v8025
    %8307 = vmatprep.subr.mxu0 0.0
    %8308 = vmatpush1.msra.mxu0 %v8024
    %8309 = vmatprep.subr.mxu0 0.0
    %8310 = vmatpush1.msra.mxu0 %v8023
    %8311 = vmatprep.subr.mxu0 0.0
    %8312 = vmatpush2.msra.mxu0 %v8054
    %8313 = vmatprep.subr.mxu0 0.0
    %8314 = vmatpush2.msra.mxu0 %v8053
    %8315 = vmatprep.subr.mxu0 0.0
    %8316 = vmatpush2.msra.mxu0 %v8052
    %8317 = vmatprep.subr.mxu0 0.0
    %8318 = vmatpush2.msra.mxu0 %v8051
    %8319 = vmatprep.subr.mxu0 0.0
    %8320 = vmatpush2.msra.mxu0 %v8050
    %8321 = vmatprep.subr.mxu0 0.0
    %8322 = vmatpush2.msra.mxu0 %v8049
    %8323 = vmatprep.subr.mxu0 0.0
    %8324 = vmatpush2.msra.mxu0 %v8048
    %8325 = vmatprep.subr.mxu0 0.0
    %8326 = vmatpush2.msra.mxu0 %v8047
    %8327 = vmatprep.subr.mxu0 0.0
    %8328 = vmatpush2.msra.mxu0 %v8046
    %8329 = vmatprep.subr.mxu0 0.0
    %8330 = vmatpush2.msra.mxu0 %v8045
    %8331 = vmatprep.subr.mxu0 0.0
    %8332 = vmatpush2.msra.mxu0 %v8044
    %8333 = vmatprep.subr.mxu0 0.0
    %8334 = vmatpush2.msra.mxu0 %v8043
    %8335 = vmatprep.subr.mxu0 0.0
    %8336 = vmatpush2.msra.mxu0 %v8042
    %8337 = vmatprep.subr.mxu0 0.0
    %8338 = vmatpush2.msra.mxu0 %v8041
    %8339 = vmatprep.subr.mxu0 0.0
    %8340 = vmatpush2.msra.mxu0 %v8040
    %8341 = vmatprep.subr.mxu0 0.0
    %8342 = vmatpush2.msra.mxu0 %v8039
    %8343 = vmatprep.mubr.f32.mxu0 %v7992
    %8344 = vmatmul.mubr.f32.gmra.mxu0 %v7991
    %v8345 = vpop.f32.mrf.mxu0
    %v8346 = vadd.f32 0.0, %v8345
    %v8347 = vpop.f32.mrf.mxu0
    %8348 = vmatprep.mubr.f32.mxu0 %v8008
    %8349 = vmatmul.mubr.f32.gmra.mxu0 %v8007
    %v8350 = vpop.f32.mrf.mxu0
    %v8351 = vadd.f32 0.0, %v8350
    %v8352 = vpop.f32.mrf.mxu0
    %8353 = vdwg.mxu0
    %8354 = vmatprep.subr.mxu0 0.0
    %8355 = vmatpush1.msra.mxu0 %v8070
    %8356 = vmatprep.subr.mxu0 0.0
    %8357 = vmatpush1.msra.mxu0 %v8069
    %8358 = vmatprep.subr.mxu0 0.0
    %8359 = vmatpush1.msra.mxu0 %v8068
    %8360 = vmatprep.subr.mxu0 0.0
    %8361 = vmatpush1.msra.mxu0 %v8067
    %8362 = vmatprep.subr.mxu0 0.0
    %8363 = vmatpush1.msra.mxu0 %v8066
    %8364 = vmatprep.subr.mxu0 0.0
    %8365 = vmatpush1.msra.mxu0 %v8065
    %8366 = vmatprep.subr.mxu0 0.0
    %8367 = vmatpush1.msra.mxu0 %v8064
    %8368 = vmatprep.subr.mxu0 0.0
    %8369 = vmatpush1.msra.mxu0 %v8063
    %8370 = vmatprep.subr.mxu0 0.0
    %8371 = vmatpush1.msra.mxu0 %v8062
    %8372 = vmatprep.subr.mxu0 0.0
    %8373 = vmatpush1.msra.mxu0 %v8061
    %8374 = vmatprep.subr.mxu0 0.0
    %8375 = vmatpush1.msra.mxu0 %v8060
    %8376 = vmatprep.subr.mxu0 0.0
    %8377 = vmatpush1.msra.mxu0 %v8059
    %8378 = vmatprep.subr.mxu0 0.0
    %8379 = vmatpush1.msra.mxu0 %v8058
    %8380 = vmatprep.subr.mxu0 0.0
    %8381 = vmatpush1.msra.mxu0 %v8057
    %8382 = vmatprep.subr.mxu0 0.0
    %8383 = vmatpush1.msra.mxu0 %v8056
    %8384 = vmatprep.subr.mxu0 0.0
    %8385 = vmatpush1.msra.mxu0 %v8055
    %8386 = vmatprep.subr.mxu0 0.0
    %8387 = vmatpush2.msra.mxu0 %v8086
    %8388 = vmatprep.subr.mxu0 0.0
    %8389 = vmatpush2.msra.mxu0 %v8085
    %8390 = vmatprep.subr.mxu0 0.0
    %8391 = vmatpush2.msra.mxu0 %v8084
    %8392 = vmatprep.subr.mxu0 0.0
    %8393 = vmatpush2.msra.mxu0 %v8083
    %8394 = vmatprep.subr.mxu0 0.0
    %8395 = vmatpush2.msra.mxu0 %v8082
    %8396 = vmatprep.subr.mxu0 0.0
    %8397 = vmatpush2.msra.mxu0 %v8081
    %8398 = vmatprep.subr.mxu0 0.0
    %8399 = vmatpush2.msra.mxu0 %v8080
    %8400 = vmatprep.subr.mxu0 0.0
    %8401 = vmatpush2.msra.mxu0 %v8079
    %8402 = vmatprep.subr.mxu0 0.0
    %8403 = vmatpush2.msra.mxu0 %v8078
    %8404 = vmatprep.subr.mxu0 0.0
    %8405 = vmatpush2.msra.mxu0 %v8077
    %8406 = vmatprep.subr.mxu0 0.0
    %8407 = vmatpush2.msra.mxu0 %v8076
    %8408 = vmatprep.subr.mxu0 0.0
    %8409 = vmatpush2.msra.mxu0 %v8075
    %8410 = vmatprep.subr.mxu0 0.0
    %8411 = vmatpush2.msra.mxu0 %v8074
    %8412 = vmatprep.subr.mxu0 0.0
    %8413 = vmatpush2.msra.mxu0 %v8073
    %8414 = vmatprep.subr.mxu0 0.0
    %8415 = vmatpush2.msra.mxu0 %v8072
    %8416 = vmatprep.subr.mxu0 0.0
    %8417 = vmatpush2.msra.mxu0 %v8071
    %8418 = vmatprep.mubr.f32.mxu0 %v7994
    %8419 = vmatmul.mubr.f32.gmra.mxu0 %v7993
    %v8420 = vpop.f32.mrf.mxu0
    %v8421 = vadd.f32 %v8346, %v8420
    %v8422 = vpop.f32.mrf.mxu0
    %8423 = vmatprep.mubr.f32.mxu0 %v8010
    %8424 = vmatmul.mubr.f32.gmra.mxu0 %v8009
    %v8425 = vpop.f32.mrf.mxu0
    %v8426 = vadd.f32 %v8351, %v8425
    %v8427 = vpop.f32.mrf.mxu0
    %8428 = vdwg.mxu0
    %8429 = vmatprep.subr.mxu0 0.0
    %8430 = vmatpush1.msra.mxu0 %v8102
    %8431 = vmatprep.subr.mxu0 0.0
    %8432 = vmatpush1.msra.mxu0 %v8101
    %8433 = vmatprep.subr.mxu0 0.0
    %8434 = vmatpush1.msra.mxu0 %v8100
    %8435 = vmatprep.subr.mxu0 0.0
    %8436 = vmatpush1.msra.mxu0 %v8099
    %8437 = vmatprep.subr.mxu0 0.0
    %8438 = vmatpush1.msra.mxu0 %v8098
    %8439 = vmatprep.subr.mxu0 0.0
    %8440 = vmatpush1.msra.mxu0 %v8097
    %8441 = vmatprep.subr.mxu0 0.0
    %8442 = vmatpush1.msra.mxu0 %v8096
    %8443 = vmatprep.subr.mxu0 0.0
    %8444 = vmatpush1.msra.mxu0 %v8095
    %8445 = vmatprep.subr.mxu0 0.0
    %8446 = vmatpush1.msra.mxu0 %v8094
    %8447 = vmatprep.subr.mxu0 0.0
    %8448 = vmatpush1.msra.mxu0 %v8093
    %8449 = vmatprep.subr.mxu0 0.0
    %8450 = vmatpush1.msra.mxu0 %v8092
    %8451 = vmatprep.subr.mxu0 0.0
    %8452 = vmatpush1.msra.mxu0 %v8091
    %8453 = vmatprep.subr.mxu0 0.0
    %8454 = vmatpush1.msra.mxu0 %v8090
    %8455 = vmatprep.subr.mxu0 0.0
    %8456 = vmatpush1.msra.mxu0 %v8089
    %8457 = vmatprep.subr.mxu0 0.0
    %8458 = vmatpush1.msra.mxu0 %v8088
    %8459 = vmatprep.subr.mxu0 0.0
    %8460 = vmatpush1.msra.mxu0 %v8087
    %8461 = vmatprep.subr.mxu0 0.0
    %8462 = vmatpush2.msra.mxu0 %v8118
    %8463 = vmatprep.subr.mxu0 0.0
    %8464 = vmatpush2.msra.mxu0 %v8117
    %8465 = vmatprep.subr.mxu0 0.0
    %8466 = vmatpush2.msra.mxu0 %v8116
    %8467 = vmatprep.subr.mxu0 0.0
    %8468 = vmatpush2.msra.mxu0 %v8115
    %8469 = vmatprep.subr.mxu0 0.0
    %8470 = vmatpush2.msra.mxu0 %v8114
    %8471 = vmatprep.subr.mxu0 0.0
    %8472 = vmatpush2.msra.mxu0 %v8113
    %8473 = vmatprep.subr.mxu0 0.0
    %8474 = vmatpush2.msra.mxu0 %v8112
    %8475 = vmatprep.subr.mxu0 0.0
    %8476 = vmatpush2.msra.mxu0 %v8111
    %8477 = vmatprep.subr.mxu0 0.0
    %8478 = vmatpush2.msra.mxu0 %v8110
    %8479 = vmatprep.subr.mxu0 0.0
    %8480 = vmatpush2.msra.mxu0 %v8109
    %8481 = vmatprep.subr.mxu0 0.0
    %8482 = vmatpush2.msra.mxu0 %v8108
    %8483 = vmatprep.subr.mxu0 0.0
    %8484 = vmatpush2.msra.mxu0 %v8107
    %8485 = vmatprep.subr.mxu0 0.0
    %8486 = vmatpush2.msra.mxu0 %v8106
    %8487 = vmatprep.subr.mxu0 0.0
    %8488 = vmatpush2.msra.mxu0 %v8105
    %8489 = vmatprep.subr.mxu0 0.0
    %8490 = vmatpush2.msra.mxu0 %v8104
    %8491 = vmatprep.subr.mxu0 0.0
    %8492 = vmatpush2.msra.mxu0 %v8103
    %8493 = vmatprep.mubr.f32.mxu0 %v7996
    %8494 = vmatmul.mubr.f32.gmra.mxu0 %v7995
    %v8495 = vpop.f32.mrf.mxu0
    %v8496 = vadd.f32 %v8421, %v8495
    %v8497 = vpop.f32.mrf.mxu0
    %8498 = vmatprep.mubr.f32.mxu0 %v8012
    %8499 = vmatmul.mubr.f32.gmra.mxu0 %v8011
    %v8500 = vpop.f32.mrf.mxu0
    %v8501 = vadd.f32 %v8426, %v8500
    %v8502 = vpop.f32.mrf.mxu0
    %8503 = vdwg.mxu0
    %8504 = vmatprep.subr.mxu0 0.0
    %8505 = vmatpush1.msra.mxu0 %v8134
    %8506 = vmatprep.subr.mxu0 0.0
    %8507 = vmatpush1.msra.mxu0 %v8133
    %8508 = vmatprep.subr.mxu0 0.0
    %8509 = vmatpush1.msra.mxu0 %v8132
    %8510 = vmatprep.subr.mxu0 0.0
    %8511 = vmatpush1.msra.mxu0 %v8131
    %8512 = vmatprep.subr.mxu0 0.0
    %8513 = vmatpush1.msra.mxu0 %v8130
    %8514 = vmatprep.subr.mxu0 0.0
    %8515 = vmatpush1.msra.mxu0 %v8129
    %8516 = vmatprep.subr.mxu0 0.0
    %8517 = vmatpush1.msra.mxu0 %v8128
    %8518 = vmatprep.subr.mxu0 0.0
    %8519 = vmatpush1.msra.mxu0 %v8127
    %8520 = vmatprep.subr.mxu0 0.0
    %8521 = vmatpush1.msra.mxu0 %v8126
    %8522 = vmatprep.subr.mxu0 0.0
    %8523 = vmatpush1.msra.mxu0 %v8125
    %8524 = vmatprep.subr.mxu0 0.0
    %8525 = vmatpush1.msra.mxu0 %v8124
    %8526 = vmatprep.subr.mxu0 0.0
    %8527 = vmatpush1.msra.mxu0 %v8123
    %8528 = vmatprep.subr.mxu0 0.0
    %8529 = vmatpush1.msra.mxu0 %v8122
    %8530 = vmatprep.subr.mxu0 0.0
    %8531 = vmatpush1.msra.mxu0 %v8121
    %8532 = vmatprep.subr.mxu0 0.0
    %8533 = vmatpush1.msra.mxu0 %v8120
    %8534 = vmatprep.subr.mxu0 0.0
    %8535 = vmatpush1.msra.mxu0 %v8119
    %8536 = vmatprep.subr.mxu0 0.0
    %8537 = vmatpush2.msra.mxu0 %v8150
    %8538 = vmatprep.subr.mxu0 0.0
    %8539 = vmatpush2.msra.mxu0 %v8149
    %8540 = vmatprep.subr.mxu0 0.0
    %8541 = vmatpush2.msra.mxu0 %v8148
    %8542 = vmatprep.subr.mxu0 0.0
    %8543 = vmatpush2.msra.mxu0 %v8147
    %8544 = vmatprep.subr.mxu0 0.0
    %8545 = vmatpush2.msra.mxu0 %v8146
    %8546 = vmatprep.subr.mxu0 0.0
    %8547 = vmatpush2.msra.mxu0 %v8145
    %8548 = vmatprep.subr.mxu0 0.0
    %8549 = vmatpush2.msra.mxu0 %v8144
    %8550 = vmatprep.subr.mxu0 0.0
    %8551 = vmatpush2.msra.mxu0 %v8143
    %8552 = vmatprep.subr.mxu0 0.0
    %8553 = vmatpush2.msra.mxu0 %v8142
    %8554 = vmatprep.subr.mxu0 0.0
    %8555 = vmatpush2.msra.mxu0 %v8141
    %8556 = vmatprep.subr.mxu0 0.0
    %8557 = vmatpush2.msra.mxu0 %v8140
    %8558 = vmatprep.subr.mxu0 0.0
    %8559 = vmatpush2.msra.mxu0 %v8139
    %8560 = vmatprep.subr.mxu0 0.0
    %8561 = vmatpush2.msra.mxu0 %v8138
    %8562 = vmatprep.subr.mxu0 0.0
    %8563 = vmatpush2.msra.mxu0 %v8137
    %8564 = vmatprep.subr.mxu0 0.0
    %8565 = vmatpush2.msra.mxu0 %v8136
    %8566 = vmatprep.subr.mxu0 0.0
    %8567 = vmatpush2.msra.mxu0 %v8135
    %8568 = vmatprep.mubr.f32.mxu0 %v7998
    %8569 = vmatmul.mubr.f32.gmra.mxu0 %v7997
    %v8570 = vpop.f32.mrf.mxu0
    %v8571 = vadd.f32 %v8496, %v8570
    %v8572 = vpop.f32.mrf.mxu0
    %8573 = vmatprep.mubr.f32.mxu0 %v8014
    %8574 = vmatmul.mubr.f32.gmra.mxu0 %v8013
    %v8575 = vpop.f32.mrf.mxu0
    %v8576 = vadd.f32 %v8501, %v8575
    %v8577 = vpop.f32.mrf.mxu0
    %8578 = vdwg.mxu0
    %8579 = vmatprep.subr.mxu0 0.0
    %8580 = vmatpush1.msra.mxu0 %v8166
    %8581 = vmatprep.subr.mxu0 0.0
    %8582 = vmatpush1.msra.mxu0 %v8165
    %8583 = vmatprep.subr.mxu0 0.0
    %8584 = vmatpush1.msra.mxu0 %v8164
    %8585 = vmatprep.subr.mxu0 0.0
    %8586 = vmatpush1.msra.mxu0 %v8163
    %8587 = vmatprep.subr.mxu0 0.0
    %8588 = vmatpush1.msra.mxu0 %v8162
    %8589 = vmatprep.subr.mxu0 0.0
    %8590 = vmatpush1.msra.mxu0 %v8161
    %8591 = vmatprep.subr.mxu0 0.0
    %8592 = vmatpush1.msra.mxu0 %v8160
    %8593 = vmatprep.subr.mxu0 0.0
    %8594 = vmatpush1.msra.mxu0 %v8159
    %8595 = vmatprep.subr.mxu0 0.0
    %8596 = vmatpush1.msra.mxu0 %v8158
    %8597 = vmatprep.subr.mxu0 0.0
    %8598 = vmatpush1.msra.mxu0 %v8157
    %8599 = vmatprep.subr.mxu0 0.0
    %8600 = vmatpush1.msra.mxu0 %v8156
    %8601 = vmatprep.subr.mxu0 0.0
    %8602 = vmatpush1.msra.mxu0 %v8155
    %8603 = vmatprep.subr.mxu0 0.0
    %8604 = vmatpush1.msra.mxu0 %v8154
    %8605 = vmatprep.subr.mxu0 0.0
    %8606 = vmatpush1.msra.mxu0 %v8153
    %8607 = vmatprep.subr.mxu0 0.0
    %8608 = vmatpush1.msra.mxu0 %v8152
    %8609 = vmatprep.subr.mxu0 0.0
    %8610 = vmatpush1.msra.mxu0 %v8151
    %8611 = vmatprep.subr.mxu0 0.0
    %8612 = vmatpush2.msra.mxu0 %v8182
    %8613 = vmatprep.subr.mxu0 0.0
    %8614 = vmatpush2.msra.mxu0 %v8181
    %8615 = vmatprep.subr.mxu0 0.0
    %8616 = vmatpush2.msra.mxu0 %v8180
    %8617 = vmatprep.subr.mxu0 0.0
    %8618 = vmatpush2.msra.mxu0 %v8179
    %8619 = vmatprep.subr.mxu0 0.0
    %8620 = vmatpush2.msra.mxu0 %v8178
    %8621 = vmatprep.subr.mxu0 0.0
    %8622 = vmatpush2.msra.mxu0 %v8177
    %8623 = vmatprep.subr.mxu0 0.0
    %8624 = vmatpush2.msra.mxu0 %v8176
    %8625 = vmatprep.subr.mxu0 0.0
    %8626 = vmatpush2.msra.mxu0 %v8175
    %8627 = vmatprep.subr.mxu0 0.0
    %8628 = vmatpush2.msra.mxu0 %v8174
    %8629 = vmatprep.subr.mxu0 0.0
    %8630 = vmatpush2.msra.mxu0 %v8173
    %8631 = vmatprep.subr.mxu0 0.0
    %8632 = vmatpush2.msra.mxu0 %v8172
    %8633 = vmatprep.subr.mxu0 0.0
    %8634 = vmatpush2.msra.mxu0 %v8171
    %8635 = vmatprep.subr.mxu0 0.0
    %8636 = vmatpush2.msra.mxu0 %v8170
    %8637 = vmatprep.subr.mxu0 0.0
    %8638 = vmatpush2.msra.mxu0 %v8169
    %8639 = vmatprep.subr.mxu0 0.0
    %8640 = vmatpush2.msra.mxu0 %v8168
    %8641 = vmatprep.subr.mxu0 0.0
    %8642 = vmatpush2.msra.mxu0 %v8167
    %8643 = vmatprep.mubr.f32.mxu0 %v8000
    %8644 = vmatmul.mubr.f32.gmra.mxu0 %v7999
    %v8645 = vpop.f32.mrf.mxu0
    %v8646 = vadd.f32 %v8571, %v8645
    %v8647 = vpop.f32.mrf.mxu0
    %8648 = vmatprep.mubr.f32.mxu0 %v8016
    %8649 = vmatmul.mubr.f32.gmra.mxu0 %v8015
    %v8650 = vpop.f32.mrf.mxu0
    %v8651 = vadd.f32 %v8576, %v8650
    %v8652 = vpop.f32.mrf.mxu0
    %8653 = vdwg.mxu0
    %8654 = vmatprep.subr.mxu0 0.0
    %8655 = vmatpush1.msra.mxu0 %v8198
    %8656 = vmatprep.subr.mxu0 0.0
    %8657 = vmatpush1.msra.mxu0 %v8197
    %8658 = vmatprep.subr.mxu0 0.0
    %8659 = vmatpush1.msra.mxu0 %v8196
    %8660 = vmatprep.subr.mxu0 0.0
    %8661 = vmatpush1.msra.mxu0 %v8195
    %8662 = vmatprep.subr.mxu0 0.0
    %8663 = vmatpush1.msra.mxu0 %v8194
    %8664 = vmatprep.subr.mxu0 0.0
    %8665 = vmatpush1.msra.mxu0 %v8193
    %8666 = vmatprep.subr.mxu0 0.0
    %8667 = vmatpush1.msra.mxu0 %v8192
    %8668 = vmatprep.subr.mxu0 0.0
    %8669 = vmatpush1.msra.mxu0 %v8191
    %8670 = vmatprep.subr.mxu0 0.0
    %8671 = vmatpush1.msra.mxu0 %v8190
    %8672 = vmatprep.subr.mxu0 0.0
    %8673 = vmatpush1.msra.mxu0 %v8189
    %8674 = vmatprep.subr.mxu0 0.0
    %8675 = vmatpush1.msra.mxu0 %v8188
    %8676 = vmatprep.subr.mxu0 0.0
    %8677 = vmatpush1.msra.mxu0 %v8187
    %8678 = vmatprep.subr.mxu0 0.0
    %8679 = vmatpush1.msra.mxu0 %v8186
    %8680 = vmatprep.subr.mxu0 0.0
    %8681 = vmatpush1.msra.mxu0 %v8185
    %8682 = vmatprep.subr.mxu0 0.0
    %8683 = vmatpush1.msra.mxu0 %v8184
    %8684 = vmatprep.subr.mxu0 0.0
    %8685 = vmatpush1.msra.mxu0 %v8183
    %8686 = vmatprep.subr.mxu0 0.0
    %8687 = vmatpush2.msra.mxu0 %v8214
    %8688 = vmatprep.subr.mxu0 0.0
    %8689 = vmatpush2.msra.mxu0 %v8213
    %8690 = vmatprep.subr.mxu0 0.0
    %8691 = vmatpush2.msra.mxu0 %v8212
    %8692 = vmatprep.subr.mxu0 0.0
    %8693 = vmatpush2.msra.mxu0 %v8211
    %8694 = vmatprep.subr.mxu0 0.0
    %8695 = vmatpush2.msra.mxu0 %v8210
    %8696 = vmatprep.subr.mxu0 0.0
    %8697 = vmatpush2.msra.mxu0 %v8209
    %8698 = vmatprep.subr.mxu0 0.0
    %8699 = vmatpush2.msra.mxu0 %v8208
    %8700 = vmatprep.subr.mxu0 0.0
    %8701 = vmatpush2.msra.mxu0 %v8207
    %8702 = vmatprep.subr.mxu0 0.0
    %8703 = vmatpush2.msra.mxu0 %v8206
    %8704 = vmatprep.subr.mxu0 0.0
    %8705 = vmatpush2.msra.mxu0 %v8205
    %8706 = vmatprep.subr.mxu0 0.0
    %8707 = vmatpush2.msra.mxu0 %v8204
    %8708 = vmatprep.subr.mxu0 0.0
    %8709 = vmatpush2.msra.mxu0 %v8203
    %8710 = vmatprep.subr.mxu0 0.0
    %8711 = vmatpush2.msra.mxu0 %v8202
    %8712 = vmatprep.subr.mxu0 0.0
    %8713 = vmatpush2.msra.mxu0 %v8201
    %8714 = vmatprep.subr.mxu0 0.0
    %8715 = vmatpush2.msra.mxu0 %v8200
    %8716 = vmatprep.subr.mxu0 0.0
    %8717 = vmatpush2.msra.mxu0 %v8199
    %8718 = vmatprep.mubr.f32.mxu0 %v8002
    %8719 = vmatmul.mubr.f32.gmra.mxu0 %v8001
    %v8720 = vpop.f32.mrf.mxu0
    %v8721 = vadd.f32 %v8646, %v8720
    %v8722 = vpop.f32.mrf.mxu0
    %8723 = vmatprep.mubr.f32.mxu0 %v8018
    %8724 = vmatmul.mubr.f32.gmra.mxu0 %v8017
    %v8725 = vpop.f32.mrf.mxu0
    %v8726 = vadd.f32 %v8651, %v8725
    %v8727 = vpop.f32.mrf.mxu0
    %8728 = vdwg.mxu0
    %8729 = vmatprep.subr.mxu0 0.0
    %8730 = vmatpush1.msra.mxu0 %v8230
    %8731 = vmatprep.subr.mxu0 0.0
    %8732 = vmatpush1.msra.mxu0 %v8229
    %8733 = vmatprep.subr.mxu0 0.0
    %8734 = vmatpush1.msra.mxu0 %v8228
    %8735 = vmatprep.subr.mxu0 0.0
    %8736 = vmatpush1.msra.mxu0 %v8227
    %8737 = vmatprep.subr.mxu0 0.0
    %8738 = vmatpush1.msra.mxu0 %v8226
    %8739 = vmatprep.subr.mxu0 0.0
    %8740 = vmatpush1.msra.mxu0 %v8225
    %8741 = vmatprep.subr.mxu0 0.0
    %8742 = vmatpush1.msra.mxu0 %v8224
    %8743 = vmatprep.subr.mxu0 0.0
    %8744 = vmatpush1.msra.mxu0 %v8223
    %8745 = vmatprep.subr.mxu0 0.0
    %8746 = vmatpush1.msra.mxu0 %v8222
    %8747 = vmatprep.subr.mxu0 0.0
    %8748 = vmatpush1.msra.mxu0 %v8221
    %8749 = vmatprep.subr.mxu0 0.0
    %8750 = vmatpush1.msra.mxu0 %v8220
    %8751 = vmatprep.subr.mxu0 0.0
    %8752 = vmatpush1.msra.mxu0 %v8219
    %8753 = vmatprep.subr.mxu0 0.0
    %8754 = vmatpush1.msra.mxu0 %v8218
    %8755 = vmatprep.subr.mxu0 0.0
    %8756 = vmatpush1.msra.mxu0 %v8217
    %8757 = vmatprep.subr.mxu0 0.0
    %8758 = vmatpush1.msra.mxu0 %v8216
    %8759 = vmatprep.subr.mxu0 0.0
    %8760 = vmatpush1.msra.mxu0 %v8215
    %8761 = vmatprep.subr.mxu0 0.0
    %8762 = vmatpush2.msra.mxu0 %v8246
    %8763 = vmatprep.subr.mxu0 0.0
    %8764 = vmatpush2.msra.mxu0 %v8245
    %8765 = vmatprep.subr.mxu0 0.0
    %8766 = vmatpush2.msra.mxu0 %v8244
    %8767 = vmatprep.subr.mxu0 0.0
    %8768 = vmatpush2.msra.mxu0 %v8243
    %8769 = vmatprep.subr.mxu0 0.0
    %8770 = vmatpush2.msra.mxu0 %v8242
    %8771 = vmatprep.subr.mxu0 0.0
    %8772 = vmatpush2.msra.mxu0 %v8241
    %8773 = vmatprep.subr.mxu0 0.0
    %8774 = vmatpush2.msra.mxu0 %v8240
    %8775 = vmatprep.subr.mxu0 0.0
    %8776 = vmatpush2.msra.mxu0 %v8239
    %8777 = vmatprep.subr.mxu0 0.0
    %8778 = vmatpush2.msra.mxu0 %v8238
    %8779 = vmatprep.subr.mxu0 0.0
    %8780 = vmatpush2.msra.mxu0 %v8237
    %8781 = vmatprep.subr.mxu0 0.0
    %8782 = vmatpush2.msra.mxu0 %v8236
    %8783 = vmatprep.subr.mxu0 0.0
    %8784 = vmatpush2.msra.mxu0 %v8235
    %8785 = vmatprep.subr.mxu0 0.0
    %8786 = vmatpush2.msra.mxu0 %v8234
    %8787 = vmatprep.subr.mxu0 0.0
    %8788 = vmatpush2.msra.mxu0 %v8233
    %8789 = vmatprep.subr.mxu0 0.0
    %8790 = vmatpush2.msra.mxu0 %v8232
    %8791 = vmatprep.subr.mxu0 0.0
    %8792 = vmatpush2.msra.mxu0 %v8231
    %8793 = vmatprep.mubr.f32.mxu0 %v8004
    %8794 = vmatmul.mubr.f32.gmra.mxu0 %v8003
    %v8795 = vpop.f32.mrf.mxu0
    %v8796 = vadd.f32 %v8721, %v8795
    %v8797 = vpop.f32.mrf.mxu0
    %8798 = vmatprep.mubr.f32.mxu0 %v8020
    %8799 = vmatmul.mubr.f32.gmra.mxu0 %v8019
    %v8800 = vpop.f32.mrf.mxu0
    %v8801 = vadd.f32 %v8726, %v8800
    %v8802 = vpop.f32.mrf.mxu0
    %8803 = vdwg.mxu0
    %8804 = vmatprep.subr.mxu0 0.0
    %8805 = vmatpush1.msra.mxu0 %v8262
    %8806 = vmatprep.subr.mxu0 0.0
    %8807 = vmatpush1.msra.mxu0 %v8261
    %8808 = vmatprep.subr.mxu0 0.0
    %8809 = vmatpush1.msra.mxu0 %v8260
    %8810 = vmatprep.subr.mxu0 0.0
    %8811 = vmatpush1.msra.mxu0 %v8259
    %8812 = vmatprep.subr.mxu0 0.0
    %8813 = vmatpush1.msra.mxu0 %v8258
    %8814 = vmatprep.subr.mxu0 0.0
    %8815 = vmatpush1.msra.mxu0 %v8257
    %8816 = vmatprep.subr.mxu0 0.0
    %8817 = vmatpush1.msra.mxu0 %v8256
    %8818 = vmatprep.subr.mxu0 0.0
    %8819 = vmatpush1.msra.mxu0 %v8255
    %8820 = vmatprep.subr.mxu0 0.0
    %8821 = vmatpush1.msra.mxu0 %v8254
    %8822 = vmatprep.subr.mxu0 0.0
    %8823 = vmatpush1.msra.mxu0 %v8253
    %8824 = vmatprep.subr.mxu0 0.0
    %8825 = vmatpush1.msra.mxu0 %v8252
    %8826 = vmatprep.subr.mxu0 0.0
    %8827 = vmatpush1.msra.mxu0 %v8251
    %8828 = vmatprep.subr.mxu0 0.0
    %8829 = vmatpush1.msra.mxu0 %v8250
    %8830 = vmatprep.subr.mxu0 0.0
    %8831 = vmatpush1.msra.mxu0 %v8249
    %8832 = vmatprep.subr.mxu0 0.0
    %8833 = vmatpush1.msra.mxu0 %v8248
    %8834 = vmatprep.subr.mxu0 0.0
    %8835 = vmatpush1.msra.mxu0 %v8247
    %8836 = vmatprep.subr.mxu0 0.0
    %8837 = vmatpush2.msra.mxu0 %v8278
    %8838 = vmatprep.subr.mxu0 0.0
    %8839 = vmatpush2.msra.mxu0 %v8277
    %8840 = vmatprep.subr.mxu0 0.0
    %8841 = vmatpush2.msra.mxu0 %v8276
    %8842 = vmatprep.subr.mxu0 0.0
    %8843 = vmatpush2.msra.mxu0 %v8275
    %8844 = vmatprep.subr.mxu0 0.0
    %8845 = vmatpush2.msra.mxu0 %v8274
    %8846 = vmatprep.subr.mxu0 0.0
    %8847 = vmatpush2.msra.mxu0 %v8273
    %8848 = vmatprep.subr.mxu0 0.0
    %8849 = vmatpush2.msra.mxu0 %v8272
    %8850 = vmatprep.subr.mxu0 0.0
    %8851 = vmatpush2.msra.mxu0 %v8271
    %8852 = vmatprep.subr.mxu0 0.0
    %8853 = vmatpush2.msra.mxu0 %v8270
    %8854 = vmatprep.subr.mxu0 0.0
    %8855 = vmatpush2.msra.mxu0 %v8269
    %8856 = vmatprep.subr.mxu0 0.0
    %8857 = vmatpush2.msra.mxu0 %v8268
    %8858 = vmatprep.subr.mxu0 0.0
    %8859 = vmatpush2.msra.mxu0 %v8267
    %8860 = vmatprep.subr.mxu0 0.0
    %8861 = vmatpush2.msra.mxu0 %v8266
    %8862 = vmatprep.subr.mxu0 0.0
    %8863 = vmatpush2.msra.mxu0 %v8265
    %8864 = vmatprep.subr.mxu0 0.0
    %8865 = vmatpush2.msra.mxu0 %v8264
    %8866 = vmatprep.subr.mxu0 0.0
    %8867 = vmatpush2.msra.mxu0 %v8263
    %8868 = vmatprep.mubr.f32.mxu0 %v8006
    %8869 = vmatmul.mubr.f32.gmra.mxu0 %v8005
    %v8870 = vpop.f32.mrf.mxu0
    %v8871 = vadd.f32 %v8796, %v8870
    %v8872 = vpop.f32.mrf.mxu0
    %8873 = vmatprep.mubr.f32.mxu0 %v8022
    %8874 = vmatmul.mubr.f32.gmra.mxu0 %v8021
    %v8875 = vpop.f32.mrf.mxu0
    %v8876 = vadd.f32 %v8801, %v8875
    %v8877 = vpop.f32.mrf.mxu0
    %8878 = vdwg.mxu0
    %vm8879 = vcmask 196608
    %8880 = vst.msk [vmem:[#allocation7] sm:$0x1] %vm8879, %v8871
    %v8883 = vunpack.c.l.s4 1983009808
    %v8884 = vunpack.c.0.s8 %v8883
    %v8885 = vlaneseq
    %v8886 = vshrl.u32 %v8885, 7
    %v8887 = vsub.s32 %v8884, %v8886
    %v8888 = vrot.slane %v8871, %v8887
    %v8889 = vrot.slane %v8888, 7
    %v8890 = vrot.slane %v8889, 2
    %8891 = vrot.lane.b32.xlu0 %v8890, 25
    %v8892 = vpop.permute.xlu0 %8891
    %vm8894 = vcmask 401608
    %8895 = vst.msk [vmem:[#allocation7] sm:$0x1] %vm8894, %v8892
    %v8896 = vcombine.high %v8888, %v8888
    %8897 = vrot.lane.b32.xlu0 %v8896, 50
    %v8898 = vpop.permute.xlu0 %8897
    %vm8900 = vcmask 606608
    %8901 = vst.msk [vmem:[#allocation7] sm:$0x1] %vm8900, %v8898
    %v8902 = vrot.slane %v8896, 7
    %v8903 = vrot.slane %v8902, 2
    %8904 = vrot.lane.b32.xlu0 %v8903, 75
    %v8905 = vpop.permute.xlu0 %8904
    %vm8907 = vcmask 811608
    %8908 = vst.msk [vmem:[#allocation7] sm:$0x1] %vm8907, %v8905
    %v8909 = vcombine.high %v8871, %v8871
    %v8911 = vunpack.c.l.s4 1983009808
    %v8912 = vunpack.c.0.s8 %v8911
    %v8913 = vlaneseq
    %v8914 = vshrl.u32 %v8913, 7
    %v8915 = vsub.s32 %v8912, %v8914
    %v8916 = vrot.slane %v8909, %v8915
    %8917 = vrot.lane.b32.xlu0 %v8916, 100
    %v8918 = vpop.permute.xlu0 %8917
    %vm8920 = vcmask 1016608
    %8921 = vst.msk [vmem:[#allocation7] sm:$0x1] %vm8920, %v8918
    %v8922 = vrot.slane %v8916, 7
    %v8923 = vrot.slane %v8922, 2
    %8924 = vrot.lane.b32.xlu0 %v8923, 125
    %v8925 = vpop.permute.xlu0 %8924
    %v8926 = vrot.slane %v8925, 6
    %v8927 = vsel %vm708, %v8926, %v8925
    %vm8929 = vcmask 1041384
    %vm8930 = vcmask 174082
    %vm8931 = vmor %vm8930, %vm8929
    %8932 = vst.msk [vmem:[#allocation7] sm:$0x5] %vm8931, %v8927
    %v8933 = vcombine.high %v8916, %v8916
    %8934 = vrot.lane.b32.xlu0 %v8933, 22
    %v8935 = vpop.permute.xlu0 %8934
    %vm8937 = vcmask 377008
    %8938 = vst.msk [vmem:[#allocation7 + $0x2] sm:$0x1] %vm8937, %v8935
    %v8939 = vrot.slane %v8933, 7
    %v8940 = vrot.slane %v8939, 2
    %8941 = vrot.lane.b32.xlu0 %v8940, 47
    %v8942 = vpop.permute.xlu0 %8941
    %vm8944 = vcmask 582008
    %8945 = vst.msk [vmem:[#allocation7 + $0x2] sm:$0x1] %vm8944, %v8942
    %v8948 = vunpack.c.l.s4 1983009808
    %v8949 = vunpack.c.0.s8 %v8948
    %v8950 = vlaneseq
    %v8951 = vshrl.u32 %v8950, 7
    %v8952 = vsub.s32 %v8949, %v8951
    %v8953 = vrot.slane %v8876, %v8952
    %8954 = vrot.lane.b32.xlu0 %v8953, 72
    %v8955 = vpop.permute.xlu0 %8954
    %vm8957 = vcmask 787008
    %8958 = vst.msk [vmem:[#allocation7 + $0x2] sm:$0x1] %vm8957, %v8955
    %v8959 = vrot.slane %v8953, 7
    %v8960 = vrot.slane %v8959, 2
    %8961 = vrot.lane.b32.xlu0 %v8960, 97
    %v8962 = vpop.permute.xlu0 %8961
    %vm8964 = vcmask 992008
    %8965 = vst.msk [vmem:[#allocation7 + $0x2] sm:$0x1] %vm8964, %v8962
    %v8966 = vcombine.high %v8953, %v8953
    %8967 = vrot.lane.b32.xlu0 %v8966, 122
    %v8968 = vpop.permute.xlu0 %8967
    %v8969 = vrot.slane %v8968, 6
    %v8970 = vsel %vm4035, %v8969, %v8968
    %vm8972 = vcmask 1041360
    %vm8973 = vcmask 149506
    %vm8974 = vmor %vm8973, %vm8972
    %8975 = vst.msk [vmem:[#allocation7 + $0x2] sm:$0x5] %vm8974, %v8970
    %v8976 = vrot.slane %v8966, 7
    %v8977 = vrot.slane %v8976, 2
    %8978 = vrot.lane.b32.xlu0 %v8977, 19
    %v8979 = vpop.permute.xlu0 %8978
    %vm8981 = vcmask 352408
    %8982 = vst.msk [vmem:[#allocation7 + $0x4] sm:$0x1] %vm8981, %v8979
    %v8983 = vcombine.high %v8876, %v8876
    %v8985 = vunpack.c.l.s4 1983009808
    %v8986 = vunpack.c.0.s8 %v8985
    %v8987 = vlaneseq
    %v8988 = vshrl.u32 %v8987, 7
    %v8989 = vsub.s32 %v8986, %v8988
    %v8990 = vrot.slane %v8983, %v8989
    %8991 = vrot.lane.b32.xlu0 %v8990, 44
    %v8992 = vpop.permute.xlu0 %8991
    %vm8994 = vcmask 557408
    %8995 = vst.msk [vmem:[#allocation7 + $0x4] sm:$0x1] %vm8994, %v8992
    %v8996 = vrot.slane %v8990, 7
    %v8997 = vrot.slane %v8996, 2
    %8998 = vrot.lane.b32.xlu0 %v8997, 69
    %v8999 = vpop.permute.xlu0 %8998
    %vm9001 = vcmask 762408
    %9002 = vst.msk [vmem:[#allocation7 + $0x4] sm:$0x1] %vm9001, %v8999
    %v9003 = vcombine.high %v8990, %v8990
    %9004 = vrot.lane.b32.xlu0 %v9003, 94
    %v9005 = vpop.permute.xlu0 %9004
    %vm9007 = vcmask 967408
    %9008 = vst.msk [vmem:[#allocation7 + $0x4] sm:$0x1] %vm9007, %v9005
    %v9009 = vrot.slane %v9003, 7
    %v9010 = vrot.slane %v9009, 2
    %9011 = vrot.lane.b32.xlu0 %v9010, 119
    %v9012 = vpop.permute.xlu0 %9011
    %v9013 = vrot.slane %v9012, 6
    %vm9014 = vcmask 973824
    %v9015 = vsel %vm9014, %v9013, %v9012
    %vm9017 = vcmask 1041336
    %vm9018 = vcmask 124930
    %vm9019 = vmor %vm9018, %vm9017
    %9020 = vst.msk [vmem:[#allocation7 + $0x4] sm:$0x5] %vm9019, %v9015
    %9021 = vrot.lane.b32.xlu0 %v8888, 103
    %v9022 = vpop.permute.xlu0 %9021
    %9024 = vst.msk [vmem:[#allocation7 + $0x1] sm:$0x1] %vm8879, %v9022
    %9026 = vst.msk [vmem:[#allocation7 + $0x1] sm:$0x1] %vm8894, %v8890
    %9027 = vrot.lane.b32.xlu0 %v8896, 25
    %v9028 = vpop.permute.xlu0 %9027
    %9030 = vst.msk [vmem:[#allocation7 + $0x1] sm:$0x1] %vm8900, %v9028
    %9031 = vrot.lane.b32.xlu0 %v8903, 50
    %v9032 = vpop.permute.xlu0 %9031
    %9034 = vst.msk [vmem:[#allocation7 + $0x1] sm:$0x1] %vm8907, %v9032
    %9035 = vrot.lane.b32.xlu0 %v8916, 75
    %v9036 = vpop.permute.xlu0 %9035
    %9038 = vst.msk [vmem:[#allocation7 + $0x1] sm:$0x1] %vm8920, %v9036
    %9039 = vrot.lane.b32.xlu0 %v8923, 100
    %v9040 = vpop.permute.xlu0 %9039
    %v9041 = vrot.slane %v9040, 6
    %vm9042 = vcmask 818176
    %v9043 = vsel %vm9042, %v9041, %v9040
    %9045 = vst.msk [vmem:[#allocation7 + $0x1] sm:$0x5] %vm8931, %v9043
    %9046 = vrot.lane.b32.xlu0 %v8933, 125
    %v9047 = vpop.permute.xlu0 %9046
    %9049 = vst.msk [vmem:[#allocation7 + $0x3] sm:$0x1] %vm8937, %v9047
    %9050 = vrot.lane.b32.xlu0 %v8940, 22
    %v9051 = vpop.permute.xlu0 %9050
    %9053 = vst.msk [vmem:[#allocation7 + $0x3] sm:$0x1] %vm8944, %v9051
    %9054 = vrot.lane.b32.xlu0 %v8953, 47
    %v9055 = vpop.permute.xlu0 %9054
    %9057 = vst.msk [vmem:[#allocation7 + $0x3] sm:$0x1] %vm8957, %v9055
    %9058 = vrot.lane.b32.xlu0 %v8960, 72
    %v9059 = vpop.permute.xlu0 %9058
    %9061 = vst.msk [vmem:[#allocation7 + $0x3] sm:$0x1] %vm8964, %v9059
    %9062 = vrot.lane.b32.xlu0 %v8966, 97
    %v9063 = vpop.permute.xlu0 %9062
    %v9064 = vrot.slane %v9063, 6
    %vm9065 = vcmask 793600
    %v9066 = vsel %vm9065, %v9064, %v9063
    %9068 = vst.msk [vmem:[#allocation7 + $0x3] sm:$0x5] %vm8974, %v9066
    %9069 = vrot.lane.b32.xlu0 %v8977, 122
    %v9070 = vpop.permute.xlu0 %9069
    %9072 = vst.msk [vmem:[#allocation7 + $0x5] sm:$0x1] %vm8981, %v9070
    %9073 = vrot.lane.b32.xlu0 %v8990, 19
    %v9074 = vpop.permute.xlu0 %9073
    %9076 = vst.msk [vmem:[#allocation7 + $0x5] sm:$0x1] %vm8994, %v9074
    %9077 = vrot.lane.b32.xlu0 %v8997, 44
    %v9078 = vpop.permute.xlu0 %9077
    %9080 = vst.msk [vmem:[#allocation7 + $0x5] sm:$0x1] %vm9001, %v9078
    %9081 = vrot.lane.b32.xlu0 %v9003, 69
    %v9082 = vpop.permute.xlu0 %9081
    %9084 = vst.msk [vmem:[#allocation7 + $0x5] sm:$0x1] %vm9007, %v9082
    %9085 = vrot.lane.b32.xlu0 %v9010, 94
    %v9086 = vpop.permute.xlu0 %9085
    %v9087 = vrot.slane %v9086, 6
    %v9088 = vsel %vm1192, %v9087, %v9086
    %9090 = vst.msk [vmem:[#allocation7 + $0x5] sm:$0x5] %vm9019, %v9088
    %s9091 = smul.u32 400, 1
    %s9092 = sshll.u32 %s9091, 4
    %9093 = dma.done %s49, %s9092
    %v9094 = vld [vmem:[#allocation7] sm:$0xff]
    %v9095 = vld [vmem:[#allocation9] sm:$0xff]
    %v9096 = vld [vmem:[#allocation9 + $0x8] sm:$0xff]
    %v9097 = vld [vmem:[#allocation9 + $0x10] sm:$0xff]
    %v9098 = vld [vmem:[#allocation9 + $0x18] sm:$0xff]
    %v9099 = vld [vmem:[#allocation9 + $0x20] sm:$0xff]
    %v9100 = vld [vmem:[#allocation9 + $0x28] sm:$0xff]
    %v9101 = vld [vmem:[#allocation9 + $0x30] sm:$0xff]
    %v9102 = vld [vmem:[#allocation9 + $0x38] sm:$0xff]
    %v9103 = vld [vmem:[#allocation9 + $0x40] sm:$0xff]
    %v9104 = vld [vmem:[#allocation9 + $0x48] sm:$0xff]
    %v9105 = vld [vmem:[#allocation9 + $0x50] sm:$0xff]
    %v9106 = vld [vmem:[#allocation9 + $0x58] sm:$0xff]
    %v9107 = vld [vmem:[#allocation9 + $0x60] sm:$0xff]
    %v9108 = vld [vmem:[#allocation9 + $0x68] sm:$0xff]
    %v9109 = vld [vmem:[#allocation9 + $0x70] sm:$0xff]
    %v9110 = vld [vmem:[#allocation9 + $0x78] sm:$0xff]
    %v9111 = vld [vmem:[#allocation9 + $0x80] sm:$0xff]
    %v9112 = vld [vmem:[#allocation9 + $0x88] sm:$0xff]
    %v9113 = vld [vmem:[#allocation9 + $0x90] sm:$0xff]
    %v9114 = vld [vmem:[#allocation9 + $0x98] sm:$0xff]
    %v9115 = vld [vmem:[#allocation9 + $0xa0] sm:$0xff]
    %v9116 = vld [vmem:[#allocation9 + $0xa8] sm:$0xff]
    %v9117 = vld [vmem:[#allocation9 + $0xb0] sm:$0xff]
    %v9118 = vld [vmem:[#allocation9 + $0xb8] sm:$0xff]
    %v9119 = vld [vmem:[#allocation9 + $0xc0] sm:$0xff]
    %v9120 = vld [vmem:[#allocation9 + $0xc8] sm:$0xff]
    %v9121 = vld [vmem:[#allocation9 + $0xd0] sm:$0xff]
    %v9122 = vld [vmem:[#allocation9 + $0xd8] sm:$0xff]
    %v9123 = vld [vmem:[#allocation9 + $0xe0] sm:$0xff]
    %v9124 = vld [vmem:[#allocation9 + $0xe8] sm:$0xff]
    %v9125 = vld [vmem:[#allocation9 + $0xf0] sm:$0xff]
    %v9126 = vld [vmem:[#allocation9 + $0xf8] sm:$0xff]
    %v9127 = vld [vmem:[#allocation9 + $0x100] sm:$0xff]
    %v9128 = vld [vmem:[#allocation9 + $0x108] sm:$0xff]
    %v9129 = vld [vmem:[#allocation9 + $0x110] sm:$0xff]
    %v9130 = vld [vmem:[#allocation9 + $0x118] sm:$0xff]
    %v9131 = vld [vmem:[#allocation9 + $0x120] sm:$0xff]
    %v9132 = vld [vmem:[#allocation9 + $0x128] sm:$0xff]
    %v9133 = vld [vmem:[#allocation9 + $0x130] sm:$0xff]
    %v9134 = vld [vmem:[#allocation9 + $0x138] sm:$0xff]
    %v9135 = vld [vmem:[#allocation9 + $0x140] sm:$0xff]
    %v9136 = vld [vmem:[#allocation9 + $0x148] sm:$0xff]
    %v9137 = vld [vmem:[#allocation9 + $0x150] sm:$0xff]
    %v9138 = vld [vmem:[#allocation9 + $0x158] sm:$0xff]
    %v9139 = vld [vmem:[#allocation9 + $0x160] sm:$0xff]
    %v9140 = vld [vmem:[#allocation9 + $0x168] sm:$0xff]
    %v9141 = vld [vmem:[#allocation9 + $0x170] sm:$0xff]
    %v9142 = vld [vmem:[#allocation9 + $0x178] sm:$0xff]
    %v9143 = vld [vmem:[#allocation9 + $0x180] sm:$0xff]
    %v9144 = vld [vmem:[#allocation9 + $0x188] sm:$0xff]
    %v9145 = vld [vmem:[%s7] sm:$0x1]
    %v9147 = vlaneseq
    %v9148 = vshrl.u32 %v9147, 7
    %v9149 = vsub.s32 0, %v9148
    %v9150 = vrot.slane %v9145, %v9149
    %v9153 = vcombine.high %v9094, %v9094
    %v9155 = vunpack.c.l.s4 1983009808
    %v9156 = vunpack.c.0.s8 %v9155
    %v9157 = vlaneseq
    %v9158 = vshrl.u32 %v9157, 7
    %v9159 = vsub.s32 %v9156, %v9158
    %v9160 = vrot.slane %v9094, %v9159
    %v9162 = vunpack.c.l.s4 1983009808
    %v9163 = vunpack.c.0.s8 %v9162
    %v9164 = vlaneseq
    %v9165 = vshrl.u32 %v9164, 7
    %v9166 = vsub.s32 %v9163, %v9165
    %v9167 = vrot.slane %v9153, %v9166
    %v9168 = vcombine.high %v9160, %v9160
    %v9169 = vcombine.high %v9167, %v9167
    %vm9173 = vcmask 130048
    %v9174 = vsel %vm9173, %v9169, 0
    %9176 = vmatprep.subr.mxu0 0.0
    %9177 = vmatpush1.msra.mxu0 %v9110
    %9178 = vmatprep.subr.mxu0 0.0
    %9179 = vmatpush1.msra.mxu0 %v9109
    %9180 = vmatprep.subr.mxu0 0.0
    %9181 = vmatpush1.msra.mxu0 %v9108
    %9182 = vmatprep.subr.mxu0 0.0
    %9183 = vmatpush1.msra.mxu0 %v9107
    %9184 = vmatprep.subr.mxu0 0.0
    %9185 = vmatpush1.msra.mxu0 %v9106
    %9186 = vmatprep.subr.mxu0 0.0
    %9187 = vmatpush1.msra.mxu0 %v9105
    %9188 = vmatprep.subr.mxu0 0.0
    %9189 = vmatpush1.msra.mxu0 %v9104
    %9190 = vmatprep.subr.mxu0 0.0
    %9191 = vmatpush1.msra.mxu0 %v9103
    %9192 = vmatprep.subr.mxu0 0.0
    %9193 = vmatpush1.msra.mxu0 %v9102
    %9194 = vmatprep.subr.mxu0 0.0
    %9195 = vmatpush1.msra.mxu0 %v9101
    %9196 = vmatprep.subr.mxu0 0.0
    %9197 = vmatpush1.msra.mxu0 %v9100
    %9198 = vmatprep.subr.mxu0 0.0
    %9199 = vmatpush1.msra.mxu0 %v9099
    %9200 = vmatprep.subr.mxu0 0.0
    %9201 = vmatpush1.msra.mxu0 %v9098
    %9202 = vmatprep.subr.mxu0 0.0
    %9203 = vmatpush1.msra.mxu0 %v9097
    %9204 = vmatprep.subr.mxu0 0.0
    %9205 = vmatpush1.msra.mxu0 %v9096
    %9206 = vmatprep.subr.mxu0 0.0
    %9207 = vmatpush1.msra.mxu0 %v9095
    %9208 = vmatprep.subr.mxu0 0.0
    %9209 = vmatpush2.msra.mxu0 %v9126
    %9210 = vmatprep.subr.mxu0 0.0
    %9211 = vmatpush2.msra.mxu0 %v9125
    %9212 = vmatprep.subr.mxu0 0.0
    %9213 = vmatpush2.msra.mxu0 %v9124
    %9214 = vmatprep.subr.mxu0 0.0
    %9215 = vmatpush2.msra.mxu0 %v9123
    %9216 = vmatprep.subr.mxu0 0.0
    %9217 = vmatpush2.msra.mxu0 %v9122
    %9218 = vmatprep.subr.mxu0 0.0
    %9219 = vmatpush2.msra.mxu0 %v9121
    %9220 = vmatprep.subr.mxu0 0.0
    %9221 = vmatpush2.msra.mxu0 %v9120
    %9222 = vmatprep.subr.mxu0 0.0
    %9223 = vmatpush2.msra.mxu0 %v9119
    %9224 = vmatprep.subr.mxu0 0.0
    %9225 = vmatpush2.msra.mxu0 %v9118
    %9226 = vmatprep.subr.mxu0 0.0
    %9227 = vmatpush2.msra.mxu0 %v9117
    %9228 = vmatprep.subr.mxu0 0.0
    %9229 = vmatpush2.msra.mxu0 %v9116
    %9230 = vmatprep.subr.mxu0 0.0
    %9231 = vmatpush2.msra.mxu0 %v9115
    %9232 = vmatprep.subr.mxu0 0.0
    %9233 = vmatpush2.msra.mxu0 %v9114
    %9234 = vmatprep.subr.mxu0 0.0
    %9235 = vmatpush2.msra.mxu0 %v9113
    %9236 = vmatprep.subr.mxu0 0.0
    %9237 = vmatpush2.msra.mxu0 %v9112
    %9238 = vmatprep.subr.mxu0 0.0
    %9239 = vmatpush2.msra.mxu0 %v9111
    %9240 = vmatprep.mubr.f32.mxu0 %v9168
    %9241 = vmatmul.mubr.f32.gmra.mxu0 %v9160
    %v9242 = vpop.f32.mrf.mxu0
    %v9243 = vadd.f32 %v9150, %v9242
    %v9244 = vpop.f32.mrf.mxu0
    %9245 = vdwg.mxu0
    %9246 = vmatprep.subr.mxu0 0.0
    %9247 = vmatpush1.msra.mxu0 %v9142
    %9248 = vmatprep.subr.mxu0 0.0
    %9249 = vmatpush1.msra.mxu0 %v9141
    %9250 = vmatprep.subr.mxu0 0.0
    %9251 = vmatpush1.msra.mxu0 %v9140
    %9252 = vmatprep.subr.mxu0 0.0
    %9253 = vmatpush1.msra.mxu0 %v9139
    %9254 = vmatprep.subr.mxu0 0.0
    %9255 = vmatpush1.msra.mxu0 %v9138
    %9256 = vmatprep.subr.mxu0 0.0
    %9257 = vmatpush1.msra.mxu0 %v9137
    %9258 = vmatprep.subr.mxu0 0.0
    %9259 = vmatpush1.msra.mxu0 %v9136
    %9260 = vmatprep.subr.mxu0 0.0
    %9261 = vmatpush1.msra.mxu0 %v9135
    %9262 = vmatprep.subr.mxu0 0.0
    %9263 = vmatpush1.msra.mxu0 %v9134
    %9264 = vmatprep.subr.mxu0 0.0
    %9265 = vmatpush1.msra.mxu0 %v9133
    %9266 = vmatprep.subr.mxu0 0.0
    %9267 = vmatpush1.msra.mxu0 %v9132
    %9268 = vmatprep.subr.mxu0 0.0
    %9269 = vmatpush1.msra.mxu0 %v9131
    %9270 = vmatprep.subr.mxu0 0.0
    %9271 = vmatpush1.msra.mxu0 %v9130
    %9272 = vmatprep.subr.mxu0 0.0
    %9273 = vmatpush1.msra.mxu0 %v9129
    %9274 = vmatprep.subr.mxu0 0.0
    %9275 = vmatpush1.msra.mxu0 %v9128
    %9276 = vmatprep.subr.mxu0 0.0
    %9277 = vmatpush1.msra.mxu0 %v9127
    %9278 = vmatprep.subr.mxu0 0.0
    %9279 = vmatpush2.msra.mxu0 0.0
    %9280 = vmatprep.subr.mxu0 0.0
    %9281 = vmatpush2.msra.mxu0 0.0
    %9282 = vmatprep.subr.mxu0 0.0
    %9283 = vmatpush2.msra.mxu0 0.0
    %9284 = vmatprep.subr.mxu0 0.0
    %9285 = vmatpush2.msra.mxu0 0.0
    %9286 = vmatprep.subr.mxu0 0.0
    %9287 = vmatpush2.msra.mxu0 0.0
    %9288 = vmatprep.subr.mxu0 0.0
    %9289 = vmatpush2.msra.mxu0 0.0
    %9290 = vmatprep.subr.mxu0 0.0
    %9291 = vmatpush2.msra.mxu0 0.0
    %9292 = vmatprep.subr.mxu0 0.0
    %9293 = vmatpush2.msra.mxu0 0.0
    %9294 = vmatprep.subr.mxu0 0.0
    %9295 = vmatpush2.msra.mxu0 0.0
    %9296 = vmatprep.subr.mxu0 0.0
    %9297 = vmatpush2.msra.mxu0 0.0
    %9298 = vmatprep.subr.mxu0 0.0
    %9299 = vmatpush2.msra.mxu0 0.0
    %9300 = vmatprep.subr.mxu0 0.0
    %9301 = vmatpush2.msra.mxu0 0.0
    %9302 = vmatprep.subr.mxu0 0.0
    %9303 = vmatpush2.msra.mxu0 0.0
    %9304 = vmatprep.subr.mxu0 0.0
    %9305 = vmatpush2.msra.mxu0 0.0
    %9306 = vmatprep.subr.mxu0 0.0
    %9307 = vmatpush2.msra.mxu0 %v9144
    %9308 = vmatprep.subr.mxu0 0.0
    %9309 = vmatpush2.msra.mxu0 %v9143
    %9310 = vmatprep.mubr.f32.mxu0 %v9174
    %9311 = vmatmul.mubr.f32.gmra.mxu0 %v9167
    %v9312 = vpop.f32.mrf.mxu0
    %v9313 = vadd.f32 %v9243, %v9312
    %v9314 = vpop.f32.mrf.mxu0
    %9315 = vdwg.mxu0
    %v9316 = vmax.f32 %v9313, 0.0
    %v9317 = vld [vmem:[%s8] sm:$0xff]
    %v9318 = vld [vmem:[%s8 + $0x8] sm:$0xff]
    %v9319 = vld [vmem:[%s8 + $0x10] sm:$0xff]
    %v9320 = vld [vmem:[%s8 + $0x18] sm:$0xff]
    %v9321 = vld [vmem:[%s8 + $0x20] sm:$0xff]
    %v9322 = vld [vmem:[%s8 + $0x28] sm:$0xff]
    %v9323 = vld [vmem:[%s8 + $0x30] sm:$0xff]
    %v9324 = vld [vmem:[%s8 + $0x38] sm:$0xff]
    %v9325 = vld [vmem:[%s8 + $0x40] sm:$0xff]
    %v9326 = vld [vmem:[%s8 + $0x48] sm:$0xff]
    %v9327 = vld [vmem:[%s8 + $0x50] sm:$0xff]
    %v9328 = vld [vmem:[%s8 + $0x58] sm:$0xff]
    %v9329 = vld [vmem:[%s8 + $0x60] sm:$0xff]
    %v9330 = vld [vmem:[%s8 + $0x68] sm:$0xff]
    %v9331 = vld [vmem:[%s8 + $0x70] sm:$0xff]
    %v9332 = vld [vmem:[%s9] sm:$0x1]
    %v9334 = vlaneseq
    %v9335 = vshrl.u32 %v9334, 7
    %v9336 = vsub.s32 0, %v9335
    %v9337 = vrot.slane %v9332, %v9336
    %v9340 = vsel %vm4152, %v9316, 0
    %9342 = vmatprep.subr.mxu0 0.0
    %9343 = vmatpush1.msra.mxu0 0.0
    %9344 = vmatprep.subr.mxu0 0.0
    %9345 = vmatpush1.msra.mxu0 %v9331
    %9346 = vmatprep.subr.mxu0 0.0
    %9347 = vmatpush1.msra.mxu0 %v9330
    %9348 = vmatprep.subr.mxu0 0.0
    %9349 = vmatpush1.msra.mxu0 %v9329
    %9350 = vmatprep.subr.mxu0 0.0
    %9351 = vmatpush1.msra.mxu0 %v9328
    %9352 = vmatprep.subr.mxu0 0.0
    %9353 = vmatpush1.msra.mxu0 %v9327
    %9354 = vmatprep.subr.mxu0 0.0
    %9355 = vmatpush1.msra.mxu0 %v9326
    %9356 = vmatprep.subr.mxu0 0.0
    %9357 = vmatpush1.msra.mxu0 %v9325
    %9358 = vmatprep.subr.mxu0 0.0
    %9359 = vmatpush1.msra.mxu0 %v9324
    %9360 = vmatprep.subr.mxu0 0.0
    %9361 = vmatpush1.msra.mxu0 %v9323
    %9362 = vmatprep.subr.mxu0 0.0
    %9363 = vmatpush1.msra.mxu0 %v9322
    %9364 = vmatprep.subr.mxu0 0.0
    %9365 = vmatpush1.msra.mxu0 %v9321
    %9366 = vmatprep.subr.mxu0 0.0
    %9367 = vmatpush1.msra.mxu0 %v9320
    %9368 = vmatprep.subr.mxu0 0.0
    %9369 = vmatpush1.msra.mxu0 %v9319
    %9370 = vmatprep.subr.mxu0 0.0
    %9371 = vmatpush1.msra.mxu0 %v9318
    %9372 = vmatprep.subr.mxu0 0.0
    %9373 = vmatpush1.msra.mxu0 %v9317
    %9374 = vmatprep.subr.mxu0 0.0
    %9375 = vmatpush2.msra.mxu0 0.0
    %9376 = vmatprep.subr.mxu0 0.0
    %9377 = vmatpush2.msra.mxu0 0.0
    %9378 = vmatprep.subr.mxu0 0.0
    %9379 = vmatpush2.msra.mxu0 0.0
    %9380 = vmatprep.subr.mxu0 0.0
    %9381 = vmatpush2.msra.mxu0 0.0
    %9382 = vmatprep.subr.mxu0 0.0
    %9383 = vmatpush2.msra.mxu0 0.0
    %9384 = vmatprep.subr.mxu0 0.0
    %9385 = vmatpush2.msra.mxu0 0.0
    %9386 = vmatprep.subr.mxu0 0.0
    %9387 = vmatpush2.msra.mxu0 0.0
    %9388 = vmatprep.subr.mxu0 0.0
    %9389 = vmatpush2.msra.mxu0 0.0
    %9390 = vmatprep.subr.mxu0 0.0
    %9391 = vmatpush2.msra.mxu0 0.0
    %9392 = vmatprep.subr.mxu0 0.0
    %9393 = vmatpush2.msra.mxu0 0.0
    %9394 = vmatprep.subr.mxu0 0.0
    %9395 = vmatpush2.msra.mxu0 0.0
    %9396 = vmatprep.subr.mxu0 0.0
    %9397 = vmatpush2.msra.mxu0 0.0
    %9398 = vmatprep.subr.mxu0 0.0
    %9399 = vmatpush2.msra.mxu0 0.0
    %9400 = vmatprep.subr.mxu0 0.0
    %9401 = vmatpush2.msra.mxu0 0.0
    %9402 = vmatprep.subr.mxu0 0.0
    %9403 = vmatpush2.msra.mxu0 0.0
    %9404 = vmatprep.subr.mxu0 0.0
    %9405 = vmatpush2.msra.mxu0 0.0
    %9406 = vmatprep.mubr.f32.mxu0 0.0
    %9407 = vmatmul.mubr.f32.gmra.mxu0 %v9340
    %v9408 = vpop.f32.mrf.mxu0
    %v9409 = vadd.f32 %v9337, %v9408
    %v9410 = vpop.f32.mrf.mxu0
    %9411 = vdwg.mxu0
    %v9412 = vmax.f32 %v9409, 0.0
    %v9413 = vld [vmem:[%s10] sm:$0xff]
    %v9414 = vld [vmem:[%s10 + $0x8] sm:$0xff]
    %v9415 = vld [vmem:[%s10 + $0x10] sm:$0xff]
    %v9416 = vld [vmem:[%s10 + $0x18] sm:$0xff]
    %v9417 = vld [vmem:[%s10 + $0x20] sm:$0xff]
    %v9418 = vld [vmem:[%s10 + $0x28] sm:$0xff]
    %v9419 = vld [vmem:[%s10 + $0x30] sm:$0xff]
    %v9420 = vld [vmem:[%s10 + $0x38] sm:$0xff]
    %v9421 = vld [vmem:[%s10 + $0x40] sm:$0xff]
    %v9422 = vld [vmem:[%s10 + $0x48] sm:$0xff]
    %v9423 = vld [vmem:[%s10 + $0x50] sm:$0xf]
    %v9424 = vld [vmem:[%s11] sm:$0x1]
    %v9426 = vlaneseq
    %v9427 = vshrl.u32 %v9426, 7
    %v9428 = vsub.s32 0, %v9427
    %v9429 = vrot.slane %v9424, %v9428
    %vm9431 = vcmask 687104
    %v9433 = vsel %vm9431, %v9412, 0
    %vm9435 = vcmask 1043456
    %v9437 = vsel %vm9435, %v9423, 0
    %9439 = vmatprep.subr.mxu0 0.0
    %9440 = vmatpush1.msra.mxu0 0.0
    %9441 = vmatprep.subr.mxu0 0.0
    %9442 = vmatpush1.msra.mxu0 0.0
    %9443 = vmatprep.subr.mxu0 0.0
    %9444 = vmatpush1.msra.mxu0 0.0
    %9445 = vmatprep.subr.mxu0 0.0
    %9446 = vmatpush1.msra.mxu0 0.0
    %9447 = vmatprep.subr.mxu0 0.0
    %9448 = vmatpush1.msra.mxu0 0.0
    %9449 = vmatprep.subr.mxu0 0.0
    %9450 = vmatpush1.msra.mxu0 %v9437
    %9451 = vmatprep.subr.mxu0 0.0
    %9452 = vmatpush1.msra.mxu0 %v9422
    %9453 = vmatprep.subr.mxu0 0.0
    %9454 = vmatpush1.msra.mxu0 %v9421
    %9455 = vmatprep.subr.mxu0 0.0
    %9456 = vmatpush1.msra.mxu0 %v9420
    %9457 = vmatprep.subr.mxu0 0.0
    %9458 = vmatpush1.msra.mxu0 %v9419
    %9459 = vmatprep.subr.mxu0 0.0
    %9460 = vmatpush1.msra.mxu0 %v9418
    %9461 = vmatprep.subr.mxu0 0.0
    %9462 = vmatpush1.msra.mxu0 %v9417
    %9463 = vmatprep.subr.mxu0 0.0
    %9464 = vmatpush1.msra.mxu0 %v9416
    %9465 = vmatprep.subr.mxu0 0.0
    %9466 = vmatpush1.msra.mxu0 %v9415
    %9467 = vmatprep.subr.mxu0 0.0
    %9468 = vmatpush1.msra.mxu0 %v9414
    %9469 = vmatprep.subr.mxu0 0.0
    %9470 = vmatpush1.msra.mxu0 %v9413
    %9471 = vmatprep.subr.mxu0 0.0
    %9472 = vmatpush2.msra.mxu0 0.0
    %9473 = vmatprep.subr.mxu0 0.0
    %9474 = vmatpush2.msra.mxu0 0.0
    %9475 = vmatprep.subr.mxu0 0.0
    %9476 = vmatpush2.msra.mxu0 0.0
    %9477 = vmatprep.subr.mxu0 0.0
    %9478 = vmatpush2.msra.mxu0 0.0
    %9479 = vmatprep.subr.mxu0 0.0
    %9480 = vmatpush2.msra.mxu0 0.0
    %9481 = vmatprep.subr.mxu0 0.0
    %9482 = vmatpush2.msra.mxu0 0.0
    %9483 = vmatprep.subr.mxu0 0.0
    %9484 = vmatpush2.msra.mxu0 0.0
    %9485 = vmatprep.subr.mxu0 0.0
    %9486 = vmatpush2.msra.mxu0 0.0
    %9487 = vmatprep.subr.mxu0 0.0
    %9488 = vmatpush2.msra.mxu0 0.0
    %9489 = vmatprep.subr.mxu0 0.0
    %9490 = vmatpush2.msra.mxu0 0.0
    %9491 = vmatprep.subr.mxu0 0.0
    %9492 = vmatpush2.msra.mxu0 0.0
    %9493 = vmatprep.subr.mxu0 0.0
    %9494 = vmatpush2.msra.mxu0 0.0
    %9495 = vmatprep.subr.mxu0 0.0
    %9496 = vmatpush2.msra.mxu0 0.0
    %9497 = vmatprep.subr.mxu0 0.0
    %9498 = vmatpush2.msra.mxu0 0.0
    %9499 = vmatprep.subr.mxu0 0.0
    %9500 = vmatpush2.msra.mxu0 0.0
    %9501 = vmatprep.subr.mxu0 0.0
    %9502 = vmatpush2.msra.mxu0 0.0
    %9503 = vmatprep.mubr.f32.mxu0 0.0
    %9504 = vmatmul.mubr.f32.gmra.mxu0 %v9433
    %v9505 = vpop.f32.mrf.mxu0
    %v9506 = vadd.f32 %v9429, %v9505
    %v9507 = vpop.f32.mrf.mxu0
    %9508 = vdwg.mxu0
    %vm9509 = vcmask 74752
    %9510 = vst.msk [vmem:[#allocation11] sm:$0x3] %vm9509, %v9506
    // Predicated region
    $region80: #{lenet_forward.1} parent=1 // pred_check
      _
    $region81: #{lenet_forward.1} parent=1 // pred_check_branch
      %9512 = sbr.rel (0) target = $region83
    $region82: #{lenet_forward.1} parent=1 // pred_region
      %s9514 = ssub.s32 32, 32
      %9515 = vsyncadd [#allocation12], %s9514
      %s9517 = sshll.u32 [#allocation11], 4
      %s9518 = int_to_ptr.vmem [resolvable:$true] %s9517
      %9520 = dma.vmem_to_hbm [thread:$0]  %s9518, 32, %s12, [#allocation12]
    $region83: #{lenet_forward.1} parent=1 // pred_fallthru
      _
    // Predicated region
    $region84: #{lenet_forward.1} parent=1 // pred_check
      _
    $region85: #{lenet_forward.1} parent=1 // pred_check_branch
      %9522 = sbr.rel (0) target = $region87
    $region86: #{lenet_forward.1} parent=1 // pred_region
      %9523 = dma.done [#allocation12], 32
    $region87: #{lenet_forward.1} parent=1 // pred_fallthru
      _
    %9524 = vsyncpa [#allocation12], 1
  %9525 = vsyncmov [#allocation10]
  %s9526 = vpop.sfrf %9525
  %p9527 = scmp.eq.s32.totalorder %s9526, 0
  %p9528 = pneg %p9527
  %9530 = shalt.err (%p9528)
  %s9531 = scalar_lea.sflag [#allocation10], 1
  %9532 = vsyncmov %s9531
  %s9533 = vpop.sfrf %9532
  %p9534 = scmp.eq.s32.totalorder %s9533, 0
  %p9535 = pneg %p9534
  %9537 = shalt.err (%p9535)

</llo_original>
